<compile_context>
chip_gen: v7x
topology: tpu7x:2x2x1
jax: 0.10.0
libtpu: 0.0.40
codegen_flags: <defaults>
</compile_context>

<pallas_src>
import functools

import jax
import jax.numpy as jnp
from jax.experimental import pallas as pl
from jax.experimental.pallas import tpu as pltpu

INPUT_DIM, HIDDEN_DIM, LATENT_DIM = 784, 400, 200


def _leaky_relu(x, slope=0.2):
    return jnp.where(x >= 0, x, slope * x)


def _elementwise_dtype():
    """bf16 elementwise on v6e/v7x (packed VPU path); f32 on v5e and older."""
    try:
        kind = jax.devices()[0].device_kind.lower()
    except Exception:
        return jnp.float32
    if any(t in kind for t in ("v2", "v3", "v4", "v5")):
        return jnp.float32
    return jnp.bfloat16


def vae_kernel(x_ref, eps_ref,
               w1_ref, b1_ref, w2_ref, b2_ref,        # encoder
               wh_ref, bh_ref,                        # fused mean/logvar head
               wd1_ref, bd1_ref, wd2_ref, bd2_ref,    # decoder
               wd3_ref, bd3_ref,
               xhat_ref, stats_ref, *, act_dtype):

    def affine_act(a_bf16, w_ref, b_ref):
        # MXU matmul with f32 accumulation; bias + LeakyReLU in act_dtype
        # (bf16 on v6e/v7x, f32 on v5e).
        y = jnp.dot(a_bf16, w_ref[...], preferred_element_type=jnp.float32)
        y = y.astype(act_dtype) + b_ref[...].astype(act_dtype)
        return _leaky_relu(y)

    # ---- encoder: Linear -> LeakyReLU(0.2) -> Linear -> LeakyReLU(0.2)
    x = x_ref[...]                                        # already bf16
    h = affine_act(x, w1_ref, b1_ref)                     # (tb, hidden)
    h = affine_act(h.astype(jnp.bfloat16), w2_ref, b2_ref)  # (tb, latent)

    # ---- fused mean/logvar heads: one (latent, 4) matmul, split the lanes.
    # Kept in f32 (tiny; precision matters for the latent).
    stats = jnp.dot(h.astype(jnp.bfloat16), wh_ref[...],
                    preferred_element_type=jnp.float32) + bh_ref[...]
    mean = stats[:, 0:2]
    logvar = stats[:, 2:4]

    # ---- reparameterization.  NOTE: matches the PyTorch module exactly,
    # which passes logvar (NOT exp(0.5*logvar)) as "var":  z = mean + logvar*eps
    z = mean + logvar * eps_ref[...]

    # ---- decoder.0 has K=2: two VPU broadcast FMAs instead of an MXU pass.
    wd1 = wd1_ref[...].astype(jnp.float32)                # (2, latent)
    d = z[:, 0:1] * wd1[0:1, :] + z[:, 1:2] * wd1[1:2, :] + bd1_ref[...]
    d = _leaky_relu(d)
    d = affine_act(d.astype(jnp.bfloat16), wd2_ref, bd2_ref)   # (tb, hidden)
    d = jnp.dot(d.astype(jnp.bfloat16), wd3_ref[...],
                preferred_element_type=jnp.float32)
    d = d.astype(act_dtype) + bd3_ref[...].astype(act_dtype)

    xhat_ref[...] = jax.nn.sigmoid(d).astype(xhat_ref.dtype)   # bf16 out
    stats_ref[...] = stats.astype(stats_ref.dtype)
    # TODO(synk): original PyTorch forward returns undefined `log_var`
    # (NameError bug); we return the intended `logvar`.


def vae_forward(x, eps, params, tb=256):
    """x: (B, input_dim) f32/bf16, eps: (B, 2) f32, params: 14 arrays."""
    (w1, b1, w2, b2, wm, bm, wv, bv,
     wd1, bd1, wd2, bd2, wd3, bd3) = params
    B, input_dim = x.shape
    hidden = w1.shape[1]
    latent = w2.shape[1]

    # Fuse the two N=2 heads into one lane-contiguous (latent, 4) matmul.
    wh = jnp.concatenate([wm, wv], axis=1)    # (latent, 4) bf16
    bh = jnp.concatenate([bm, bv], axis=1)    # (1, 4)      f32

    # Shrink the dominant HBM input stream: the kernel consumes bf16 anyway.
    x = x.astype(jnp.bfloat16)
    eps = eps.astype(jnp.float32)

    act_dtype = _elementwise_dtype()

    tb = min(tb, B)
    pad = (-B) % tb
    if pad:
        x = jnp.pad(x, ((0, pad), (0, 0)))
        eps = jnp.pad(eps, ((0, pad), (0, 0)))
    bp = B + pad
    grid = (bp // tb,)

    def batch_spec(cols):
        return pl.BlockSpec((tb, cols), lambda i: (i, 0))

    def resident_spec(arr):
        # Constant block index -> operand DMA'd once, resident across the grid.
        return pl.BlockSpec(arr.shape, lambda i: (0, 0))

    weights = (w1, b1, w2, b2, wh, bh, wd1, bd1, wd2, bd2, wd3, bd3)
    in_specs = ([batch_spec(input_dim), batch_spec(2)]
                + [resident_spec(w) for w in weights])
    out_specs = (batch_spec(input_dim), batch_spec(4))
    out_shape = (jax.ShapeDtypeStruct((bp, input_dim), jnp.bfloat16),  # x_hat
                 jax.ShapeDtypeStruct((bp, 4), jnp.float32))           # mean|logvar

    flops = 2 * bp * (input_dim * hidden + hidden * latent + latent * 4
                      + 2 * latent + latent * hidden + hidden * input_dim)
    bytes_accessed = (sum(int(w.size) * w.dtype.itemsize for w in weights)
                      + int(x.size) * 2 + int(eps.size) * 4      # bf16 x, f32 eps
                      + bp * input_dim * 2 + bp * 4 * 4)         # bf16 x_hat, f32 stats
    cost = pl.CostEstimate(flops=flops,
                           transcendentals=bp * input_dim,       # sigmoid exp
                           bytes_accessed=bytes_accessed)

    kernel = functools.partial(vae_kernel, act_dtype=act_dtype)

    x_hat, stats = pl.pallas_call(
        kernel,
        out_shape=out_shape,
        grid=grid,
        in_specs=in_specs,
        out_specs=out_specs,
        compiler_params=pltpu.CompilerParams(
            dimension_semantics=("parallel",)),   # megacore split on v7x
        cost_estimate=cost,
    )(x, eps, *weights)

    x_hat = x_hat[:B]
    stats = stats[:B]
    return x_hat, stats[:, 0:2], stats[:, 2:4]


def init_params(key, input_dim=784, hidden_dim=400, latent_dim=200):
    """PyTorch-style uniform(+/- 1/sqrt(fan_in)) init; bf16 weights, f32 biases."""
    layer_dims = [
        (input_dim, hidden_dim),   # encoder.0
        (hidden_dim, latent_dim),  # encoder.2
        (latent_dim, 2),           # mean_layer
        (latent_dim, 2),           # logvar_layer
        (2, latent_dim),           # decoder.0
        (latent_dim, hidden_dim),  # decoder.2
        (hidden_dim, input_dim),   # decoder.4
    ]
    params = []
    for fin, fout in layer_dims:
        key, kw, kb = jax.random.split(key, 3)
        bound = 1.0 / (fin ** 0.5)
        w = jax.random.uniform(kw, (fin, fout), jnp.float32, -bound, bound)
        b = jax.random.uniform(kb, (1, fout), jnp.float32, -bound, bound)
        params += [w.astype(jnp.bfloat16), b]
    return tuple(params)


if __name__ == "__main__":
    # 4 batch tiles of 256 rows -> pipelining on every chip and >=2 steps per
    # TensorCore on v7x.  Total I/O is still only a few MB.
    BATCH = 1024

    key = jax.random.PRNGKey(0)
    key, kx, keps, kp = jax.random.split(key, 4)

    x = jax.random.uniform(kx, (BATCH, INPUT_DIM), jnp.float32)   # "images"
    eps = jax.random.normal(keps, (BATCH, 2), jnp.float32)        # reparam noise
    params = init_params(kp, INPUT_DIM, HIDDEN_DIM, LATENT_DIM)

    x_hat, mean, logvar = jax.jit(vae_forward)(x, eps, params)
    jax.block_until_ready((x_hat, mean, logvar))

    assert x_hat.shape == (BATCH, INPUT_DIM) and x_hat.dtype == jnp.bfloat16
    assert mean.shape == (BATCH, 2) and logvar.shape == (BATCH, 2)
    assert bool(jnp.all(jnp.isfinite(x_hat.astype(jnp.float32))))
    assert bool(jnp.all((x_hat >= 0.0) & (x_hat <= 1.0)))
    assert bool(jnp.all(jnp.isfinite(mean))) and bool(jnp.all(jnp.isfinite(logvar)))

    print("KERNEL_OK")
</pallas_src>

<mosaic_0001>
module attributes {stable_mosaic.version = 11 : i64} {
  func.func @vae_kernel(%arg0: i32, %arg1: memref<256x784xbf16, #tpu.memory_space<vmem>>, %arg2: memref<256x2xf32, #tpu.memory_space<vmem>>, %arg3: memref<784x400xbf16, #tpu.memory_space<vmem>>, %arg4: memref<1x400xf32, #tpu.memory_space<vmem>>, %arg5: memref<400x200xbf16, #tpu.memory_space<vmem>>, %arg6: memref<1x200xf32, #tpu.memory_space<vmem>>, %arg7: memref<200x4xbf16, #tpu.memory_space<vmem>>, %arg8: memref<1x4xf32, #tpu.memory_space<vmem>>, %arg9: memref<2x200xbf16, #tpu.memory_space<vmem>>, %arg10: memref<1x200xf32, #tpu.memory_space<vmem>>, %arg11: memref<200x400xbf16, #tpu.memory_space<vmem>>, %arg12: memref<1x400xf32, #tpu.memory_space<vmem>>, %arg13: memref<400x784xbf16, #tpu.memory_space<vmem>>, %arg14: memref<1x784xf32, #tpu.memory_space<vmem>>, %arg15: memref<256x784xbf16, #tpu.memory_space<vmem>>, %arg16: memref<256x4xf32, #tpu.memory_space<vmem>>) attributes {dimension_semantics = [#tpu.dimension_semantics<parallel>], iteration_bounds = array<i64: 4>, scalar_prefetch = 0 : i64, scratch_operands = 0 : i64, tpu.core_type = #tpu.core_type<tc>, window_params = [{transform_indices = @transform_0, window_bounds = array<i64: 256, 784>}, {transform_indices = @transform_1, window_bounds = array<i64: 256, 2>}, {pipeline_mode = #tpu.pipeline_mode<synchronous>, transform_indices = @transform_2, window_bounds = array<i64: 784, 400>}, {pipeline_mode = #tpu.pipeline_mode<synchronous>, transform_indices = @transform_3, window_bounds = array<i64: 1, 400>}, {pipeline_mode = #tpu.pipeline_mode<synchronous>, transform_indices = @transform_4, window_bounds = array<i64: 400, 200>}, {pipeline_mode = #tpu.pipeline_mode<synchronous>, transform_indices = @transform_5, window_bounds = array<i64: 1, 200>}, {pipeline_mode = #tpu.pipeline_mode<synchronous>, transform_indices = @transform_6, window_bounds = array<i64: 200, 4>}, {pipeline_mode = #tpu.pipeline_mode<synchronous>, transform_indices = @transform_7, window_bounds = array<i64: 1, 4>}, {pipeline_mode = #tpu.pipeline_mode<synchronous>, transform_indices = @transform_8, window_bounds = array<i64: 2, 200>}, {pipeline_mode = #tpu.pipeline_mode<synchronous>, transform_indices = @transform_9, window_bounds = array<i64: 1, 200>}, {pipeline_mode = #tpu.pipeline_mode<synchronous>, transform_indices = @transform_10, window_bounds = array<i64: 200, 400>}, {pipeline_mode = #tpu.pipeline_mode<synchronous>, transform_indices = @transform_11, window_bounds = array<i64: 1, 400>}, {pipeline_mode = #tpu.pipeline_mode<synchronous>, transform_indices = @transform_12, window_bounds = array<i64: 400, 784>}, {pipeline_mode = #tpu.pipeline_mode<synchronous>, transform_indices = @transform_13, window_bounds = array<i64: 1, 784>}, {transform_indices = @transform_14, window_bounds = array<i64: 256, 784>}, {transform_indices = @transform_15, window_bounds = array<i64: 256, 4>}]} {
    %c0 = arith.constant 0 : index
    %c0_0 = arith.constant 0 : index
    %0 = vector.load %arg1[%c0, %c0_0] : memref<256x784xbf16, #tpu.memory_space<vmem>>, vector<256x784xbf16>
    %c0_1 = arith.constant 0 : index
    %c0_2 = arith.constant 0 : index
    %1 = vector.load %arg3[%c0_1, %c0_2] : memref<784x400xbf16, #tpu.memory_space<vmem>>, vector<784x400xbf16>
    %cst = arith.constant dense<0.000000e+00> : vector<256x400xf32>
    %2 = tpu.matmul %0, %1, %cst {dimension_numbers = #tpu.dot_dimension_numbers<[1], [0], [0], [1], [0, 0, 1, 1], [], []>} : vector<256x784xbf16>, vector<784x400xbf16>, vector<256x400xf32> -> vector<256x400xf32>
    %3 = arith.truncf %2 : vector<256x400xf32> to vector<256x400xbf16>
    %c0_3 = arith.constant 0 : index
    %c0_4 = arith.constant 0 : index
    %4 = vector.load %arg4[%c0_3, %c0_4] : memref<1x400xf32, #tpu.memory_space<vmem>>, vector<1x400xf32>
    %5 = arith.truncf %4 : vector<1x400xf32> to vector<1x400xbf16>
    %6 = vector.broadcast %5 : vector<1x400xbf16> to vector<256x400xbf16>
    %7 = arith.addf %3, %6 : vector<256x400xbf16>
    %cst_5 = arith.constant 0.000000e+00 : bf16
    %8 = vector.broadcast %cst_5 : bf16 to vector<256x400xbf16>
    %9 = arith.cmpf oge, %7, %8 : vector<256x400xbf16>
    %cst_6 = arith.constant 2.001950e-01 : bf16
    %10 = vector.broadcast %cst_6 : bf16 to vector<256x400xbf16>
    %11 = arith.mulf %10, %7 : vector<256x400xbf16>
    %12 = arith.select %9, %7, %11 : vector<256x400xi1>, vector<256x400xbf16>
    %c0_7 = arith.constant 0 : index
    %c0_8 = arith.constant 0 : index
    %13 = vector.load %arg5[%c0_7, %c0_8] : memref<400x200xbf16, #tpu.memory_space<vmem>>, vector<400x200xbf16>
    %cst_9 = arith.constant dense<0.000000e+00> : vector<256x200xf32>
    %14 = tpu.matmul %12, %13, %cst_9 {dimension_numbers = #tpu.dot_dimension_numbers<[1], [0], [0], [1], [0, 0, 1, 1], [], []>} : vector<256x400xbf16>, vector<400x200xbf16>, vector<256x200xf32> -> vector<256x200xf32>
    %15 = arith.truncf %14 : vector<256x200xf32> to vector<256x200xbf16>
    %c0_10 = arith.constant 0 : index
    %c0_11 = arith.constant 0 : index
    %16 = vector.load %arg6[%c0_10, %c0_11] : memref<1x200xf32, #tpu.memory_space<vmem>>, vector<1x200xf32>
    %17 = arith.truncf %16 : vector<1x200xf32> to vector<1x200xbf16>
    %18 = vector.broadcast %17 : vector<1x200xbf16> to vector<256x200xbf16>
    %19 = arith.addf %15, %18 : vector<256x200xbf16>
    %cst_12 = arith.constant 0.000000e+00 : bf16
    %20 = vector.broadcast %cst_12 : bf16 to vector<256x200xbf16>
    %21 = arith.cmpf oge, %19, %20 : vector<256x200xbf16>
    %cst_13 = arith.constant 2.001950e-01 : bf16
    %22 = vector.broadcast %cst_13 : bf16 to vector<256x200xbf16>
    %23 = arith.mulf %22, %19 : vector<256x200xbf16>
    %24 = arith.select %21, %19, %23 : vector<256x200xi1>, vector<256x200xbf16>
    %c0_14 = arith.constant 0 : index
    %c0_15 = arith.constant 0 : index
    %25 = vector.load %arg7[%c0_14, %c0_15] : memref<200x4xbf16, #tpu.memory_space<vmem>>, vector<200x4xbf16>
    %cst_16 = arith.constant dense<0.000000e+00> : vector<256x4xf32>
    %26 = tpu.matmul %24, %25, %cst_16 {dimension_numbers = #tpu.dot_dimension_numbers<[1], [0], [0], [1], [0, 0, 1, 1], [], []>} : vector<256x200xbf16>, vector<200x4xbf16>, vector<256x4xf32> -> vector<256x4xf32>
    %c0_17 = arith.constant 0 : index
    %c0_18 = arith.constant 0 : index
    %27 = vector.load %arg8[%c0_17, %c0_18] : memref<1x4xf32, #tpu.memory_space<vmem>>, vector<1x4xf32>
    %28 = vector.broadcast %27 : vector<1x4xf32> to vector<256x4xf32>
    %29 = arith.addf %26, %28 : vector<256x4xf32>
    %30 = vector.extract_strided_slice %29 {offsets = [0, 0], sizes = [256, 2], strides = [1, 1]} : vector<256x4xf32> to vector<256x2xf32>
    %31 = vector.extract_strided_slice %29 {offsets = [0, 2], sizes = [256, 2], strides = [1, 1]} : vector<256x4xf32> to vector<256x2xf32>
    %c0_19 = arith.constant 0 : index
    %c0_20 = arith.constant 0 : index
    %32 = vector.load %arg2[%c0_19, %c0_20] : memref<256x2xf32, #tpu.memory_space<vmem>>, vector<256x2xf32>
    %33 = arith.mulf %31, %32 : vector<256x2xf32>
    %34 = arith.addf %30, %33 : vector<256x2xf32>
    %c0_21 = arith.constant 0 : index
    %c0_22 = arith.constant 0 : index
    %35 = vector.load %arg9[%c0_21, %c0_22] : memref<2x200xbf16, #tpu.memory_space<vmem>>, vector<2x200xbf16>
    %36 = arith.extf %35 : vector<2x200xbf16> to vector<2x200xf32>
    %37 = vector.extract_strided_slice %34 {offsets = [0, 0], sizes = [256, 1], strides = [1, 1]} : vector<256x2xf32> to vector<256x1xf32>
    %38 = vector.extract_strided_slice %36 {offsets = [0, 0], sizes = [1, 200], strides = [1, 1]} : vector<2x200xf32> to vector<1x200xf32>
    %39 = vector.broadcast %37 : vector<256x1xf32> to vector<256x200xf32>
    %40 = vector.broadcast %38 : vector<1x200xf32> to vector<256x200xf32>
    %41 = arith.mulf %39, %40 : vector<256x200xf32>
    %42 = vector.extract_strided_slice %34 {offsets = [0, 1], sizes = [256, 1], strides = [1, 1]} : vector<256x2xf32> to vector<256x1xf32>
    %43 = vector.extract_strided_slice %36 {offsets = [1, 0], sizes = [1, 200], strides = [1, 1]} : vector<2x200xf32> to vector<1x200xf32>
    %44 = vector.broadcast %42 : vector<256x1xf32> to vector<256x200xf32>
    %45 = vector.broadcast %43 : vector<1x200xf32> to vector<256x200xf32>
    %46 = arith.mulf %44, %45 : vector<256x200xf32>
    %47 = arith.addf %41, %46 : vector<256x200xf32>
    %c0_23 = arith.constant 0 : index
    %c0_24 = arith.constant 0 : index
    %48 = vector.load %arg10[%c0_23, %c0_24] : memref<1x200xf32, #tpu.memory_space<vmem>>, vector<1x200xf32>
    %49 = vector.broadcast %48 : vector<1x200xf32> to vector<256x200xf32>
    %50 = arith.addf %47, %49 : vector<256x200xf32>
    %cst_25 = arith.constant 0.000000e+00 : f32
    %51 = vector.broadcast %cst_25 : f32 to vector<256x200xf32>
    %52 = arith.cmpf oge, %50, %51 : vector<256x200xf32>
    %cst_26 = arith.constant 2.000000e-01 : f32
    %53 = vector.broadcast %cst_26 : f32 to vector<256x200xf32>
    %54 = arith.mulf %53, %50 : vector<256x200xf32>
    %55 = arith.select %52, %50, %54 : vector<256x200xi1>, vector<256x200xf32>
    %56 = arith.truncf %55 : vector<256x200xf32> to vector<256x200xbf16>
    %c0_27 = arith.constant 0 : index
    %c0_28 = arith.constant 0 : index
    %57 = vector.load %arg11[%c0_27, %c0_28] : memref<200x400xbf16, #tpu.memory_space<vmem>>, vector<200x400xbf16>
    %cst_29 = arith.constant dense<0.000000e+00> : vector<256x400xf32>
    %58 = tpu.matmul %56, %57, %cst_29 {dimension_numbers = #tpu.dot_dimension_numbers<[1], [0], [0], [1], [0, 0, 1, 1], [], []>} : vector<256x200xbf16>, vector<200x400xbf16>, vector<256x400xf32> -> vector<256x400xf32>
    %59 = arith.truncf %58 : vector<256x400xf32> to vector<256x400xbf16>
    %c0_30 = arith.constant 0 : index
    %c0_31 = arith.constant 0 : index
    %60 = vector.load %arg12[%c0_30, %c0_31] : memref<1x400xf32, #tpu.memory_space<vmem>>, vector<1x400xf32>
    %61 = arith.truncf %60 : vector<1x400xf32> to vector<1x400xbf16>
    %62 = vector.broadcast %61 : vector<1x400xbf16> to vector<256x400xbf16>
    %63 = arith.addf %59, %62 : vector<256x400xbf16>
    %cst_32 = arith.constant 0.000000e+00 : bf16
    %64 = vector.broadcast %cst_32 : bf16 to vector<256x400xbf16>
    %65 = arith.cmpf oge, %63, %64 : vector<256x400xbf16>
    %cst_33 = arith.constant 2.001950e-01 : bf16
    %66 = vector.broadcast %cst_33 : bf16 to vector<256x400xbf16>
    %67 = arith.mulf %66, %63 : vector<256x400xbf16>
    %68 = arith.select %65, %63, %67 : vector<256x400xi1>, vector<256x400xbf16>
    %c0_34 = arith.constant 0 : index
    %c0_35 = arith.constant 0 : index
    %69 = vector.load %arg13[%c0_34, %c0_35] : memref<400x784xbf16, #tpu.memory_space<vmem>>, vector<400x784xbf16>
    %cst_36 = arith.constant dense<0.000000e+00> : vector<256x784xf32>
    %70 = tpu.matmul %68, %69, %cst_36 {dimension_numbers = #tpu.dot_dimension_numbers<[1], [0], [0], [1], [0, 0, 1, 1], [], []>} : vector<256x400xbf16>, vector<400x784xbf16>, vector<256x784xf32> -> vector<256x784xf32>
    %71 = arith.truncf %70 : vector<256x784xf32> to vector<256x784xbf16>
    %c0_37 = arith.constant 0 : index
    %c0_38 = arith.constant 0 : index
    %72 = vector.load %arg14[%c0_37, %c0_38] : memref<1x784xf32, #tpu.memory_space<vmem>>, vector<1x784xf32>
    %73 = arith.truncf %72 : vector<1x784xf32> to vector<1x784xbf16>
    %74 = vector.broadcast %73 : vector<1x784xbf16> to vector<256x784xbf16>
    %75 = arith.addf %71, %74 : vector<256x784xbf16>
    %76 = arith.negf %75 : vector<256x784xbf16>
    %77 = math.exp %76 : vector<256x784xbf16>
    %cst_39 = arith.constant 1.000000e+00 : bf16
    %78 = vector.broadcast %cst_39 : bf16 to vector<256x784xbf16>
    %79 = arith.addf %78, %77 : vector<256x784xbf16>
    %80 = arith.divf %78, %79 : vector<256x784xbf16>
    %c0_40 = arith.constant 0 : index
    %c0_41 = arith.constant 0 : index
    %81 = vector.load %arg15[%c0_40, %c0_41] : memref<256x784xbf16, #tpu.memory_space<vmem>>, vector<256x784xbf16>
    tpu.vector_store %arg15[%c0_40, %c0_41], %80 {strides = array<i32>} : memref<256x784xbf16, #tpu.memory_space<vmem>>, vector<256x784xbf16>,
    %c0_42 = arith.constant 0 : index
    %c0_43 = arith.constant 0 : index
    %82 = vector.load %arg16[%c0_42, %c0_43] : memref<256x4xf32, #tpu.memory_space<vmem>>, vector<256x4xf32>
    tpu.vector_store %arg16[%c0_42, %c0_43], %29 {strides = array<i32>} : memref<256x4xf32, #tpu.memory_space<vmem>>, vector<256x4xf32>,
    return
  }
  func.func @transform_0(%arg0: i32) -> (i32, i32) {
    %c0_i32 = arith.constant 0 : i32
    %c0_i32_0 = arith.constant 0 : i32
    return %arg0, %c0_i32 : i32, i32
  }
  func.func @transform_1(%arg0: i32) -> (i32, i32) {
    %c0_i32 = arith.constant 0 : i32
    %c0_i32_0 = arith.constant 0 : i32
    return %arg0, %c0_i32 : i32, i32
  }
  func.func @transform_2(%arg0: i32) -> (i32, i32) {
    %c0_i32 = arith.constant 0 : i32
    %c0_i32_0 = arith.constant 0 : i32
    %c0_i32_1 = arith.constant 0 : i32
    return %c0_i32, %c0_i32_0 : i32, i32
  }
  func.func @transform_3(%arg0: i32) -> (i32, i32) {
    %c0_i32 = arith.constant 0 : i32
    %c0_i32_0 = arith.constant 0 : i32
    %c0_i32_1 = arith.constant 0 : i32
    return %c0_i32, %c0_i32_0 : i32, i32
  }
  func.func @transform_4(%arg0: i32) -> (i32, i32) {
    %c0_i32 = arith.constant 0 : i32
    %c0_i32_0 = arith.constant 0 : i32
    %c0_i32_1 = arith.constant 0 : i32
    return %c0_i32, %c0_i32_0 : i32, i32
  }
  func.func @transform_5(%arg0: i32) -> (i32, i32) {
    %c0_i32 = arith.constant 0 : i32
    %c0_i32_0 = arith.constant 0 : i32
    %c0_i32_1 = arith.constant 0 : i32
    return %c0_i32, %c0_i32_0 : i32, i32
  }
  func.func @transform_6(%arg0: i32) -> (i32, i32) {
    %c0_i32 = arith.constant 0 : i32
    %c0_i32_0 = arith.constant 0 : i32
    %c0_i32_1 = arith.constant 0 : i32
    return %c0_i32, %c0_i32_0 : i32, i32
  }
  func.func @transform_7(%arg0: i32) -> (i32, i32) {
    %c0_i32 = arith.constant 0 : i32
    %c0_i32_0 = arith.constant 0 : i32
    %c0_i32_1 = arith.constant 0 : i32
    return %c0_i32, %c0_i32_0 : i32, i32
  }
  func.func @transform_8(%arg0: i32) -> (i32, i32) {
    %c0_i32 = arith.constant 0 : i32
    %c0_i32_0 = arith.constant 0 : i32
    %c0_i32_1 = arith.constant 0 : i32
    return %c0_i32, %c0_i32_0 : i32, i32
  }
  func.func @transform_9(%arg0: i32) -> (i32, i32) {
    %c0_i32 = arith.constant 0 : i32
    %c0_i32_0 = arith.constant 0 : i32
    %c0_i32_1 = arith.constant 0 : i32
    return %c0_i32, %c0_i32_0 : i32, i32
  }
  func.func @transform_10(%arg0: i32) -> (i32, i32) {
    %c0_i32 = arith.constant 0 : i32
    %c0_i32_0 = arith.constant 0 : i32
    %c0_i32_1 = arith.constant 0 : i32
    return %c0_i32, %c0_i32_0 : i32, i32
  }
  func.func @transform_11(%arg0: i32) -> (i32, i32) {
    %c0_i32 = arith.constant 0 : i32
    %c0_i32_0 = arith.constant 0 : i32
    %c0_i32_1 = arith.constant 0 : i32
    return %c0_i32, %c0_i32_0 : i32, i32
  }
  func.func @transform_12(%arg0: i32) -> (i32, i32) {
    %c0_i32 = arith.constant 0 : i32
    %c0_i32_0 = arith.constant 0 : i32
    %c0_i32_1 = arith.constant 0 : i32
    return %c0_i32, %c0_i32_0 : i32, i32
  }
  func.func @transform_13(%arg0: i32) -> (i32, i32) {
    %c0_i32 = arith.constant 0 : i32
    %c0_i32_0 = arith.constant 0 : i32
    %c0_i32_1 = arith.constant 0 : i32
    return %c0_i32, %c0_i32_0 : i32, i32
  }
  func.func @transform_14(%arg0: i32) -> (i32, i32) {
    %c0_i32 = arith.constant 0 : i32
    %c0_i32_0 = arith.constant 0 : i32
    return %arg0, %c0_i32 : i32, i32
  }
  func.func @transform_15(%arg0: i32) -> (i32, i32) {
    %c0_i32 = arith.constant 0 : i32
    %c0_i32_0 = arith.constant 0 : i32
    return %arg0, %c0_i32 : i32, i32
  }
}

</mosaic_0001>

<llo_original>
// kernel: vae_forward.1
$region0: #{vae_forward.1}
  #allocation0 [shape = 'u32[]', space=smem, size = 0x4, offset = 0x4, fixed_abs, tag = 'smem constant byte address 0x4 - core index']
  #allocation1 [shape = 'u32[144,128]{1,0:T(1,128)}', space=vmem, size = 0x12000, scoped, tag = 'internal scratch']
  %s0 = inlined_call_operand.vmem [shape: bf16[1024,784], index: 0, kind: input, shape index: {}]
  %s1 = inlined_call_operand.vmem [shape: f32[1024,2], index: 1, kind: input, shape index: {}]
  %s2 = inlined_call_operand.vmem [shape: bf16[784,400], index: 2, kind: input, shape index: {}]
  %s3 = inlined_call_operand.vmem [shape: f32[1,400], index: 3, kind: input, shape index: {}]
  %s4 = inlined_call_operand.vmem [shape: bf16[400,200], index: 4, kind: input, shape index: {}]
  %s5 = inlined_call_operand.vmem [shape: f32[1,200], index: 5, kind: input, shape index: {}]
  %s6 = inlined_call_operand.vmem [shape: bf16[200,4], index: 6, kind: input, shape index: {}]
  %s7 = inlined_call_operand.vmem [shape: f32[1,4], index: 7, kind: input, shape index: {}]
  %s8 = inlined_call_operand.vmem [shape: bf16[2,200], index: 8, kind: input, shape index: {}]
  %s9 = inlined_call_operand.vmem [shape: f32[1,200], index: 9, kind: input, shape index: {}]
  %s10 = inlined_call_operand.vmem [shape: bf16[200,400], index: 10, kind: input, shape index: {}]
  %s11 = inlined_call_operand.vmem [shape: f32[1,400], index: 11, kind: input, shape index: {}]
  %s12 = inlined_call_operand.vmem [shape: bf16[400,784], index: 12, kind: input, shape index: {}]
  %s13 = inlined_call_operand.vmem [shape: f32[1,784], index: 13, kind: input, shape index: {}]
  %s14 = inlined_call_operand.vmem [shape: bf16[1024,784], index: 14, kind: output, shape index: {0}]
  %s15 = inlined_call_operand.vmem [shape: f32[1024,4], index: 15, kind: output, shape index: {1}]
  %16 = xla_tuple %s14, %s15
  %s17 = sld [smem:[#allocation0]]
  $region97: #{vae_forward.1} parent=0
    _
  %s19 = ssub.s32 1, %s17
  %s20 = scalar_select 0, %s19, %s17
  loop: start=0, step=1, limit=6
  $region2: #{vae_forward.1} parent=0 // loop_pre_header
    _
  $region3: #{vae_forward.1} parent=0 // loop_header
    %s22 = sphi 0, %s26
    %p23 = scmp.ge.s32.totalorder %s22, 6
    %s32 = sphi 0, %s34
    %s35 = sphi 0, %s32
    %s36 = sphi 0, %s35
    %s52 = sphi 0, %s36
    %s58 = sphi 0, %s60
    %s61 = sphi 0, %s58
    %s62 = sphi 0, %s61
    %s78 = sphi 0, %s62
    %s82 = sphi 0, %s82
    %s84 = sphi 0, %s82
    %s85 = sphi 0, %s84
    %s99 = sphi 0, %s85
    %s103 = sphi 0, %s103
    %s105 = sphi 0, %s103
    %s106 = sphi 0, %s105
    %s120 = sphi 0, %s106
    %s124 = sphi 0, %s124
    %s126 = sphi 0, %s124
    %s127 = sphi 0, %s126
    %s141 = sphi 0, %s127
    %s145 = sphi 0, %s145
    %s147 = sphi 0, %s145
    %s148 = sphi 0, %s147
    %s162 = sphi 0, %s148
    %s166 = sphi 0, %s166
    %s168 = sphi 0, %s166
    %s169 = sphi 0, %s168
    %s183 = sphi 0, %s169
    %s187 = sphi 0, %s187
    %s189 = sphi 0, %s187
    %s190 = sphi 0, %s189
    %s204 = sphi 0, %s190
    %s208 = sphi 0, %s208
    %s210 = sphi 0, %s208
    %s211 = sphi 0, %s210
    %s225 = sphi 0, %s211
    %s229 = sphi 0, %s229
    %s231 = sphi 0, %s229
    %s232 = sphi 0, %s231
    %s246 = sphi 0, %s232
    %s250 = sphi 0, %s250
    %s252 = sphi 0, %s250
    %s253 = sphi 0, %s252
    %s267 = sphi 0, %s253
    %s271 = sphi 0, %s271
    %s273 = sphi 0, %s271
    %s274 = sphi 0, %s273
    %s288 = sphi 0, %s274
    %s292 = sphi 0, %s292
    %s294 = sphi 0, %s292
    %s295 = sphi 0, %s294
    %s309 = sphi 0, %s295
    %s313 = sphi 0, %s313
    %s315 = sphi 0, %s313
    %s316 = sphi 0, %s315
    %s330 = sphi 0, %s316
    %s336 = sphi 0, %s338
    %s339 = sphi 0, %s336
    %s340 = sphi 0, %s339
    %s356 = sphi 0, %s340
    %s362 = sphi 0, %s364
    %s365 = sphi 0, %s362
    %s366 = sphi 0, %s365
    %s382 = sphi 0, %s366
  $region4: #{vae_forward.1} parent=0 // loop_header_branch
    %25 = sbr.rel (%p23) target = $region8
  $region5: #{vae_forward.1} parent=0 // loop_body
    %s27 = ssub.s32 %s22, 1
    %s28 = ssub.s32 %s22, 2
    %s29 = sadd.s32 %s22, 1
    %s30 = ssub.s32 %s22, %s29
    %p31 = scmp.eq.s32.totalorder %s30, 0
    %s33 = sadd.s32 %s32, 1
    %s34 = scalar_select %p31, %s32, %s33
    %p37 = pneg %p31
    %p38 = scmp.eq.s32.totalorder %s22, 3
    %p39 = por %p37, %p38
    %p40 = scmp.ne.s32.totalorder %s32, %s35
    %p41 = scmp.eq.s32.totalorder %s22, 0
    %p42 = por %p40, %p41
    %p43 = scmp.ne.s32.totalorder %s32, %s35
    %p44 = scmp.eq.s32.totalorder %s27, 3
    %p45 = por %p43, %p44
    %p46 = scmp.ne.s32.totalorder %s35, %s36
    %p47 = scmp.eq.s32.totalorder %s27, 0
    %p48 = por %p46, %p47
    %p49 = scmp.ne.s32.totalorder %s35, %s36
    %p50 = scmp.eq.s32.totalorder %s28, 3
    %p51 = por %p49, %p50
    %p53 = scmp.ne.s32.totalorder %s36, %s52
    %p54 = scmp.eq.s32.totalorder %s28, 0
    %p55 = por %p53, %p54
    %s56 = ssub.s32 %s22, %s29
    %p57 = scmp.eq.s32.totalorder %s56, 0
    %s59 = sadd.s32 %s58, 1
    %s60 = scalar_select %p57, %s58, %s59
    %p63 = pneg %p57
    %p64 = scmp.eq.s32.totalorder %s22, 3
    %p65 = por %p63, %p64
    %p66 = scmp.ne.s32.totalorder %s58, %s61
    %p67 = scmp.eq.s32.totalorder %s22, 0
    %p68 = por %p66, %p67
    %p69 = scmp.ne.s32.totalorder %s58, %s61
    %p70 = scmp.eq.s32.totalorder %s27, 3
    %p71 = por %p69, %p70
    %p72 = scmp.ne.s32.totalorder %s61, %s62
    %p73 = scmp.eq.s32.totalorder %s27, 0
    %p74 = por %p72, %p73
    %p75 = scmp.ne.s32.totalorder %s61, %s62
    %p76 = scmp.eq.s32.totalorder %s28, 3
    %p77 = por %p75, %p76
    %p79 = scmp.ne.s32.totalorder %s62, %s78
    %p80 = scmp.eq.s32.totalorder %s28, 0
    %p81 = por %p79, %p80
    %s83 = sadd.s32 %s82, 1
    %p86 = scmp.eq.s32.totalorder %s22, 3
    %p87 = scmp.ne.s32.totalorder %s82, %s84
    %p88 = scmp.eq.s32.totalorder %s22, 0
    %p89 = por %p87, %p88
    %p90 = scmp.ne.s32.totalorder %s82, %s84
    %p91 = scmp.eq.s32.totalorder %s27, 3
    %p92 = por %p90, %p91
    %p93 = scmp.ne.s32.totalorder %s84, %s85
    %p94 = scmp.eq.s32.totalorder %s27, 0
    %p95 = por %p93, %p94
    %p96 = scmp.ne.s32.totalorder %s84, %s85
    %p97 = scmp.eq.s32.totalorder %s28, 3
    %p98 = por %p96, %p97
    %p100 = scmp.ne.s32.totalorder %s85, %s99
    %p101 = scmp.eq.s32.totalorder %s28, 0
    %p102 = por %p100, %p101
    %s104 = sadd.s32 %s103, 1
    %p107 = scmp.eq.s32.totalorder %s22, 3
    %p108 = scmp.ne.s32.totalorder %s103, %s105
    %p109 = scmp.eq.s32.totalorder %s22, 0
    %p110 = por %p108, %p109
    %p111 = scmp.ne.s32.totalorder %s103, %s105
    %p112 = scmp.eq.s32.totalorder %s27, 3
    %p113 = por %p111, %p112
    %p114 = scmp.ne.s32.totalorder %s105, %s106
    %p115 = scmp.eq.s32.totalorder %s27, 0
    %p116 = por %p114, %p115
    %p117 = scmp.ne.s32.totalorder %s105, %s106
    %p118 = scmp.eq.s32.totalorder %s28, 3
    %p119 = por %p117, %p118
    %p121 = scmp.ne.s32.totalorder %s106, %s120
    %p122 = scmp.eq.s32.totalorder %s28, 0
    %p123 = por %p121, %p122
    %s125 = sadd.s32 %s124, 1
    %p128 = scmp.eq.s32.totalorder %s22, 3
    %p129 = scmp.ne.s32.totalorder %s124, %s126
    %p130 = scmp.eq.s32.totalorder %s22, 0
    %p131 = por %p129, %p130
    %p132 = scmp.ne.s32.totalorder %s124, %s126
    %p133 = scmp.eq.s32.totalorder %s27, 3
    %p134 = por %p132, %p133
    %p135 = scmp.ne.s32.totalorder %s126, %s127
    %p136 = scmp.eq.s32.totalorder %s27, 0
    %p137 = por %p135, %p136
    %p138 = scmp.ne.s32.totalorder %s126, %s127
    %p139 = scmp.eq.s32.totalorder %s28, 3
    %p140 = por %p138, %p139
    %p142 = scmp.ne.s32.totalorder %s127, %s141
    %p143 = scmp.eq.s32.totalorder %s28, 0
    %p144 = por %p142, %p143
    %s146 = sadd.s32 %s145, 1
    %p149 = scmp.eq.s32.totalorder %s22, 3
    %p150 = scmp.ne.s32.totalorder %s145, %s147
    %p151 = scmp.eq.s32.totalorder %s22, 0
    %p152 = por %p150, %p151
    %p153 = scmp.ne.s32.totalorder %s145, %s147
    %p154 = scmp.eq.s32.totalorder %s27, 3
    %p155 = por %p153, %p154
    %p156 = scmp.ne.s32.totalorder %s147, %s148
    %p157 = scmp.eq.s32.totalorder %s27, 0
    %p158 = por %p156, %p157
    %p159 = scmp.ne.s32.totalorder %s147, %s148
    %p160 = scmp.eq.s32.totalorder %s28, 3
    %p161 = por %p159, %p160
    %p163 = scmp.ne.s32.totalorder %s148, %s162
    %p164 = scmp.eq.s32.totalorder %s28, 0
    %p165 = por %p163, %p164
    %s167 = sadd.s32 %s166, 1
    %p170 = scmp.eq.s32.totalorder %s22, 3
    %p171 = scmp.ne.s32.totalorder %s166, %s168
    %p172 = scmp.eq.s32.totalorder %s22, 0
    %p173 = por %p171, %p172
    %p174 = scmp.ne.s32.totalorder %s166, %s168
    %p175 = scmp.eq.s32.totalorder %s27, 3
    %p176 = por %p174, %p175
    %p177 = scmp.ne.s32.totalorder %s168, %s169
    %p178 = scmp.eq.s32.totalorder %s27, 0
    %p179 = por %p177, %p178
    %p180 = scmp.ne.s32.totalorder %s168, %s169
    %p181 = scmp.eq.s32.totalorder %s28, 3
    %p182 = por %p180, %p181
    %p184 = scmp.ne.s32.totalorder %s169, %s183
    %p185 = scmp.eq.s32.totalorder %s28, 0
    %p186 = por %p184, %p185
    %s188 = sadd.s32 %s187, 1
    %p191 = scmp.eq.s32.totalorder %s22, 3
    %p192 = scmp.ne.s32.totalorder %s187, %s189
    %p193 = scmp.eq.s32.totalorder %s22, 0
    %p194 = por %p192, %p193
    %p195 = scmp.ne.s32.totalorder %s187, %s189
    %p196 = scmp.eq.s32.totalorder %s27, 3
    %p197 = por %p195, %p196
    %p198 = scmp.ne.s32.totalorder %s189, %s190
    %p199 = scmp.eq.s32.totalorder %s27, 0
    %p200 = por %p198, %p199
    %p201 = scmp.ne.s32.totalorder %s189, %s190
    %p202 = scmp.eq.s32.totalorder %s28, 3
    %p203 = por %p201, %p202
    %p205 = scmp.ne.s32.totalorder %s190, %s204
    %p206 = scmp.eq.s32.totalorder %s28, 0
    %p207 = por %p205, %p206
    %s209 = sadd.s32 %s208, 1
    %p212 = scmp.eq.s32.totalorder %s22, 3
    %p213 = scmp.ne.s32.totalorder %s208, %s210
    %p214 = scmp.eq.s32.totalorder %s22, 0
    %p215 = por %p213, %p214
    %p216 = scmp.ne.s32.totalorder %s208, %s210
    %p217 = scmp.eq.s32.totalorder %s27, 3
    %p218 = por %p216, %p217
    %p219 = scmp.ne.s32.totalorder %s210, %s211
    %p220 = scmp.eq.s32.totalorder %s27, 0
    %p221 = por %p219, %p220
    %p222 = scmp.ne.s32.totalorder %s210, %s211
    %p223 = scmp.eq.s32.totalorder %s28, 3
    %p224 = por %p222, %p223
    %p226 = scmp.ne.s32.totalorder %s211, %s225
    %p227 = scmp.eq.s32.totalorder %s28, 0
    %p228 = por %p226, %p227
    %s230 = sadd.s32 %s229, 1
    %p233 = scmp.eq.s32.totalorder %s22, 3
    %p234 = scmp.ne.s32.totalorder %s229, %s231
    %p235 = scmp.eq.s32.totalorder %s22, 0
    %p236 = por %p234, %p235
    %p237 = scmp.ne.s32.totalorder %s229, %s231
    %p238 = scmp.eq.s32.totalorder %s27, 3
    %p239 = por %p237, %p238
    %p240 = scmp.ne.s32.totalorder %s231, %s232
    %p241 = scmp.eq.s32.totalorder %s27, 0
    %p242 = por %p240, %p241
    %p243 = scmp.ne.s32.totalorder %s231, %s232
    %p244 = scmp.eq.s32.totalorder %s28, 3
    %p245 = por %p243, %p244
    %p247 = scmp.ne.s32.totalorder %s232, %s246
    %p248 = scmp.eq.s32.totalorder %s28, 0
    %p249 = por %p247, %p248
    %s251 = sadd.s32 %s250, 1
    %p254 = scmp.eq.s32.totalorder %s22, 3
    %p255 = scmp.ne.s32.totalorder %s250, %s252
    %p256 = scmp.eq.s32.totalorder %s22, 0
    %p257 = por %p255, %p256
    %p258 = scmp.ne.s32.totalorder %s250, %s252
    %p259 = scmp.eq.s32.totalorder %s27, 3
    %p260 = por %p258, %p259
    %p261 = scmp.ne.s32.totalorder %s252, %s253
    %p262 = scmp.eq.s32.totalorder %s27, 0
    %p263 = por %p261, %p262
    %p264 = scmp.ne.s32.totalorder %s252, %s253
    %p265 = scmp.eq.s32.totalorder %s28, 3
    %p266 = por %p264, %p265
    %p268 = scmp.ne.s32.totalorder %s253, %s267
    %p269 = scmp.eq.s32.totalorder %s28, 0
    %p270 = por %p268, %p269
    %s272 = sadd.s32 %s271, 1
    %p275 = scmp.eq.s32.totalorder %s22, 3
    %p276 = scmp.ne.s32.totalorder %s271, %s273
    %p277 = scmp.eq.s32.totalorder %s22, 0
    %p278 = por %p276, %p277
    %p279 = scmp.ne.s32.totalorder %s271, %s273
    %p280 = scmp.eq.s32.totalorder %s27, 3
    %p281 = por %p279, %p280
    %p282 = scmp.ne.s32.totalorder %s273, %s274
    %p283 = scmp.eq.s32.totalorder %s27, 0
    %p284 = por %p282, %p283
    %p285 = scmp.ne.s32.totalorder %s273, %s274
    %p286 = scmp.eq.s32.totalorder %s28, 3
    %p287 = por %p285, %p286
    %p289 = scmp.ne.s32.totalorder %s274, %s288
    %p290 = scmp.eq.s32.totalorder %s28, 0
    %p291 = por %p289, %p290
    %s293 = sadd.s32 %s292, 1
    %p296 = scmp.eq.s32.totalorder %s22, 3
    %p297 = scmp.ne.s32.totalorder %s292, %s294
    %p298 = scmp.eq.s32.totalorder %s22, 0
    %p299 = por %p297, %p298
    %p300 = scmp.ne.s32.totalorder %s292, %s294
    %p301 = scmp.eq.s32.totalorder %s27, 3
    %p302 = por %p300, %p301
    %p303 = scmp.ne.s32.totalorder %s294, %s295
    %p304 = scmp.eq.s32.totalorder %s27, 0
    %p305 = por %p303, %p304
    %p306 = scmp.ne.s32.totalorder %s294, %s295
    %p307 = scmp.eq.s32.totalorder %s28, 3
    %p308 = por %p306, %p307
    %p310 = scmp.ne.s32.totalorder %s295, %s309
    %p311 = scmp.eq.s32.totalorder %s28, 0
    %p312 = por %p310, %p311
    %s314 = sadd.s32 %s313, 1
    %p317 = scmp.eq.s32.totalorder %s22, 3
    %p318 = scmp.ne.s32.totalorder %s313, %s315
    %p319 = scmp.eq.s32.totalorder %s22, 0
    %p320 = por %p318, %p319
    %p321 = scmp.ne.s32.totalorder %s313, %s315
    %p322 = scmp.eq.s32.totalorder %s27, 3
    %p323 = por %p321, %p322
    %p324 = scmp.ne.s32.totalorder %s315, %s316
    %p325 = scmp.eq.s32.totalorder %s27, 0
    %p326 = por %p324, %p325
    %p327 = scmp.ne.s32.totalorder %s315, %s316
    %p328 = scmp.eq.s32.totalorder %s28, 3
    %p329 = por %p327, %p328
    %p331 = scmp.ne.s32.totalorder %s316, %s330
    %p332 = scmp.eq.s32.totalorder %s28, 0
    %p333 = por %p331, %p332
    %s334 = ssub.s32 %s22, %s29
    %p335 = scmp.eq.s32.totalorder %s334, 0
    %s337 = sadd.s32 %s336, 1
    %s338 = scalar_select %p335, %s336, %s337
    %p341 = pneg %p335
    %p342 = scmp.eq.s32.totalorder %s22, 3
    %p343 = por %p341, %p342
    %p344 = scmp.ne.s32.totalorder %s336, %s339
    %p345 = scmp.eq.s32.totalorder %s22, 0
    %p346 = por %p344, %p345
    %p347 = scmp.ne.s32.totalorder %s336, %s339
    %p348 = scmp.eq.s32.totalorder %s27, 3
    %p349 = por %p347, %p348
    %p350 = scmp.ne.s32.totalorder %s339, %s340
    %p351 = scmp.eq.s32.totalorder %s27, 0
    %p352 = por %p350, %p351
    %p353 = scmp.ne.s32.totalorder %s339, %s340
    %p354 = scmp.eq.s32.totalorder %s28, 3
    %p355 = por %p353, %p354
    %p357 = scmp.ne.s32.totalorder %s340, %s356
    %p358 = scmp.eq.s32.totalorder %s28, 0
    %p359 = por %p357, %p358
    %s360 = ssub.s32 %s22, %s29
    %p361 = scmp.eq.s32.totalorder %s360, 0
    %s363 = sadd.s32 %s362, 1
    %s364 = scalar_select %p361, %s362, %s363
    %p367 = pneg %p361
    %p368 = scmp.eq.s32.totalorder %s22, 3
    %p369 = por %p367, %p368
    %p370 = scmp.ne.s32.totalorder %s362, %s365
    %p371 = scmp.eq.s32.totalorder %s22, 0
    %p372 = por %p370, %p371
    %p373 = scmp.ne.s32.totalorder %s362, %s365
    %p374 = scmp.eq.s32.totalorder %s27, 3
    %p375 = por %p373, %p374
    %p376 = scmp.ne.s32.totalorder %s365, %s366
    %p377 = scmp.eq.s32.totalorder %s27, 0
    %p378 = por %p376, %p377
    %p379 = scmp.ne.s32.totalorder %s365, %s366
    %p380 = scmp.eq.s32.totalorder %s28, 3
    %p381 = por %p379, %p380
    %p383 = scmp.ne.s32.totalorder %s366, %s382
    %p384 = scmp.eq.s32.totalorder %s28, 0
    %p385 = por %p383, %p384
    %p386 = scmp.le.s32.totalorder 1, %s22
    %p387 = scmp.lt.s32.totalorder %s22, 5
    %p388 = pnand %p386, %p387
    %p389 = pneg %p388
    // Predicated region
    $region9: #{vae_forward.1} parent=5 // pred_check
      _
    $region10: #{vae_forward.1} parent=5 // pred_check_branch
      %391 = sbr.rel (%p388) target = $region12
    $region11: #{vae_forward.1} parent=5 // pred_region
      %s392 = ssub.s32 %s22, 1
      // Predicated region
      $region13: #{vae_forward.1} parent=11 // pred_check
        %p393 = pneg %p95
      $region14: #{vae_forward.1} parent=11 // pred_check_branch
        %395 = sbr.rel (%p393) target = $region16
      $region15: #{vae_forward.1} parent=11 // pred_region
        _
      $region16: #{vae_forward.1} parent=11 // pred_fallthru
        _
      // Predicated region
      $region17: #{vae_forward.1} parent=11 // pred_check
        %p396 = pneg %p116
      $region18: #{vae_forward.1} parent=11 // pred_check_branch
        %398 = sbr.rel (%p396) target = $region20
      $region19: #{vae_forward.1} parent=11 // pred_region
        _
      $region20: #{vae_forward.1} parent=11 // pred_fallthru
        _
      // Predicated region
      $region21: #{vae_forward.1} parent=11 // pred_check
        %p399 = pneg %p137
      $region22: #{vae_forward.1} parent=11 // pred_check_branch
        %401 = sbr.rel (%p399) target = $region24
      $region23: #{vae_forward.1} parent=11 // pred_region
        _
      $region24: #{vae_forward.1} parent=11 // pred_fallthru
        _
      // Predicated region
      $region25: #{vae_forward.1} parent=11 // pred_check
        %p402 = pneg %p158
      $region26: #{vae_forward.1} parent=11 // pred_check_branch
        %404 = sbr.rel (%p402) target = $region28
      $region27: #{vae_forward.1} parent=11 // pred_region
        _
      $region28: #{vae_forward.1} parent=11 // pred_fallthru
        _
      // Predicated region
      $region29: #{vae_forward.1} parent=11 // pred_check
        %p405 = pneg %p179
      $region30: #{vae_forward.1} parent=11 // pred_check_branch
        %407 = sbr.rel (%p405) target = $region32
      $region31: #{vae_forward.1} parent=11 // pred_region
        _
      $region32: #{vae_forward.1} parent=11 // pred_fallthru
        _
      // Predicated region
      $region33: #{vae_forward.1} parent=11 // pred_check
        %p408 = pneg %p200
      $region34: #{vae_forward.1} parent=11 // pred_check_branch
        %410 = sbr.rel (%p408) target = $region36
      $region35: #{vae_forward.1} parent=11 // pred_region
        _
      $region36: #{vae_forward.1} parent=11 // pred_fallthru
        _
      // Predicated region
      $region37: #{vae_forward.1} parent=11 // pred_check
        %p411 = pneg %p221
      $region38: #{vae_forward.1} parent=11 // pred_check_branch
        %413 = sbr.rel (%p411) target = $region40
      $region39: #{vae_forward.1} parent=11 // pred_region
        _
      $region40: #{vae_forward.1} parent=11 // pred_fallthru
        _
      // Predicated region
      $region41: #{vae_forward.1} parent=11 // pred_check
        %p414 = pneg %p242
      $region42: #{vae_forward.1} parent=11 // pred_check_branch
        %416 = sbr.rel (%p414) target = $region44
      $region43: #{vae_forward.1} parent=11 // pred_region
        _
      $region44: #{vae_forward.1} parent=11 // pred_fallthru
        _
      // Predicated region
      $region45: #{vae_forward.1} parent=11 // pred_check
        %p417 = pneg %p263
      $region46: #{vae_forward.1} parent=11 // pred_check_branch
        %419 = sbr.rel (%p417) target = $region48
      $region47: #{vae_forward.1} parent=11 // pred_region
        _
      $region48: #{vae_forward.1} parent=11 // pred_fallthru
        _
      // Predicated region
      $region49: #{vae_forward.1} parent=11 // pred_check
        %p420 = pneg %p284
      $region50: #{vae_forward.1} parent=11 // pred_check_branch
        %422 = sbr.rel (%p420) target = $region52
      $region51: #{vae_forward.1} parent=11 // pred_region
        _
      $region52: #{vae_forward.1} parent=11 // pred_fallthru
        _
      // Predicated region
      $region53: #{vae_forward.1} parent=11 // pred_check
        %p423 = pneg %p305
      $region54: #{vae_forward.1} parent=11 // pred_check_branch
        %425 = sbr.rel (%p423) target = $region56
      $region55: #{vae_forward.1} parent=11 // pred_region
        _
      $region56: #{vae_forward.1} parent=11 // pred_fallthru
        _
      // Predicated region
      $region57: #{vae_forward.1} parent=11 // pred_check
        %p426 = pneg %p326
      $region58: #{vae_forward.1} parent=11 // pred_check_branch
        %428 = sbr.rel (%p426) target = $region60
      $region59: #{vae_forward.1} parent=11 // pred_region
        _
      $region60: #{vae_forward.1} parent=11 // pred_fallthru
        _
    $region12: #{vae_forward.1} parent=5 // pred_fallthru
      _
    %p429 = scmp.lt.s32.totalorder %s22, 4
    // Predicated region
    $region61: #{vae_forward.1} parent=5 // pred_check
      %p430 = pneg %p429
    $region62: #{vae_forward.1} parent=5 // pred_check_branch
      %432 = sbr.rel (%p430) target = $region64
    $region63: #{vae_forward.1} parent=5 // pred_region
      // Predicated region
      $region65: #{vae_forward.1} parent=63 // pred_check
        %p433 = pneg %p42
      $region66: #{vae_forward.1} parent=63 // pred_check_branch
        %435 = sbr.rel (%p433) target = $region68
      $region67: #{vae_forward.1} parent=63 // pred_region
        %s436 = smul.u32 32, %s22
        %p437 = scmp.lt.s32.totalorder %s436, 127
        %s438 = scalar_select %p437, %s436, 127
        %s439 = smul.addr %s438, 7
        %s440 = smul.addr %s439, 4
        %s441 = scalar_lea.vmem %s0, %s440
        %s442 = smul.u32 32, %s22
      $region68: #{vae_forward.1} parent=63 // pred_fallthru
        _
      // Predicated region
      $region69: #{vae_forward.1} parent=63 // pred_check
        %p443 = pneg %p68
      $region70: #{vae_forward.1} parent=63 // pred_check_branch
        %445 = sbr.rel (%p443) target = $region72
      $region71: #{vae_forward.1} parent=63 // pred_region
        %s446 = smul.u32 32, %s22
        %p447 = scmp.lt.s32.totalorder %s446, 127
        %s448 = scalar_select %p447, %s446, 127
        %s449 = smul.addr %s448, 8
        %s450 = scalar_lea.vmem %s1, %s449
        %s451 = smul.u32 32, %s22
      $region72: #{vae_forward.1} parent=63 // pred_fallthru
        _
    $region64: #{vae_forward.1} parent=5 // pred_fallthru
      _
    %p452 = scmp.le.s32.totalorder 1, %s22
    %p453 = scmp.lt.s32.totalorder %s22, 5
    %p454 = pnand %p452, %p453
    %p455 = pneg %p454
    // Predicated region
    $region73: #{vae_forward.1} parent=5 // pred_check
      _
    $region74: #{vae_forward.1} parent=5 // pred_check_branch
      %457 = sbr.rel (%p454) target = $region76
    $region75: #{vae_forward.1} parent=5 // pred_region
      %s458 = ssub.s32 %s22, 1
      %s459 = smul.u32 32, %s27
      %p460 = scmp.lt.s32.totalorder %s459, 127
      %s461 = scalar_select %p460, %s459, 127
      %s462 = smul.addr %s461, 7
      %s463 = smul.addr %s462, 4
      %s464 = scalar_lea.vmem %s0, %s463
      %p465 = pneg %p48
      %p466 = pneg %p45
      %s467 = smul.u32 32, %s27
      %p468 = scmp.lt.s32.totalorder %s467, 127
      %s469 = scalar_select %p468, %s467, 127
      %s470 = smul.addr %s469, 8
      %s471 = scalar_lea.vmem %s1, %s470
      %p472 = pneg %p74
      %p473 = pneg %p71
      %p474 = pneg %p95
      %p475 = pneg %p92
      %p476 = pneg %p116
      %p477 = pneg %p113
      %p478 = pneg %p137
      %p479 = pneg %p134
      %p480 = pneg %p158
      %p481 = pneg %p155
      %p482 = pneg %p179
      %p483 = pneg %p176
      %p484 = pneg %p200
      %p485 = pneg %p197
      %p486 = pneg %p221
      %p487 = pneg %p218
      %p488 = pneg %p242
      %p489 = pneg %p239
      %p490 = pneg %p263
      %p491 = pneg %p260
      %p492 = pneg %p284
      %p493 = pneg %p281
      %p494 = pneg %p305
      %p495 = pneg %p302
      %p496 = pneg %p326
      %p497 = pneg %p323
      %p498 = pneg %p352
      %p499 = pneg %p349
      %s500 = smul.u32 32, %s27
      %p501 = scmp.lt.s32.totalorder %s500, 127
      %s502 = scalar_select %p501, %s500, 127
      %s503 = smul.addr %s502, 7
      %s504 = smul.addr %s503, 4
      %s505 = scalar_lea.vmem %s14, %s504
      %p506 = pneg %p378
      %p507 = pneg %p375
      %s508 = smul.u32 32, %s27
      %p509 = scmp.lt.s32.totalorder %s508, 127
      %s510 = scalar_select %p509, %s508, 127
      %s511 = smul.addr %s510, 8
      %s512 = scalar_lea.vmem %s15, %s511
      %s513 = smul.u32 32, %s27
      %p514 = scmp.lt.s32.totalorder %s513, 127
      %s515 = scalar_select %p514, %s513, 127
      %s516 = smul.addr %s515, 7
      %s517 = smul.addr %s516, 4
      %s518 = scalar_lea.vmem %s0, %s517
      %s519 = smul.u32 32, %s27
      %s520 = smul.u32 32, %s27
      %p521 = scmp.lt.s32.totalorder %s520, 127
      %s522 = scalar_select %p521, %s520, 127
      %s523 = smul.addr %s522, 8
      %s524 = scalar_lea.vmem %s1, %s523
      %s525 = smul.u32 32, %s27
      %s526 = smul.u32 32, %s27
      %p527 = scmp.lt.s32.totalorder %s526, 127
      %s528 = scalar_select %p527, %s526, 127
      %s529 = smul.addr %s528, 7
      %s530 = smul.addr %s529, 4
      %s531 = scalar_lea.vmem %s14, %s530
      %s532 = smul.u32 32, %s27
      %s533 = smul.u32 32, %s27
      %p534 = scmp.lt.s32.totalorder %s533, 127
      %s535 = scalar_select %p534, %s533, 127
      %s536 = smul.addr %s535, 8
      %s537 = scalar_lea.vmem %s15, %s536
      %s538 = smul.u32 32, %s27
      %v542 = vld [vmem:[%s518] sm:$0xff]
      %v543 = vld [vmem:[%s518 + $0x8] sm:$0xff]
      %v544 = vld [vmem:[%s518 + $0x10] sm:$0xff]
      %v545 = vld [vmem:[%s518 + $0x18] sm:$0xf]
      %v546 = vld [vmem:[%s518 + $0x1c] sm:$0xff]
      %v547 = vld [vmem:[%s518 + $0x24] sm:$0xff]
      %v548 = vld [vmem:[%s518 + $0x2c] sm:$0xff]
      %v549 = vld [vmem:[%s518 + $0x34] sm:$0xf]
      %v550 = vld [vmem:[%s518 + $0x38] sm:$0xff]
      %v551 = vld [vmem:[%s518 + $0x40] sm:$0xff]
      %v552 = vld [vmem:[%s518 + $0x48] sm:$0xff]
      %v553 = vld [vmem:[%s518 + $0x50] sm:$0xf]
      %v554 = vld [vmem:[%s518 + $0x54] sm:$0xff]
      %v555 = vld [vmem:[%s518 + $0x5c] sm:$0xff]
      %v556 = vld [vmem:[%s518 + $0x64] sm:$0xff]
      %v557 = vld [vmem:[%s518 + $0x6c] sm:$0xf]
      %v558 = vld [vmem:[%s518 + $0x70] sm:$0xff]
      %v559 = vld [vmem:[%s518 + $0x78] sm:$0xff]
      %v560 = vld [vmem:[%s518 + $0x80] sm:$0xff]
      %v561 = vld [vmem:[%s518 + $0x88] sm:$0xf]
      %v562 = vld [vmem:[%s518 + $0x8c] sm:$0xff]
      %v563 = vld [vmem:[%s518 + $0x94] sm:$0xff]
      %v564 = vld [vmem:[%s518 + $0x9c] sm:$0xff]
      %v565 = vld [vmem:[%s518 + $0xa4] sm:$0xf]
      %v566 = vld [vmem:[%s518 + $0xa8] sm:$0xff]
      %v567 = vld [vmem:[%s518 + $0xb0] sm:$0xff]
      %v568 = vld [vmem:[%s518 + $0xb8] sm:$0xff]
      %v569 = vld [vmem:[%s518 + $0xc0] sm:$0xf]
      %v570 = vld [vmem:[%s518 + $0xc4] sm:$0xff]
      %v571 = vld [vmem:[%s518 + $0xcc] sm:$0xff]
      %v572 = vld [vmem:[%s518 + $0xd4] sm:$0xff]
      %v573 = vld [vmem:[%s518 + $0xdc] sm:$0xf]
      %v574 = vld [vmem:[%s518 + $0xe0] sm:$0xff]
      %v575 = vld [vmem:[%s518 + $0xe8] sm:$0xff]
      %v576 = vld [vmem:[%s518 + $0xf0] sm:$0xff]
      %v577 = vld [vmem:[%s518 + $0xf8] sm:$0xf]
      %v578 = vld [vmem:[%s518 + $0xfc] sm:$0xff]
      %v579 = vld [vmem:[%s518 + $0x104] sm:$0xff]
      %v580 = vld [vmem:[%s518 + $0x10c] sm:$0xff]
      %v581 = vld [vmem:[%s518 + $0x114] sm:$0xf]
      %v582 = vld [vmem:[%s518 + $0x118] sm:$0xff]
      %v583 = vld [vmem:[%s518 + $0x120] sm:$0xff]
      %v584 = vld [vmem:[%s518 + $0x128] sm:$0xff]
      %v585 = vld [vmem:[%s518 + $0x130] sm:$0xf]
      %v586 = vld [vmem:[%s518 + $0x134] sm:$0xff]
      %v587 = vld [vmem:[%s518 + $0x13c] sm:$0xff]
      %v588 = vld [vmem:[%s518 + $0x144] sm:$0xff]
      %v589 = vld [vmem:[%s518 + $0x14c] sm:$0xf]
      %v590 = vld [vmem:[%s518 + $0x150] sm:$0xff]
      %v591 = vld [vmem:[%s518 + $0x158] sm:$0xff]
      %v592 = vld [vmem:[%s518 + $0x160] sm:$0xff]
      %v593 = vld [vmem:[%s518 + $0x168] sm:$0xf]
      %v594 = vld [vmem:[%s518 + $0x16c] sm:$0xff]
      %v595 = vld [vmem:[%s518 + $0x174] sm:$0xff]
      %v596 = vld [vmem:[%s518 + $0x17c] sm:$0xff]
      %v597 = vld [vmem:[%s518 + $0x184] sm:$0xf]
      %v598 = vld [vmem:[%s518 + $0x188] sm:$0xff]
      %v599 = vld [vmem:[%s518 + $0x190] sm:$0xff]
      %v600 = vld [vmem:[%s518 + $0x198] sm:$0xff]
      %v601 = vld [vmem:[%s518 + $0x1a0] sm:$0xf]
      %v602 = vld [vmem:[%s518 + $0x1a4] sm:$0xff]
      %v603 = vld [vmem:[%s518 + $0x1ac] sm:$0xff]
      %v604 = vld [vmem:[%s518 + $0x1b4] sm:$0xff]
      %v605 = vld [vmem:[%s518 + $0x1bc] sm:$0xf]
      %v606 = vld [vmem:[%s518 + $0x1c0] sm:$0xff]
      %v607 = vld [vmem:[%s518 + $0x1c8] sm:$0xff]
      %v608 = vld [vmem:[%s518 + $0x1d0] sm:$0xff]
      %v609 = vld [vmem:[%s518 + $0x1d8] sm:$0xf]
      %v610 = vld [vmem:[%s518 + $0x1dc] sm:$0xff]
      %v611 = vld [vmem:[%s518 + $0x1e4] sm:$0xff]
      %v612 = vld [vmem:[%s518 + $0x1ec] sm:$0xff]
      %v613 = vld [vmem:[%s518 + $0x1f4] sm:$0xf]
      %v614 = vld [vmem:[%s518 + $0x1f8] sm:$0xff]
      %v615 = vld [vmem:[%s518 + $0x200] sm:$0xff]
      %v616 = vld [vmem:[%s518 + $0x208] sm:$0xff]
      %v617 = vld [vmem:[%s518 + $0x210] sm:$0xf]
      %v618 = vld [vmem:[%s518 + $0x214] sm:$0xff]
      %v619 = vld [vmem:[%s518 + $0x21c] sm:$0xff]
      %v620 = vld [vmem:[%s518 + $0x224] sm:$0xff]
      %v621 = vld [vmem:[%s518 + $0x22c] sm:$0xf]
      %v622 = vld [vmem:[%s518 + $0x230] sm:$0xff]
      %v623 = vld [vmem:[%s518 + $0x238] sm:$0xff]
      %v624 = vld [vmem:[%s518 + $0x240] sm:$0xff]
      %v625 = vld [vmem:[%s518 + $0x248] sm:$0xf]
      %v626 = vld [vmem:[%s518 + $0x24c] sm:$0xff]
      %v627 = vld [vmem:[%s518 + $0x254] sm:$0xff]
      %v628 = vld [vmem:[%s518 + $0x25c] sm:$0xff]
      %v629 = vld [vmem:[%s518 + $0x264] sm:$0xf]
      %v630 = vld [vmem:[%s518 + $0x268] sm:$0xff]
      %v631 = vld [vmem:[%s518 + $0x270] sm:$0xff]
      %v632 = vld [vmem:[%s518 + $0x278] sm:$0xff]
      %v633 = vld [vmem:[%s518 + $0x280] sm:$0xf]
      %v634 = vld [vmem:[%s518 + $0x284] sm:$0xff]
      %v635 = vld [vmem:[%s518 + $0x28c] sm:$0xff]
      %v636 = vld [vmem:[%s518 + $0x294] sm:$0xff]
      %v637 = vld [vmem:[%s518 + $0x29c] sm:$0xf]
      %v638 = vld [vmem:[%s518 + $0x2a0] sm:$0xff]
      %v639 = vld [vmem:[%s518 + $0x2a8] sm:$0xff]
      %v640 = vld [vmem:[%s518 + $0x2b0] sm:$0xff]
      %v641 = vld [vmem:[%s518 + $0x2b8] sm:$0xf]
      %v642 = vld [vmem:[%s518 + $0x2bc] sm:$0xff]
      %v643 = vld [vmem:[%s518 + $0x2c4] sm:$0xff]
      %v644 = vld [vmem:[%s518 + $0x2cc] sm:$0xff]
      %v645 = vld [vmem:[%s518 + $0x2d4] sm:$0xf]
      %v646 = vld [vmem:[%s518 + $0x2d8] sm:$0xff]
      %v647 = vld [vmem:[%s518 + $0x2e0] sm:$0xff]
      %v648 = vld [vmem:[%s518 + $0x2e8] sm:$0xff]
      %v649 = vld [vmem:[%s518 + $0x2f0] sm:$0xf]
      %v650 = vld [vmem:[%s518 + $0x2f4] sm:$0xff]
      %v651 = vld [vmem:[%s518 + $0x2fc] sm:$0xff]
      %v652 = vld [vmem:[%s518 + $0x304] sm:$0xff]
      %v653 = vld [vmem:[%s518 + $0x30c] sm:$0xf]
      %v654 = vld [vmem:[%s518 + $0x310] sm:$0xff]
      %v655 = vld [vmem:[%s518 + $0x318] sm:$0xff]
      %v656 = vld [vmem:[%s518 + $0x320] sm:$0xff]
      %v657 = vld [vmem:[%s518 + $0x328] sm:$0xf]
      %v658 = vld [vmem:[%s518 + $0x32c] sm:$0xff]
      %v659 = vld [vmem:[%s518 + $0x334] sm:$0xff]
      %v660 = vld [vmem:[%s518 + $0x33c] sm:$0xff]
      %v661 = vld [vmem:[%s518 + $0x344] sm:$0xf]
      %v662 = vld [vmem:[%s518 + $0x348] sm:$0xff]
      %v663 = vld [vmem:[%s518 + $0x350] sm:$0xff]
      %v664 = vld [vmem:[%s518 + $0x358] sm:$0xff]
      %v665 = vld [vmem:[%s518 + $0x360] sm:$0xf]
      %v666 = vld [vmem:[%s518 + $0x364] sm:$0xff]
      %v667 = vld [vmem:[%s518 + $0x36c] sm:$0xff]
      %v668 = vld [vmem:[%s518 + $0x374] sm:$0xff]
      %v669 = vld [vmem:[%s518 + $0x37c] sm:$0xf]
      %v670 = vld [vmem:[%s2] sm:$0xff]
      %v671 = vld [vmem:[%s2 + $0x8] sm:$0xff]
      %v672 = vld [vmem:[%s2 + $0x10] sm:$0xff]
      %v673 = vld [vmem:[%s2 + $0x18] sm:$0xff]
      %v674 = vld [vmem:[%s2 + $0x20] sm:$0xff]
      %v675 = vld [vmem:[%s2 + $0x28] sm:$0xff]
      %v676 = vld [vmem:[%s2 + $0x30] sm:$0xff]
      %v677 = vld [vmem:[%s2 + $0x38] sm:$0xff]
      %v678 = vld [vmem:[%s2 + $0x40] sm:$0xff]
      %v679 = vld [vmem:[%s2 + $0x48] sm:$0xff]
      %v680 = vld [vmem:[%s2 + $0x50] sm:$0xff]
      %v681 = vld [vmem:[%s2 + $0x58] sm:$0xff]
      %v682 = vld [vmem:[%s2 + $0x60] sm:$0xff]
      %v683 = vld [vmem:[%s2 + $0x68] sm:$0xff]
      %v684 = vld [vmem:[%s2 + $0x70] sm:$0xff]
      %v685 = vld [vmem:[%s2 + $0x78] sm:$0xff]
      %v686 = vld [vmem:[%s2 + $0x80] sm:$0xff]
      %v687 = vld [vmem:[%s2 + $0x88] sm:$0xff]
      %v688 = vld [vmem:[%s2 + $0x90] sm:$0xff]
      %v689 = vld [vmem:[%s2 + $0x98] sm:$0xff]
      %v690 = vld [vmem:[%s2 + $0xa0] sm:$0xff]
      %v691 = vld [vmem:[%s2 + $0xa8] sm:$0xff]
      %v692 = vld [vmem:[%s2 + $0xb0] sm:$0xff]
      %v693 = vld [vmem:[%s2 + $0xb8] sm:$0xff]
      %v694 = vld [vmem:[%s2 + $0xc0] sm:$0xff]
      %v695 = vld [vmem:[%s2 + $0xc8] sm:$0xff]
      %v696 = vld [vmem:[%s2 + $0xd0] sm:$0xff]
      %v697 = vld [vmem:[%s2 + $0xd8] sm:$0xff]
      %v698 = vld [vmem:[%s2 + $0xe0] sm:$0xff]
      %v699 = vld [vmem:[%s2 + $0xe8] sm:$0xff]
      %v700 = vld [vmem:[%s2 + $0xf0] sm:$0xff]
      %v701 = vld [vmem:[%s2 + $0xf8] sm:$0xff]
      %v702 = vld [vmem:[%s2 + $0x100] sm:$0xff]
      %v703 = vld [vmem:[%s2 + $0x108] sm:$0xff]
      %v704 = vld [vmem:[%s2 + $0x110] sm:$0xff]
      %v705 = vld [vmem:[%s2 + $0x118] sm:$0xff]
      %v706 = vld [vmem:[%s2 + $0x120] sm:$0xff]
      %v707 = vld [vmem:[%s2 + $0x128] sm:$0xff]
      %v708 = vld [vmem:[%s2 + $0x130] sm:$0xff]
      %v709 = vld [vmem:[%s2 + $0x138] sm:$0xff]
      %v710 = vld [vmem:[%s2 + $0x140] sm:$0xff]
      %v711 = vld [vmem:[%s2 + $0x148] sm:$0xff]
      %v712 = vld [vmem:[%s2 + $0x150] sm:$0xff]
      %v713 = vld [vmem:[%s2 + $0x158] sm:$0xff]
      %v714 = vld [vmem:[%s2 + $0x160] sm:$0xff]
      %v715 = vld [vmem:[%s2 + $0x168] sm:$0xff]
      %v716 = vld [vmem:[%s2 + $0x170] sm:$0xff]
      %v717 = vld [vmem:[%s2 + $0x178] sm:$0xff]
      %v718 = vld [vmem:[%s2 + $0x180] sm:$0xff]
      %v719 = vld [vmem:[%s2 + $0x188] sm:$0xff]
      %v720 = vld [vmem:[%s2 + $0x190] sm:$0xff]
      %v721 = vld [vmem:[%s2 + $0x198] sm:$0xff]
      %v722 = vld [vmem:[%s2 + $0x1a0] sm:$0xff]
      %v723 = vld [vmem:[%s2 + $0x1a8] sm:$0xff]
      %v724 = vld [vmem:[%s2 + $0x1b0] sm:$0xff]
      %v725 = vld [vmem:[%s2 + $0x1b8] sm:$0xff]
      %v726 = vld [vmem:[%s2 + $0x1c0] sm:$0xff]
      %v727 = vld [vmem:[%s2 + $0x1c8] sm:$0xff]
      %v728 = vld [vmem:[%s2 + $0x1d0] sm:$0xff]
      %v729 = vld [vmem:[%s2 + $0x1d8] sm:$0xff]
      %v730 = vld [vmem:[%s2 + $0x1e0] sm:$0xff]
      %v731 = vld [vmem:[%s2 + $0x1e8] sm:$0xff]
      %v732 = vld [vmem:[%s2 + $0x1f0] sm:$0xff]
      %v733 = vld [vmem:[%s2 + $0x1f8] sm:$0xff]
      %v734 = vld [vmem:[%s2 + $0x200] sm:$0xff]
      %v735 = vld [vmem:[%s2 + $0x208] sm:$0xff]
      %v736 = vld [vmem:[%s2 + $0x210] sm:$0xff]
      %v737 = vld [vmem:[%s2 + $0x218] sm:$0xff]
      %v738 = vld [vmem:[%s2 + $0x220] sm:$0xff]
      %v739 = vld [vmem:[%s2 + $0x228] sm:$0xff]
      %v740 = vld [vmem:[%s2 + $0x230] sm:$0xff]
      %v741 = vld [vmem:[%s2 + $0x238] sm:$0xff]
      %v742 = vld [vmem:[%s2 + $0x240] sm:$0xff]
      %v743 = vld [vmem:[%s2 + $0x248] sm:$0xff]
      %v744 = vld [vmem:[%s2 + $0x250] sm:$0xff]
      %v745 = vld [vmem:[%s2 + $0x258] sm:$0xff]
      %v746 = vld [vmem:[%s2 + $0x260] sm:$0xff]
      %v747 = vld [vmem:[%s2 + $0x268] sm:$0xff]
      %v748 = vld [vmem:[%s2 + $0x270] sm:$0xff]
      %v749 = vld [vmem:[%s2 + $0x278] sm:$0xff]
      %v750 = vld [vmem:[%s2 + $0x280] sm:$0xff]
      %v751 = vld [vmem:[%s2 + $0x288] sm:$0xff]
      %v752 = vld [vmem:[%s2 + $0x290] sm:$0xff]
      %v753 = vld [vmem:[%s2 + $0x298] sm:$0xff]
      %v754 = vld [vmem:[%s2 + $0x2a0] sm:$0xff]
      %v755 = vld [vmem:[%s2 + $0x2a8] sm:$0xff]
      %v756 = vld [vmem:[%s2 + $0x2b0] sm:$0xff]
      %v757 = vld [vmem:[%s2 + $0x2b8] sm:$0xff]
      %v758 = vld [vmem:[%s2 + $0x2c0] sm:$0xff]
      %v759 = vld [vmem:[%s2 + $0x2c8] sm:$0xff]
      %v760 = vld [vmem:[%s2 + $0x2d0] sm:$0xff]
      %v761 = vld [vmem:[%s2 + $0x2d8] sm:$0xff]
      %v762 = vld [vmem:[%s2 + $0x2e0] sm:$0xff]
      %v763 = vld [vmem:[%s2 + $0x2e8] sm:$0xff]
      %v764 = vld [vmem:[%s2 + $0x2f0] sm:$0xff]
      %v765 = vld [vmem:[%s2 + $0x2f8] sm:$0xff]
      %v766 = vld [vmem:[%s2 + $0x300] sm:$0xff]
      %v767 = vld [vmem:[%s2 + $0x308] sm:$0xff]
      %v768 = vld [vmem:[%s2 + $0x310] sm:$0xff]
      %v769 = vld [vmem:[%s2 + $0x318] sm:$0xff]
      %v770 = vld [vmem:[%s2 + $0x320] sm:$0xff]
      %v771 = vld [vmem:[%s2 + $0x328] sm:$0xff]
      %v772 = vld [vmem:[%s2 + $0x330] sm:$0xff]
      %v773 = vld [vmem:[%s2 + $0x338] sm:$0xff]
      %v774 = vld [vmem:[%s2 + $0x340] sm:$0xff]
      %v775 = vld [vmem:[%s2 + $0x348] sm:$0xff]
      %v776 = vld [vmem:[%s2 + $0x350] sm:$0xff]
      %v777 = vld [vmem:[%s2 + $0x358] sm:$0xff]
      %v778 = vld [vmem:[%s2 + $0x360] sm:$0xff]
      %v779 = vld [vmem:[%s2 + $0x368] sm:$0xff]
      %v780 = vld [vmem:[%s2 + $0x370] sm:$0xff]
      %v781 = vld [vmem:[%s2 + $0x378] sm:$0xff]
      %v782 = vld [vmem:[%s2 + $0x380] sm:$0xff]
      %v783 = vld [vmem:[%s2 + $0x388] sm:$0xff]
      %v784 = vld [vmem:[%s2 + $0x390] sm:$0xff]
      %v785 = vld [vmem:[%s2 + $0x398] sm:$0xff]
      %v786 = vld [vmem:[%s2 + $0x3a0] sm:$0xff]
      %v787 = vld [vmem:[%s2 + $0x3a8] sm:$0xff]
      %v788 = vld [vmem:[%s2 + $0x3b0] sm:$0xff]
      %v789 = vld [vmem:[%s2 + $0x3b8] sm:$0xff]
      %v790 = vld [vmem:[%s2 + $0x3c0] sm:$0xff]
      %v791 = vld [vmem:[%s2 + $0x3c8] sm:$0xff]
      %v792 = vld [vmem:[%s2 + $0x3d0] sm:$0xff]
      %v793 = vld [vmem:[%s2 + $0x3d8] sm:$0xff]
      %v794 = vld [vmem:[%s2 + $0x3e0] sm:$0xff]
      %v795 = vld [vmem:[%s2 + $0x3e8] sm:$0xff]
      %v796 = vld [vmem:[%s2 + $0x3f0] sm:$0xff]
      %v797 = vld [vmem:[%s2 + $0x3f8] sm:$0xff]
      %v798 = vld [vmem:[%s2 + $0x400] sm:$0xff]
      %v799 = vld [vmem:[%s2 + $0x408] sm:$0xff]
      %v800 = vld [vmem:[%s2 + $0x410] sm:$0xff]
      %v801 = vld [vmem:[%s2 + $0x418] sm:$0xff]
      %v802 = vld [vmem:[%s2 + $0x420] sm:$0xff]
      %v803 = vld [vmem:[%s2 + $0x428] sm:$0xff]
      %v804 = vld [vmem:[%s2 + $0x430] sm:$0xff]
      %v805 = vld [vmem:[%s2 + $0x438] sm:$0xff]
      %v806 = vld [vmem:[%s2 + $0x440] sm:$0xff]
      %v807 = vld [vmem:[%s2 + $0x448] sm:$0xff]
      %v808 = vld [vmem:[%s2 + $0x450] sm:$0xff]
      %v809 = vld [vmem:[%s2 + $0x458] sm:$0xff]
      %v810 = vld [vmem:[%s2 + $0x460] sm:$0xff]
      %v811 = vld [vmem:[%s2 + $0x468] sm:$0xff]
      %v812 = vld [vmem:[%s2 + $0x470] sm:$0xff]
      %v813 = vld [vmem:[%s2 + $0x478] sm:$0xff]
      %v814 = vld [vmem:[%s2 + $0x480] sm:$0xff]
      %v815 = vld [vmem:[%s2 + $0x488] sm:$0xff]
      %v816 = vld [vmem:[%s2 + $0x490] sm:$0xff]
      %v817 = vld [vmem:[%s2 + $0x498] sm:$0xff]
      %v818 = vld [vmem:[%s2 + $0x4a0] sm:$0xff]
      %v819 = vld [vmem:[%s2 + $0x4a8] sm:$0xff]
      %v820 = vld [vmem:[%s2 + $0x4b0] sm:$0xff]
      %v821 = vld [vmem:[%s2 + $0x4b8] sm:$0xff]
      %v822 = vld [vmem:[%s2 + $0x4c0] sm:$0xff]
      %v823 = vld [vmem:[%s2 + $0x4c8] sm:$0xff]
      %v824 = vld [vmem:[%s2 + $0x4d0] sm:$0xff]
      %v825 = vld [vmem:[%s2 + $0x4d8] sm:$0xff]
      %v826 = vld [vmem:[%s2 + $0x4e0] sm:$0xff]
      %v827 = vld [vmem:[%s2 + $0x4e8] sm:$0xff]
      %v828 = vld [vmem:[%s2 + $0x4f0] sm:$0xff]
      %v829 = vld [vmem:[%s2 + $0x4f8] sm:$0xff]
      %v830 = vld [vmem:[%s2 + $0x500] sm:$0xff]
      %v831 = vld [vmem:[%s2 + $0x508] sm:$0xff]
      %v832 = vld [vmem:[%s2 + $0x510] sm:$0xff]
      %v833 = vld [vmem:[%s2 + $0x518] sm:$0xff]
      %v834 = vld [vmem:[%s2 + $0x520] sm:$0xff]
      %v835 = vld [vmem:[%s2 + $0x528] sm:$0xff]
      %v836 = vld [vmem:[%s2 + $0x530] sm:$0xff]
      %v837 = vld [vmem:[%s2 + $0x538] sm:$0xff]
      %v838 = vld [vmem:[%s2 + $0x540] sm:$0xff]
      %v839 = vld [vmem:[%s2 + $0x548] sm:$0xff]
      %v840 = vld [vmem:[%s2 + $0x550] sm:$0xff]
      %v841 = vld [vmem:[%s2 + $0x558] sm:$0xff]
      %v842 = vld [vmem:[%s2 + $0x560] sm:$0xff]
      %v843 = vld [vmem:[%s2 + $0x568] sm:$0xff]
      %v844 = vld [vmem:[%s2 + $0x570] sm:$0xff]
      %v845 = vld [vmem:[%s2 + $0x578] sm:$0xff]
      %v846 = vld [vmem:[%s2 + $0x580] sm:$0xff]
      %v847 = vld [vmem:[%s2 + $0x588] sm:$0xff]
      %v848 = vld [vmem:[%s2 + $0x590] sm:$0xff]
      %v849 = vld [vmem:[%s2 + $0x598] sm:$0xff]
      %v850 = vld [vmem:[%s2 + $0x5a0] sm:$0xff]
      %v851 = vld [vmem:[%s2 + $0x5a8] sm:$0xff]
      %v852 = vld [vmem:[%s2 + $0x5b0] sm:$0xff]
      %v853 = vld [vmem:[%s2 + $0x5b8] sm:$0xff]
      %v854 = vld [vmem:[%s2 + $0x5c0] sm:$0xff]
      %v855 = vld [vmem:[%s2 + $0x5c8] sm:$0xff]
      %v856 = vld [vmem:[%s2 + $0x5d0] sm:$0xff]
      %v857 = vld [vmem:[%s2 + $0x5d8] sm:$0xff]
      %v858 = vld [vmem:[%s2 + $0x5e0] sm:$0xff]
      %v859 = vld [vmem:[%s2 + $0x5e8] sm:$0xff]
      %v860 = vld [vmem:[%s2 + $0x5f0] sm:$0xff]
      %v861 = vld [vmem:[%s2 + $0x5f8] sm:$0xff]
      %v862 = vld [vmem:[%s2 + $0x600] sm:$0xff]
      %v863 = vld [vmem:[%s2 + $0x608] sm:$0xff]
      %v864 = vld [vmem:[%s2 + $0x610] sm:$0xff]
      %v865 = vld [vmem:[%s2 + $0x618] sm:$0xff]
      %v994 = vunpack.c.l.b16 %v542
      %v995 = vunpack.c.h.b16 %v542
      %v996 = vunpack.c.l.b16 %v543
      %v997 = vunpack.c.h.b16 %v543
      %v998 = vunpack.c.l.b16 %v544
      %v999 = vunpack.c.h.b16 %v544
      %v1000 = vunpack.c.l.b16 %v545
      %v1001 = vunpack.c.l.b16 %v546
      %v1002 = vunpack.c.h.b16 %v546
      %v1003 = vunpack.c.l.b16 %v547
      %v1004 = vunpack.c.h.b16 %v547
      %v1005 = vunpack.c.l.b16 %v548
      %v1006 = vunpack.c.h.b16 %v548
      %v1007 = vunpack.c.l.b16 %v549
      %v1008 = vunpack.c.l.b16 %v550
      %v1009 = vunpack.c.h.b16 %v550
      %v1010 = vunpack.c.l.b16 %v551
      %v1011 = vunpack.c.h.b16 %v551
      %v1012 = vunpack.c.l.b16 %v552
      %v1013 = vunpack.c.h.b16 %v552
      %v1014 = vunpack.c.l.b16 %v553
      %v1015 = vunpack.c.l.b16 %v554
      %v1016 = vunpack.c.h.b16 %v554
      %v1017 = vunpack.c.l.b16 %v555
      %v1018 = vunpack.c.h.b16 %v555
      %v1019 = vunpack.c.l.b16 %v556
      %v1020 = vunpack.c.h.b16 %v556
      %v1021 = vunpack.c.l.b16 %v557
      %v1022 = vunpack.c.l.b16 %v558
      %v1023 = vunpack.c.h.b16 %v558
      %v1024 = vunpack.c.l.b16 %v559
      %v1025 = vunpack.c.h.b16 %v559
      %v1026 = vunpack.c.l.b16 %v560
      %v1027 = vunpack.c.h.b16 %v560
      %v1028 = vunpack.c.l.b16 %v561
      %v1029 = vunpack.c.l.b16 %v562
      %v1030 = vunpack.c.h.b16 %v562
      %v1031 = vunpack.c.l.b16 %v563
      %v1032 = vunpack.c.h.b16 %v563
      %v1033 = vunpack.c.l.b16 %v564
      %v1034 = vunpack.c.h.b16 %v564
      %v1035 = vunpack.c.l.b16 %v565
      %v1036 = vunpack.c.l.b16 %v566
      %v1037 = vunpack.c.h.b16 %v566
      %v1038 = vunpack.c.l.b16 %v567
      %v1039 = vunpack.c.h.b16 %v567
      %v1040 = vunpack.c.l.b16 %v568
      %v1041 = vunpack.c.h.b16 %v568
      %v1042 = vunpack.c.l.b16 %v569
      %v1043 = vunpack.c.l.b16 %v570
      %v1044 = vunpack.c.h.b16 %v570
      %v1045 = vunpack.c.l.b16 %v571
      %v1046 = vunpack.c.h.b16 %v571
      %v1047 = vunpack.c.l.b16 %v572
      %v1048 = vunpack.c.h.b16 %v572
      %v1049 = vunpack.c.l.b16 %v573
      %v1050 = vunpack.c.l.b16 %v574
      %v1051 = vunpack.c.h.b16 %v574
      %v1052 = vunpack.c.l.b16 %v575
      %v1053 = vunpack.c.h.b16 %v575
      %v1054 = vunpack.c.l.b16 %v576
      %v1055 = vunpack.c.h.b16 %v576
      %v1056 = vunpack.c.l.b16 %v577
      %v1057 = vunpack.c.l.b16 %v578
      %v1058 = vunpack.c.h.b16 %v578
      %v1059 = vunpack.c.l.b16 %v579
      %v1060 = vunpack.c.h.b16 %v579
      %v1061 = vunpack.c.l.b16 %v580
      %v1062 = vunpack.c.h.b16 %v580
      %v1063 = vunpack.c.l.b16 %v581
      %v1064 = vunpack.c.l.b16 %v582
      %v1065 = vunpack.c.h.b16 %v582
      %v1066 = vunpack.c.l.b16 %v583
      %v1067 = vunpack.c.h.b16 %v583
      %v1068 = vunpack.c.l.b16 %v584
      %v1069 = vunpack.c.h.b16 %v584
      %v1070 = vunpack.c.l.b16 %v585
      %v1071 = vunpack.c.l.b16 %v586
      %v1072 = vunpack.c.h.b16 %v586
      %v1073 = vunpack.c.l.b16 %v587
      %v1074 = vunpack.c.h.b16 %v587
      %v1075 = vunpack.c.l.b16 %v588
      %v1076 = vunpack.c.h.b16 %v588
      %v1077 = vunpack.c.l.b16 %v589
      %v1078 = vunpack.c.l.b16 %v590
      %v1079 = vunpack.c.h.b16 %v590
      %v1080 = vunpack.c.l.b16 %v591
      %v1081 = vunpack.c.h.b16 %v591
      %v1082 = vunpack.c.l.b16 %v592
      %v1083 = vunpack.c.h.b16 %v592
      %v1084 = vunpack.c.l.b16 %v593
      %v1085 = vunpack.c.l.b16 %v594
      %v1086 = vunpack.c.h.b16 %v594
      %v1087 = vunpack.c.l.b16 %v595
      %v1088 = vunpack.c.h.b16 %v595
      %v1089 = vunpack.c.l.b16 %v596
      %v1090 = vunpack.c.h.b16 %v596
      %v1091 = vunpack.c.l.b16 %v597
      %v1092 = vunpack.c.l.b16 %v598
      %v1093 = vunpack.c.h.b16 %v598
      %v1094 = vunpack.c.l.b16 %v599
      %v1095 = vunpack.c.h.b16 %v599
      %v1096 = vunpack.c.l.b16 %v600
      %v1097 = vunpack.c.h.b16 %v600
      %v1098 = vunpack.c.l.b16 %v601
      %v1099 = vunpack.c.l.b16 %v602
      %v1100 = vunpack.c.h.b16 %v602
      %v1101 = vunpack.c.l.b16 %v603
      %v1102 = vunpack.c.h.b16 %v603
      %v1103 = vunpack.c.l.b16 %v604
      %v1104 = vunpack.c.h.b16 %v604
      %v1105 = vunpack.c.l.b16 %v605
      %v1106 = vunpack.c.l.b16 %v606
      %v1107 = vunpack.c.h.b16 %v606
      %v1108 = vunpack.c.l.b16 %v607
      %v1109 = vunpack.c.h.b16 %v607
      %v1110 = vunpack.c.l.b16 %v608
      %v1111 = vunpack.c.h.b16 %v608
      %v1112 = vunpack.c.l.b16 %v609
      %v1113 = vunpack.c.l.b16 %v610
      %v1114 = vunpack.c.h.b16 %v610
      %v1115 = vunpack.c.l.b16 %v611
      %v1116 = vunpack.c.h.b16 %v611
      %v1117 = vunpack.c.l.b16 %v612
      %v1118 = vunpack.c.h.b16 %v612
      %v1119 = vunpack.c.l.b16 %v613
      %v1120 = vunpack.c.l.b16 %v614
      %v1121 = vunpack.c.h.b16 %v614
      %v1122 = vunpack.c.l.b16 %v615
      %v1123 = vunpack.c.h.b16 %v615
      %v1124 = vunpack.c.l.b16 %v616
      %v1125 = vunpack.c.h.b16 %v616
      %v1126 = vunpack.c.l.b16 %v617
      %v1127 = vunpack.c.l.b16 %v618
      %v1128 = vunpack.c.h.b16 %v618
      %v1129 = vunpack.c.l.b16 %v619
      %v1130 = vunpack.c.h.b16 %v619
      %v1131 = vunpack.c.l.b16 %v620
      %v1132 = vunpack.c.h.b16 %v620
      %v1133 = vunpack.c.l.b16 %v621
      %v1134 = vunpack.c.l.b16 %v622
      %v1135 = vunpack.c.h.b16 %v622
      %v1136 = vunpack.c.l.b16 %v623
      %v1137 = vunpack.c.h.b16 %v623
      %v1138 = vunpack.c.l.b16 %v624
      %v1139 = vunpack.c.h.b16 %v624
      %v1140 = vunpack.c.l.b16 %v625
      %v1141 = vunpack.c.l.b16 %v626
      %v1142 = vunpack.c.h.b16 %v626
      %v1143 = vunpack.c.l.b16 %v627
      %v1144 = vunpack.c.h.b16 %v627
      %v1145 = vunpack.c.l.b16 %v628
      %v1146 = vunpack.c.h.b16 %v628
      %v1147 = vunpack.c.l.b16 %v629
      %v1148 = vunpack.c.l.b16 %v630
      %v1149 = vunpack.c.h.b16 %v630
      %v1150 = vunpack.c.l.b16 %v631
      %v1151 = vunpack.c.h.b16 %v631
      %v1152 = vunpack.c.l.b16 %v632
      %v1153 = vunpack.c.h.b16 %v632
      %v1154 = vunpack.c.l.b16 %v633
      %v1155 = vunpack.c.l.b16 %v634
      %v1156 = vunpack.c.h.b16 %v634
      %v1157 = vunpack.c.l.b16 %v635
      %v1158 = vunpack.c.h.b16 %v635
      %v1159 = vunpack.c.l.b16 %v636
      %v1160 = vunpack.c.h.b16 %v636
      %v1161 = vunpack.c.l.b16 %v637
      %v1162 = vunpack.c.l.b16 %v638
      %v1163 = vunpack.c.h.b16 %v638
      %v1164 = vunpack.c.l.b16 %v639
      %v1165 = vunpack.c.h.b16 %v639
      %v1166 = vunpack.c.l.b16 %v640
      %v1167 = vunpack.c.h.b16 %v640
      %v1168 = vunpack.c.l.b16 %v641
      %v1169 = vunpack.c.l.b16 %v642
      %v1170 = vunpack.c.h.b16 %v642
      %v1171 = vunpack.c.l.b16 %v643
      %v1172 = vunpack.c.h.b16 %v643
      %v1173 = vunpack.c.l.b16 %v644
      %v1174 = vunpack.c.h.b16 %v644
      %v1175 = vunpack.c.l.b16 %v645
      %v1176 = vunpack.c.l.b16 %v646
      %v1177 = vunpack.c.h.b16 %v646
      %v1178 = vunpack.c.l.b16 %v647
      %v1179 = vunpack.c.h.b16 %v647
      %v1180 = vunpack.c.l.b16 %v648
      %v1181 = vunpack.c.h.b16 %v648
      %v1182 = vunpack.c.l.b16 %v649
      %v1183 = vunpack.c.l.b16 %v650
      %v1184 = vunpack.c.h.b16 %v650
      %v1185 = vunpack.c.l.b16 %v651
      %v1186 = vunpack.c.h.b16 %v651
      %v1187 = vunpack.c.l.b16 %v652
      %v1188 = vunpack.c.h.b16 %v652
      %v1189 = vunpack.c.l.b16 %v653
      %v1190 = vunpack.c.l.b16 %v654
      %v1191 = vunpack.c.h.b16 %v654
      %v1192 = vunpack.c.l.b16 %v655
      %v1193 = vunpack.c.h.b16 %v655
      %v1194 = vunpack.c.l.b16 %v656
      %v1195 = vunpack.c.h.b16 %v656
      %v1196 = vunpack.c.l.b16 %v657
      %v1197 = vunpack.c.l.b16 %v658
      %v1198 = vunpack.c.h.b16 %v658
      %v1199 = vunpack.c.l.b16 %v659
      %v1200 = vunpack.c.h.b16 %v659
      %v1201 = vunpack.c.l.b16 %v660
      %v1202 = vunpack.c.h.b16 %v660
      %v1203 = vunpack.c.l.b16 %v661
      %v1204 = vunpack.c.l.b16 %v662
      %v1205 = vunpack.c.h.b16 %v662
      %v1206 = vunpack.c.l.b16 %v663
      %v1207 = vunpack.c.h.b16 %v663
      %v1208 = vunpack.c.l.b16 %v664
      %v1209 = vunpack.c.h.b16 %v664
      %v1210 = vunpack.c.l.b16 %v665
      %v1211 = vunpack.c.l.b16 %v666
      %v1212 = vunpack.c.h.b16 %v666
      %v1213 = vunpack.c.l.b16 %v667
      %v1214 = vunpack.c.h.b16 %v667
      %v1215 = vunpack.c.l.b16 %v668
      %v1216 = vunpack.c.h.b16 %v668
      %v1217 = vunpack.c.l.b16 %v669
      %v1218 = vpack.c.b16 %v1001, %v994
      %v1219 = vpack.c.b16 %v1002, %v995
      %v1220 = vpack.c.b16 %v1003, %v996
      %v1221 = vpack.c.b16 %v1004, %v997
      %v1222 = vpack.c.b16 %v1005, %v998
      %v1223 = vpack.c.b16 %v1006, %v999
      %v1224 = vpack.c.b16 %v1007, %v1000
      %v1225 = vpack.c.b16 %v1015, %v1008
      %v1226 = vpack.c.b16 %v1016, %v1009
      %v1227 = vpack.c.b16 %v1017, %v1010
      %v1228 = vpack.c.b16 %v1018, %v1011
      %v1229 = vpack.c.b16 %v1019, %v1012
      %v1230 = vpack.c.b16 %v1020, %v1013
      %v1231 = vpack.c.b16 %v1021, %v1014
      %v1232 = vpack.c.b16 %v1029, %v1022
      %v1233 = vpack.c.b16 %v1030, %v1023
      %v1234 = vpack.c.b16 %v1031, %v1024
      %v1235 = vpack.c.b16 %v1032, %v1025
      %v1236 = vpack.c.b16 %v1033, %v1026
      %v1237 = vpack.c.b16 %v1034, %v1027
      %v1238 = vpack.c.b16 %v1035, %v1028
      %v1239 = vpack.c.b16 %v1043, %v1036
      %v1240 = vpack.c.b16 %v1044, %v1037
      %v1241 = vpack.c.b16 %v1045, %v1038
      %v1242 = vpack.c.b16 %v1046, %v1039
      %v1243 = vpack.c.b16 %v1047, %v1040
      %v1244 = vpack.c.b16 %v1048, %v1041
      %v1245 = vpack.c.b16 %v1049, %v1042
      %v1246 = vpack.c.b16 %v1057, %v1050
      %v1247 = vpack.c.b16 %v1058, %v1051
      %v1248 = vpack.c.b16 %v1059, %v1052
      %v1249 = vpack.c.b16 %v1060, %v1053
      %v1250 = vpack.c.b16 %v1061, %v1054
      %v1251 = vpack.c.b16 %v1062, %v1055
      %v1252 = vpack.c.b16 %v1063, %v1056
      %v1253 = vpack.c.b16 %v1071, %v1064
      %v1254 = vpack.c.b16 %v1072, %v1065
      %v1255 = vpack.c.b16 %v1073, %v1066
      %v1256 = vpack.c.b16 %v1074, %v1067
      %v1257 = vpack.c.b16 %v1075, %v1068
      %v1258 = vpack.c.b16 %v1076, %v1069
      %v1259 = vpack.c.b16 %v1077, %v1070
      %v1260 = vpack.c.b16 %v1085, %v1078
      %v1261 = vpack.c.b16 %v1086, %v1079
      %v1262 = vpack.c.b16 %v1087, %v1080
      %v1263 = vpack.c.b16 %v1088, %v1081
      %v1264 = vpack.c.b16 %v1089, %v1082
      %v1265 = vpack.c.b16 %v1090, %v1083
      %v1266 = vpack.c.b16 %v1091, %v1084
      %v1267 = vpack.c.b16 %v1099, %v1092
      %v1268 = vpack.c.b16 %v1100, %v1093
      %v1269 = vpack.c.b16 %v1101, %v1094
      %v1270 = vpack.c.b16 %v1102, %v1095
      %v1271 = vpack.c.b16 %v1103, %v1096
      %v1272 = vpack.c.b16 %v1104, %v1097
      %v1273 = vpack.c.b16 %v1105, %v1098
      %v1274 = vpack.c.b16 %v1113, %v1106
      %v1275 = vpack.c.b16 %v1114, %v1107
      %v1276 = vpack.c.b16 %v1115, %v1108
      %v1277 = vpack.c.b16 %v1116, %v1109
      %v1278 = vpack.c.b16 %v1117, %v1110
      %v1279 = vpack.c.b16 %v1118, %v1111
      %v1280 = vpack.c.b16 %v1119, %v1112
      %v1281 = vpack.c.b16 %v1127, %v1120
      %v1282 = vpack.c.b16 %v1128, %v1121
      %v1283 = vpack.c.b16 %v1129, %v1122
      %v1284 = vpack.c.b16 %v1130, %v1123
      %v1285 = vpack.c.b16 %v1131, %v1124
      %v1286 = vpack.c.b16 %v1132, %v1125
      %v1287 = vpack.c.b16 %v1133, %v1126
      %v1288 = vpack.c.b16 %v1141, %v1134
      %v1289 = vpack.c.b16 %v1142, %v1135
      %v1290 = vpack.c.b16 %v1143, %v1136
      %v1291 = vpack.c.b16 %v1144, %v1137
      %v1292 = vpack.c.b16 %v1145, %v1138
      %v1293 = vpack.c.b16 %v1146, %v1139
      %v1294 = vpack.c.b16 %v1147, %v1140
      %v1295 = vpack.c.b16 %v1155, %v1148
      %v1296 = vpack.c.b16 %v1156, %v1149
      %v1297 = vpack.c.b16 %v1157, %v1150
      %v1298 = vpack.c.b16 %v1158, %v1151
      %v1299 = vpack.c.b16 %v1159, %v1152
      %v1300 = vpack.c.b16 %v1160, %v1153
      %v1301 = vpack.c.b16 %v1161, %v1154
      %v1302 = vpack.c.b16 %v1169, %v1162
      %v1303 = vpack.c.b16 %v1170, %v1163
      %v1304 = vpack.c.b16 %v1171, %v1164
      %v1305 = vpack.c.b16 %v1172, %v1165
      %v1306 = vpack.c.b16 %v1173, %v1166
      %v1307 = vpack.c.b16 %v1174, %v1167
      %v1308 = vpack.c.b16 %v1175, %v1168
      %v1309 = vpack.c.b16 %v1183, %v1176
      %v1310 = vpack.c.b16 %v1184, %v1177
      %v1311 = vpack.c.b16 %v1185, %v1178
      %v1312 = vpack.c.b16 %v1186, %v1179
      %v1313 = vpack.c.b16 %v1187, %v1180
      %v1314 = vpack.c.b16 %v1188, %v1181
      %v1315 = vpack.c.b16 %v1189, %v1182
      %v1316 = vpack.c.b16 %v1197, %v1190
      %v1317 = vpack.c.b16 %v1198, %v1191
      %v1318 = vpack.c.b16 %v1199, %v1192
      %v1319 = vpack.c.b16 %v1200, %v1193
      %v1320 = vpack.c.b16 %v1201, %v1194
      %v1321 = vpack.c.b16 %v1202, %v1195
      %v1322 = vpack.c.b16 %v1203, %v1196
      %v1323 = vpack.c.b16 %v1211, %v1204
      %v1324 = vpack.c.b16 %v1212, %v1205
      %v1325 = vpack.c.b16 %v1213, %v1206
      %v1326 = vpack.c.b16 %v1214, %v1207
      %v1327 = vpack.c.b16 %v1215, %v1208
      %v1328 = vpack.c.b16 %v1216, %v1209
      %v1329 = vpack.c.b16 %v1217, %v1210
      %v1622 = vunpack.c.l.b16 %v670
      %v1623 = vunpack.c.h.b16 %v670
      %v1624 = vunpack.c.l.b16 %v671
      %v1625 = vunpack.c.h.b16 %v671
      %v1626 = vunpack.c.l.b16 %v672
      %v1627 = vunpack.c.h.b16 %v672
      %v1628 = vunpack.c.l.b16 %v673
      %v1629 = vunpack.c.h.b16 %v673
      %v1630 = vunpack.c.l.b16 %v674
      %v1631 = vunpack.c.h.b16 %v674
      %v1632 = vunpack.c.l.b16 %v675
      %v1633 = vunpack.c.h.b16 %v675
      %v1634 = vunpack.c.l.b16 %v676
      %v1635 = vunpack.c.h.b16 %v676
      %v1636 = vunpack.c.l.b16 %v677
      %v1637 = vunpack.c.h.b16 %v677
      %v1638 = vunpack.c.l.b16 %v678
      %v1639 = vunpack.c.h.b16 %v678
      %v1640 = vunpack.c.l.b16 %v679
      %v1641 = vunpack.c.h.b16 %v679
      %v1642 = vunpack.c.l.b16 %v680
      %v1643 = vunpack.c.h.b16 %v680
      %v1644 = vunpack.c.l.b16 %v681
      %v1645 = vunpack.c.h.b16 %v681
      %v1646 = vunpack.c.l.b16 %v682
      %v1647 = vunpack.c.h.b16 %v682
      %v1648 = vunpack.c.l.b16 %v683
      %v1649 = vunpack.c.h.b16 %v683
      %v1650 = vunpack.c.l.b16 %v684
      %v1651 = vunpack.c.h.b16 %v684
      %v1652 = vunpack.c.l.b16 %v685
      %v1653 = vunpack.c.h.b16 %v685
      %v1654 = vunpack.c.l.b16 %v686
      %v1655 = vunpack.c.h.b16 %v686
      %v1656 = vunpack.c.l.b16 %v687
      %v1657 = vunpack.c.h.b16 %v687
      %v1658 = vunpack.c.l.b16 %v688
      %v1659 = vunpack.c.h.b16 %v688
      %v1660 = vunpack.c.l.b16 %v689
      %v1661 = vunpack.c.h.b16 %v689
      %v1662 = vunpack.c.l.b16 %v690
      %v1663 = vunpack.c.h.b16 %v690
      %v1664 = vunpack.c.l.b16 %v691
      %v1665 = vunpack.c.h.b16 %v691
      %v1666 = vunpack.c.l.b16 %v692
      %v1667 = vunpack.c.h.b16 %v692
      %v1668 = vunpack.c.l.b16 %v693
      %v1669 = vunpack.c.h.b16 %v693
      %v1670 = vunpack.c.l.b16 %v694
      %v1671 = vunpack.c.h.b16 %v694
      %v1672 = vunpack.c.l.b16 %v695
      %v1673 = vunpack.c.h.b16 %v695
      %v1674 = vunpack.c.l.b16 %v696
      %v1675 = vunpack.c.h.b16 %v696
      %v1676 = vunpack.c.l.b16 %v697
      %v1677 = vunpack.c.h.b16 %v697
      %v1678 = vunpack.c.l.b16 %v698
      %v1679 = vunpack.c.h.b16 %v698
      %v1680 = vunpack.c.l.b16 %v699
      %v1681 = vunpack.c.h.b16 %v699
      %v1682 = vunpack.c.l.b16 %v700
      %v1683 = vunpack.c.h.b16 %v700
      %v1684 = vunpack.c.l.b16 %v701
      %v1685 = vunpack.c.h.b16 %v701
      %v1686 = vunpack.c.l.b16 %v702
      %v1687 = vunpack.c.h.b16 %v702
      %v1688 = vunpack.c.l.b16 %v703
      %v1689 = vunpack.c.h.b16 %v703
      %v1690 = vunpack.c.l.b16 %v704
      %v1691 = vunpack.c.h.b16 %v704
      %v1692 = vunpack.c.l.b16 %v705
      %v1693 = vunpack.c.h.b16 %v705
      %v1694 = vunpack.c.l.b16 %v706
      %v1695 = vunpack.c.h.b16 %v706
      %v1696 = vunpack.c.l.b16 %v707
      %v1697 = vunpack.c.h.b16 %v707
      %v1698 = vunpack.c.l.b16 %v708
      %v1699 = vunpack.c.h.b16 %v708
      %v1700 = vunpack.c.l.b16 %v709
      %v1701 = vunpack.c.h.b16 %v709
      %v1702 = vunpack.c.l.b16 %v710
      %v1703 = vunpack.c.h.b16 %v710
      %v1704 = vunpack.c.l.b16 %v711
      %v1705 = vunpack.c.h.b16 %v711
      %v1706 = vunpack.c.l.b16 %v712
      %v1707 = vunpack.c.h.b16 %v712
      %v1708 = vunpack.c.l.b16 %v713
      %v1709 = vunpack.c.h.b16 %v713
      %v1710 = vunpack.c.l.b16 %v714
      %v1711 = vunpack.c.h.b16 %v714
      %v1712 = vunpack.c.l.b16 %v715
      %v1713 = vunpack.c.h.b16 %v715
      %v1714 = vunpack.c.l.b16 %v716
      %v1715 = vunpack.c.h.b16 %v716
      %v1716 = vunpack.c.l.b16 %v717
      %v1717 = vunpack.c.h.b16 %v717
      %v1718 = vunpack.c.l.b16 %v718
      %v1719 = vunpack.c.h.b16 %v718
      %v1720 = vunpack.c.l.b16 %v719
      %v1721 = vunpack.c.h.b16 %v719
      %v1722 = vunpack.c.l.b16 %v720
      %v1723 = vunpack.c.h.b16 %v720
      %v1724 = vunpack.c.l.b16 %v721
      %v1725 = vunpack.c.h.b16 %v721
      %v1726 = vunpack.c.l.b16 %v722
      %v1727 = vunpack.c.h.b16 %v722
      %v1728 = vunpack.c.l.b16 %v723
      %v1729 = vunpack.c.h.b16 %v723
      %v1730 = vunpack.c.l.b16 %v724
      %v1731 = vunpack.c.h.b16 %v724
      %v1732 = vunpack.c.l.b16 %v725
      %v1733 = vunpack.c.h.b16 %v725
      %v1734 = vunpack.c.l.b16 %v726
      %v1735 = vunpack.c.h.b16 %v726
      %v1736 = vunpack.c.l.b16 %v727
      %v1737 = vunpack.c.h.b16 %v727
      %v1738 = vunpack.c.l.b16 %v728
      %v1739 = vunpack.c.h.b16 %v728
      %v1740 = vunpack.c.l.b16 %v729
      %v1741 = vunpack.c.h.b16 %v729
      %v1742 = vunpack.c.l.b16 %v730
      %v1743 = vunpack.c.h.b16 %v730
      %v1744 = vunpack.c.l.b16 %v731
      %v1745 = vunpack.c.h.b16 %v731
      %v1746 = vunpack.c.l.b16 %v732
      %v1747 = vunpack.c.h.b16 %v732
      %v1748 = vunpack.c.l.b16 %v733
      %v1749 = vunpack.c.h.b16 %v733
      %v1750 = vunpack.c.l.b16 %v734
      %v1751 = vunpack.c.h.b16 %v734
      %v1752 = vunpack.c.l.b16 %v735
      %v1753 = vunpack.c.h.b16 %v735
      %v1754 = vunpack.c.l.b16 %v736
      %v1755 = vunpack.c.h.b16 %v736
      %v1756 = vunpack.c.l.b16 %v737
      %v1757 = vunpack.c.h.b16 %v737
      %v1758 = vunpack.c.l.b16 %v738
      %v1759 = vunpack.c.h.b16 %v738
      %v1760 = vunpack.c.l.b16 %v739
      %v1761 = vunpack.c.h.b16 %v739
      %v1762 = vunpack.c.l.b16 %v740
      %v1763 = vunpack.c.h.b16 %v740
      %v1764 = vunpack.c.l.b16 %v741
      %v1765 = vunpack.c.h.b16 %v741
      %v1766 = vunpack.c.l.b16 %v742
      %v1767 = vunpack.c.h.b16 %v742
      %v1768 = vunpack.c.l.b16 %v743
      %v1769 = vunpack.c.h.b16 %v743
      %v1770 = vunpack.c.l.b16 %v744
      %v1771 = vunpack.c.h.b16 %v744
      %v1772 = vunpack.c.l.b16 %v745
      %v1773 = vunpack.c.h.b16 %v745
      %v1774 = vunpack.c.l.b16 %v746
      %v1775 = vunpack.c.h.b16 %v746
      %v1776 = vunpack.c.l.b16 %v747
      %v1777 = vunpack.c.h.b16 %v747
      %v1778 = vunpack.c.l.b16 %v748
      %v1779 = vunpack.c.h.b16 %v748
      %v1780 = vunpack.c.l.b16 %v749
      %v1781 = vunpack.c.h.b16 %v749
      %v1782 = vunpack.c.l.b16 %v750
      %v1783 = vunpack.c.h.b16 %v750
      %v1784 = vunpack.c.l.b16 %v751
      %v1785 = vunpack.c.h.b16 %v751
      %v1786 = vunpack.c.l.b16 %v752
      %v1787 = vunpack.c.h.b16 %v752
      %v1788 = vunpack.c.l.b16 %v753
      %v1789 = vunpack.c.h.b16 %v753
      %v1790 = vunpack.c.l.b16 %v754
      %v1791 = vunpack.c.h.b16 %v754
      %v1792 = vunpack.c.l.b16 %v755
      %v1793 = vunpack.c.h.b16 %v755
      %v1794 = vunpack.c.l.b16 %v756
      %v1795 = vunpack.c.h.b16 %v756
      %v1796 = vunpack.c.l.b16 %v757
      %v1797 = vunpack.c.h.b16 %v757
      %v1798 = vunpack.c.l.b16 %v758
      %v1799 = vunpack.c.h.b16 %v758
      %v1800 = vunpack.c.l.b16 %v759
      %v1801 = vunpack.c.h.b16 %v759
      %v1802 = vunpack.c.l.b16 %v760
      %v1803 = vunpack.c.h.b16 %v760
      %v1804 = vunpack.c.l.b16 %v761
      %v1805 = vunpack.c.h.b16 %v761
      %v1806 = vunpack.c.l.b16 %v762
      %v1807 = vunpack.c.h.b16 %v762
      %v1808 = vunpack.c.l.b16 %v763
      %v1809 = vunpack.c.h.b16 %v763
      %v1810 = vunpack.c.l.b16 %v764
      %v1811 = vunpack.c.h.b16 %v764
      %v1812 = vunpack.c.l.b16 %v765
      %v1813 = vunpack.c.h.b16 %v765
      %v1814 = vunpack.c.l.b16 %v766
      %v1815 = vunpack.c.h.b16 %v766
      %v1816 = vunpack.c.l.b16 %v767
      %v1817 = vunpack.c.h.b16 %v767
      %v1818 = vunpack.c.l.b16 %v768
      %v1819 = vunpack.c.h.b16 %v768
      %v1820 = vunpack.c.l.b16 %v769
      %v1821 = vunpack.c.h.b16 %v769
      %v1822 = vunpack.c.l.b16 %v770
      %v1823 = vunpack.c.h.b16 %v770
      %v1824 = vunpack.c.l.b16 %v771
      %v1825 = vunpack.c.h.b16 %v771
      %v1826 = vunpack.c.l.b16 %v772
      %v1827 = vunpack.c.h.b16 %v772
      %v1828 = vunpack.c.l.b16 %v773
      %v1829 = vunpack.c.h.b16 %v773
      %v1830 = vunpack.c.l.b16 %v774
      %v1831 = vunpack.c.h.b16 %v774
      %v1832 = vunpack.c.l.b16 %v775
      %v1833 = vunpack.c.h.b16 %v775
      %v1834 = vunpack.c.l.b16 %v776
      %v1835 = vunpack.c.h.b16 %v776
      %v1836 = vunpack.c.l.b16 %v777
      %v1837 = vunpack.c.h.b16 %v777
      %v1838 = vunpack.c.l.b16 %v778
      %v1839 = vunpack.c.h.b16 %v778
      %v1840 = vunpack.c.l.b16 %v779
      %v1841 = vunpack.c.h.b16 %v779
      %v1842 = vunpack.c.l.b16 %v780
      %v1843 = vunpack.c.h.b16 %v780
      %v1844 = vunpack.c.l.b16 %v781
      %v1845 = vunpack.c.h.b16 %v781
      %v1846 = vunpack.c.l.b16 %v782
      %v1847 = vunpack.c.h.b16 %v782
      %v1848 = vunpack.c.l.b16 %v783
      %v1849 = vunpack.c.h.b16 %v783
      %v1850 = vunpack.c.l.b16 %v784
      %v1851 = vunpack.c.h.b16 %v784
      %v1852 = vunpack.c.l.b16 %v785
      %v1853 = vunpack.c.h.b16 %v785
      %v1854 = vunpack.c.l.b16 %v786
      %v1855 = vunpack.c.h.b16 %v786
      %v1856 = vunpack.c.l.b16 %v787
      %v1857 = vunpack.c.h.b16 %v787
      %v1858 = vunpack.c.l.b16 %v788
      %v1859 = vunpack.c.h.b16 %v788
      %v1860 = vunpack.c.l.b16 %v789
      %v1861 = vunpack.c.h.b16 %v789
      %v1862 = vunpack.c.l.b16 %v790
      %v1863 = vunpack.c.h.b16 %v790
      %v1864 = vunpack.c.l.b16 %v791
      %v1865 = vunpack.c.h.b16 %v791
      %v1866 = vunpack.c.l.b16 %v792
      %v1867 = vunpack.c.h.b16 %v792
      %v1868 = vunpack.c.l.b16 %v793
      %v1869 = vunpack.c.h.b16 %v793
      %v1870 = vunpack.c.l.b16 %v794
      %v1871 = vunpack.c.h.b16 %v794
      %v1872 = vunpack.c.l.b16 %v795
      %v1873 = vunpack.c.h.b16 %v795
      %v1874 = vunpack.c.l.b16 %v796
      %v1875 = vunpack.c.h.b16 %v796
      %v1876 = vunpack.c.l.b16 %v797
      %v1877 = vunpack.c.h.b16 %v797
      %v1878 = vunpack.c.l.b16 %v798
      %v1879 = vunpack.c.h.b16 %v798
      %v1880 = vunpack.c.l.b16 %v799
      %v1881 = vunpack.c.h.b16 %v799
      %v1882 = vunpack.c.l.b16 %v800
      %v1883 = vunpack.c.h.b16 %v800
      %v1884 = vunpack.c.l.b16 %v801
      %v1885 = vunpack.c.h.b16 %v801
      %v1886 = vunpack.c.l.b16 %v802
      %v1887 = vunpack.c.h.b16 %v802
      %v1888 = vunpack.c.l.b16 %v803
      %v1889 = vunpack.c.h.b16 %v803
      %v1890 = vunpack.c.l.b16 %v804
      %v1891 = vunpack.c.h.b16 %v804
      %v1892 = vunpack.c.l.b16 %v805
      %v1893 = vunpack.c.h.b16 %v805
      %v1894 = vunpack.c.l.b16 %v806
      %v1895 = vunpack.c.h.b16 %v806
      %v1896 = vunpack.c.l.b16 %v807
      %v1897 = vunpack.c.h.b16 %v807
      %v1898 = vunpack.c.l.b16 %v808
      %v1899 = vunpack.c.h.b16 %v808
      %v1900 = vunpack.c.l.b16 %v809
      %v1901 = vunpack.c.h.b16 %v809
      %v1902 = vunpack.c.l.b16 %v810
      %v1903 = vunpack.c.h.b16 %v810
      %v1904 = vunpack.c.l.b16 %v811
      %v1905 = vunpack.c.h.b16 %v811
      %v1906 = vunpack.c.l.b16 %v812
      %v1907 = vunpack.c.h.b16 %v812
      %v1908 = vunpack.c.l.b16 %v813
      %v1909 = vunpack.c.h.b16 %v813
      %v1910 = vunpack.c.l.b16 %v814
      %v1911 = vunpack.c.h.b16 %v814
      %v1912 = vunpack.c.l.b16 %v815
      %v1913 = vunpack.c.h.b16 %v815
      %v1914 = vunpack.c.l.b16 %v816
      %v1915 = vunpack.c.h.b16 %v816
      %v1916 = vunpack.c.l.b16 %v817
      %v1917 = vunpack.c.h.b16 %v817
      %v1918 = vunpack.c.l.b16 %v818
      %v1919 = vunpack.c.h.b16 %v818
      %v1920 = vunpack.c.l.b16 %v819
      %v1921 = vunpack.c.h.b16 %v819
      %v1922 = vunpack.c.l.b16 %v820
      %v1923 = vunpack.c.h.b16 %v820
      %v1924 = vunpack.c.l.b16 %v821
      %v1925 = vunpack.c.h.b16 %v821
      %v1926 = vunpack.c.l.b16 %v822
      %v1927 = vunpack.c.h.b16 %v822
      %v1928 = vunpack.c.l.b16 %v823
      %v1929 = vunpack.c.h.b16 %v823
      %v1930 = vunpack.c.l.b16 %v824
      %v1931 = vunpack.c.h.b16 %v824
      %v1932 = vunpack.c.l.b16 %v825
      %v1933 = vunpack.c.h.b16 %v825
      %v1934 = vunpack.c.l.b16 %v826
      %v1935 = vunpack.c.h.b16 %v826
      %v1936 = vunpack.c.l.b16 %v827
      %v1937 = vunpack.c.h.b16 %v827
      %v1938 = vunpack.c.l.b16 %v828
      %v1939 = vunpack.c.h.b16 %v828
      %v1940 = vunpack.c.l.b16 %v829
      %v1941 = vunpack.c.h.b16 %v829
      %v1942 = vunpack.c.l.b16 %v830
      %v1943 = vunpack.c.h.b16 %v830
      %v1944 = vunpack.c.l.b16 %v831
      %v1945 = vunpack.c.h.b16 %v831
      %v1946 = vunpack.c.l.b16 %v832
      %v1947 = vunpack.c.h.b16 %v832
      %v1948 = vunpack.c.l.b16 %v833
      %v1949 = vunpack.c.h.b16 %v833
      %v1950 = vunpack.c.l.b16 %v834
      %v1951 = vunpack.c.h.b16 %v834
      %v1952 = vunpack.c.l.b16 %v835
      %v1953 = vunpack.c.h.b16 %v835
      %v1954 = vunpack.c.l.b16 %v836
      %v1955 = vunpack.c.h.b16 %v836
      %v1956 = vunpack.c.l.b16 %v837
      %v1957 = vunpack.c.h.b16 %v837
      %v1958 = vunpack.c.l.b16 %v838
      %v1959 = vunpack.c.h.b16 %v838
      %v1960 = vunpack.c.l.b16 %v839
      %v1961 = vunpack.c.h.b16 %v839
      %v1962 = vunpack.c.l.b16 %v840
      %v1963 = vunpack.c.h.b16 %v840
      %v1964 = vunpack.c.l.b16 %v841
      %v1965 = vunpack.c.h.b16 %v841
      %v1966 = vunpack.c.l.b16 %v842
      %v1967 = vunpack.c.h.b16 %v842
      %v1968 = vunpack.c.l.b16 %v843
      %v1969 = vunpack.c.h.b16 %v843
      %v1970 = vunpack.c.l.b16 %v844
      %v1971 = vunpack.c.h.b16 %v844
      %v1972 = vunpack.c.l.b16 %v845
      %v1973 = vunpack.c.h.b16 %v845
      %v1974 = vunpack.c.l.b16 %v846
      %v1975 = vunpack.c.h.b16 %v846
      %v1976 = vunpack.c.l.b16 %v847
      %v1977 = vunpack.c.h.b16 %v847
      %v1978 = vunpack.c.l.b16 %v848
      %v1979 = vunpack.c.h.b16 %v848
      %v1980 = vunpack.c.l.b16 %v849
      %v1981 = vunpack.c.h.b16 %v849
      %v1982 = vunpack.c.l.b16 %v850
      %v1983 = vunpack.c.h.b16 %v850
      %v1984 = vunpack.c.l.b16 %v851
      %v1985 = vunpack.c.h.b16 %v851
      %v1986 = vunpack.c.l.b16 %v852
      %v1987 = vunpack.c.h.b16 %v852
      %v1988 = vunpack.c.l.b16 %v853
      %v1989 = vunpack.c.h.b16 %v853
      %v1990 = vunpack.c.l.b16 %v854
      %v1991 = vunpack.c.h.b16 %v854
      %v1992 = vunpack.c.l.b16 %v855
      %v1993 = vunpack.c.h.b16 %v855
      %v1994 = vunpack.c.l.b16 %v856
      %v1995 = vunpack.c.h.b16 %v856
      %v1996 = vunpack.c.l.b16 %v857
      %v1997 = vunpack.c.h.b16 %v857
      %v1998 = vunpack.c.l.b16 %v858
      %v1999 = vunpack.c.h.b16 %v858
      %v2000 = vunpack.c.l.b16 %v859
      %v2001 = vunpack.c.h.b16 %v859
      %v2002 = vunpack.c.l.b16 %v860
      %v2003 = vunpack.c.h.b16 %v860
      %v2004 = vunpack.c.l.b16 %v861
      %v2005 = vunpack.c.h.b16 %v861
      %v2006 = vunpack.c.l.b16 %v862
      %v2007 = vunpack.c.h.b16 %v862
      %v2008 = vunpack.c.l.b16 %v863
      %v2009 = vunpack.c.h.b16 %v863
      %v2010 = vunpack.c.l.b16 %v864
      %v2011 = vunpack.c.h.b16 %v864
      %v2012 = vunpack.c.l.b16 %v865
      %v2013 = vunpack.c.h.b16 %v865
      %v2014 = vpack.c.b16 %v1626, %v1622
      %v2015 = vpack.c.b16 %v1627, %v1623
      %v2016 = vpack.c.b16 %v1628, %v1624
      %v2017 = vpack.c.b16 %v1629, %v1625
      %v2018 = vpack.c.b16 %v1634, %v1630
      %v2019 = vpack.c.b16 %v1635, %v1631
      %v2020 = vpack.c.b16 %v1636, %v1632
      %v2021 = vpack.c.b16 %v1637, %v1633
      %v2022 = vpack.c.b16 %v1642, %v1638
      %v2023 = vpack.c.b16 %v1643, %v1639
      %v2024 = vpack.c.b16 %v1644, %v1640
      %v2025 = vpack.c.b16 %v1645, %v1641
      %v2026 = vpack.c.b16 %v1650, %v1646
      %v2027 = vpack.c.b16 %v1651, %v1647
      %v2028 = vpack.c.b16 %v1652, %v1648
      %v2029 = vpack.c.b16 %v1653, %v1649
      %v2030 = vpack.c.b16 %v1658, %v1654
      %v2031 = vpack.c.b16 %v1659, %v1655
      %v2032 = vpack.c.b16 %v1660, %v1656
      %v2033 = vpack.c.b16 %v1661, %v1657
      %v2034 = vpack.c.b16 %v1666, %v1662
      %v2035 = vpack.c.b16 %v1667, %v1663
      %v2036 = vpack.c.b16 %v1668, %v1664
      %v2037 = vpack.c.b16 %v1669, %v1665
      %v2038 = vpack.c.b16 %v1674, %v1670
      %v2039 = vpack.c.b16 %v1675, %v1671
      %v2040 = vpack.c.b16 %v1676, %v1672
      %v2041 = vpack.c.b16 %v1677, %v1673
      %v2042 = vpack.c.b16 %v1682, %v1678
      %v2043 = vpack.c.b16 %v1683, %v1679
      %v2044 = vpack.c.b16 %v1684, %v1680
      %v2045 = vpack.c.b16 %v1685, %v1681
      %v2046 = vpack.c.b16 %v1690, %v1686
      %v2047 = vpack.c.b16 %v1691, %v1687
      %v2048 = vpack.c.b16 %v1692, %v1688
      %v2049 = vpack.c.b16 %v1693, %v1689
      %v2050 = vpack.c.b16 %v1698, %v1694
      %v2051 = vpack.c.b16 %v1699, %v1695
      %v2052 = vpack.c.b16 %v1700, %v1696
      %v2053 = vpack.c.b16 %v1701, %v1697
      %v2054 = vpack.c.b16 %v1706, %v1702
      %v2055 = vpack.c.b16 %v1707, %v1703
      %v2056 = vpack.c.b16 %v1708, %v1704
      %v2057 = vpack.c.b16 %v1709, %v1705
      %v2058 = vpack.c.b16 %v1714, %v1710
      %v2059 = vpack.c.b16 %v1715, %v1711
      %v2060 = vpack.c.b16 %v1716, %v1712
      %v2061 = vpack.c.b16 %v1717, %v1713
      %v2062 = vpack.c.b16 %v1722, %v1718
      %v2063 = vpack.c.b16 %v1723, %v1719
      %v2064 = vpack.c.b16 %v1724, %v1720
      %v2065 = vpack.c.b16 %v1725, %v1721
      %v2066 = vpack.c.b16 %v1730, %v1726
      %v2067 = vpack.c.b16 %v1731, %v1727
      %v2068 = vpack.c.b16 %v1732, %v1728
      %v2069 = vpack.c.b16 %v1733, %v1729
      %v2070 = vpack.c.b16 %v1738, %v1734
      %v2071 = vpack.c.b16 %v1739, %v1735
      %v2072 = vpack.c.b16 %v1740, %v1736
      %v2073 = vpack.c.b16 %v1741, %v1737
      %v2074 = vpack.c.b16 %v1746, %v1742
      %v2075 = vpack.c.b16 %v1747, %v1743
      %v2076 = vpack.c.b16 %v1748, %v1744
      %v2077 = vpack.c.b16 %v1749, %v1745
      %v2078 = vpack.c.b16 %v1754, %v1750
      %v2079 = vpack.c.b16 %v1755, %v1751
      %v2080 = vpack.c.b16 %v1756, %v1752
      %v2081 = vpack.c.b16 %v1757, %v1753
      %v2082 = vpack.c.b16 %v1762, %v1758
      %v2083 = vpack.c.b16 %v1763, %v1759
      %v2084 = vpack.c.b16 %v1764, %v1760
      %v2085 = vpack.c.b16 %v1765, %v1761
      %v2086 = vpack.c.b16 %v1770, %v1766
      %v2087 = vpack.c.b16 %v1771, %v1767
      %v2088 = vpack.c.b16 %v1772, %v1768
      %v2089 = vpack.c.b16 %v1773, %v1769
      %v2090 = vpack.c.b16 %v1778, %v1774
      %v2091 = vpack.c.b16 %v1779, %v1775
      %v2092 = vpack.c.b16 %v1780, %v1776
      %v2093 = vpack.c.b16 %v1781, %v1777
      %v2094 = vpack.c.b16 %v1786, %v1782
      %v2095 = vpack.c.b16 %v1787, %v1783
      %v2096 = vpack.c.b16 %v1788, %v1784
      %v2097 = vpack.c.b16 %v1789, %v1785
      %v2098 = vpack.c.b16 %v1794, %v1790
      %v2099 = vpack.c.b16 %v1795, %v1791
      %v2100 = vpack.c.b16 %v1796, %v1792
      %v2101 = vpack.c.b16 %v1797, %v1793
      %v2102 = vpack.c.b16 %v1802, %v1798
      %v2103 = vpack.c.b16 %v1803, %v1799
      %v2104 = vpack.c.b16 %v1804, %v1800
      %v2105 = vpack.c.b16 %v1805, %v1801
      %v2106 = vpack.c.b16 %v1810, %v1806
      %v2107 = vpack.c.b16 %v1811, %v1807
      %v2108 = vpack.c.b16 %v1812, %v1808
      %v2109 = vpack.c.b16 %v1813, %v1809
      %v2110 = vpack.c.b16 %v1818, %v1814
      %v2111 = vpack.c.b16 %v1819, %v1815
      %v2112 = vpack.c.b16 %v1820, %v1816
      %v2113 = vpack.c.b16 %v1821, %v1817
      %v2114 = vpack.c.b16 %v1826, %v1822
      %v2115 = vpack.c.b16 %v1827, %v1823
      %v2116 = vpack.c.b16 %v1828, %v1824
      %v2117 = vpack.c.b16 %v1829, %v1825
      %v2118 = vpack.c.b16 %v1834, %v1830
      %v2119 = vpack.c.b16 %v1835, %v1831
      %v2120 = vpack.c.b16 %v1836, %v1832
      %v2121 = vpack.c.b16 %v1837, %v1833
      %v2122 = vpack.c.b16 %v1842, %v1838
      %v2123 = vpack.c.b16 %v1843, %v1839
      %v2124 = vpack.c.b16 %v1844, %v1840
      %v2125 = vpack.c.b16 %v1845, %v1841
      %v2126 = vpack.c.b16 %v1850, %v1846
      %v2127 = vpack.c.b16 %v1851, %v1847
      %v2128 = vpack.c.b16 %v1852, %v1848
      %v2129 = vpack.c.b16 %v1853, %v1849
      %v2130 = vpack.c.b16 %v1858, %v1854
      %v2131 = vpack.c.b16 %v1859, %v1855
      %v2132 = vpack.c.b16 %v1860, %v1856
      %v2133 = vpack.c.b16 %v1861, %v1857
      %v2134 = vpack.c.b16 %v1866, %v1862
      %v2135 = vpack.c.b16 %v1867, %v1863
      %v2136 = vpack.c.b16 %v1868, %v1864
      %v2137 = vpack.c.b16 %v1869, %v1865
      %v2138 = vpack.c.b16 %v1874, %v1870
      %v2139 = vpack.c.b16 %v1875, %v1871
      %v2140 = vpack.c.b16 %v1876, %v1872
      %v2141 = vpack.c.b16 %v1877, %v1873
      %v2142 = vpack.c.b16 %v1882, %v1878
      %v2143 = vpack.c.b16 %v1883, %v1879
      %v2144 = vpack.c.b16 %v1884, %v1880
      %v2145 = vpack.c.b16 %v1885, %v1881
      %v2146 = vpack.c.b16 %v1890, %v1886
      %v2147 = vpack.c.b16 %v1891, %v1887
      %v2148 = vpack.c.b16 %v1892, %v1888
      %v2149 = vpack.c.b16 %v1893, %v1889
      %v2150 = vpack.c.b16 %v1898, %v1894
      %v2151 = vpack.c.b16 %v1899, %v1895
      %v2152 = vpack.c.b16 %v1900, %v1896
      %v2153 = vpack.c.b16 %v1901, %v1897
      %v2154 = vpack.c.b16 %v1906, %v1902
      %v2155 = vpack.c.b16 %v1907, %v1903
      %v2156 = vpack.c.b16 %v1908, %v1904
      %v2157 = vpack.c.b16 %v1909, %v1905
      %v2158 = vpack.c.b16 %v1914, %v1910
      %v2159 = vpack.c.b16 %v1915, %v1911
      %v2160 = vpack.c.b16 %v1916, %v1912
      %v2161 = vpack.c.b16 %v1917, %v1913
      %v2162 = vpack.c.b16 %v1922, %v1918
      %v2163 = vpack.c.b16 %v1923, %v1919
      %v2164 = vpack.c.b16 %v1924, %v1920
      %v2165 = vpack.c.b16 %v1925, %v1921
      %v2166 = vpack.c.b16 %v1930, %v1926
      %v2167 = vpack.c.b16 %v1931, %v1927
      %v2168 = vpack.c.b16 %v1932, %v1928
      %v2169 = vpack.c.b16 %v1933, %v1929
      %v2170 = vpack.c.b16 %v1938, %v1934
      %v2171 = vpack.c.b16 %v1939, %v1935
      %v2172 = vpack.c.b16 %v1940, %v1936
      %v2173 = vpack.c.b16 %v1941, %v1937
      %v2174 = vpack.c.b16 %v1946, %v1942
      %v2175 = vpack.c.b16 %v1947, %v1943
      %v2176 = vpack.c.b16 %v1948, %v1944
      %v2177 = vpack.c.b16 %v1949, %v1945
      %v2178 = vpack.c.b16 %v1954, %v1950
      %v2179 = vpack.c.b16 %v1955, %v1951
      %v2180 = vpack.c.b16 %v1956, %v1952
      %v2181 = vpack.c.b16 %v1957, %v1953
      %v2182 = vpack.c.b16 %v1962, %v1958
      %v2183 = vpack.c.b16 %v1963, %v1959
      %v2184 = vpack.c.b16 %v1964, %v1960
      %v2185 = vpack.c.b16 %v1965, %v1961
      %v2186 = vpack.c.b16 %v1970, %v1966
      %v2187 = vpack.c.b16 %v1971, %v1967
      %v2188 = vpack.c.b16 %v1972, %v1968
      %v2189 = vpack.c.b16 %v1973, %v1969
      %v2190 = vpack.c.b16 %v1978, %v1974
      %v2191 = vpack.c.b16 %v1979, %v1975
      %v2192 = vpack.c.b16 %v1980, %v1976
      %v2193 = vpack.c.b16 %v1981, %v1977
      %v2194 = vpack.c.b16 %v1986, %v1982
      %v2195 = vpack.c.b16 %v1987, %v1983
      %v2196 = vpack.c.b16 %v1988, %v1984
      %v2197 = vpack.c.b16 %v1989, %v1985
      %v2198 = vpack.c.b16 %v1994, %v1990
      %v2199 = vpack.c.b16 %v1995, %v1991
      %v2200 = vpack.c.b16 %v1996, %v1992
      %v2201 = vpack.c.b16 %v1997, %v1993
      %v2202 = vpack.c.b16 %v2002, %v1998
      %v2203 = vpack.c.b16 %v2003, %v1999
      %v2204 = vpack.c.b16 %v2004, %v2000
      %v2205 = vpack.c.b16 %v2005, %v2001
      %v2206 = vpack.c.b16 %v2010, %v2006
      %v2207 = vpack.c.b16 %v2011, %v2007
      %v2208 = vpack.c.b16 %v2012, %v2008
      %v2209 = vpack.c.b16 %v2013, %v2009
      %vm2406 = vcmask 130048
      %v2408 = vsel %vm2406, %v1224, 0
      %v2411 = vsel %vm2406, %v1231, 0
      %v2414 = vsel %vm2406, %v1238, 0
      %v2417 = vsel %vm2406, %v1245, 0
      %v2420 = vsel %vm2406, %v1252, 0
      %v2423 = vsel %vm2406, %v1259, 0
      %v2426 = vsel %vm2406, %v1266, 0
      %v2429 = vsel %vm2406, %v1273, 0
      %v2432 = vsel %vm2406, %v1280, 0
      %v2435 = vsel %vm2406, %v1287, 0
      %v2438 = vsel %vm2406, %v1294, 0
      %v2441 = vsel %vm2406, %v1301, 0
      %v2444 = vsel %vm2406, %v1308, 0
      %v2447 = vsel %vm2406, %v1315, 0
      %v2450 = vsel %vm2406, %v1322, 0
      %v2453 = vsel %vm2406, %v1329, 0
      %2455 = vmatprep.subr.bf16.mxu0 %v2015
      %2456 = vmatpush1.bf16.msra.mxu0 %v2014
      %2457 = vmatprep.subr.bf16.mxu0 %v2019
      %2458 = vmatpush1.bf16.msra.mxu0 %v2018
      %2459 = vmatprep.subr.bf16.mxu0 %v2023
      %2460 = vmatpush1.bf16.msra.mxu0 %v2022
      %2461 = vmatprep.subr.bf16.mxu0 %v2027
      %2462 = vmatpush1.bf16.msra.mxu0 %v2026
      %2463 = vmatprep.subr.bf16.mxu0 %v2031
      %2464 = vmatpush1.bf16.msra.mxu0 %v2030
      %2465 = vmatprep.subr.bf16.mxu0 %v2035
      %2466 = vmatpush1.bf16.msra.mxu0 %v2034
      %2467 = vmatprep.subr.bf16.mxu0 %v2039
      %2468 = vmatpush1.bf16.msra.mxu0 %v2038
      %2469 = vmatprep.subr.bf16.mxu0 %v2043
      %2470 = vmatpush1.bf16.msra.mxu0 %v2042
      %2471 = vmatprep.subr.bf16.mxu0 %v2047
      %2472 = vmatpush1.bf16.msra.mxu0 %v2046
      %2473 = vmatprep.subr.bf16.mxu0 %v2051
      %2474 = vmatpush1.bf16.msra.mxu0 %v2050
      %2475 = vmatprep.subr.bf16.mxu0 %v2055
      %2476 = vmatpush1.bf16.msra.mxu0 %v2054
      %2477 = vmatprep.subr.bf16.mxu0 %v2059
      %2478 = vmatpush1.bf16.msra.mxu0 %v2058
      %2479 = vmatprep.subr.bf16.mxu0 %v2063
      %2480 = vmatpush1.bf16.msra.mxu0 %v2062
      %2481 = vmatprep.subr.bf16.mxu0 %v2067
      %2482 = vmatpush1.bf16.msra.mxu0 %v2066
      %2483 = vmatprep.subr.bf16.mxu0 %v2071
      %2484 = vmatpush1.bf16.msra.mxu0 %v2070
      %2485 = vmatprep.subr.bf16.mxu0 %v2075
      %2486 = vmatpush1.bf16.msra.mxu0 %v2074
      %2487 = vmatprep.mubr.bf16.mxu0 %v1219
      %2488 = vmatmul.mubr.bf16.gmra.mrb[0].mxu0 %v1218
      %v2489 = vpop.f32.mrb[0].mxu0
      %v2490 = vadd.f32 0.0, %v2489
      %v2491 = vpop.f32.mrb[0].mxu0
      %v2492 = vadd.f32 0.0, %v2491
      %v2493 = vpop.f32.mrb[0].mxu0
      %v2494 = vadd.f32 0.0, %v2493
      %v2495 = vpop.f32.mrb[0].mxu0
      %v2496 = vadd.f32 0.0, %v2495
      %2497 = vmatprep.mubr.bf16.mxu0 %v1226
      %2498 = vmatmul.mubr.bf16.gmra.mrb[0].mxu0 %v1225
      %v2499 = vpop.f32.mrb[0].mxu0
      %v2500 = vadd.f32 0.0, %v2499
      %v2501 = vpop.f32.mrb[0].mxu0
      %v2502 = vadd.f32 0.0, %v2501
      %v2503 = vpop.f32.mrb[0].mxu0
      %v2504 = vadd.f32 0.0, %v2503
      %v2505 = vpop.f32.mrb[0].mxu0
      %v2506 = vadd.f32 0.0, %v2505
      %2507 = vmatprep.mubr.bf16.mxu0 %v1233
      %2508 = vmatmul.mubr.bf16.gmra.mrb[0].mxu0 %v1232
      %v2509 = vpop.f32.mrb[0].mxu0
      %v2510 = vadd.f32 0.0, %v2509
      %v2511 = vpop.f32.mrb[0].mxu0
      %v2512 = vadd.f32 0.0, %v2511
      %v2513 = vpop.f32.mrb[0].mxu0
      %v2514 = vadd.f32 0.0, %v2513
      %v2515 = vpop.f32.mrb[0].mxu0
      %v2516 = vadd.f32 0.0, %v2515
      %2517 = vmatprep.mubr.bf16.mxu0 %v1240
      %2518 = vmatmul.mubr.bf16.gmra.mrb[0].mxu0 %v1239
      %v2519 = vpop.f32.mrb[0].mxu0
      %v2520 = vadd.f32 0.0, %v2519
      %v2521 = vpop.f32.mrb[0].mxu0
      %v2522 = vadd.f32 0.0, %v2521
      %v2523 = vpop.f32.mrb[0].mxu0
      %v2524 = vadd.f32 0.0, %v2523
      %v2525 = vpop.f32.mrb[0].mxu0
      %v2526 = vadd.f32 0.0, %v2525
      %2527 = vmatprep.mubr.bf16.mxu0 %v1247
      %2528 = vmatmul.mubr.bf16.gmra.mrb[0].mxu0 %v1246
      %v2529 = vpop.f32.mrb[0].mxu0
      %v2530 = vadd.f32 0.0, %v2529
      %v2531 = vpop.f32.mrb[0].mxu0
      %v2532 = vadd.f32 0.0, %v2531
      %v2533 = vpop.f32.mrb[0].mxu0
      %v2534 = vadd.f32 0.0, %v2533
      %v2535 = vpop.f32.mrb[0].mxu0
      %v2536 = vadd.f32 0.0, %v2535
      %2537 = vmatprep.mubr.bf16.mxu0 %v1254
      %2538 = vmatmul.mubr.bf16.gmra.mrb[0].mxu0 %v1253
      %v2539 = vpop.f32.mrb[0].mxu0
      %v2540 = vadd.f32 0.0, %v2539
      %v2541 = vpop.f32.mrb[0].mxu0
      %v2542 = vadd.f32 0.0, %v2541
      %v2543 = vpop.f32.mrb[0].mxu0
      %v2544 = vadd.f32 0.0, %v2543
      %v2545 = vpop.f32.mrb[0].mxu0
      %v2546 = vadd.f32 0.0, %v2545
      %2547 = vmatprep.mubr.bf16.mxu0 %v1261
      %2548 = vmatmul.mubr.bf16.gmra.mrb[0].mxu0 %v1260
      %v2549 = vpop.f32.mrb[0].mxu0
      %v2550 = vadd.f32 0.0, %v2549
      %v2551 = vpop.f32.mrb[0].mxu0
      %v2552 = vadd.f32 0.0, %v2551
      %v2553 = vpop.f32.mrb[0].mxu0
      %v2554 = vadd.f32 0.0, %v2553
      %v2555 = vpop.f32.mrb[0].mxu0
      %v2556 = vadd.f32 0.0, %v2555
      %2557 = vmatprep.mubr.bf16.mxu0 %v1268
      %2558 = vmatmul.mubr.bf16.gmra.mrb[0].mxu0 %v1267
      %v2559 = vpop.f32.mrb[0].mxu0
      %v2560 = vadd.f32 0.0, %v2559
      %v2561 = vpop.f32.mrb[0].mxu0
      %v2562 = vadd.f32 0.0, %v2561
      %v2563 = vpop.f32.mrb[0].mxu0
      %v2564 = vadd.f32 0.0, %v2563
      %v2565 = vpop.f32.mrb[0].mxu0
      %v2566 = vadd.f32 0.0, %v2565
      %2567 = vmatprep.mubr.bf16.mxu0 %v1275
      %2568 = vmatmul.mubr.bf16.gmra.mrb[0].mxu0 %v1274
      %v2569 = vpop.f32.mrb[0].mxu0
      %v2570 = vadd.f32 0.0, %v2569
      %v2571 = vpop.f32.mrb[0].mxu0
      %v2572 = vadd.f32 0.0, %v2571
      %v2573 = vpop.f32.mrb[0].mxu0
      %v2574 = vadd.f32 0.0, %v2573
      %v2575 = vpop.f32.mrb[0].mxu0
      %v2576 = vadd.f32 0.0, %v2575
      %2577 = vmatprep.mubr.bf16.mxu0 %v1282
      %2578 = vmatmul.mubr.bf16.gmra.mrb[0].mxu0 %v1281
      %v2579 = vpop.f32.mrb[0].mxu0
      %v2580 = vadd.f32 0.0, %v2579
      %v2581 = vpop.f32.mrb[0].mxu0
      %v2582 = vadd.f32 0.0, %v2581
      %v2583 = vpop.f32.mrb[0].mxu0
      %v2584 = vadd.f32 0.0, %v2583
      %v2585 = vpop.f32.mrb[0].mxu0
      %v2586 = vadd.f32 0.0, %v2585
      %2587 = vmatprep.mubr.bf16.mxu0 %v1289
      %2588 = vmatmul.mubr.bf16.gmra.mrb[0].mxu0 %v1288
      %v2589 = vpop.f32.mrb[0].mxu0
      %v2590 = vadd.f32 0.0, %v2589
      %v2591 = vpop.f32.mrb[0].mxu0
      %v2592 = vadd.f32 0.0, %v2591
      %v2593 = vpop.f32.mrb[0].mxu0
      %v2594 = vadd.f32 0.0, %v2593
      %v2595 = vpop.f32.mrb[0].mxu0
      %v2596 = vadd.f32 0.0, %v2595
      %2597 = vmatprep.mubr.bf16.mxu0 %v1296
      %2598 = vmatmul.mubr.bf16.gmra.mrb[0].mxu0 %v1295
      %v2599 = vpop.f32.mrb[0].mxu0
      %v2600 = vadd.f32 0.0, %v2599
      %v2601 = vpop.f32.mrb[0].mxu0
      %v2602 = vadd.f32 0.0, %v2601
      %v2603 = vpop.f32.mrb[0].mxu0
      %v2604 = vadd.f32 0.0, %v2603
      %v2605 = vpop.f32.mrb[0].mxu0
      %v2606 = vadd.f32 0.0, %v2605
      %2607 = vmatprep.mubr.bf16.mxu0 %v1303
      %2608 = vmatmul.mubr.bf16.gmra.mrb[0].mxu0 %v1302
      %v2609 = vpop.f32.mrb[0].mxu0
      %v2610 = vadd.f32 0.0, %v2609
      %v2611 = vpop.f32.mrb[0].mxu0
      %v2612 = vadd.f32 0.0, %v2611
      %v2613 = vpop.f32.mrb[0].mxu0
      %v2614 = vadd.f32 0.0, %v2613
      %v2615 = vpop.f32.mrb[0].mxu0
      %v2616 = vadd.f32 0.0, %v2615
      %2617 = vmatprep.mubr.bf16.mxu0 %v1310
      %2618 = vmatmul.mubr.bf16.gmra.mrb[0].mxu0 %v1309
      %v2619 = vpop.f32.mrb[0].mxu0
      %v2620 = vadd.f32 0.0, %v2619
      %v2621 = vpop.f32.mrb[0].mxu0
      %v2622 = vadd.f32 0.0, %v2621
      %v2623 = vpop.f32.mrb[0].mxu0
      %v2624 = vadd.f32 0.0, %v2623
      %v2625 = vpop.f32.mrb[0].mxu0
      %v2626 = vadd.f32 0.0, %v2625
      %2627 = vmatprep.mubr.bf16.mxu0 %v1317
      %2628 = vmatmul.mubr.bf16.gmra.mrb[0].mxu0 %v1316
      %v2629 = vpop.f32.mrb[0].mxu0
      %v2630 = vadd.f32 0.0, %v2629
      %v2631 = vpop.f32.mrb[0].mxu0
      %v2632 = vadd.f32 0.0, %v2631
      %v2633 = vpop.f32.mrb[0].mxu0
      %v2634 = vadd.f32 0.0, %v2633
      %v2635 = vpop.f32.mrb[0].mxu0
      %v2636 = vadd.f32 0.0, %v2635
      %2637 = vmatprep.mubr.bf16.mxu0 %v1324
      %2638 = vmatmul.mubr.bf16.gmra.mrb[0].mxu0 %v1323
      %v2639 = vpop.f32.mrb[0].mxu0
      %v2640 = vadd.f32 0.0, %v2639
      %v2641 = vpop.f32.mrb[0].mxu0
      %v2642 = vadd.f32 0.0, %v2641
      %v2643 = vpop.f32.mrb[0].mxu0
      %v2644 = vadd.f32 0.0, %v2643
      %v2645 = vpop.f32.mrb[0].mxu0
      %v2646 = vadd.f32 0.0, %v2645
      %2647 = vdwg.mxu0
      %2648 = vmatprep.subr.bf16.mxu0 %v2079
      %2649 = vmatpush1.bf16.msra.mxu0 %v2078
      %2650 = vmatprep.subr.bf16.mxu0 %v2083
      %2651 = vmatpush1.bf16.msra.mxu0 %v2082
      %2652 = vmatprep.subr.bf16.mxu0 %v2087
      %2653 = vmatpush1.bf16.msra.mxu0 %v2086
      %2654 = vmatprep.subr.bf16.mxu0 %v2091
      %2655 = vmatpush1.bf16.msra.mxu0 %v2090
      %2656 = vmatprep.subr.bf16.mxu0 %v2095
      %2657 = vmatpush1.bf16.msra.mxu0 %v2094
      %2658 = vmatprep.subr.bf16.mxu0 %v2099
      %2659 = vmatpush1.bf16.msra.mxu0 %v2098
      %2660 = vmatprep.subr.bf16.mxu0 %v2103
      %2661 = vmatpush1.bf16.msra.mxu0 %v2102
      %2662 = vmatprep.subr.bf16.mxu0 %v2107
      %2663 = vmatpush1.bf16.msra.mxu0 %v2106
      %2664 = vmatprep.subr.bf16.mxu0 %v2111
      %2665 = vmatpush1.bf16.msra.mxu0 %v2110
      %2666 = vmatprep.subr.bf16.mxu0 %v2115
      %2667 = vmatpush1.bf16.msra.mxu0 %v2114
      %2668 = vmatprep.subr.bf16.mxu0 %v2119
      %2669 = vmatpush1.bf16.msra.mxu0 %v2118
      %2670 = vmatprep.subr.bf16.mxu0 %v2123
      %2671 = vmatpush1.bf16.msra.mxu0 %v2122
      %2672 = vmatprep.subr.bf16.mxu0 %v2127
      %2673 = vmatpush1.bf16.msra.mxu0 %v2126
      %2674 = vmatprep.subr.bf16.mxu0 %v2131
      %2675 = vmatpush1.bf16.msra.mxu0 %v2130
      %2676 = vmatprep.subr.bf16.mxu0 %v2135
      %2677 = vmatpush1.bf16.msra.mxu0 %v2134
      %2678 = vmatprep.subr.bf16.mxu0 %v2139
      %2679 = vmatpush1.bf16.msra.mxu0 %v2138
      %2680 = vmatprep.mubr.bf16.mxu0 %v1221
      %2681 = vmatmul.mubr.bf16.gmra.mrb[0].mxu0 %v1220
      %v2682 = vpop.f32.mrb[0].mxu0
      %v2683 = vadd.f32 %v2490, %v2682
      %v2684 = vpop.f32.mrb[0].mxu0
      %v2685 = vadd.f32 %v2492, %v2684
      %v2686 = vpop.f32.mrb[0].mxu0
      %v2687 = vadd.f32 %v2494, %v2686
      %v2688 = vpop.f32.mrb[0].mxu0
      %v2689 = vadd.f32 %v2496, %v2688
      %2690 = vmatprep.mubr.bf16.mxu0 %v1228
      %2691 = vmatmul.mubr.bf16.gmra.mrb[0].mxu0 %v1227
      %v2692 = vpop.f32.mrb[0].mxu0
      %v2693 = vadd.f32 %v2500, %v2692
      %v2694 = vpop.f32.mrb[0].mxu0
      %v2695 = vadd.f32 %v2502, %v2694
      %v2696 = vpop.f32.mrb[0].mxu0
      %v2697 = vadd.f32 %v2504, %v2696
      %v2698 = vpop.f32.mrb[0].mxu0
      %v2699 = vadd.f32 %v2506, %v2698
      %2700 = vmatprep.mubr.bf16.mxu0 %v1235
      %2701 = vmatmul.mubr.bf16.gmra.mrb[0].mxu0 %v1234
      %v2702 = vpop.f32.mrb[0].mxu0
      %v2703 = vadd.f32 %v2510, %v2702
      %v2704 = vpop.f32.mrb[0].mxu0
      %v2705 = vadd.f32 %v2512, %v2704
      %v2706 = vpop.f32.mrb[0].mxu0
      %v2707 = vadd.f32 %v2514, %v2706
      %v2708 = vpop.f32.mrb[0].mxu0
      %v2709 = vadd.f32 %v2516, %v2708
      %2710 = vmatprep.mubr.bf16.mxu0 %v1242
      %2711 = vmatmul.mubr.bf16.gmra.mrb[0].mxu0 %v1241
      %v2712 = vpop.f32.mrb[0].mxu0
      %v2713 = vadd.f32 %v2520, %v2712
      %v2714 = vpop.f32.mrb[0].mxu0
      %v2715 = vadd.f32 %v2522, %v2714
      %v2716 = vpop.f32.mrb[0].mxu0
      %v2717 = vadd.f32 %v2524, %v2716
      %v2718 = vpop.f32.mrb[0].mxu0
      %v2719 = vadd.f32 %v2526, %v2718
      %2720 = vmatprep.mubr.bf16.mxu0 %v1249
      %2721 = vmatmul.mubr.bf16.gmra.mrb[0].mxu0 %v1248
      %v2722 = vpop.f32.mrb[0].mxu0
      %v2723 = vadd.f32 %v2530, %v2722
      %v2724 = vpop.f32.mrb[0].mxu0
      %v2725 = vadd.f32 %v2532, %v2724
      %v2726 = vpop.f32.mrb[0].mxu0
      %v2727 = vadd.f32 %v2534, %v2726
      %v2728 = vpop.f32.mrb[0].mxu0
      %v2729 = vadd.f32 %v2536, %v2728
      %2730 = vmatprep.mubr.bf16.mxu0 %v1256
      %2731 = vmatmul.mubr.bf16.gmra.mrb[0].mxu0 %v1255
      %v2732 = vpop.f32.mrb[0].mxu0
      %v2733 = vadd.f32 %v2540, %v2732
      %v2734 = vpop.f32.mrb[0].mxu0
      %v2735 = vadd.f32 %v2542, %v2734
      %v2736 = vpop.f32.mrb[0].mxu0
      %v2737 = vadd.f32 %v2544, %v2736
      %v2738 = vpop.f32.mrb[0].mxu0
      %v2739 = vadd.f32 %v2546, %v2738
      %2740 = vmatprep.mubr.bf16.mxu0 %v1263
      %2741 = vmatmul.mubr.bf16.gmra.mrb[0].mxu0 %v1262
      %v2742 = vpop.f32.mrb[0].mxu0
      %v2743 = vadd.f32 %v2550, %v2742
      %v2744 = vpop.f32.mrb[0].mxu0
      %v2745 = vadd.f32 %v2552, %v2744
      %v2746 = vpop.f32.mrb[0].mxu0
      %v2747 = vadd.f32 %v2554, %v2746
      %v2748 = vpop.f32.mrb[0].mxu0
      %v2749 = vadd.f32 %v2556, %v2748
      %2750 = vmatprep.mubr.bf16.mxu0 %v1270
      %2751 = vmatmul.mubr.bf16.gmra.mrb[0].mxu0 %v1269
      %v2752 = vpop.f32.mrb[0].mxu0
      %v2753 = vadd.f32 %v2560, %v2752
      %v2754 = vpop.f32.mrb[0].mxu0
      %v2755 = vadd.f32 %v2562, %v2754
      %v2756 = vpop.f32.mrb[0].mxu0
      %v2757 = vadd.f32 %v2564, %v2756
      %v2758 = vpop.f32.mrb[0].mxu0
      %v2759 = vadd.f32 %v2566, %v2758
      %2760 = vmatprep.mubr.bf16.mxu0 %v1277
      %2761 = vmatmul.mubr.bf16.gmra.mrb[0].mxu0 %v1276
      %v2762 = vpop.f32.mrb[0].mxu0
      %v2763 = vadd.f32 %v2570, %v2762
      %v2764 = vpop.f32.mrb[0].mxu0
      %v2765 = vadd.f32 %v2572, %v2764
      %v2766 = vpop.f32.mrb[0].mxu0
      %v2767 = vadd.f32 %v2574, %v2766
      %v2768 = vpop.f32.mrb[0].mxu0
      %v2769 = vadd.f32 %v2576, %v2768
      %2770 = vmatprep.mubr.bf16.mxu0 %v1284
      %2771 = vmatmul.mubr.bf16.gmra.mrb[0].mxu0 %v1283
      %v2772 = vpop.f32.mrb[0].mxu0
      %v2773 = vadd.f32 %v2580, %v2772
      %v2774 = vpop.f32.mrb[0].mxu0
      %v2775 = vadd.f32 %v2582, %v2774
      %v2776 = vpop.f32.mrb[0].mxu0
      %v2777 = vadd.f32 %v2584, %v2776
      %v2778 = vpop.f32.mrb[0].mxu0
      %v2779 = vadd.f32 %v2586, %v2778
      %2780 = vmatprep.mubr.bf16.mxu0 %v1291
      %2781 = vmatmul.mubr.bf16.gmra.mrb[0].mxu0 %v1290
      %v2782 = vpop.f32.mrb[0].mxu0
      %v2783 = vadd.f32 %v2590, %v2782
      %v2784 = vpop.f32.mrb[0].mxu0
      %v2785 = vadd.f32 %v2592, %v2784
      %v2786 = vpop.f32.mrb[0].mxu0
      %v2787 = vadd.f32 %v2594, %v2786
      %v2788 = vpop.f32.mrb[0].mxu0
      %v2789 = vadd.f32 %v2596, %v2788
      %2790 = vmatprep.mubr.bf16.mxu0 %v1298
      %2791 = vmatmul.mubr.bf16.gmra.mrb[0].mxu0 %v1297
      %v2792 = vpop.f32.mrb[0].mxu0
      %v2793 = vadd.f32 %v2600, %v2792
      %v2794 = vpop.f32.mrb[0].mxu0
      %v2795 = vadd.f32 %v2602, %v2794
      %v2796 = vpop.f32.mrb[0].mxu0
      %v2797 = vadd.f32 %v2604, %v2796
      %v2798 = vpop.f32.mrb[0].mxu0
      %v2799 = vadd.f32 %v2606, %v2798
      %2800 = vmatprep.mubr.bf16.mxu0 %v1305
      %2801 = vmatmul.mubr.bf16.gmra.mrb[0].mxu0 %v1304
      %v2802 = vpop.f32.mrb[0].mxu0
      %v2803 = vadd.f32 %v2610, %v2802
      %v2804 = vpop.f32.mrb[0].mxu0
      %v2805 = vadd.f32 %v2612, %v2804
      %v2806 = vpop.f32.mrb[0].mxu0
      %v2807 = vadd.f32 %v2614, %v2806
      %v2808 = vpop.f32.mrb[0].mxu0
      %v2809 = vadd.f32 %v2616, %v2808
      %2810 = vmatprep.mubr.bf16.mxu0 %v1312
      %2811 = vmatmul.mubr.bf16.gmra.mrb[0].mxu0 %v1311
      %v2812 = vpop.f32.mrb[0].mxu0
      %v2813 = vadd.f32 %v2620, %v2812
      %v2814 = vpop.f32.mrb[0].mxu0
      %v2815 = vadd.f32 %v2622, %v2814
      %v2816 = vpop.f32.mrb[0].mxu0
      %v2817 = vadd.f32 %v2624, %v2816
      %v2818 = vpop.f32.mrb[0].mxu0
      %v2819 = vadd.f32 %v2626, %v2818
      %2820 = vmatprep.mubr.bf16.mxu0 %v1319
      %2821 = vmatmul.mubr.bf16.gmra.mrb[0].mxu0 %v1318
      %v2822 = vpop.f32.mrb[0].mxu0
      %v2823 = vadd.f32 %v2630, %v2822
      %v2824 = vpop.f32.mrb[0].mxu0
      %v2825 = vadd.f32 %v2632, %v2824
      %v2826 = vpop.f32.mrb[0].mxu0
      %v2827 = vadd.f32 %v2634, %v2826
      %v2828 = vpop.f32.mrb[0].mxu0
      %v2829 = vadd.f32 %v2636, %v2828
      %2830 = vmatprep.mubr.bf16.mxu0 %v1326
      %2831 = vmatmul.mubr.bf16.gmra.mrb[0].mxu0 %v1325
      %v2832 = vpop.f32.mrb[0].mxu0
      %v2833 = vadd.f32 %v2640, %v2832
      %v2834 = vpop.f32.mrb[0].mxu0
      %v2835 = vadd.f32 %v2642, %v2834
      %v2836 = vpop.f32.mrb[0].mxu0
      %v2837 = vadd.f32 %v2644, %v2836
      %v2838 = vpop.f32.mrb[0].mxu0
      %v2839 = vadd.f32 %v2646, %v2838
      %2840 = vdwg.mxu0
      %2841 = vmatprep.subr.bf16.mxu0 %v2143
      %2842 = vmatpush1.bf16.msra.mxu0 %v2142
      %2843 = vmatprep.subr.bf16.mxu0 %v2147
      %2844 = vmatpush1.bf16.msra.mxu0 %v2146
      %2845 = vmatprep.subr.bf16.mxu0 %v2151
      %2846 = vmatpush1.bf16.msra.mxu0 %v2150
      %2847 = vmatprep.subr.bf16.mxu0 %v2155
      %2848 = vmatpush1.bf16.msra.mxu0 %v2154
      %2849 = vmatprep.subr.bf16.mxu0 %v2159
      %2850 = vmatpush1.bf16.msra.mxu0 %v2158
      %2851 = vmatprep.subr.bf16.mxu0 %v2163
      %2852 = vmatpush1.bf16.msra.mxu0 %v2162
      %2853 = vmatprep.subr.bf16.mxu0 %v2167
      %2854 = vmatpush1.bf16.msra.mxu0 %v2166
      %2855 = vmatprep.subr.bf16.mxu0 %v2171
      %2856 = vmatpush1.bf16.msra.mxu0 %v2170
      %2857 = vmatprep.subr.bf16.mxu0 %v2175
      %2858 = vmatpush1.bf16.msra.mxu0 %v2174
      %2859 = vmatprep.subr.bf16.mxu0 %v2179
      %2860 = vmatpush1.bf16.msra.mxu0 %v2178
      %2861 = vmatprep.subr.bf16.mxu0 %v2183
      %2862 = vmatpush1.bf16.msra.mxu0 %v2182
      %2863 = vmatprep.subr.bf16.mxu0 %v2187
      %2864 = vmatpush1.bf16.msra.mxu0 %v2186
      %2865 = vmatprep.subr.bf16.mxu0 %v2191
      %2866 = vmatpush1.bf16.msra.mxu0 %v2190
      %2867 = vmatprep.subr.bf16.mxu0 %v2195
      %2868 = vmatpush1.bf16.msra.mxu0 %v2194
      %2869 = vmatprep.subr.bf16.mxu0 %v2199
      %2870 = vmatpush1.bf16.msra.mxu0 %v2198
      %2871 = vmatprep.subr.bf16.mxu0 %v2203
      %2872 = vmatpush1.bf16.msra.mxu0 %v2202
      %2873 = vmatprep.mubr.bf16.mxu0 %v1223
      %2874 = vmatmul.mubr.bf16.gmra.mrb[0].mxu0 %v1222
      %v2875 = vpop.f32.mrb[0].mxu0
      %v2876 = vadd.f32 %v2683, %v2875
      %v2877 = vpop.f32.mrb[0].mxu0
      %v2878 = vadd.f32 %v2685, %v2877
      %v2879 = vpop.f32.mrb[0].mxu0
      %v2880 = vadd.f32 %v2687, %v2879
      %v2881 = vpop.f32.mrb[0].mxu0
      %v2882 = vadd.f32 %v2689, %v2881
      %2883 = vmatprep.mubr.bf16.mxu0 %v1230
      %2884 = vmatmul.mubr.bf16.gmra.mrb[0].mxu0 %v1229
      %v2885 = vpop.f32.mrb[0].mxu0
      %v2886 = vadd.f32 %v2693, %v2885
      %v2887 = vpop.f32.mrb[0].mxu0
      %v2888 = vadd.f32 %v2695, %v2887
      %v2889 = vpop.f32.mrb[0].mxu0
      %v2890 = vadd.f32 %v2697, %v2889
      %v2891 = vpop.f32.mrb[0].mxu0
      %v2892 = vadd.f32 %v2699, %v2891
      %2893 = vmatprep.mubr.bf16.mxu0 %v1237
      %2894 = vmatmul.mubr.bf16.gmra.mrb[0].mxu0 %v1236
      %v2895 = vpop.f32.mrb[0].mxu0
      %v2896 = vadd.f32 %v2703, %v2895
      %v2897 = vpop.f32.mrb[0].mxu0
      %v2898 = vadd.f32 %v2705, %v2897
      %v2899 = vpop.f32.mrb[0].mxu0
      %v2900 = vadd.f32 %v2707, %v2899
      %v2901 = vpop.f32.mrb[0].mxu0
      %v2902 = vadd.f32 %v2709, %v2901
      %2903 = vmatprep.mubr.bf16.mxu0 %v1244
      %2904 = vmatmul.mubr.bf16.gmra.mrb[0].mxu0 %v1243
      %v2905 = vpop.f32.mrb[0].mxu0
      %v2906 = vadd.f32 %v2713, %v2905
      %v2907 = vpop.f32.mrb[0].mxu0
      %v2908 = vadd.f32 %v2715, %v2907
      %v2909 = vpop.f32.mrb[0].mxu0
      %v2910 = vadd.f32 %v2717, %v2909
      %v2911 = vpop.f32.mrb[0].mxu0
      %v2912 = vadd.f32 %v2719, %v2911
      %2913 = vmatprep.mubr.bf16.mxu0 %v1251
      %2914 = vmatmul.mubr.bf16.gmra.mrb[0].mxu0 %v1250
      %v2915 = vpop.f32.mrb[0].mxu0
      %v2916 = vadd.f32 %v2723, %v2915
      %v2917 = vpop.f32.mrb[0].mxu0
      %v2918 = vadd.f32 %v2725, %v2917
      %v2919 = vpop.f32.mrb[0].mxu0
      %v2920 = vadd.f32 %v2727, %v2919
      %v2921 = vpop.f32.mrb[0].mxu0
      %v2922 = vadd.f32 %v2729, %v2921
      %2923 = vmatprep.mubr.bf16.mxu0 %v1258
      %2924 = vmatmul.mubr.bf16.gmra.mrb[0].mxu0 %v1257
      %v2925 = vpop.f32.mrb[0].mxu0
      %v2926 = vadd.f32 %v2733, %v2925
      %v2927 = vpop.f32.mrb[0].mxu0
      %v2928 = vadd.f32 %v2735, %v2927
      %v2929 = vpop.f32.mrb[0].mxu0
      %v2930 = vadd.f32 %v2737, %v2929
      %v2931 = vpop.f32.mrb[0].mxu0
      %v2932 = vadd.f32 %v2739, %v2931
      %2933 = vmatprep.mubr.bf16.mxu0 %v1265
      %2934 = vmatmul.mubr.bf16.gmra.mrb[0].mxu0 %v1264
      %v2935 = vpop.f32.mrb[0].mxu0
      %v2936 = vadd.f32 %v2743, %v2935
      %v2937 = vpop.f32.mrb[0].mxu0
      %v2938 = vadd.f32 %v2745, %v2937
      %v2939 = vpop.f32.mrb[0].mxu0
      %v2940 = vadd.f32 %v2747, %v2939
      %v2941 = vpop.f32.mrb[0].mxu0
      %v2942 = vadd.f32 %v2749, %v2941
      %2943 = vmatprep.mubr.bf16.mxu0 %v1272
      %2944 = vmatmul.mubr.bf16.gmra.mrb[0].mxu0 %v1271
      %v2945 = vpop.f32.mrb[0].mxu0
      %v2946 = vadd.f32 %v2753, %v2945
      %v2947 = vpop.f32.mrb[0].mxu0
      %v2948 = vadd.f32 %v2755, %v2947
      %v2949 = vpop.f32.mrb[0].mxu0
      %v2950 = vadd.f32 %v2757, %v2949
      %v2951 = vpop.f32.mrb[0].mxu0
      %v2952 = vadd.f32 %v2759, %v2951
      %2953 = vmatprep.mubr.bf16.mxu0 %v1279
      %2954 = vmatmul.mubr.bf16.gmra.mrb[0].mxu0 %v1278
      %v2955 = vpop.f32.mrb[0].mxu0
      %v2956 = vadd.f32 %v2763, %v2955
      %v2957 = vpop.f32.mrb[0].mxu0
      %v2958 = vadd.f32 %v2765, %v2957
      %v2959 = vpop.f32.mrb[0].mxu0
      %v2960 = vadd.f32 %v2767, %v2959
      %v2961 = vpop.f32.mrb[0].mxu0
      %v2962 = vadd.f32 %v2769, %v2961
      %2963 = vmatprep.mubr.bf16.mxu0 %v1286
      %2964 = vmatmul.mubr.bf16.gmra.mrb[0].mxu0 %v1285
      %v2965 = vpop.f32.mrb[0].mxu0
      %v2966 = vadd.f32 %v2773, %v2965
      %v2967 = vpop.f32.mrb[0].mxu0
      %v2968 = vadd.f32 %v2775, %v2967
      %v2969 = vpop.f32.mrb[0].mxu0
      %v2970 = vadd.f32 %v2777, %v2969
      %v2971 = vpop.f32.mrb[0].mxu0
      %v2972 = vadd.f32 %v2779, %v2971
      %2973 = vmatprep.mubr.bf16.mxu0 %v1293
      %2974 = vmatmul.mubr.bf16.gmra.mrb[0].mxu0 %v1292
      %v2975 = vpop.f32.mrb[0].mxu0
      %v2976 = vadd.f32 %v2783, %v2975
      %v2977 = vpop.f32.mrb[0].mxu0
      %v2978 = vadd.f32 %v2785, %v2977
      %v2979 = vpop.f32.mrb[0].mxu0
      %v2980 = vadd.f32 %v2787, %v2979
      %v2981 = vpop.f32.mrb[0].mxu0
      %v2982 = vadd.f32 %v2789, %v2981
      %2983 = vmatprep.mubr.bf16.mxu0 %v1300
      %2984 = vmatmul.mubr.bf16.gmra.mrb[0].mxu0 %v1299
      %v2985 = vpop.f32.mrb[0].mxu0
      %v2986 = vadd.f32 %v2793, %v2985
      %v2987 = vpop.f32.mrb[0].mxu0
      %v2988 = vadd.f32 %v2795, %v2987
      %v2989 = vpop.f32.mrb[0].mxu0
      %v2990 = vadd.f32 %v2797, %v2989
      %v2991 = vpop.f32.mrb[0].mxu0
      %v2992 = vadd.f32 %v2799, %v2991
      %2993 = vmatprep.mubr.bf16.mxu0 %v1307
      %2994 = vmatmul.mubr.bf16.gmra.mrb[0].mxu0 %v1306
      %v2995 = vpop.f32.mrb[0].mxu0
      %v2996 = vadd.f32 %v2803, %v2995
      %v2997 = vpop.f32.mrb[0].mxu0
      %v2998 = vadd.f32 %v2805, %v2997
      %v2999 = vpop.f32.mrb[0].mxu0
      %v3000 = vadd.f32 %v2807, %v2999
      %v3001 = vpop.f32.mrb[0].mxu0
      %v3002 = vadd.f32 %v2809, %v3001
      %3003 = vmatprep.mubr.bf16.mxu0 %v1314
      %3004 = vmatmul.mubr.bf16.gmra.mrb[0].mxu0 %v1313
      %v3005 = vpop.f32.mrb[0].mxu0
      %v3006 = vadd.f32 %v2813, %v3005
      %v3007 = vpop.f32.mrb[0].mxu0
      %v3008 = vadd.f32 %v2815, %v3007
      %v3009 = vpop.f32.mrb[0].mxu0
      %v3010 = vadd.f32 %v2817, %v3009
      %v3011 = vpop.f32.mrb[0].mxu0
      %v3012 = vadd.f32 %v2819, %v3011
      %3013 = vmatprep.mubr.bf16.mxu0 %v1321
      %3014 = vmatmul.mubr.bf16.gmra.mrb[0].mxu0 %v1320
      %v3015 = vpop.f32.mrb[0].mxu0
      %v3016 = vadd.f32 %v2823, %v3015
      %v3017 = vpop.f32.mrb[0].mxu0
      %v3018 = vadd.f32 %v2825, %v3017
      %v3019 = vpop.f32.mrb[0].mxu0
      %v3020 = vadd.f32 %v2827, %v3019
      %v3021 = vpop.f32.mrb[0].mxu0
      %v3022 = vadd.f32 %v2829, %v3021
      %3023 = vmatprep.mubr.bf16.mxu0 %v1328
      %3024 = vmatmul.mubr.bf16.gmra.mrb[0].mxu0 %v1327
      %v3025 = vpop.f32.mrb[0].mxu0
      %v3026 = vadd.f32 %v2833, %v3025
      %v3027 = vpop.f32.mrb[0].mxu0
      %v3028 = vadd.f32 %v2835, %v3027
      %v3029 = vpop.f32.mrb[0].mxu0
      %v3030 = vadd.f32 %v2837, %v3029
      %v3031 = vpop.f32.mrb[0].mxu0
      %v3032 = vadd.f32 %v2839, %v3031
      %3033 = vdwg.mxu0
      %3034 = vmatprep.subr.bf16.mxu0 %v2207
      %3035 = vmatpush1.bf16.msra.mxu0 %v2206
      %3036 = vmatprep.subr.bf16.mxu0 0
      %3037 = vmatpush1.bf16.msra.mxu0 0
      %3038 = vmatprep.subr.bf16.mxu0 0
      %3039 = vmatpush1.bf16.msra.mxu0 0
      %3040 = vmatprep.subr.bf16.mxu0 0
      %3041 = vmatpush1.bf16.msra.mxu0 0
      %3042 = vmatprep.subr.bf16.mxu0 0
      %3043 = vmatpush1.bf16.msra.mxu0 0
      %3044 = vmatprep.subr.bf16.mxu0 0
      %3045 = vmatpush1.bf16.msra.mxu0 0
      %3046 = vmatprep.subr.bf16.mxu0 0
      %3047 = vmatpush1.bf16.msra.mxu0 0
      %3048 = vmatprep.subr.bf16.mxu0 0
      %3049 = vmatpush1.bf16.msra.mxu0 0
      %3050 = vmatprep.subr.bf16.mxu0 0
      %3051 = vmatpush1.bf16.msra.mxu0 0
      %3052 = vmatprep.subr.bf16.mxu0 0
      %3053 = vmatpush1.bf16.msra.mxu0 0
      %3054 = vmatprep.subr.bf16.mxu0 0
      %3055 = vmatpush1.bf16.msra.mxu0 0
      %3056 = vmatprep.subr.bf16.mxu0 0
      %3057 = vmatpush1.bf16.msra.mxu0 0
      %3058 = vmatprep.subr.bf16.mxu0 0
      %3059 = vmatpush1.bf16.msra.mxu0 0
      %3060 = vmatprep.subr.bf16.mxu0 0
      %3061 = vmatpush1.bf16.msra.mxu0 0
      %3062 = vmatprep.subr.bf16.mxu0 0
      %3063 = vmatpush1.bf16.msra.mxu0 0
      %3064 = vmatprep.subr.bf16.mxu0 0
      %3065 = vmatpush1.bf16.msra.mxu0 0
      %3066 = vmatprep.mubr.bf16.mxu0 0
      %3067 = vmatmul.mubr.bf16.gmra.mrb[0].mxu0 %v2408
      %v3068 = vpop.f32.mrb[0].mxu0
      %v3069 = vadd.f32 %v2876, %v3068
      %v3070 = vpop.f32.mrb[0].mxu0
      %v3071 = vadd.f32 %v2878, %v3070
      %v3072 = vpop.f32.mrb[0].mxu0
      %v3073 = vadd.f32 %v2880, %v3072
      %v3074 = vpop.f32.mrb[0].mxu0
      %v3075 = vadd.f32 %v2882, %v3074
      %3076 = vmatprep.mubr.bf16.mxu0 0
      %3077 = vmatmul.mubr.bf16.gmra.mrb[0].mxu0 %v2411
      %v3078 = vpop.f32.mrb[0].mxu0
      %v3079 = vadd.f32 %v2886, %v3078
      %v3080 = vpop.f32.mrb[0].mxu0
      %v3081 = vadd.f32 %v2888, %v3080
      %v3082 = vpop.f32.mrb[0].mxu0
      %v3083 = vadd.f32 %v2890, %v3082
      %v3084 = vpop.f32.mrb[0].mxu0
      %v3085 = vadd.f32 %v2892, %v3084
      %3086 = vmatprep.mubr.bf16.mxu0 0
      %3087 = vmatmul.mubr.bf16.gmra.mrb[0].mxu0 %v2414
      %v3088 = vpop.f32.mrb[0].mxu0
      %v3089 = vadd.f32 %v2896, %v3088
      %v3090 = vpop.f32.mrb[0].mxu0
      %v3091 = vadd.f32 %v2898, %v3090
      %v3092 = vpop.f32.mrb[0].mxu0
      %v3093 = vadd.f32 %v2900, %v3092
      %v3094 = vpop.f32.mrb[0].mxu0
      %v3095 = vadd.f32 %v2902, %v3094
      %3096 = vmatprep.mubr.bf16.mxu0 0
      %3097 = vmatmul.mubr.bf16.gmra.mrb[0].mxu0 %v2417
      %v3098 = vpop.f32.mrb[0].mxu0
      %v3099 = vadd.f32 %v2906, %v3098
      %v3100 = vpop.f32.mrb[0].mxu0
      %v3101 = vadd.f32 %v2908, %v3100
      %v3102 = vpop.f32.mrb[0].mxu0
      %v3103 = vadd.f32 %v2910, %v3102
      %v3104 = vpop.f32.mrb[0].mxu0
      %v3105 = vadd.f32 %v2912, %v3104
      %3106 = vmatprep.mubr.bf16.mxu0 0
      %3107 = vmatmul.mubr.bf16.gmra.mrb[0].mxu0 %v2420
      %v3108 = vpop.f32.mrb[0].mxu0
      %v3109 = vadd.f32 %v2916, %v3108
      %v3110 = vpop.f32.mrb[0].mxu0
      %v3111 = vadd.f32 %v2918, %v3110
      %v3112 = vpop.f32.mrb[0].mxu0
      %v3113 = vadd.f32 %v2920, %v3112
      %v3114 = vpop.f32.mrb[0].mxu0
      %v3115 = vadd.f32 %v2922, %v3114
      %3116 = vmatprep.mubr.bf16.mxu0 0
      %3117 = vmatmul.mubr.bf16.gmra.mrb[0].mxu0 %v2423
      %v3118 = vpop.f32.mrb[0].mxu0
      %v3119 = vadd.f32 %v2926, %v3118
      %v3120 = vpop.f32.mrb[0].mxu0
      %v3121 = vadd.f32 %v2928, %v3120
      %v3122 = vpop.f32.mrb[0].mxu0
      %v3123 = vadd.f32 %v2930, %v3122
      %v3124 = vpop.f32.mrb[0].mxu0
      %v3125 = vadd.f32 %v2932, %v3124
      %3126 = vmatprep.mubr.bf16.mxu0 0
      %3127 = vmatmul.mubr.bf16.gmra.mrb[0].mxu0 %v2426
      %v3128 = vpop.f32.mrb[0].mxu0
      %v3129 = vadd.f32 %v2936, %v3128
      %v3130 = vpop.f32.mrb[0].mxu0
      %v3131 = vadd.f32 %v2938, %v3130
      %v3132 = vpop.f32.mrb[0].mxu0
      %v3133 = vadd.f32 %v2940, %v3132
      %v3134 = vpop.f32.mrb[0].mxu0
      %v3135 = vadd.f32 %v2942, %v3134
      %3136 = vmatprep.mubr.bf16.mxu0 0
      %3137 = vmatmul.mubr.bf16.gmra.mrb[0].mxu0 %v2429
      %v3138 = vpop.f32.mrb[0].mxu0
      %v3139 = vadd.f32 %v2946, %v3138
      %v3140 = vpop.f32.mrb[0].mxu0
      %v3141 = vadd.f32 %v2948, %v3140
      %v3142 = vpop.f32.mrb[0].mxu0
      %v3143 = vadd.f32 %v2950, %v3142
      %v3144 = vpop.f32.mrb[0].mxu0
      %v3145 = vadd.f32 %v2952, %v3144
      %3146 = vmatprep.mubr.bf16.mxu0 0
      %3147 = vmatmul.mubr.bf16.gmra.mrb[0].mxu0 %v2432
      %v3148 = vpop.f32.mrb[0].mxu0
      %v3149 = vadd.f32 %v2956, %v3148
      %v3150 = vpop.f32.mrb[0].mxu0
      %v3151 = vadd.f32 %v2958, %v3150
      %v3152 = vpop.f32.mrb[0].mxu0
      %v3153 = vadd.f32 %v2960, %v3152
      %v3154 = vpop.f32.mrb[0].mxu0
      %v3155 = vadd.f32 %v2962, %v3154
      %3156 = vmatprep.mubr.bf16.mxu0 0
      %3157 = vmatmul.mubr.bf16.gmra.mrb[0].mxu0 %v2435
      %v3158 = vpop.f32.mrb[0].mxu0
      %v3159 = vadd.f32 %v2966, %v3158
      %v3160 = vpop.f32.mrb[0].mxu0
      %v3161 = vadd.f32 %v2968, %v3160
      %v3162 = vpop.f32.mrb[0].mxu0
      %v3163 = vadd.f32 %v2970, %v3162
      %v3164 = vpop.f32.mrb[0].mxu0
      %v3165 = vadd.f32 %v2972, %v3164
      %3166 = vmatprep.mubr.bf16.mxu0 0
      %3167 = vmatmul.mubr.bf16.gmra.mrb[0].mxu0 %v2438
      %v3168 = vpop.f32.mrb[0].mxu0
      %v3169 = vadd.f32 %v2976, %v3168
      %v3170 = vpop.f32.mrb[0].mxu0
      %v3171 = vadd.f32 %v2978, %v3170
      %v3172 = vpop.f32.mrb[0].mxu0
      %v3173 = vadd.f32 %v2980, %v3172
      %v3174 = vpop.f32.mrb[0].mxu0
      %v3175 = vadd.f32 %v2982, %v3174
      %3176 = vmatprep.mubr.bf16.mxu0 0
      %3177 = vmatmul.mubr.bf16.gmra.mrb[0].mxu0 %v2441
      %v3178 = vpop.f32.mrb[0].mxu0
      %v3179 = vadd.f32 %v2986, %v3178
      %v3180 = vpop.f32.mrb[0].mxu0
      %v3181 = vadd.f32 %v2988, %v3180
      %v3182 = vpop.f32.mrb[0].mxu0
      %v3183 = vadd.f32 %v2990, %v3182
      %v3184 = vpop.f32.mrb[0].mxu0
      %v3185 = vadd.f32 %v2992, %v3184
      %3186 = vmatprep.mubr.bf16.mxu0 0
      %3187 = vmatmul.mubr.bf16.gmra.mrb[0].mxu0 %v2444
      %v3188 = vpop.f32.mrb[0].mxu0
      %v3189 = vadd.f32 %v2996, %v3188
      %v3190 = vpop.f32.mrb[0].mxu0
      %v3191 = vadd.f32 %v2998, %v3190
      %v3192 = vpop.f32.mrb[0].mxu0
      %v3193 = vadd.f32 %v3000, %v3192
      %v3194 = vpop.f32.mrb[0].mxu0
      %v3195 = vadd.f32 %v3002, %v3194
      %3196 = vmatprep.mubr.bf16.mxu0 0
      %3197 = vmatmul.mubr.bf16.gmra.mrb[0].mxu0 %v2447
      %v3198 = vpop.f32.mrb[0].mxu0
      %v3199 = vadd.f32 %v3006, %v3198
      %v3200 = vpop.f32.mrb[0].mxu0
      %v3201 = vadd.f32 %v3008, %v3200
      %v3202 = vpop.f32.mrb[0].mxu0
      %v3203 = vadd.f32 %v3010, %v3202
      %v3204 = vpop.f32.mrb[0].mxu0
      %v3205 = vadd.f32 %v3012, %v3204
      %3206 = vmatprep.mubr.bf16.mxu0 0
      %3207 = vmatmul.mubr.bf16.gmra.mrb[0].mxu0 %v2450
      %v3208 = vpop.f32.mrb[0].mxu0
      %v3209 = vadd.f32 %v3016, %v3208
      %v3210 = vpop.f32.mrb[0].mxu0
      %v3211 = vadd.f32 %v3018, %v3210
      %v3212 = vpop.f32.mrb[0].mxu0
      %v3213 = vadd.f32 %v3020, %v3212
      %v3214 = vpop.f32.mrb[0].mxu0
      %v3215 = vadd.f32 %v3022, %v3214
      %3216 = vmatprep.mubr.bf16.mxu0 0
      %3217 = vmatmul.mubr.bf16.gmra.mrb[0].mxu0 %v2453
      %v3218 = vpop.f32.mrb[0].mxu0
      %v3219 = vadd.f32 %v3026, %v3218
      %v3220 = vpop.f32.mrb[0].mxu0
      %v3221 = vadd.f32 %v3028, %v3220
      %v3222 = vpop.f32.mrb[0].mxu0
      %v3223 = vadd.f32 %v3030, %v3222
      %v3224 = vpop.f32.mrb[0].mxu0
      %v3225 = vadd.f32 %v3032, %v3224
      %3226 = vdwg.mxu0
      %3227 = vmatprep.subr.bf16.mxu0 %v2017
      %3228 = vmatpush1.bf16.msra.mxu0 %v2016
      %3229 = vmatprep.subr.bf16.mxu0 %v2021
      %3230 = vmatpush1.bf16.msra.mxu0 %v2020
      %3231 = vmatprep.subr.bf16.mxu0 %v2025
      %3232 = vmatpush1.bf16.msra.mxu0 %v2024
      %3233 = vmatprep.subr.bf16.mxu0 %v2029
      %3234 = vmatpush1.bf16.msra.mxu0 %v2028
      %3235 = vmatprep.subr.bf16.mxu0 %v2033
      %3236 = vmatpush1.bf16.msra.mxu0 %v2032
      %3237 = vmatprep.subr.bf16.mxu0 %v2037
      %3238 = vmatpush1.bf16.msra.mxu0 %v2036
      %3239 = vmatprep.subr.bf16.mxu0 %v2041
      %3240 = vmatpush1.bf16.msra.mxu0 %v2040
      %3241 = vmatprep.subr.bf16.mxu0 %v2045
      %3242 = vmatpush1.bf16.msra.mxu0 %v2044
      %3243 = vmatprep.subr.bf16.mxu0 %v2049
      %3244 = vmatpush1.bf16.msra.mxu0 %v2048
      %3245 = vmatprep.subr.bf16.mxu0 %v2053
      %3246 = vmatpush1.bf16.msra.mxu0 %v2052
      %3247 = vmatprep.subr.bf16.mxu0 %v2057
      %3248 = vmatpush1.bf16.msra.mxu0 %v2056
      %3249 = vmatprep.subr.bf16.mxu0 %v2061
      %3250 = vmatpush1.bf16.msra.mxu0 %v2060
      %3251 = vmatprep.subr.bf16.mxu0 %v2065
      %3252 = vmatpush1.bf16.msra.mxu0 %v2064
      %3253 = vmatprep.subr.bf16.mxu0 %v2069
      %3254 = vmatpush1.bf16.msra.mxu0 %v2068
      %3255 = vmatprep.subr.bf16.mxu0 %v2073
      %3256 = vmatpush1.bf16.msra.mxu0 %v2072
      %3257 = vmatprep.subr.bf16.mxu0 %v2077
      %3258 = vmatpush1.bf16.msra.mxu0 %v2076
      %3259 = vmatprep.mubr.bf16.mxu0 %v1219
      %3260 = vmatmul.mubr.bf16.gmra.mrb[0].mxu0 %v1218
      %v3261 = vpop.f32.mrb[0].mxu0
      %v3262 = vadd.f32 0.0, %v3261
      %v3263 = vpop.f32.mrb[0].mxu0
      %v3264 = vadd.f32 0.0, %v3263
      %v3265 = vpop.f32.mrb[0].mxu0
      %v3266 = vadd.f32 0.0, %v3265
      %v3267 = vpop.f32.mrb[0].mxu0
      %v3268 = vadd.f32 0.0, %v3267
      %3269 = vmatprep.mubr.bf16.mxu0 %v1226
      %3270 = vmatmul.mubr.bf16.gmra.mrb[0].mxu0 %v1225
      %v3271 = vpop.f32.mrb[0].mxu0
      %v3272 = vadd.f32 0.0, %v3271
      %v3273 = vpop.f32.mrb[0].mxu0
      %v3274 = vadd.f32 0.0, %v3273
      %v3275 = vpop.f32.mrb[0].mxu0
      %v3276 = vadd.f32 0.0, %v3275
      %v3277 = vpop.f32.mrb[0].mxu0
      %v3278 = vadd.f32 0.0, %v3277
      %3279 = vmatprep.mubr.bf16.mxu0 %v1233
      %3280 = vmatmul.mubr.bf16.gmra.mrb[0].mxu0 %v1232
      %v3281 = vpop.f32.mrb[0].mxu0
      %v3282 = vadd.f32 0.0, %v3281
      %v3283 = vpop.f32.mrb[0].mxu0
      %v3284 = vadd.f32 0.0, %v3283
      %v3285 = vpop.f32.mrb[0].mxu0
      %v3286 = vadd.f32 0.0, %v3285
      %v3287 = vpop.f32.mrb[0].mxu0
      %v3288 = vadd.f32 0.0, %v3287
      %3289 = vmatprep.mubr.bf16.mxu0 %v1240
      %3290 = vmatmul.mubr.bf16.gmra.mrb[0].mxu0 %v1239
      %v3291 = vpop.f32.mrb[0].mxu0
      %v3292 = vadd.f32 0.0, %v3291
      %v3293 = vpop.f32.mrb[0].mxu0
      %v3294 = vadd.f32 0.0, %v3293
      %v3295 = vpop.f32.mrb[0].mxu0
      %v3296 = vadd.f32 0.0, %v3295
      %v3297 = vpop.f32.mrb[0].mxu0
      %v3298 = vadd.f32 0.0, %v3297
      %3299 = vmatprep.mubr.bf16.mxu0 %v1247
      %3300 = vmatmul.mubr.bf16.gmra.mrb[0].mxu0 %v1246
      %v3301 = vpop.f32.mrb[0].mxu0
      %v3302 = vadd.f32 0.0, %v3301
      %v3303 = vpop.f32.mrb[0].mxu0
      %v3304 = vadd.f32 0.0, %v3303
      %v3305 = vpop.f32.mrb[0].mxu0
      %v3306 = vadd.f32 0.0, %v3305
      %v3307 = vpop.f32.mrb[0].mxu0
      %v3308 = vadd.f32 0.0, %v3307
      %3309 = vmatprep.mubr.bf16.mxu0 %v1254
      %3310 = vmatmul.mubr.bf16.gmra.mrb[0].mxu0 %v1253
      %v3311 = vpop.f32.mrb[0].mxu0
      %v3312 = vadd.f32 0.0, %v3311
      %v3313 = vpop.f32.mrb[0].mxu0
      %v3314 = vadd.f32 0.0, %v3313
      %v3315 = vpop.f32.mrb[0].mxu0
      %v3316 = vadd.f32 0.0, %v3315
      %v3317 = vpop.f32.mrb[0].mxu0
      %v3318 = vadd.f32 0.0, %v3317
      %3319 = vmatprep.mubr.bf16.mxu0 %v1261
      %3320 = vmatmul.mubr.bf16.gmra.mrb[0].mxu0 %v1260
      %v3321 = vpop.f32.mrb[0].mxu0
      %v3322 = vadd.f32 0.0, %v3321
      %v3323 = vpop.f32.mrb[0].mxu0
      %v3324 = vadd.f32 0.0, %v3323
      %v3325 = vpop.f32.mrb[0].mxu0
      %v3326 = vadd.f32 0.0, %v3325
      %v3327 = vpop.f32.mrb[0].mxu0
      %v3328 = vadd.f32 0.0, %v3327
      %3329 = vmatprep.mubr.bf16.mxu0 %v1268
      %3330 = vmatmul.mubr.bf16.gmra.mrb[0].mxu0 %v1267
      %v3331 = vpop.f32.mrb[0].mxu0
      %v3332 = vadd.f32 0.0, %v3331
      %v3333 = vpop.f32.mrb[0].mxu0
      %v3334 = vadd.f32 0.0, %v3333
      %v3335 = vpop.f32.mrb[0].mxu0
      %v3336 = vadd.f32 0.0, %v3335
      %v3337 = vpop.f32.mrb[0].mxu0
      %v3338 = vadd.f32 0.0, %v3337
      %3339 = vmatprep.mubr.bf16.mxu0 %v1275
      %3340 = vmatmul.mubr.bf16.gmra.mrb[0].mxu0 %v1274
      %v3341 = vpop.f32.mrb[0].mxu0
      %v3342 = vadd.f32 0.0, %v3341
      %v3343 = vpop.f32.mrb[0].mxu0
      %v3344 = vadd.f32 0.0, %v3343
      %v3345 = vpop.f32.mrb[0].mxu0
      %v3346 = vadd.f32 0.0, %v3345
      %v3347 = vpop.f32.mrb[0].mxu0
      %v3348 = vadd.f32 0.0, %v3347
      %3349 = vmatprep.mubr.bf16.mxu0 %v1282
      %3350 = vmatmul.mubr.bf16.gmra.mrb[0].mxu0 %v1281
      %v3351 = vpop.f32.mrb[0].mxu0
      %v3352 = vadd.f32 0.0, %v3351
      %v3353 = vpop.f32.mrb[0].mxu0
      %v3354 = vadd.f32 0.0, %v3353
      %v3355 = vpop.f32.mrb[0].mxu0
      %v3356 = vadd.f32 0.0, %v3355
      %v3357 = vpop.f32.mrb[0].mxu0
      %v3358 = vadd.f32 0.0, %v3357
      %3359 = vmatprep.mubr.bf16.mxu0 %v1289
      %3360 = vmatmul.mubr.bf16.gmra.mrb[0].mxu0 %v1288
      %v3361 = vpop.f32.mrb[0].mxu0
      %v3362 = vadd.f32 0.0, %v3361
      %v3363 = vpop.f32.mrb[0].mxu0
      %v3364 = vadd.f32 0.0, %v3363
      %v3365 = vpop.f32.mrb[0].mxu0
      %v3366 = vadd.f32 0.0, %v3365
      %v3367 = vpop.f32.mrb[0].mxu0
      %v3368 = vadd.f32 0.0, %v3367
      %3369 = vmatprep.mubr.bf16.mxu0 %v1296
      %3370 = vmatmul.mubr.bf16.gmra.mrb[0].mxu0 %v1295
      %v3371 = vpop.f32.mrb[0].mxu0
      %v3372 = vadd.f32 0.0, %v3371
      %v3373 = vpop.f32.mrb[0].mxu0
      %v3374 = vadd.f32 0.0, %v3373
      %v3375 = vpop.f32.mrb[0].mxu0
      %v3376 = vadd.f32 0.0, %v3375
      %v3377 = vpop.f32.mrb[0].mxu0
      %v3378 = vadd.f32 0.0, %v3377
      %3379 = vmatprep.mubr.bf16.mxu0 %v1303
      %3380 = vmatmul.mubr.bf16.gmra.mrb[0].mxu0 %v1302
      %v3381 = vpop.f32.mrb[0].mxu0
      %v3382 = vadd.f32 0.0, %v3381
      %v3383 = vpop.f32.mrb[0].mxu0
      %v3384 = vadd.f32 0.0, %v3383
      %v3385 = vpop.f32.mrb[0].mxu0
      %v3386 = vadd.f32 0.0, %v3385
      %v3387 = vpop.f32.mrb[0].mxu0
      %v3388 = vadd.f32 0.0, %v3387
      %3389 = vmatprep.mubr.bf16.mxu0 %v1310
      %3390 = vmatmul.mubr.bf16.gmra.mrb[0].mxu0 %v1309
      %v3391 = vpop.f32.mrb[0].mxu0
      %v3392 = vadd.f32 0.0, %v3391
      %v3393 = vpop.f32.mrb[0].mxu0
      %v3394 = vadd.f32 0.0, %v3393
      %v3395 = vpop.f32.mrb[0].mxu0
      %v3396 = vadd.f32 0.0, %v3395
      %v3397 = vpop.f32.mrb[0].mxu0
      %v3398 = vadd.f32 0.0, %v3397
      %3399 = vmatprep.mubr.bf16.mxu0 %v1317
      %3400 = vmatmul.mubr.bf16.gmra.mrb[0].mxu0 %v1316
      %v3401 = vpop.f32.mrb[0].mxu0
      %v3402 = vadd.f32 0.0, %v3401
      %v3403 = vpop.f32.mrb[0].mxu0
      %v3404 = vadd.f32 0.0, %v3403
      %v3405 = vpop.f32.mrb[0].mxu0
      %v3406 = vadd.f32 0.0, %v3405
      %v3407 = vpop.f32.mrb[0].mxu0
      %v3408 = vadd.f32 0.0, %v3407
      %3409 = vmatprep.mubr.bf16.mxu0 %v1324
      %3410 = vmatmul.mubr.bf16.gmra.mrb[0].mxu0 %v1323
      %v3411 = vpop.f32.mrb[0].mxu0
      %v3412 = vadd.f32 0.0, %v3411
      %v3413 = vpop.f32.mrb[0].mxu0
      %v3414 = vadd.f32 0.0, %v3413
      %v3415 = vpop.f32.mrb[0].mxu0
      %v3416 = vadd.f32 0.0, %v3415
      %v3417 = vpop.f32.mrb[0].mxu0
      %v3418 = vadd.f32 0.0, %v3417
      %3419 = vdwg.mxu0
      %3420 = vmatprep.subr.bf16.mxu0 %v2081
      %3421 = vmatpush1.bf16.msra.mxu0 %v2080
      %3422 = vmatprep.subr.bf16.mxu0 %v2085
      %3423 = vmatpush1.bf16.msra.mxu0 %v2084
      %3424 = vmatprep.subr.bf16.mxu0 %v2089
      %3425 = vmatpush1.bf16.msra.mxu0 %v2088
      %3426 = vmatprep.subr.bf16.mxu0 %v2093
      %3427 = vmatpush1.bf16.msra.mxu0 %v2092
      %3428 = vmatprep.subr.bf16.mxu0 %v2097
      %3429 = vmatpush1.bf16.msra.mxu0 %v2096
      %3430 = vmatprep.subr.bf16.mxu0 %v2101
      %3431 = vmatpush1.bf16.msra.mxu0 %v2100
      %3432 = vmatprep.subr.bf16.mxu0 %v2105
      %3433 = vmatpush1.bf16.msra.mxu0 %v2104
      %3434 = vmatprep.subr.bf16.mxu0 %v2109
      %3435 = vmatpush1.bf16.msra.mxu0 %v2108
      %3436 = vmatprep.subr.bf16.mxu0 %v2113
      %3437 = vmatpush1.bf16.msra.mxu0 %v2112
      %3438 = vmatprep.subr.bf16.mxu0 %v2117
      %3439 = vmatpush1.bf16.msra.mxu0 %v2116
      %3440 = vmatprep.subr.bf16.mxu0 %v2121
      %3441 = vmatpush1.bf16.msra.mxu0 %v2120
      %3442 = vmatprep.subr.bf16.mxu0 %v2125
      %3443 = vmatpush1.bf16.msra.mxu0 %v2124
      %3444 = vmatprep.subr.bf16.mxu0 %v2129
      %3445 = vmatpush1.bf16.msra.mxu0 %v2128
      %3446 = vmatprep.subr.bf16.mxu0 %v2133
      %3447 = vmatpush1.bf16.msra.mxu0 %v2132
      %3448 = vmatprep.subr.bf16.mxu0 %v2137
      %3449 = vmatpush1.bf16.msra.mxu0 %v2136
      %3450 = vmatprep.subr.bf16.mxu0 %v2141
      %3451 = vmatpush1.bf16.msra.mxu0 %v2140
      %3452 = vmatprep.mubr.bf16.mxu0 %v1221
      %3453 = vmatmul.mubr.bf16.gmra.mrb[0].mxu0 %v1220
      %v3454 = vpop.f32.mrb[0].mxu0
      %v3455 = vadd.f32 %v3262, %v3454
      %v3456 = vpop.f32.mrb[0].mxu0
      %v3457 = vadd.f32 %v3264, %v3456
      %v3458 = vpop.f32.mrb[0].mxu0
      %v3459 = vadd.f32 %v3266, %v3458
      %v3460 = vpop.f32.mrb[0].mxu0
      %v3461 = vadd.f32 %v3268, %v3460
      %3462 = vmatprep.mubr.bf16.mxu0 %v1228
      %3463 = vmatmul.mubr.bf16.gmra.mrb[0].mxu0 %v1227
      %v3464 = vpop.f32.mrb[0].mxu0
      %v3465 = vadd.f32 %v3272, %v3464
      %v3466 = vpop.f32.mrb[0].mxu0
      %v3467 = vadd.f32 %v3274, %v3466
      %v3468 = vpop.f32.mrb[0].mxu0
      %v3469 = vadd.f32 %v3276, %v3468
      %v3470 = vpop.f32.mrb[0].mxu0
      %v3471 = vadd.f32 %v3278, %v3470
      %3472 = vmatprep.mubr.bf16.mxu0 %v1235
      %3473 = vmatmul.mubr.bf16.gmra.mrb[0].mxu0 %v1234
      %v3474 = vpop.f32.mrb[0].mxu0
      %v3475 = vadd.f32 %v3282, %v3474
      %v3476 = vpop.f32.mrb[0].mxu0
      %v3477 = vadd.f32 %v3284, %v3476
      %v3478 = vpop.f32.mrb[0].mxu0
      %v3479 = vadd.f32 %v3286, %v3478
      %v3480 = vpop.f32.mrb[0].mxu0
      %v3481 = vadd.f32 %v3288, %v3480
      %3482 = vmatprep.mubr.bf16.mxu0 %v1242
      %3483 = vmatmul.mubr.bf16.gmra.mrb[0].mxu0 %v1241
      %v3484 = vpop.f32.mrb[0].mxu0
      %v3485 = vadd.f32 %v3292, %v3484
      %v3486 = vpop.f32.mrb[0].mxu0
      %v3487 = vadd.f32 %v3294, %v3486
      %v3488 = vpop.f32.mrb[0].mxu0
      %v3489 = vadd.f32 %v3296, %v3488
      %v3490 = vpop.f32.mrb[0].mxu0
      %v3491 = vadd.f32 %v3298, %v3490
      %3492 = vmatprep.mubr.bf16.mxu0 %v1249
      %3493 = vmatmul.mubr.bf16.gmra.mrb[0].mxu0 %v1248
      %v3494 = vpop.f32.mrb[0].mxu0
      %v3495 = vadd.f32 %v3302, %v3494
      %v3496 = vpop.f32.mrb[0].mxu0
      %v3497 = vadd.f32 %v3304, %v3496
      %v3498 = vpop.f32.mrb[0].mxu0
      %v3499 = vadd.f32 %v3306, %v3498
      %v3500 = vpop.f32.mrb[0].mxu0
      %v3501 = vadd.f32 %v3308, %v3500
      %3502 = vmatprep.mubr.bf16.mxu0 %v1256
      %3503 = vmatmul.mubr.bf16.gmra.mrb[0].mxu0 %v1255
      %v3504 = vpop.f32.mrb[0].mxu0
      %v3505 = vadd.f32 %v3312, %v3504
      %v3506 = vpop.f32.mrb[0].mxu0
      %v3507 = vadd.f32 %v3314, %v3506
      %v3508 = vpop.f32.mrb[0].mxu0
      %v3509 = vadd.f32 %v3316, %v3508
      %v3510 = vpop.f32.mrb[0].mxu0
      %v3511 = vadd.f32 %v3318, %v3510
      %3512 = vmatprep.mubr.bf16.mxu0 %v1263
      %3513 = vmatmul.mubr.bf16.gmra.mrb[0].mxu0 %v1262
      %v3514 = vpop.f32.mrb[0].mxu0
      %v3515 = vadd.f32 %v3322, %v3514
      %v3516 = vpop.f32.mrb[0].mxu0
      %v3517 = vadd.f32 %v3324, %v3516
      %v3518 = vpop.f32.mrb[0].mxu0
      %v3519 = vadd.f32 %v3326, %v3518
      %v3520 = vpop.f32.mrb[0].mxu0
      %v3521 = vadd.f32 %v3328, %v3520
      %3522 = vmatprep.mubr.bf16.mxu0 %v1270
      %3523 = vmatmul.mubr.bf16.gmra.mrb[0].mxu0 %v1269
      %v3524 = vpop.f32.mrb[0].mxu0
      %v3525 = vadd.f32 %v3332, %v3524
      %v3526 = vpop.f32.mrb[0].mxu0
      %v3527 = vadd.f32 %v3334, %v3526
      %v3528 = vpop.f32.mrb[0].mxu0
      %v3529 = vadd.f32 %v3336, %v3528
      %v3530 = vpop.f32.mrb[0].mxu0
      %v3531 = vadd.f32 %v3338, %v3530
      %3532 = vmatprep.mubr.bf16.mxu0 %v1277
      %3533 = vmatmul.mubr.bf16.gmra.mrb[0].mxu0 %v1276
      %v3534 = vpop.f32.mrb[0].mxu0
      %v3535 = vadd.f32 %v3342, %v3534
      %v3536 = vpop.f32.mrb[0].mxu0
      %v3537 = vadd.f32 %v3344, %v3536
      %v3538 = vpop.f32.mrb[0].mxu0
      %v3539 = vadd.f32 %v3346, %v3538
      %v3540 = vpop.f32.mrb[0].mxu0
      %v3541 = vadd.f32 %v3348, %v3540
      %3542 = vmatprep.mubr.bf16.mxu0 %v1284
      %3543 = vmatmul.mubr.bf16.gmra.mrb[0].mxu0 %v1283
      %v3544 = vpop.f32.mrb[0].mxu0
      %v3545 = vadd.f32 %v3352, %v3544
      %v3546 = vpop.f32.mrb[0].mxu0
      %v3547 = vadd.f32 %v3354, %v3546
      %v3548 = vpop.f32.mrb[0].mxu0
      %v3549 = vadd.f32 %v3356, %v3548
      %v3550 = vpop.f32.mrb[0].mxu0
      %v3551 = vadd.f32 %v3358, %v3550
      %3552 = vmatprep.mubr.bf16.mxu0 %v1291
      %3553 = vmatmul.mubr.bf16.gmra.mrb[0].mxu0 %v1290
      %v3554 = vpop.f32.mrb[0].mxu0
      %v3555 = vadd.f32 %v3362, %v3554
      %v3556 = vpop.f32.mrb[0].mxu0
      %v3557 = vadd.f32 %v3364, %v3556
      %v3558 = vpop.f32.mrb[0].mxu0
      %v3559 = vadd.f32 %v3366, %v3558
      %v3560 = vpop.f32.mrb[0].mxu0
      %v3561 = vadd.f32 %v3368, %v3560
      %3562 = vmatprep.mubr.bf16.mxu0 %v1298
      %3563 = vmatmul.mubr.bf16.gmra.mrb[0].mxu0 %v1297
      %v3564 = vpop.f32.mrb[0].mxu0
      %v3565 = vadd.f32 %v3372, %v3564
      %v3566 = vpop.f32.mrb[0].mxu0
      %v3567 = vadd.f32 %v3374, %v3566
      %v3568 = vpop.f32.mrb[0].mxu0
      %v3569 = vadd.f32 %v3376, %v3568
      %v3570 = vpop.f32.mrb[0].mxu0
      %v3571 = vadd.f32 %v3378, %v3570
      %3572 = vmatprep.mubr.bf16.mxu0 %v1305
      %3573 = vmatmul.mubr.bf16.gmra.mrb[0].mxu0 %v1304
      %v3574 = vpop.f32.mrb[0].mxu0
      %v3575 = vadd.f32 %v3382, %v3574
      %v3576 = vpop.f32.mrb[0].mxu0
      %v3577 = vadd.f32 %v3384, %v3576
      %v3578 = vpop.f32.mrb[0].mxu0
      %v3579 = vadd.f32 %v3386, %v3578
      %v3580 = vpop.f32.mrb[0].mxu0
      %v3581 = vadd.f32 %v3388, %v3580
      %3582 = vmatprep.mubr.bf16.mxu0 %v1312
      %3583 = vmatmul.mubr.bf16.gmra.mrb[0].mxu0 %v1311
      %v3584 = vpop.f32.mrb[0].mxu0
      %v3585 = vadd.f32 %v3392, %v3584
      %v3586 = vpop.f32.mrb[0].mxu0
      %v3587 = vadd.f32 %v3394, %v3586
      %v3588 = vpop.f32.mrb[0].mxu0
      %v3589 = vadd.f32 %v3396, %v3588
      %v3590 = vpop.f32.mrb[0].mxu0
      %v3591 = vadd.f32 %v3398, %v3590
      %3592 = vmatprep.mubr.bf16.mxu0 %v1319
      %3593 = vmatmul.mubr.bf16.gmra.mrb[0].mxu0 %v1318
      %v3594 = vpop.f32.mrb[0].mxu0
      %v3595 = vadd.f32 %v3402, %v3594
      %v3596 = vpop.f32.mrb[0].mxu0
      %v3597 = vadd.f32 %v3404, %v3596
      %v3598 = vpop.f32.mrb[0].mxu0
      %v3599 = vadd.f32 %v3406, %v3598
      %v3600 = vpop.f32.mrb[0].mxu0
      %v3601 = vadd.f32 %v3408, %v3600
      %3602 = vmatprep.mubr.bf16.mxu0 %v1326
      %3603 = vmatmul.mubr.bf16.gmra.mrb[0].mxu0 %v1325
      %v3604 = vpop.f32.mrb[0].mxu0
      %v3605 = vadd.f32 %v3412, %v3604
      %v3606 = vpop.f32.mrb[0].mxu0
      %v3607 = vadd.f32 %v3414, %v3606
      %v3608 = vpop.f32.mrb[0].mxu0
      %v3609 = vadd.f32 %v3416, %v3608
      %v3610 = vpop.f32.mrb[0].mxu0
      %v3611 = vadd.f32 %v3418, %v3610
      %3612 = vdwg.mxu0
      %3613 = vmatprep.subr.bf16.mxu0 %v2145
      %3614 = vmatpush1.bf16.msra.mxu0 %v2144
      %3615 = vmatprep.subr.bf16.mxu0 %v2149
      %3616 = vmatpush1.bf16.msra.mxu0 %v2148
      %3617 = vmatprep.subr.bf16.mxu0 %v2153
      %3618 = vmatpush1.bf16.msra.mxu0 %v2152
      %3619 = vmatprep.subr.bf16.mxu0 %v2157
      %3620 = vmatpush1.bf16.msra.mxu0 %v2156
      %3621 = vmatprep.subr.bf16.mxu0 %v2161
      %3622 = vmatpush1.bf16.msra.mxu0 %v2160
      %3623 = vmatprep.subr.bf16.mxu0 %v2165
      %3624 = vmatpush1.bf16.msra.mxu0 %v2164
      %3625 = vmatprep.subr.bf16.mxu0 %v2169
      %3626 = vmatpush1.bf16.msra.mxu0 %v2168
      %3627 = vmatprep.subr.bf16.mxu0 %v2173
      %3628 = vmatpush1.bf16.msra.mxu0 %v2172
      %3629 = vmatprep.subr.bf16.mxu0 %v2177
      %3630 = vmatpush1.bf16.msra.mxu0 %v2176
      %3631 = vmatprep.subr.bf16.mxu0 %v2181
      %3632 = vmatpush1.bf16.msra.mxu0 %v2180
      %3633 = vmatprep.subr.bf16.mxu0 %v2185
      %3634 = vmatpush1.bf16.msra.mxu0 %v2184
      %3635 = vmatprep.subr.bf16.mxu0 %v2189
      %3636 = vmatpush1.bf16.msra.mxu0 %v2188
      %3637 = vmatprep.subr.bf16.mxu0 %v2193
      %3638 = vmatpush1.bf16.msra.mxu0 %v2192
      %3639 = vmatprep.subr.bf16.mxu0 %v2197
      %3640 = vmatpush1.bf16.msra.mxu0 %v2196
      %3641 = vmatprep.subr.bf16.mxu0 %v2201
      %3642 = vmatpush1.bf16.msra.mxu0 %v2200
      %3643 = vmatprep.subr.bf16.mxu0 %v2205
      %3644 = vmatpush1.bf16.msra.mxu0 %v2204
      %3645 = vmatprep.mubr.bf16.mxu0 %v1223
      %3646 = vmatmul.mubr.bf16.gmra.mrb[0].mxu0 %v1222
      %v3647 = vpop.f32.mrb[0].mxu0
      %v3648 = vadd.f32 %v3455, %v3647
      %v3649 = vpop.f32.mrb[0].mxu0
      %v3650 = vadd.f32 %v3457, %v3649
      %v3651 = vpop.f32.mrb[0].mxu0
      %v3652 = vadd.f32 %v3459, %v3651
      %v3653 = vpop.f32.mrb[0].mxu0
      %v3654 = vadd.f32 %v3461, %v3653
      %3655 = vmatprep.mubr.bf16.mxu0 %v1230
      %3656 = vmatmul.mubr.bf16.gmra.mrb[0].mxu0 %v1229
      %v3657 = vpop.f32.mrb[0].mxu0
      %v3658 = vadd.f32 %v3465, %v3657
      %v3659 = vpop.f32.mrb[0].mxu0
      %v3660 = vadd.f32 %v3467, %v3659
      %v3661 = vpop.f32.mrb[0].mxu0
      %v3662 = vadd.f32 %v3469, %v3661
      %v3663 = vpop.f32.mrb[0].mxu0
      %v3664 = vadd.f32 %v3471, %v3663
      %3665 = vmatprep.mubr.bf16.mxu0 %v1237
      %3666 = vmatmul.mubr.bf16.gmra.mrb[0].mxu0 %v1236
      %v3667 = vpop.f32.mrb[0].mxu0
      %v3668 = vadd.f32 %v3475, %v3667
      %v3669 = vpop.f32.mrb[0].mxu0
      %v3670 = vadd.f32 %v3477, %v3669
      %v3671 = vpop.f32.mrb[0].mxu0
      %v3672 = vadd.f32 %v3479, %v3671
      %v3673 = vpop.f32.mrb[0].mxu0
      %v3674 = vadd.f32 %v3481, %v3673
      %3675 = vmatprep.mubr.bf16.mxu0 %v1244
      %3676 = vmatmul.mubr.bf16.gmra.mrb[0].mxu0 %v1243
      %v3677 = vpop.f32.mrb[0].mxu0
      %v3678 = vadd.f32 %v3485, %v3677
      %v3679 = vpop.f32.mrb[0].mxu0
      %v3680 = vadd.f32 %v3487, %v3679
      %v3681 = vpop.f32.mrb[0].mxu0
      %v3682 = vadd.f32 %v3489, %v3681
      %v3683 = vpop.f32.mrb[0].mxu0
      %v3684 = vadd.f32 %v3491, %v3683
      %3685 = vmatprep.mubr.bf16.mxu0 %v1251
      %3686 = vmatmul.mubr.bf16.gmra.mrb[0].mxu0 %v1250
      %v3687 = vpop.f32.mrb[0].mxu0
      %v3688 = vadd.f32 %v3495, %v3687
      %v3689 = vpop.f32.mrb[0].mxu0
      %v3690 = vadd.f32 %v3497, %v3689
      %v3691 = vpop.f32.mrb[0].mxu0
      %v3692 = vadd.f32 %v3499, %v3691
      %v3693 = vpop.f32.mrb[0].mxu0
      %v3694 = vadd.f32 %v3501, %v3693
      %3695 = vmatprep.mubr.bf16.mxu0 %v1258
      %3696 = vmatmul.mubr.bf16.gmra.mrb[0].mxu0 %v1257
      %v3697 = vpop.f32.mrb[0].mxu0
      %v3698 = vadd.f32 %v3505, %v3697
      %v3699 = vpop.f32.mrb[0].mxu0
      %v3700 = vadd.f32 %v3507, %v3699
      %v3701 = vpop.f32.mrb[0].mxu0
      %v3702 = vadd.f32 %v3509, %v3701
      %v3703 = vpop.f32.mrb[0].mxu0
      %v3704 = vadd.f32 %v3511, %v3703
      %3705 = vmatprep.mubr.bf16.mxu0 %v1265
      %3706 = vmatmul.mubr.bf16.gmra.mrb[0].mxu0 %v1264
      %v3707 = vpop.f32.mrb[0].mxu0
      %v3708 = vadd.f32 %v3515, %v3707
      %v3709 = vpop.f32.mrb[0].mxu0
      %v3710 = vadd.f32 %v3517, %v3709
      %v3711 = vpop.f32.mrb[0].mxu0
      %v3712 = vadd.f32 %v3519, %v3711
      %v3713 = vpop.f32.mrb[0].mxu0
      %v3714 = vadd.f32 %v3521, %v3713
      %3715 = vmatprep.mubr.bf16.mxu0 %v1272
      %3716 = vmatmul.mubr.bf16.gmra.mrb[0].mxu0 %v1271
      %v3717 = vpop.f32.mrb[0].mxu0
      %v3718 = vadd.f32 %v3525, %v3717
      %v3719 = vpop.f32.mrb[0].mxu0
      %v3720 = vadd.f32 %v3527, %v3719
      %v3721 = vpop.f32.mrb[0].mxu0
      %v3722 = vadd.f32 %v3529, %v3721
      %v3723 = vpop.f32.mrb[0].mxu0
      %v3724 = vadd.f32 %v3531, %v3723
      %3725 = vmatprep.mubr.bf16.mxu0 %v1279
      %3726 = vmatmul.mubr.bf16.gmra.mrb[0].mxu0 %v1278
      %v3727 = vpop.f32.mrb[0].mxu0
      %v3728 = vadd.f32 %v3535, %v3727
      %v3729 = vpop.f32.mrb[0].mxu0
      %v3730 = vadd.f32 %v3537, %v3729
      %v3731 = vpop.f32.mrb[0].mxu0
      %v3732 = vadd.f32 %v3539, %v3731
      %v3733 = vpop.f32.mrb[0].mxu0
      %v3734 = vadd.f32 %v3541, %v3733
      %3735 = vmatprep.mubr.bf16.mxu0 %v1286
      %3736 = vmatmul.mubr.bf16.gmra.mrb[0].mxu0 %v1285
      %v3737 = vpop.f32.mrb[0].mxu0
      %v3738 = vadd.f32 %v3545, %v3737
      %v3739 = vpop.f32.mrb[0].mxu0
      %v3740 = vadd.f32 %v3547, %v3739
      %v3741 = vpop.f32.mrb[0].mxu0
      %v3742 = vadd.f32 %v3549, %v3741
      %v3743 = vpop.f32.mrb[0].mxu0
      %v3744 = vadd.f32 %v3551, %v3743
      %3745 = vmatprep.mubr.bf16.mxu0 %v1293
      %3746 = vmatmul.mubr.bf16.gmra.mrb[0].mxu0 %v1292
      %v3747 = vpop.f32.mrb[0].mxu0
      %v3748 = vadd.f32 %v3555, %v3747
      %v3749 = vpop.f32.mrb[0].mxu0
      %v3750 = vadd.f32 %v3557, %v3749
      %v3751 = vpop.f32.mrb[0].mxu0
      %v3752 = vadd.f32 %v3559, %v3751
      %v3753 = vpop.f32.mrb[0].mxu0
      %v3754 = vadd.f32 %v3561, %v3753
      %3755 = vmatprep.mubr.bf16.mxu0 %v1300
      %3756 = vmatmul.mubr.bf16.gmra.mrb[0].mxu0 %v1299
      %v3757 = vpop.f32.mrb[0].mxu0
      %v3758 = vadd.f32 %v3565, %v3757
      %v3759 = vpop.f32.mrb[0].mxu0
      %v3760 = vadd.f32 %v3567, %v3759
      %v3761 = vpop.f32.mrb[0].mxu0
      %v3762 = vadd.f32 %v3569, %v3761
      %v3763 = vpop.f32.mrb[0].mxu0
      %v3764 = vadd.f32 %v3571, %v3763
      %3765 = vmatprep.mubr.bf16.mxu0 %v1307
      %3766 = vmatmul.mubr.bf16.gmra.mrb[0].mxu0 %v1306
      %v3767 = vpop.f32.mrb[0].mxu0
      %v3768 = vadd.f32 %v3575, %v3767
      %v3769 = vpop.f32.mrb[0].mxu0
      %v3770 = vadd.f32 %v3577, %v3769
      %v3771 = vpop.f32.mrb[0].mxu0
      %v3772 = vadd.f32 %v3579, %v3771
      %v3773 = vpop.f32.mrb[0].mxu0
      %v3774 = vadd.f32 %v3581, %v3773
      %3775 = vmatprep.mubr.bf16.mxu0 %v1314
      %3776 = vmatmul.mubr.bf16.gmra.mrb[0].mxu0 %v1313
      %v3777 = vpop.f32.mrb[0].mxu0
      %v3778 = vadd.f32 %v3585, %v3777
      %v3779 = vpop.f32.mrb[0].mxu0
      %v3780 = vadd.f32 %v3587, %v3779
      %v3781 = vpop.f32.mrb[0].mxu0
      %v3782 = vadd.f32 %v3589, %v3781
      %v3783 = vpop.f32.mrb[0].mxu0
      %v3784 = vadd.f32 %v3591, %v3783
      %3785 = vmatprep.mubr.bf16.mxu0 %v1321
      %3786 = vmatmul.mubr.bf16.gmra.mrb[0].mxu0 %v1320
      %v3787 = vpop.f32.mrb[0].mxu0
      %v3788 = vadd.f32 %v3595, %v3787
      %v3789 = vpop.f32.mrb[0].mxu0
      %v3790 = vadd.f32 %v3597, %v3789
      %v3791 = vpop.f32.mrb[0].mxu0
      %v3792 = vadd.f32 %v3599, %v3791
      %v3793 = vpop.f32.mrb[0].mxu0
      %v3794 = vadd.f32 %v3601, %v3793
      %3795 = vmatprep.mubr.bf16.mxu0 %v1328
      %3796 = vmatmul.mubr.bf16.gmra.mrb[0].mxu0 %v1327
      %v3797 = vpop.f32.mrb[0].mxu0
      %v3798 = vadd.f32 %v3605, %v3797
      %v3799 = vpop.f32.mrb[0].mxu0
      %v3800 = vadd.f32 %v3607, %v3799
      %v3801 = vpop.f32.mrb[0].mxu0
      %v3802 = vadd.f32 %v3609, %v3801
      %v3803 = vpop.f32.mrb[0].mxu0
      %v3804 = vadd.f32 %v3611, %v3803
      %3805 = vdwg.mxu0
      %3806 = vmatprep.subr.bf16.mxu0 %v2209
      %3807 = vmatpush1.bf16.msra.mxu0 %v2208
      %3808 = vmatprep.subr.bf16.mxu0 0
      %3809 = vmatpush1.bf16.msra.mxu0 0
      %3810 = vmatprep.subr.bf16.mxu0 0
      %3811 = vmatpush1.bf16.msra.mxu0 0
      %3812 = vmatprep.subr.bf16.mxu0 0
      %3813 = vmatpush1.bf16.msra.mxu0 0
      %3814 = vmatprep.subr.bf16.mxu0 0
      %3815 = vmatpush1.bf16.msra.mxu0 0
      %3816 = vmatprep.subr.bf16.mxu0 0
      %3817 = vmatpush1.bf16.msra.mxu0 0
      %3818 = vmatprep.subr.bf16.mxu0 0
      %3819 = vmatpush1.bf16.msra.mxu0 0
      %3820 = vmatprep.subr.bf16.mxu0 0
      %3821 = vmatpush1.bf16.msra.mxu0 0
      %3822 = vmatprep.subr.bf16.mxu0 0
      %3823 = vmatpush1.bf16.msra.mxu0 0
      %3824 = vmatprep.subr.bf16.mxu0 0
      %3825 = vmatpush1.bf16.msra.mxu0 0
      %3826 = vmatprep.subr.bf16.mxu0 0
      %3827 = vmatpush1.bf16.msra.mxu0 0
      %3828 = vmatprep.subr.bf16.mxu0 0
      %3829 = vmatpush1.bf16.msra.mxu0 0
      %3830 = vmatprep.subr.bf16.mxu0 0
      %3831 = vmatpush1.bf16.msra.mxu0 0
      %3832 = vmatprep.subr.bf16.mxu0 0
      %3833 = vmatpush1.bf16.msra.mxu0 0
      %3834 = vmatprep.subr.bf16.mxu0 0
      %3835 = vmatpush1.bf16.msra.mxu0 0
      %3836 = vmatprep.subr.bf16.mxu0 0
      %3837 = vmatpush1.bf16.msra.mxu0 0
      %3838 = vmatprep.mubr.bf16.mxu0 0
      %3839 = vmatmul.mubr.bf16.gmra.mrb[0].mxu0 %v2408
      %v3840 = vpop.f32.mrb[0].mxu0
      %v3841 = vadd.f32 %v3648, %v3840
      %v3842 = vpop.f32.mrb[0].mxu0
      %v3843 = vadd.f32 %v3650, %v3842
      %v3844 = vpop.f32.mrb[0].mxu0
      %v3845 = vadd.f32 %v3652, %v3844
      %v3846 = vpop.f32.mrb[0].mxu0
      %v3847 = vadd.f32 %v3654, %v3846
      %3848 = vmatprep.mubr.bf16.mxu0 0
      %3849 = vmatmul.mubr.bf16.gmra.mrb[0].mxu0 %v2411
      %v3850 = vpop.f32.mrb[0].mxu0
      %v3851 = vadd.f32 %v3658, %v3850
      %v3852 = vpop.f32.mrb[0].mxu0
      %v3853 = vadd.f32 %v3660, %v3852
      %v3854 = vpop.f32.mrb[0].mxu0
      %v3855 = vadd.f32 %v3662, %v3854
      %v3856 = vpop.f32.mrb[0].mxu0
      %v3857 = vadd.f32 %v3664, %v3856
      %3858 = vmatprep.mubr.bf16.mxu0 0
      %3859 = vmatmul.mubr.bf16.gmra.mrb[0].mxu0 %v2414
      %v3860 = vpop.f32.mrb[0].mxu0
      %v3861 = vadd.f32 %v3668, %v3860
      %v3862 = vpop.f32.mrb[0].mxu0
      %v3863 = vadd.f32 %v3670, %v3862
      %v3864 = vpop.f32.mrb[0].mxu0
      %v3865 = vadd.f32 %v3672, %v3864
      %v3866 = vpop.f32.mrb[0].mxu0
      %v3867 = vadd.f32 %v3674, %v3866
      %3868 = vmatprep.mubr.bf16.mxu0 0
      %3869 = vmatmul.mubr.bf16.gmra.mrb[0].mxu0 %v2417
      %v3870 = vpop.f32.mrb[0].mxu0
      %v3871 = vadd.f32 %v3678, %v3870
      %v3872 = vpop.f32.mrb[0].mxu0
      %v3873 = vadd.f32 %v3680, %v3872
      %v3874 = vpop.f32.mrb[0].mxu0
      %v3875 = vadd.f32 %v3682, %v3874
      %v3876 = vpop.f32.mrb[0].mxu0
      %v3877 = vadd.f32 %v3684, %v3876
      %3878 = vmatprep.mubr.bf16.mxu0 0
      %3879 = vmatmul.mubr.bf16.gmra.mrb[0].mxu0 %v2420
      %v3880 = vpop.f32.mrb[0].mxu0
      %v3881 = vadd.f32 %v3688, %v3880
      %v3882 = vpop.f32.mrb[0].mxu0
      %v3883 = vadd.f32 %v3690, %v3882
      %v3884 = vpop.f32.mrb[0].mxu0
      %v3885 = vadd.f32 %v3692, %v3884
      %v3886 = vpop.f32.mrb[0].mxu0
      %v3887 = vadd.f32 %v3694, %v3886
      %3888 = vmatprep.mubr.bf16.mxu0 0
      %3889 = vmatmul.mubr.bf16.gmra.mrb[0].mxu0 %v2423
      %v3890 = vpop.f32.mrb[0].mxu0
      %v3891 = vadd.f32 %v3698, %v3890
      %v3892 = vpop.f32.mrb[0].mxu0
      %v3893 = vadd.f32 %v3700, %v3892
      %v3894 = vpop.f32.mrb[0].mxu0
      %v3895 = vadd.f32 %v3702, %v3894
      %v3896 = vpop.f32.mrb[0].mxu0
      %v3897 = vadd.f32 %v3704, %v3896
      %3898 = vmatprep.mubr.bf16.mxu0 0
      %3899 = vmatmul.mubr.bf16.gmra.mrb[0].mxu0 %v2426
      %v3900 = vpop.f32.mrb[0].mxu0
      %v3901 = vadd.f32 %v3708, %v3900
      %v3902 = vpop.f32.mrb[0].mxu0
      %v3903 = vadd.f32 %v3710, %v3902
      %v3904 = vpop.f32.mrb[0].mxu0
      %v3905 = vadd.f32 %v3712, %v3904
      %v3906 = vpop.f32.mrb[0].mxu0
      %v3907 = vadd.f32 %v3714, %v3906
      %3908 = vmatprep.mubr.bf16.mxu0 0
      %3909 = vmatmul.mubr.bf16.gmra.mrb[0].mxu0 %v2429
      %v3910 = vpop.f32.mrb[0].mxu0
      %v3911 = vadd.f32 %v3718, %v3910
      %v3912 = vpop.f32.mrb[0].mxu0
      %v3913 = vadd.f32 %v3720, %v3912
      %v3914 = vpop.f32.mrb[0].mxu0
      %v3915 = vadd.f32 %v3722, %v3914
      %v3916 = vpop.f32.mrb[0].mxu0
      %v3917 = vadd.f32 %v3724, %v3916
      %3918 = vmatprep.mubr.bf16.mxu0 0
      %3919 = vmatmul.mubr.bf16.gmra.mrb[0].mxu0 %v2432
      %v3920 = vpop.f32.mrb[0].mxu0
      %v3921 = vadd.f32 %v3728, %v3920
      %v3922 = vpop.f32.mrb[0].mxu0
      %v3923 = vadd.f32 %v3730, %v3922
      %v3924 = vpop.f32.mrb[0].mxu0
      %v3925 = vadd.f32 %v3732, %v3924
      %v3926 = vpop.f32.mrb[0].mxu0
      %v3927 = vadd.f32 %v3734, %v3926
      %3928 = vmatprep.mubr.bf16.mxu0 0
      %3929 = vmatmul.mubr.bf16.gmra.mrb[0].mxu0 %v2435
      %v3930 = vpop.f32.mrb[0].mxu0
      %v3931 = vadd.f32 %v3738, %v3930
      %v3932 = vpop.f32.mrb[0].mxu0
      %v3933 = vadd.f32 %v3740, %v3932
      %v3934 = vpop.f32.mrb[0].mxu0
      %v3935 = vadd.f32 %v3742, %v3934
      %v3936 = vpop.f32.mrb[0].mxu0
      %v3937 = vadd.f32 %v3744, %v3936
      %3938 = vmatprep.mubr.bf16.mxu0 0
      %3939 = vmatmul.mubr.bf16.gmra.mrb[0].mxu0 %v2438
      %v3940 = vpop.f32.mrb[0].mxu0
      %v3941 = vadd.f32 %v3748, %v3940
      %v3942 = vpop.f32.mrb[0].mxu0
      %v3943 = vadd.f32 %v3750, %v3942
      %v3944 = vpop.f32.mrb[0].mxu0
      %v3945 = vadd.f32 %v3752, %v3944
      %v3946 = vpop.f32.mrb[0].mxu0
      %v3947 = vadd.f32 %v3754, %v3946
      %3948 = vmatprep.mubr.bf16.mxu0 0
      %3949 = vmatmul.mubr.bf16.gmra.mrb[0].mxu0 %v2441
      %v3950 = vpop.f32.mrb[0].mxu0
      %v3951 = vadd.f32 %v3758, %v3950
      %v3952 = vpop.f32.mrb[0].mxu0
      %v3953 = vadd.f32 %v3760, %v3952
      %v3954 = vpop.f32.mrb[0].mxu0
      %v3955 = vadd.f32 %v3762, %v3954
      %v3956 = vpop.f32.mrb[0].mxu0
      %v3957 = vadd.f32 %v3764, %v3956
      %3958 = vmatprep.mubr.bf16.mxu0 0
      %3959 = vmatmul.mubr.bf16.gmra.mrb[0].mxu0 %v2444
      %v3960 = vpop.f32.mrb[0].mxu0
      %v3961 = vadd.f32 %v3768, %v3960
      %v3962 = vpop.f32.mrb[0].mxu0
      %v3963 = vadd.f32 %v3770, %v3962
      %v3964 = vpop.f32.mrb[0].mxu0
      %v3965 = vadd.f32 %v3772, %v3964
      %v3966 = vpop.f32.mrb[0].mxu0
      %v3967 = vadd.f32 %v3774, %v3966
      %3968 = vmatprep.mubr.bf16.mxu0 0
      %3969 = vmatmul.mubr.bf16.gmra.mrb[0].mxu0 %v2447
      %v3970 = vpop.f32.mrb[0].mxu0
      %v3971 = vadd.f32 %v3778, %v3970
      %v3972 = vpop.f32.mrb[0].mxu0
      %v3973 = vadd.f32 %v3780, %v3972
      %v3974 = vpop.f32.mrb[0].mxu0
      %v3975 = vadd.f32 %v3782, %v3974
      %v3976 = vpop.f32.mrb[0].mxu0
      %v3977 = vadd.f32 %v3784, %v3976
      %3978 = vmatprep.mubr.bf16.mxu0 0
      %3979 = vmatmul.mubr.bf16.gmra.mrb[0].mxu0 %v2450
      %v3980 = vpop.f32.mrb[0].mxu0
      %v3981 = vadd.f32 %v3788, %v3980
      %v3982 = vpop.f32.mrb[0].mxu0
      %v3983 = vadd.f32 %v3790, %v3982
      %v3984 = vpop.f32.mrb[0].mxu0
      %v3985 = vadd.f32 %v3792, %v3984
      %v3986 = vpop.f32.mrb[0].mxu0
      %v3987 = vadd.f32 %v3794, %v3986
      %3988 = vmatprep.mubr.bf16.mxu0 0
      %3989 = vmatmul.mubr.bf16.gmra.mrb[0].mxu0 %v2453
      %v3990 = vpop.f32.mrb[0].mxu0
      %v3991 = vadd.f32 %v3798, %v3990
      %v3992 = vpop.f32.mrb[0].mxu0
      %v3993 = vadd.f32 %v3800, %v3992
      %v3994 = vpop.f32.mrb[0].mxu0
      %v3995 = vadd.f32 %v3802, %v3994
      %v3996 = vpop.f32.mrb[0].mxu0
      %v3997 = vadd.f32 %v3804, %v3996
      %3998 = vdwg.mxu0
      %v3999 = vpack.c.bf16 %v3073, %v3069
      %v4000 = vpack.c.bf16 %v3075, %v3071
      %v4001 = vpack.c.bf16 %v3845, %v3841
      %v4002 = vpack.c.bf16 %v3847, %v3843
      %v4003 = vpack.c.bf16 %v3083, %v3079
      %v4004 = vpack.c.bf16 %v3085, %v3081
      %v4005 = vpack.c.bf16 %v3855, %v3851
      %v4006 = vpack.c.bf16 %v3857, %v3853
      %v4007 = vpack.c.bf16 %v3093, %v3089
      %v4008 = vpack.c.bf16 %v3095, %v3091
      %v4009 = vpack.c.bf16 %v3865, %v3861
      %v4010 = vpack.c.bf16 %v3867, %v3863
      %v4011 = vpack.c.bf16 %v3103, %v3099
      %v4012 = vpack.c.bf16 %v3105, %v3101
      %v4013 = vpack.c.bf16 %v3875, %v3871
      %v4014 = vpack.c.bf16 %v3877, %v3873
      %v4015 = vpack.c.bf16 %v3113, %v3109
      %v4016 = vpack.c.bf16 %v3115, %v3111
      %v4017 = vpack.c.bf16 %v3885, %v3881
      %v4018 = vpack.c.bf16 %v3887, %v3883
      %v4019 = vpack.c.bf16 %v3123, %v3119
      %v4020 = vpack.c.bf16 %v3125, %v3121
      %v4021 = vpack.c.bf16 %v3895, %v3891
      %v4022 = vpack.c.bf16 %v3897, %v3893
      %v4023 = vpack.c.bf16 %v3133, %v3129
      %v4024 = vpack.c.bf16 %v3135, %v3131
      %v4025 = vpack.c.bf16 %v3905, %v3901
      %v4026 = vpack.c.bf16 %v3907, %v3903
      %v4027 = vpack.c.bf16 %v3143, %v3139
      %v4028 = vpack.c.bf16 %v3145, %v3141
      %v4029 = vpack.c.bf16 %v3915, %v3911
      %v4030 = vpack.c.bf16 %v3917, %v3913
      %v4031 = vpack.c.bf16 %v3153, %v3149
      %v4032 = vpack.c.bf16 %v3155, %v3151
      %v4033 = vpack.c.bf16 %v3925, %v3921
      %v4034 = vpack.c.bf16 %v3927, %v3923
      %v4035 = vpack.c.bf16 %v3163, %v3159
      %v4036 = vpack.c.bf16 %v3165, %v3161
      %v4037 = vpack.c.bf16 %v3935, %v3931
      %v4038 = vpack.c.bf16 %v3937, %v3933
      %v4039 = vpack.c.bf16 %v3173, %v3169
      %v4040 = vpack.c.bf16 %v3175, %v3171
      %v4041 = vpack.c.bf16 %v3945, %v3941
      %v4042 = vpack.c.bf16 %v3947, %v3943
      %v4043 = vpack.c.bf16 %v3183, %v3179
      %v4044 = vpack.c.bf16 %v3185, %v3181
      %v4045 = vpack.c.bf16 %v3955, %v3951
      %v4046 = vpack.c.bf16 %v3957, %v3953
      %v4047 = vpack.c.bf16 %v3193, %v3189
      %v4048 = vpack.c.bf16 %v3195, %v3191
      %v4049 = vpack.c.bf16 %v3965, %v3961
      %v4050 = vpack.c.bf16 %v3967, %v3963
      %v4051 = vpack.c.bf16 %v3203, %v3199
      %v4052 = vpack.c.bf16 %v3205, %v3201
      %v4053 = vpack.c.bf16 %v3975, %v3971
      %v4054 = vpack.c.bf16 %v3977, %v3973
      %v4055 = vpack.c.bf16 %v3213, %v3209
      %v4056 = vpack.c.bf16 %v3215, %v3211
      %v4057 = vpack.c.bf16 %v3985, %v3981
      %v4058 = vpack.c.bf16 %v3987, %v3983
      %v4059 = vpack.c.bf16 %v3223, %v3219
      %v4060 = vpack.c.bf16 %v3225, %v3221
      %v4061 = vpack.c.bf16 %v3995, %v3991
      %v4062 = vpack.c.bf16 %v3997, %v3993
      %v4063 = vld [vmem:[%s3] sm:$0xf]
      %v4065 = vlaneseq
      %v4066 = vshrl.u32 %v4065, 7
      %v4067 = vsub.s32 0, %v4066
      %v4068 = vrot.slane %v4063, %v4067
      %v4069 = vlaneseq
      %v4070 = vshrl.u32 %v4069, 7
      %v4071 = vsub.s32 1, %v4070
      %v4072 = vrot.slane %v4063, %v4071
      %v4073 = vlaneseq
      %v4074 = vshrl.u32 %v4073, 7
      %v4075 = vsub.s32 2, %v4074
      %v4076 = vrot.slane %v4063, %v4075
      %v4077 = vlaneseq
      %v4078 = vshrl.u32 %v4077, 7
      %v4079 = vsub.s32 3, %v4078
      %v4080 = vrot.slane %v4063, %v4079
      %v4085 = vpack.c.bf16 %v4068, %v4068
      %v4086 = vpack.c.bf16 %v4072, %v4072
      %v4087 = vpack.c.bf16 %v4076, %v4076
      %v4088 = vpack.c.bf16 %v4080, %v4080
      %v4090 = vpack.i.b16 %v4085, %v4085
      %v4092 = vlaneseq
      %v4093 = vshrl.u32 %v4092, 7
      %v4094 = vsub.s32 0, %v4093
      %v4095 = vrot.slane %v4090, %v4094
      %v4097 = vpack.i.b16 %v4086, %v4086
      %v4099 = vlaneseq
      %v4100 = vshrl.u32 %v4099, 7
      %v4101 = vsub.s32 0, %v4100
      %v4102 = vrot.slane %v4097, %v4101
      %v4104 = vpack.i.b16 %v4087, %v4087
      %v4106 = vlaneseq
      %v4107 = vshrl.u32 %v4106, 7
      %v4108 = vsub.s32 0, %v4107
      %v4109 = vrot.slane %v4104, %v4108
      %v4111 = vpack.i.b16 %v4088, %v4088
      %v4113 = vlaneseq
      %v4114 = vshrl.u32 %v4113, 7
      %v4115 = vsub.s32 0, %v4114
      %v4116 = vrot.slane %v4111, %v4115
      %v4117 = vadd.bf16 %v3999, %v4095
      %v4118 = vadd.bf16 %v4000, %v4102
      %v4119 = vadd.bf16 %v4001, %v4109
      %v4120 = vadd.bf16 %v4002, %v4116
      %v4121 = vadd.bf16 %v4003, %v4095
      %v4122 = vadd.bf16 %v4004, %v4102
      %v4123 = vadd.bf16 %v4005, %v4109
      %v4124 = vadd.bf16 %v4006, %v4116
      %v4125 = vadd.bf16 %v4007, %v4095
      %v4126 = vadd.bf16 %v4008, %v4102
      %v4127 = vadd.bf16 %v4009, %v4109
      %v4128 = vadd.bf16 %v4010, %v4116
      %v4129 = vadd.bf16 %v4011, %v4095
      %v4130 = vadd.bf16 %v4012, %v4102
      %v4131 = vadd.bf16 %v4013, %v4109
      %v4132 = vadd.bf16 %v4014, %v4116
      %v4133 = vadd.bf16 %v4015, %v4095
      %v4134 = vadd.bf16 %v4016, %v4102
      %v4135 = vadd.bf16 %v4017, %v4109
      %v4136 = vadd.bf16 %v4018, %v4116
      %v4137 = vadd.bf16 %v4019, %v4095
      %v4138 = vadd.bf16 %v4020, %v4102
      %v4139 = vadd.bf16 %v4021, %v4109
      %v4140 = vadd.bf16 %v4022, %v4116
      %v4141 = vadd.bf16 %v4023, %v4095
      %v4142 = vadd.bf16 %v4024, %v4102
      %v4143 = vadd.bf16 %v4025, %v4109
      %v4144 = vadd.bf16 %v4026, %v4116
      %v4145 = vadd.bf16 %v4027, %v4095
      %v4146 = vadd.bf16 %v4028, %v4102
      %v4147 = vadd.bf16 %v4029, %v4109
      %v4148 = vadd.bf16 %v4030, %v4116
      %v4149 = vadd.bf16 %v4031, %v4095
      %v4150 = vadd.bf16 %v4032, %v4102
      %v4151 = vadd.bf16 %v4033, %v4109
      %v4152 = vadd.bf16 %v4034, %v4116
      %v4153 = vadd.bf16 %v4035, %v4095
      %v4154 = vadd.bf16 %v4036, %v4102
      %v4155 = vadd.bf16 %v4037, %v4109
      %v4156 = vadd.bf16 %v4038, %v4116
      %v4157 = vadd.bf16 %v4039, %v4095
      %v4158 = vadd.bf16 %v4040, %v4102
      %v4159 = vadd.bf16 %v4041, %v4109
      %v4160 = vadd.bf16 %v4042, %v4116
      %v4161 = vadd.bf16 %v4043, %v4095
      %v4162 = vadd.bf16 %v4044, %v4102
      %v4163 = vadd.bf16 %v4045, %v4109
      %v4164 = vadd.bf16 %v4046, %v4116
      %v4165 = vadd.bf16 %v4047, %v4095
      %v4166 = vadd.bf16 %v4048, %v4102
      %v4167 = vadd.bf16 %v4049, %v4109
      %v4168 = vadd.bf16 %v4050, %v4116
      %v4169 = vadd.bf16 %v4051, %v4095
      %v4170 = vadd.bf16 %v4052, %v4102
      %v4171 = vadd.bf16 %v4053, %v4109
      %v4172 = vadd.bf16 %v4054, %v4116
      %v4173 = vadd.bf16 %v4055, %v4095
      %v4174 = vadd.bf16 %v4056, %v4102
      %v4175 = vadd.bf16 %v4057, %v4109
      %v4176 = vadd.bf16 %v4058, %v4116
      %v4177 = vadd.bf16 %v4059, %v4095
      %v4178 = vadd.bf16 %v4060, %v4102
      %v4179 = vadd.bf16 %v4061, %v4109
      %v4180 = vadd.bf16 %v4062, %v4116
      %vm4181 = vcmp.ge.bf16.partialorder %v4117, 0
      %vm4182 = vcmp.ge.bf16.partialorder %v4118, 0
      %vm4183 = vcmp.ge.bf16.partialorder %v4119, 0
      %vm4184 = vcmp.ge.bf16.partialorder %v4120, 0
      %vm4185 = vcmp.ge.bf16.partialorder %v4121, 0
      %vm4186 = vcmp.ge.bf16.partialorder %v4122, 0
      %vm4187 = vcmp.ge.bf16.partialorder %v4123, 0
      %vm4188 = vcmp.ge.bf16.partialorder %v4124, 0
      %vm4189 = vcmp.ge.bf16.partialorder %v4125, 0
      %vm4190 = vcmp.ge.bf16.partialorder %v4126, 0
      %vm4191 = vcmp.ge.bf16.partialorder %v4127, 0
      %vm4192 = vcmp.ge.bf16.partialorder %v4128, 0
      %vm4193 = vcmp.ge.bf16.partialorder %v4129, 0
      %vm4194 = vcmp.ge.bf16.partialorder %v4130, 0
      %vm4195 = vcmp.ge.bf16.partialorder %v4131, 0
      %vm4196 = vcmp.ge.bf16.partialorder %v4132, 0
      %vm4197 = vcmp.ge.bf16.partialorder %v4133, 0
      %vm4198 = vcmp.ge.bf16.partialorder %v4134, 0
      %vm4199 = vcmp.ge.bf16.partialorder %v4135, 0
      %vm4200 = vcmp.ge.bf16.partialorder %v4136, 0
      %vm4201 = vcmp.ge.bf16.partialorder %v4137, 0
      %vm4202 = vcmp.ge.bf16.partialorder %v4138, 0
      %vm4203 = vcmp.ge.bf16.partialorder %v4139, 0
      %vm4204 = vcmp.ge.bf16.partialorder %v4140, 0
      %vm4205 = vcmp.ge.bf16.partialorder %v4141, 0
      %vm4206 = vcmp.ge.bf16.partialorder %v4142, 0
      %vm4207 = vcmp.ge.bf16.partialorder %v4143, 0
      %vm4208 = vcmp.ge.bf16.partialorder %v4144, 0
      %vm4209 = vcmp.ge.bf16.partialorder %v4145, 0
      %vm4210 = vcmp.ge.bf16.partialorder %v4146, 0
      %vm4211 = vcmp.ge.bf16.partialorder %v4147, 0
      %vm4212 = vcmp.ge.bf16.partialorder %v4148, 0
      %vm4213 = vcmp.ge.bf16.partialorder %v4149, 0
      %vm4214 = vcmp.ge.bf16.partialorder %v4150, 0
      %vm4215 = vcmp.ge.bf16.partialorder %v4151, 0
      %vm4216 = vcmp.ge.bf16.partialorder %v4152, 0
      %vm4217 = vcmp.ge.bf16.partialorder %v4153, 0
      %vm4218 = vcmp.ge.bf16.partialorder %v4154, 0
      %vm4219 = vcmp.ge.bf16.partialorder %v4155, 0
      %vm4220 = vcmp.ge.bf16.partialorder %v4156, 0
      %vm4221 = vcmp.ge.bf16.partialorder %v4157, 0
      %vm4222 = vcmp.ge.bf16.partialorder %v4158, 0
      %vm4223 = vcmp.ge.bf16.partialorder %v4159, 0
      %vm4224 = vcmp.ge.bf16.partialorder %v4160, 0
      %vm4225 = vcmp.ge.bf16.partialorder %v4161, 0
      %vm4226 = vcmp.ge.bf16.partialorder %v4162, 0
      %vm4227 = vcmp.ge.bf16.partialorder %v4163, 0
      %vm4228 = vcmp.ge.bf16.partialorder %v4164, 0
      %vm4229 = vcmp.ge.bf16.partialorder %v4165, 0
      %vm4230 = vcmp.ge.bf16.partialorder %v4166, 0
      %vm4231 = vcmp.ge.bf16.partialorder %v4167, 0
      %vm4232 = vcmp.ge.bf16.partialorder %v4168, 0
      %vm4233 = vcmp.ge.bf16.partialorder %v4169, 0
      %vm4234 = vcmp.ge.bf16.partialorder %v4170, 0
      %vm4235 = vcmp.ge.bf16.partialorder %v4171, 0
      %vm4236 = vcmp.ge.bf16.partialorder %v4172, 0
      %vm4237 = vcmp.ge.bf16.partialorder %v4173, 0
      %vm4238 = vcmp.ge.bf16.partialorder %v4174, 0
      %vm4239 = vcmp.ge.bf16.partialorder %v4175, 0
      %vm4240 = vcmp.ge.bf16.partialorder %v4176, 0
      %vm4241 = vcmp.ge.bf16.partialorder %v4177, 0
      %vm4242 = vcmp.ge.bf16.partialorder %v4178, 0
      %vm4243 = vcmp.ge.bf16.partialorder %v4179, 0
      %vm4244 = vcmp.ge.bf16.partialorder %v4180, 0
      %v4245 = vmul.bf16 %v4117, 1045249613
      %v4246 = vmul.bf16 %v4118, 1045249613
      %v4247 = vmul.bf16 %v4119, 1045249613
      %v4248 = vmul.bf16 %v4120, 1045249613
      %v4249 = vmul.bf16 %v4121, 1045249613
      %v4250 = vmul.bf16 %v4122, 1045249613
      %v4251 = vmul.bf16 %v4123, 1045249613
      %v4252 = vmul.bf16 %v4124, 1045249613
      %v4253 = vmul.bf16 %v4125, 1045249613
      %v4254 = vmul.bf16 %v4126, 1045249613
      %v4255 = vmul.bf16 %v4127, 1045249613
      %v4256 = vmul.bf16 %v4128, 1045249613
      %v4257 = vmul.bf16 %v4129, 1045249613
      %v4258 = vmul.bf16 %v4130, 1045249613
      %v4259 = vmul.bf16 %v4131, 1045249613
      %v4260 = vmul.bf16 %v4132, 1045249613
      %v4261 = vmul.bf16 %v4133, 1045249613
      %v4262 = vmul.bf16 %v4134, 1045249613
      %v4263 = vmul.bf16 %v4135, 1045249613
      %v4264 = vmul.bf16 %v4136, 1045249613
      %v4265 = vmul.bf16 %v4137, 1045249613
      %v4266 = vmul.bf16 %v4138, 1045249613
      %v4267 = vmul.bf16 %v4139, 1045249613
      %v4268 = vmul.bf16 %v4140, 1045249613
      %v4269 = vmul.bf16 %v4141, 1045249613
      %v4270 = vmul.bf16 %v4142, 1045249613
      %v4271 = vmul.bf16 %v4143, 1045249613
      %v4272 = vmul.bf16 %v4144, 1045249613
      %v4273 = vmul.bf16 %v4145, 1045249613
      %v4274 = vmul.bf16 %v4146, 1045249613
      %v4275 = vmul.bf16 %v4147, 1045249613
      %v4276 = vmul.bf16 %v4148, 1045249613
      %v4277 = vmul.bf16 %v4149, 1045249613
      %v4278 = vmul.bf16 %v4150, 1045249613
      %v4279 = vmul.bf16 %v4151, 1045249613
      %v4280 = vmul.bf16 %v4152, 1045249613
      %v4281 = vmul.bf16 %v4153, 1045249613
      %v4282 = vmul.bf16 %v4154, 1045249613
      %v4283 = vmul.bf16 %v4155, 1045249613
      %v4284 = vmul.bf16 %v4156, 1045249613
      %v4285 = vmul.bf16 %v4157, 1045249613
      %v4286 = vmul.bf16 %v4158, 1045249613
      %v4287 = vmul.bf16 %v4159, 1045249613
      %v4288 = vmul.bf16 %v4160, 1045249613
      %v4289 = vmul.bf16 %v4161, 1045249613
      %v4290 = vmul.bf16 %v4162, 1045249613
      %v4291 = vmul.bf16 %v4163, 1045249613
      %v4292 = vmul.bf16 %v4164, 1045249613
      %v4293 = vmul.bf16 %v4165, 1045249613
      %v4294 = vmul.bf16 %v4166, 1045249613
      %v4295 = vmul.bf16 %v4167, 1045249613
      %v4296 = vmul.bf16 %v4168, 1045249613
      %v4297 = vmul.bf16 %v4169, 1045249613
      %v4298 = vmul.bf16 %v4170, 1045249613
      %v4299 = vmul.bf16 %v4171, 1045249613
      %v4300 = vmul.bf16 %v4172, 1045249613
      %v4301 = vmul.bf16 %v4173, 1045249613
      %v4302 = vmul.bf16 %v4174, 1045249613
      %v4303 = vmul.bf16 %v4175, 1045249613
      %v4304 = vmul.bf16 %v4176, 1045249613
      %v4305 = vmul.bf16 %v4177, 1045249613
      %v4306 = vmul.bf16 %v4178, 1045249613
      %v4307 = vmul.bf16 %v4179, 1045249613
      %v4308 = vmul.bf16 %v4180, 1045249613
      %v4309 = vsel %vm4181, %v4117, %v4245
      %v4310 = vsel %vm4182, %v4118, %v4246
      %v4311 = vsel %vm4183, %v4119, %v4247
      %v4312 = vsel %vm4184, %v4120, %v4248
      %v4313 = vsel %vm4185, %v4121, %v4249
      %v4314 = vsel %vm4186, %v4122, %v4250
      %v4315 = vsel %vm4187, %v4123, %v4251
      %v4316 = vsel %vm4188, %v4124, %v4252
      %v4317 = vsel %vm4189, %v4125, %v4253
      %v4318 = vsel %vm4190, %v4126, %v4254
      %v4319 = vsel %vm4191, %v4127, %v4255
      %v4320 = vsel %vm4192, %v4128, %v4256
      %v4321 = vsel %vm4193, %v4129, %v4257
      %v4322 = vsel %vm4194, %v4130, %v4258
      %v4323 = vsel %vm4195, %v4131, %v4259
      %v4324 = vsel %vm4196, %v4132, %v4260
      %v4325 = vsel %vm4197, %v4133, %v4261
      %v4326 = vsel %vm4198, %v4134, %v4262
      %v4327 = vsel %vm4199, %v4135, %v4263
      %v4328 = vsel %vm4200, %v4136, %v4264
      %v4329 = vsel %vm4201, %v4137, %v4265
      %v4330 = vsel %vm4202, %v4138, %v4266
      %v4331 = vsel %vm4203, %v4139, %v4267
      %v4332 = vsel %vm4204, %v4140, %v4268
      %v4333 = vsel %vm4205, %v4141, %v4269
      %v4334 = vsel %vm4206, %v4142, %v4270
      %v4335 = vsel %vm4207, %v4143, %v4271
      %v4336 = vsel %vm4208, %v4144, %v4272
      %v4337 = vsel %vm4209, %v4145, %v4273
      %v4338 = vsel %vm4210, %v4146, %v4274
      %v4339 = vsel %vm4211, %v4147, %v4275
      %v4340 = vsel %vm4212, %v4148, %v4276
      %v4341 = vsel %vm4213, %v4149, %v4277
      %v4342 = vsel %vm4214, %v4150, %v4278
      %v4343 = vsel %vm4215, %v4151, %v4279
      %v4344 = vsel %vm4216, %v4152, %v4280
      %v4345 = vsel %vm4217, %v4153, %v4281
      %v4346 = vsel %vm4218, %v4154, %v4282
      %v4347 = vsel %vm4219, %v4155, %v4283
      %v4348 = vsel %vm4220, %v4156, %v4284
      %v4349 = vsel %vm4221, %v4157, %v4285
      %v4350 = vsel %vm4222, %v4158, %v4286
      %v4351 = vsel %vm4223, %v4159, %v4287
      %v4352 = vsel %vm4224, %v4160, %v4288
      %v4353 = vsel %vm4225, %v4161, %v4289
      %v4354 = vsel %vm4226, %v4162, %v4290
      %v4355 = vsel %vm4227, %v4163, %v4291
      %v4356 = vsel %vm4228, %v4164, %v4292
      %v4357 = vsel %vm4229, %v4165, %v4293
      %v4358 = vsel %vm4230, %v4166, %v4294
      %v4359 = vsel %vm4231, %v4167, %v4295
      %v4360 = vsel %vm4232, %v4168, %v4296
      %v4361 = vsel %vm4233, %v4169, %v4297
      %v4362 = vsel %vm4234, %v4170, %v4298
      %v4363 = vsel %vm4235, %v4171, %v4299
      %v4364 = vsel %vm4236, %v4172, %v4300
      %v4365 = vsel %vm4237, %v4173, %v4301
      %v4366 = vsel %vm4238, %v4174, %v4302
      %v4367 = vsel %vm4239, %v4175, %v4303
      %v4368 = vsel %vm4240, %v4176, %v4304
      %v4369 = vsel %vm4241, %v4177, %v4305
      %v4370 = vsel %vm4242, %v4178, %v4306
      %v4371 = vsel %vm4243, %v4179, %v4307
      %v4372 = vsel %vm4244, %v4180, %v4308
      %v4373 = vld [vmem:[%s4] sm:$0xff]
      %v4374 = vld [vmem:[%s4 + $0x8] sm:$0xff]
      %v4375 = vld [vmem:[%s4 + $0x10] sm:$0xff]
      %v4376 = vld [vmem:[%s4 + $0x18] sm:$0xff]
      %v4377 = vld [vmem:[%s4 + $0x20] sm:$0xff]
      %v4378 = vld [vmem:[%s4 + $0x28] sm:$0xff]
      %v4379 = vld [vmem:[%s4 + $0x30] sm:$0xff]
      %v4380 = vld [vmem:[%s4 + $0x38] sm:$0xff]
      %v4381 = vld [vmem:[%s4 + $0x40] sm:$0xff]
      %v4382 = vld [vmem:[%s4 + $0x48] sm:$0xff]
      %v4383 = vld [vmem:[%s4 + $0x50] sm:$0xff]
      %v4384 = vld [vmem:[%s4 + $0x58] sm:$0xff]
      %v4385 = vld [vmem:[%s4 + $0x60] sm:$0xff]
      %v4386 = vld [vmem:[%s4 + $0x68] sm:$0xff]
      %v4387 = vld [vmem:[%s4 + $0x70] sm:$0xff]
      %v4388 = vld [vmem:[%s4 + $0x78] sm:$0xff]
      %v4389 = vld [vmem:[%s4 + $0x80] sm:$0xff]
      %v4390 = vld [vmem:[%s4 + $0x88] sm:$0xff]
      %v4391 = vld [vmem:[%s4 + $0x90] sm:$0xff]
      %v4392 = vld [vmem:[%s4 + $0x98] sm:$0xff]
      %v4393 = vld [vmem:[%s4 + $0xa0] sm:$0xff]
      %v4394 = vld [vmem:[%s4 + $0xa8] sm:$0xff]
      %v4395 = vld [vmem:[%s4 + $0xb0] sm:$0xff]
      %v4396 = vld [vmem:[%s4 + $0xb8] sm:$0xff]
      %v4397 = vld [vmem:[%s4 + $0xc0] sm:$0xff]
      %v4398 = vld [vmem:[%s4 + $0xc8] sm:$0xff]
      %v4399 = vld [vmem:[%s4 + $0xd0] sm:$0xff]
      %v4400 = vld [vmem:[%s4 + $0xd8] sm:$0xff]
      %v4401 = vld [vmem:[%s4 + $0xe0] sm:$0xff]
      %v4402 = vld [vmem:[%s4 + $0xe8] sm:$0xff]
      %v4403 = vld [vmem:[%s4 + $0xf0] sm:$0xff]
      %v4404 = vld [vmem:[%s4 + $0xf8] sm:$0xff]
      %v4405 = vld [vmem:[%s4 + $0x100] sm:$0xff]
      %v4406 = vld [vmem:[%s4 + $0x108] sm:$0xff]
      %v4407 = vld [vmem:[%s4 + $0x110] sm:$0xff]
      %v4408 = vld [vmem:[%s4 + $0x118] sm:$0xff]
      %v4409 = vld [vmem:[%s4 + $0x120] sm:$0xff]
      %v4410 = vld [vmem:[%s4 + $0x128] sm:$0xff]
      %v4411 = vld [vmem:[%s4 + $0x130] sm:$0xff]
      %v4412 = vld [vmem:[%s4 + $0x138] sm:$0xff]
      %v4413 = vld [vmem:[%s4 + $0x140] sm:$0xff]
      %v4414 = vld [vmem:[%s4 + $0x148] sm:$0xff]
      %v4415 = vld [vmem:[%s4 + $0x150] sm:$0xff]
      %v4416 = vld [vmem:[%s4 + $0x158] sm:$0xff]
      %v4417 = vld [vmem:[%s4 + $0x160] sm:$0xff]
      %v4418 = vld [vmem:[%s4 + $0x168] sm:$0xff]
      %v4419 = vld [vmem:[%s4 + $0x170] sm:$0xff]
      %v4420 = vld [vmem:[%s4 + $0x178] sm:$0xff]
      %v4421 = vld [vmem:[%s4 + $0x180] sm:$0xff]
      %v4422 = vld [vmem:[%s4 + $0x188] sm:$0xff]
      %v4473 = vunpack.c.l.b16 %v4373
      %v4474 = vunpack.c.h.b16 %v4373
      %v4475 = vunpack.c.l.b16 %v4374
      %v4476 = vunpack.c.h.b16 %v4374
      %v4477 = vunpack.c.l.b16 %v4375
      %v4478 = vunpack.c.h.b16 %v4375
      %v4479 = vunpack.c.l.b16 %v4376
      %v4480 = vunpack.c.h.b16 %v4376
      %v4481 = vunpack.c.l.b16 %v4377
      %v4482 = vunpack.c.h.b16 %v4377
      %v4483 = vunpack.c.l.b16 %v4378
      %v4484 = vunpack.c.h.b16 %v4378
      %v4485 = vunpack.c.l.b16 %v4379
      %v4486 = vunpack.c.h.b16 %v4379
      %v4487 = vunpack.c.l.b16 %v4380
      %v4488 = vunpack.c.h.b16 %v4380
      %v4489 = vunpack.c.l.b16 %v4381
      %v4490 = vunpack.c.h.b16 %v4381
      %v4491 = vunpack.c.l.b16 %v4382
      %v4492 = vunpack.c.h.b16 %v4382
      %v4493 = vunpack.c.l.b16 %v4383
      %v4494 = vunpack.c.h.b16 %v4383
      %v4495 = vunpack.c.l.b16 %v4384
      %v4496 = vunpack.c.h.b16 %v4384
      %v4497 = vunpack.c.l.b16 %v4385
      %v4498 = vunpack.c.h.b16 %v4385
      %v4499 = vunpack.c.l.b16 %v4386
      %v4500 = vunpack.c.h.b16 %v4386
      %v4501 = vunpack.c.l.b16 %v4387
      %v4502 = vunpack.c.h.b16 %v4387
      %v4503 = vunpack.c.l.b16 %v4388
      %v4504 = vunpack.c.h.b16 %v4388
      %v4505 = vunpack.c.l.b16 %v4389
      %v4506 = vunpack.c.h.b16 %v4389
      %v4507 = vunpack.c.l.b16 %v4390
      %v4508 = vunpack.c.h.b16 %v4390
      %v4509 = vunpack.c.l.b16 %v4391
      %v4510 = vunpack.c.h.b16 %v4391
      %v4511 = vunpack.c.l.b16 %v4392
      %v4512 = vunpack.c.h.b16 %v4392
      %v4513 = vunpack.c.l.b16 %v4393
      %v4514 = vunpack.c.h.b16 %v4393
      %v4515 = vunpack.c.l.b16 %v4394
      %v4516 = vunpack.c.h.b16 %v4394
      %v4517 = vunpack.c.l.b16 %v4395
      %v4518 = vunpack.c.h.b16 %v4395
      %v4519 = vunpack.c.l.b16 %v4396
      %v4520 = vunpack.c.h.b16 %v4396
      %v4521 = vunpack.c.l.b16 %v4397
      %v4522 = vunpack.c.h.b16 %v4397
      %v4523 = vunpack.c.l.b16 %v4398
      %v4524 = vunpack.c.h.b16 %v4398
      %v4525 = vunpack.c.l.b16 %v4399
      %v4526 = vunpack.c.h.b16 %v4399
      %v4527 = vunpack.c.l.b16 %v4400
      %v4528 = vunpack.c.h.b16 %v4400
      %v4529 = vunpack.c.l.b16 %v4401
      %v4530 = vunpack.c.h.b16 %v4401
      %v4531 = vunpack.c.l.b16 %v4402
      %v4532 = vunpack.c.h.b16 %v4402
      %v4533 = vunpack.c.l.b16 %v4403
      %v4534 = vunpack.c.h.b16 %v4403
      %v4535 = vunpack.c.l.b16 %v4404
      %v4536 = vunpack.c.h.b16 %v4404
      %v4537 = vunpack.c.l.b16 %v4405
      %v4538 = vunpack.c.h.b16 %v4405
      %v4539 = vunpack.c.l.b16 %v4406
      %v4540 = vunpack.c.h.b16 %v4406
      %v4541 = vunpack.c.l.b16 %v4407
      %v4542 = vunpack.c.h.b16 %v4407
      %v4543 = vunpack.c.l.b16 %v4408
      %v4544 = vunpack.c.h.b16 %v4408
      %v4545 = vunpack.c.l.b16 %v4409
      %v4546 = vunpack.c.h.b16 %v4409
      %v4547 = vunpack.c.l.b16 %v4410
      %v4548 = vunpack.c.h.b16 %v4410
      %v4549 = vunpack.c.l.b16 %v4411
      %v4550 = vunpack.c.h.b16 %v4411
      %v4551 = vunpack.c.l.b16 %v4412
      %v4552 = vunpack.c.h.b16 %v4412
      %v4553 = vunpack.c.l.b16 %v4413
      %v4554 = vunpack.c.h.b16 %v4413
      %v4555 = vunpack.c.l.b16 %v4414
      %v4556 = vunpack.c.h.b16 %v4414
      %v4557 = vunpack.c.l.b16 %v4415
      %v4558 = vunpack.c.h.b16 %v4415
      %v4559 = vunpack.c.l.b16 %v4416
      %v4560 = vunpack.c.h.b16 %v4416
      %v4561 = vunpack.c.l.b16 %v4417
      %v4562 = vunpack.c.h.b16 %v4417
      %v4563 = vunpack.c.l.b16 %v4418
      %v4564 = vunpack.c.h.b16 %v4418
      %v4565 = vunpack.c.l.b16 %v4419
      %v4566 = vunpack.c.h.b16 %v4419
      %v4567 = vunpack.c.l.b16 %v4420
      %v4568 = vunpack.c.h.b16 %v4420
      %v4569 = vunpack.c.l.b16 %v4421
      %v4570 = vunpack.c.h.b16 %v4421
      %v4571 = vunpack.c.l.b16 %v4422
      %v4572 = vunpack.c.h.b16 %v4422
      %v4573 = vpack.c.b16 %v4475, %v4473
      %v4574 = vpack.c.b16 %v4476, %v4474
      %v4575 = vpack.c.b16 %v4479, %v4477
      %v4576 = vpack.c.b16 %v4480, %v4478
      %v4577 = vpack.c.b16 %v4483, %v4481
      %v4578 = vpack.c.b16 %v4484, %v4482
      %v4579 = vpack.c.b16 %v4487, %v4485
      %v4580 = vpack.c.b16 %v4488, %v4486
      %v4581 = vpack.c.b16 %v4491, %v4489
      %v4582 = vpack.c.b16 %v4492, %v4490
      %v4583 = vpack.c.b16 %v4495, %v4493
      %v4584 = vpack.c.b16 %v4496, %v4494
      %v4585 = vpack.c.b16 %v4499, %v4497
      %v4586 = vpack.c.b16 %v4500, %v4498
      %v4587 = vpack.c.b16 %v4503, %v4501
      %v4588 = vpack.c.b16 %v4504, %v4502
      %v4589 = vpack.c.b16 %v4507, %v4505
      %v4590 = vpack.c.b16 %v4508, %v4506
      %v4591 = vpack.c.b16 %v4511, %v4509
      %v4592 = vpack.c.b16 %v4512, %v4510
      %v4593 = vpack.c.b16 %v4515, %v4513
      %v4594 = vpack.c.b16 %v4516, %v4514
      %v4595 = vpack.c.b16 %v4519, %v4517
      %v4596 = vpack.c.b16 %v4520, %v4518
      %v4597 = vpack.c.b16 %v4523, %v4521
      %v4598 = vpack.c.b16 %v4524, %v4522
      %v4599 = vpack.c.b16 %v4527, %v4525
      %v4600 = vpack.c.b16 %v4528, %v4526
      %v4601 = vpack.c.b16 %v4531, %v4529
      %v4602 = vpack.c.b16 %v4532, %v4530
      %v4603 = vpack.c.b16 %v4535, %v4533
      %v4604 = vpack.c.b16 %v4536, %v4534
      %v4605 = vpack.c.b16 %v4539, %v4537
      %v4606 = vpack.c.b16 %v4540, %v4538
      %v4607 = vpack.c.b16 %v4543, %v4541
      %v4608 = vpack.c.b16 %v4544, %v4542
      %v4609 = vpack.c.b16 %v4547, %v4545
      %v4610 = vpack.c.b16 %v4548, %v4546
      %v4611 = vpack.c.b16 %v4551, %v4549
      %v4612 = vpack.c.b16 %v4552, %v4550
      %v4613 = vpack.c.b16 %v4555, %v4553
      %v4614 = vpack.c.b16 %v4556, %v4554
      %v4615 = vpack.c.b16 %v4559, %v4557
      %v4616 = vpack.c.b16 %v4560, %v4558
      %v4617 = vpack.c.b16 %v4563, %v4561
      %v4618 = vpack.c.b16 %v4564, %v4562
      %v4619 = vpack.c.b16 %v4567, %v4565
      %v4620 = vpack.c.b16 %v4568, %v4566
      %v4621 = vpack.c.b16 %v4571, %v4569
      %v4622 = vpack.c.b16 %v4572, %v4570
      %v4674 = vsel %vm2406, %v4312, 0
      %v4677 = vsel %vm2406, %v4316, 0
      %v4680 = vsel %vm2406, %v4320, 0
      %v4683 = vsel %vm2406, %v4324, 0
      %v4686 = vsel %vm2406, %v4328, 0
      %v4689 = vsel %vm2406, %v4332, 0
      %v4692 = vsel %vm2406, %v4336, 0
      %v4695 = vsel %vm2406, %v4340, 0
      %v4698 = vsel %vm2406, %v4344, 0
      %v4701 = vsel %vm2406, %v4348, 0
      %v4704 = vsel %vm2406, %v4352, 0
      %v4707 = vsel %vm2406, %v4356, 0
      %v4710 = vsel %vm2406, %v4360, 0
      %v4713 = vsel %vm2406, %v4364, 0
      %v4716 = vsel %vm2406, %v4368, 0
      %v4719 = vsel %vm2406, %v4372, 0
      %4721 = vmatprep.subr.bf16.mxu0 %v4574
      %4722 = vmatpush1.bf16.msra.mxu0 %v4573
      %4723 = vmatprep.subr.bf16.mxu0 %v4576
      %4724 = vmatpush1.bf16.msra.mxu0 %v4575
      %4725 = vmatprep.subr.bf16.mxu0 %v4578
      %4726 = vmatpush1.bf16.msra.mxu0 %v4577
      %4727 = vmatprep.subr.bf16.mxu0 %v4580
      %4728 = vmatpush1.bf16.msra.mxu0 %v4579
      %4729 = vmatprep.subr.bf16.mxu0 %v4582
      %4730 = vmatpush1.bf16.msra.mxu0 %v4581
      %4731 = vmatprep.subr.bf16.mxu0 %v4584
      %4732 = vmatpush1.bf16.msra.mxu0 %v4583
      %4733 = vmatprep.subr.bf16.mxu0 %v4586
      %4734 = vmatpush1.bf16.msra.mxu0 %v4585
      %4735 = vmatprep.subr.bf16.mxu0 %v4588
      %4736 = vmatpush1.bf16.msra.mxu0 %v4587
      %4737 = vmatprep.subr.bf16.mxu0 %v4590
      %4738 = vmatpush1.bf16.msra.mxu0 %v4589
      %4739 = vmatprep.subr.bf16.mxu0 %v4592
      %4740 = vmatpush1.bf16.msra.mxu0 %v4591
      %4741 = vmatprep.subr.bf16.mxu0 %v4594
      %4742 = vmatpush1.bf16.msra.mxu0 %v4593
      %4743 = vmatprep.subr.bf16.mxu0 %v4596
      %4744 = vmatpush1.bf16.msra.mxu0 %v4595
      %4745 = vmatprep.subr.bf16.mxu0 %v4598
      %4746 = vmatpush1.bf16.msra.mxu0 %v4597
      %4747 = vmatprep.subr.bf16.mxu0 %v4600
      %4748 = vmatpush1.bf16.msra.mxu0 %v4599
      %4749 = vmatprep.subr.bf16.mxu0 %v4602
      %4750 = vmatpush1.bf16.msra.mxu0 %v4601
      %4751 = vmatprep.subr.bf16.mxu0 %v4604
      %4752 = vmatpush1.bf16.msra.mxu0 %v4603
      %4753 = vmatprep.mubr.bf16.mxu0 %v4310
      %4754 = vmatmul.mubr.bf16.gmra.mrb[0].mxu0 %v4309
      %v4755 = vpop.f32.mrb[0].mxu0
      %v4756 = vadd.f32 0.0, %v4755
      %v4757 = vpop.f32.mrb[0].mxu0
      %v4758 = vadd.f32 0.0, %v4757
      %v4759 = vpop.f32.mrb[0].mxu0
      %v4760 = vadd.f32 0.0, %v4759
      %v4761 = vpop.f32.mrb[0].mxu0
      %v4762 = vadd.f32 0.0, %v4761
      %4763 = vmatprep.mubr.bf16.mxu0 %v4314
      %4764 = vmatmul.mubr.bf16.gmra.mrb[0].mxu0 %v4313
      %v4765 = vpop.f32.mrb[0].mxu0
      %v4766 = vadd.f32 0.0, %v4765
      %v4767 = vpop.f32.mrb[0].mxu0
      %v4768 = vadd.f32 0.0, %v4767
      %v4769 = vpop.f32.mrb[0].mxu0
      %v4770 = vadd.f32 0.0, %v4769
      %v4771 = vpop.f32.mrb[0].mxu0
      %v4772 = vadd.f32 0.0, %v4771
      %4773 = vmatprep.mubr.bf16.mxu0 %v4318
      %4774 = vmatmul.mubr.bf16.gmra.mrb[0].mxu0 %v4317
      %v4775 = vpop.f32.mrb[0].mxu0
      %v4776 = vadd.f32 0.0, %v4775
      %v4777 = vpop.f32.mrb[0].mxu0
      %v4778 = vadd.f32 0.0, %v4777
      %v4779 = vpop.f32.mrb[0].mxu0
      %v4780 = vadd.f32 0.0, %v4779
      %v4781 = vpop.f32.mrb[0].mxu0
      %v4782 = vadd.f32 0.0, %v4781
      %4783 = vmatprep.mubr.bf16.mxu0 %v4322
      %4784 = vmatmul.mubr.bf16.gmra.mrb[0].mxu0 %v4321
      %v4785 = vpop.f32.mrb[0].mxu0
      %v4786 = vadd.f32 0.0, %v4785
      %v4787 = vpop.f32.mrb[0].mxu0
      %v4788 = vadd.f32 0.0, %v4787
      %v4789 = vpop.f32.mrb[0].mxu0
      %v4790 = vadd.f32 0.0, %v4789
      %v4791 = vpop.f32.mrb[0].mxu0
      %v4792 = vadd.f32 0.0, %v4791
      %4793 = vmatprep.mubr.bf16.mxu0 %v4326
      %4794 = vmatmul.mubr.bf16.gmra.mrb[0].mxu0 %v4325
      %v4795 = vpop.f32.mrb[0].mxu0
      %v4796 = vadd.f32 0.0, %v4795
      %v4797 = vpop.f32.mrb[0].mxu0
      %v4798 = vadd.f32 0.0, %v4797
      %v4799 = vpop.f32.mrb[0].mxu0
      %v4800 = vadd.f32 0.0, %v4799
      %v4801 = vpop.f32.mrb[0].mxu0
      %v4802 = vadd.f32 0.0, %v4801
      %4803 = vmatprep.mubr.bf16.mxu0 %v4330
      %4804 = vmatmul.mubr.bf16.gmra.mrb[0].mxu0 %v4329
      %v4805 = vpop.f32.mrb[0].mxu0
      %v4806 = vadd.f32 0.0, %v4805
      %v4807 = vpop.f32.mrb[0].mxu0
      %v4808 = vadd.f32 0.0, %v4807
      %v4809 = vpop.f32.mrb[0].mxu0
      %v4810 = vadd.f32 0.0, %v4809
      %v4811 = vpop.f32.mrb[0].mxu0
      %v4812 = vadd.f32 0.0, %v4811
      %4813 = vmatprep.mubr.bf16.mxu0 %v4334
      %4814 = vmatmul.mubr.bf16.gmra.mrb[0].mxu0 %v4333
      %v4815 = vpop.f32.mrb[0].mxu0
      %v4816 = vadd.f32 0.0, %v4815
      %v4817 = vpop.f32.mrb[0].mxu0
      %v4818 = vadd.f32 0.0, %v4817
      %v4819 = vpop.f32.mrb[0].mxu0
      %v4820 = vadd.f32 0.0, %v4819
      %v4821 = vpop.f32.mrb[0].mxu0
      %v4822 = vadd.f32 0.0, %v4821
      %4823 = vmatprep.mubr.bf16.mxu0 %v4338
      %4824 = vmatmul.mubr.bf16.gmra.mrb[0].mxu0 %v4337
      %v4825 = vpop.f32.mrb[0].mxu0
      %v4826 = vadd.f32 0.0, %v4825
      %v4827 = vpop.f32.mrb[0].mxu0
      %v4828 = vadd.f32 0.0, %v4827
      %v4829 = vpop.f32.mrb[0].mxu0
      %v4830 = vadd.f32 0.0, %v4829
      %v4831 = vpop.f32.mrb[0].mxu0
      %v4832 = vadd.f32 0.0, %v4831
      %4833 = vmatprep.mubr.bf16.mxu0 %v4342
      %4834 = vmatmul.mubr.bf16.gmra.mrb[0].mxu0 %v4341
      %v4835 = vpop.f32.mrb[0].mxu0
      %v4836 = vadd.f32 0.0, %v4835
      %v4837 = vpop.f32.mrb[0].mxu0
      %v4838 = vadd.f32 0.0, %v4837
      %v4839 = vpop.f32.mrb[0].mxu0
      %v4840 = vadd.f32 0.0, %v4839
      %v4841 = vpop.f32.mrb[0].mxu0
      %v4842 = vadd.f32 0.0, %v4841
      %4843 = vmatprep.mubr.bf16.mxu0 %v4346
      %4844 = vmatmul.mubr.bf16.gmra.mrb[0].mxu0 %v4345
      %v4845 = vpop.f32.mrb[0].mxu0
      %v4846 = vadd.f32 0.0, %v4845
      %v4847 = vpop.f32.mrb[0].mxu0
      %v4848 = vadd.f32 0.0, %v4847
      %v4849 = vpop.f32.mrb[0].mxu0
      %v4850 = vadd.f32 0.0, %v4849
      %v4851 = vpop.f32.mrb[0].mxu0
      %v4852 = vadd.f32 0.0, %v4851
      %4853 = vmatprep.mubr.bf16.mxu0 %v4350
      %4854 = vmatmul.mubr.bf16.gmra.mrb[0].mxu0 %v4349
      %v4855 = vpop.f32.mrb[0].mxu0
      %v4856 = vadd.f32 0.0, %v4855
      %v4857 = vpop.f32.mrb[0].mxu0
      %v4858 = vadd.f32 0.0, %v4857
      %v4859 = vpop.f32.mrb[0].mxu0
      %v4860 = vadd.f32 0.0, %v4859
      %v4861 = vpop.f32.mrb[0].mxu0
      %v4862 = vadd.f32 0.0, %v4861
      %4863 = vmatprep.mubr.bf16.mxu0 %v4354
      %4864 = vmatmul.mubr.bf16.gmra.mrb[0].mxu0 %v4353
      %v4865 = vpop.f32.mrb[0].mxu0
      %v4866 = vadd.f32 0.0, %v4865
      %v4867 = vpop.f32.mrb[0].mxu0
      %v4868 = vadd.f32 0.0, %v4867
      %v4869 = vpop.f32.mrb[0].mxu0
      %v4870 = vadd.f32 0.0, %v4869
      %v4871 = vpop.f32.mrb[0].mxu0
      %v4872 = vadd.f32 0.0, %v4871
      %4873 = vmatprep.mubr.bf16.mxu0 %v4358
      %4874 = vmatmul.mubr.bf16.gmra.mrb[0].mxu0 %v4357
      %v4875 = vpop.f32.mrb[0].mxu0
      %v4876 = vadd.f32 0.0, %v4875
      %v4877 = vpop.f32.mrb[0].mxu0
      %v4878 = vadd.f32 0.0, %v4877
      %v4879 = vpop.f32.mrb[0].mxu0
      %v4880 = vadd.f32 0.0, %v4879
      %v4881 = vpop.f32.mrb[0].mxu0
      %v4882 = vadd.f32 0.0, %v4881
      %4883 = vmatprep.mubr.bf16.mxu0 %v4362
      %4884 = vmatmul.mubr.bf16.gmra.mrb[0].mxu0 %v4361
      %v4885 = vpop.f32.mrb[0].mxu0
      %v4886 = vadd.f32 0.0, %v4885
      %v4887 = vpop.f32.mrb[0].mxu0
      %v4888 = vadd.f32 0.0, %v4887
      %v4889 = vpop.f32.mrb[0].mxu0
      %v4890 = vadd.f32 0.0, %v4889
      %v4891 = vpop.f32.mrb[0].mxu0
      %v4892 = vadd.f32 0.0, %v4891
      %4893 = vmatprep.mubr.bf16.mxu0 %v4366
      %4894 = vmatmul.mubr.bf16.gmra.mrb[0].mxu0 %v4365
      %v4895 = vpop.f32.mrb[0].mxu0
      %v4896 = vadd.f32 0.0, %v4895
      %v4897 = vpop.f32.mrb[0].mxu0
      %v4898 = vadd.f32 0.0, %v4897
      %v4899 = vpop.f32.mrb[0].mxu0
      %v4900 = vadd.f32 0.0, %v4899
      %v4901 = vpop.f32.mrb[0].mxu0
      %v4902 = vadd.f32 0.0, %v4901
      %4903 = vmatprep.mubr.bf16.mxu0 %v4370
      %4904 = vmatmul.mubr.bf16.gmra.mrb[0].mxu0 %v4369
      %v4905 = vpop.f32.mrb[0].mxu0
      %v4906 = vadd.f32 0.0, %v4905
      %v4907 = vpop.f32.mrb[0].mxu0
      %v4908 = vadd.f32 0.0, %v4907
      %v4909 = vpop.f32.mrb[0].mxu0
      %v4910 = vadd.f32 0.0, %v4909
      %v4911 = vpop.f32.mrb[0].mxu0
      %v4912 = vadd.f32 0.0, %v4911
      %4913 = vdwg.mxu0
      %4914 = vmatprep.subr.bf16.mxu0 %v4606
      %4915 = vmatpush1.bf16.msra.mxu0 %v4605
      %4916 = vmatprep.subr.bf16.mxu0 %v4608
      %4917 = vmatpush1.bf16.msra.mxu0 %v4607
      %4918 = vmatprep.subr.bf16.mxu0 %v4610
      %4919 = vmatpush1.bf16.msra.mxu0 %v4609
      %4920 = vmatprep.subr.bf16.mxu0 %v4612
      %4921 = vmatpush1.bf16.msra.mxu0 %v4611
      %4922 = vmatprep.subr.bf16.mxu0 %v4614
      %4923 = vmatpush1.bf16.msra.mxu0 %v4613
      %4924 = vmatprep.subr.bf16.mxu0 %v4616
      %4925 = vmatpush1.bf16.msra.mxu0 %v4615
      %4926 = vmatprep.subr.bf16.mxu0 %v4618
      %4927 = vmatpush1.bf16.msra.mxu0 %v4617
      %4928 = vmatprep.subr.bf16.mxu0 %v4620
      %4929 = vmatpush1.bf16.msra.mxu0 %v4619
      %4930 = vmatprep.subr.bf16.mxu0 %v4622
      %4931 = vmatpush1.bf16.msra.mxu0 %v4621
      %4932 = vmatprep.subr.bf16.mxu0 0
      %4933 = vmatpush1.bf16.msra.mxu0 0
      %4934 = vmatprep.subr.bf16.mxu0 0
      %4935 = vmatpush1.bf16.msra.mxu0 0
      %4936 = vmatprep.subr.bf16.mxu0 0
      %4937 = vmatpush1.bf16.msra.mxu0 0
      %4938 = vmatprep.subr.bf16.mxu0 0
      %4939 = vmatpush1.bf16.msra.mxu0 0
      %4940 = vmatprep.subr.bf16.mxu0 0
      %4941 = vmatpush1.bf16.msra.mxu0 0
      %4942 = vmatprep.subr.bf16.mxu0 0
      %4943 = vmatpush1.bf16.msra.mxu0 0
      %4944 = vmatprep.subr.bf16.mxu0 0
      %4945 = vmatpush1.bf16.msra.mxu0 0
      %4946 = vmatprep.mubr.bf16.mxu0 %v4674
      %4947 = vmatmul.mubr.bf16.gmra.mrb[0].mxu0 %v4311
      %v4948 = vpop.f32.mrb[0].mxu0
      %v4949 = vadd.f32 %v4756, %v4948
      %v4950 = vpop.f32.mrb[0].mxu0
      %v4951 = vadd.f32 %v4758, %v4950
      %v4952 = vpop.f32.mrb[0].mxu0
      %v4953 = vadd.f32 %v4760, %v4952
      %v4954 = vpop.f32.mrb[0].mxu0
      %v4955 = vadd.f32 %v4762, %v4954
      %4956 = vmatprep.mubr.bf16.mxu0 %v4677
      %4957 = vmatmul.mubr.bf16.gmra.mrb[0].mxu0 %v4315
      %v4958 = vpop.f32.mrb[0].mxu0
      %v4959 = vadd.f32 %v4766, %v4958
      %v4960 = vpop.f32.mrb[0].mxu0
      %v4961 = vadd.f32 %v4768, %v4960
      %v4962 = vpop.f32.mrb[0].mxu0
      %v4963 = vadd.f32 %v4770, %v4962
      %v4964 = vpop.f32.mrb[0].mxu0
      %v4965 = vadd.f32 %v4772, %v4964
      %4966 = vmatprep.mubr.bf16.mxu0 %v4680
      %4967 = vmatmul.mubr.bf16.gmra.mrb[0].mxu0 %v4319
      %v4968 = vpop.f32.mrb[0].mxu0
      %v4969 = vadd.f32 %v4776, %v4968
      %v4970 = vpop.f32.mrb[0].mxu0
      %v4971 = vadd.f32 %v4778, %v4970
      %v4972 = vpop.f32.mrb[0].mxu0
      %v4973 = vadd.f32 %v4780, %v4972
      %v4974 = vpop.f32.mrb[0].mxu0
      %v4975 = vadd.f32 %v4782, %v4974
      %4976 = vmatprep.mubr.bf16.mxu0 %v4683
      %4977 = vmatmul.mubr.bf16.gmra.mrb[0].mxu0 %v4323
      %v4978 = vpop.f32.mrb[0].mxu0
      %v4979 = vadd.f32 %v4786, %v4978
      %v4980 = vpop.f32.mrb[0].mxu0
      %v4981 = vadd.f32 %v4788, %v4980
      %v4982 = vpop.f32.mrb[0].mxu0
      %v4983 = vadd.f32 %v4790, %v4982
      %v4984 = vpop.f32.mrb[0].mxu0
      %v4985 = vadd.f32 %v4792, %v4984
      %4986 = vmatprep.mubr.bf16.mxu0 %v4686
      %4987 = vmatmul.mubr.bf16.gmra.mrb[0].mxu0 %v4327
      %v4988 = vpop.f32.mrb[0].mxu0
      %v4989 = vadd.f32 %v4796, %v4988
      %v4990 = vpop.f32.mrb[0].mxu0
      %v4991 = vadd.f32 %v4798, %v4990
      %v4992 = vpop.f32.mrb[0].mxu0
      %v4993 = vadd.f32 %v4800, %v4992
      %v4994 = vpop.f32.mrb[0].mxu0
      %v4995 = vadd.f32 %v4802, %v4994
      %4996 = vmatprep.mubr.bf16.mxu0 %v4689
      %4997 = vmatmul.mubr.bf16.gmra.mrb[0].mxu0 %v4331
      %v4998 = vpop.f32.mrb[0].mxu0
      %v4999 = vadd.f32 %v4806, %v4998
      %v5000 = vpop.f32.mrb[0].mxu0
      %v5001 = vadd.f32 %v4808, %v5000
      %v5002 = vpop.f32.mrb[0].mxu0
      %v5003 = vadd.f32 %v4810, %v5002
      %v5004 = vpop.f32.mrb[0].mxu0
      %v5005 = vadd.f32 %v4812, %v5004
      %5006 = vmatprep.mubr.bf16.mxu0 %v4692
      %5007 = vmatmul.mubr.bf16.gmra.mrb[0].mxu0 %v4335
      %v5008 = vpop.f32.mrb[0].mxu0
      %v5009 = vadd.f32 %v4816, %v5008
      %v5010 = vpop.f32.mrb[0].mxu0
      %v5011 = vadd.f32 %v4818, %v5010
      %v5012 = vpop.f32.mrb[0].mxu0
      %v5013 = vadd.f32 %v4820, %v5012
      %v5014 = vpop.f32.mrb[0].mxu0
      %v5015 = vadd.f32 %v4822, %v5014
      %5016 = vmatprep.mubr.bf16.mxu0 %v4695
      %5017 = vmatmul.mubr.bf16.gmra.mrb[0].mxu0 %v4339
      %v5018 = vpop.f32.mrb[0].mxu0
      %v5019 = vadd.f32 %v4826, %v5018
      %v5020 = vpop.f32.mrb[0].mxu0
      %v5021 = vadd.f32 %v4828, %v5020
      %v5022 = vpop.f32.mrb[0].mxu0
      %v5023 = vadd.f32 %v4830, %v5022
      %v5024 = vpop.f32.mrb[0].mxu0
      %v5025 = vadd.f32 %v4832, %v5024
      %5026 = vmatprep.mubr.bf16.mxu0 %v4698
      %5027 = vmatmul.mubr.bf16.gmra.mrb[0].mxu0 %v4343
      %v5028 = vpop.f32.mrb[0].mxu0
      %v5029 = vadd.f32 %v4836, %v5028
      %v5030 = vpop.f32.mrb[0].mxu0
      %v5031 = vadd.f32 %v4838, %v5030
      %v5032 = vpop.f32.mrb[0].mxu0
      %v5033 = vadd.f32 %v4840, %v5032
      %v5034 = vpop.f32.mrb[0].mxu0
      %v5035 = vadd.f32 %v4842, %v5034
      %5036 = vmatprep.mubr.bf16.mxu0 %v4701
      %5037 = vmatmul.mubr.bf16.gmra.mrb[0].mxu0 %v4347
      %v5038 = vpop.f32.mrb[0].mxu0
      %v5039 = vadd.f32 %v4846, %v5038
      %v5040 = vpop.f32.mrb[0].mxu0
      %v5041 = vadd.f32 %v4848, %v5040
      %v5042 = vpop.f32.mrb[0].mxu0
      %v5043 = vadd.f32 %v4850, %v5042
      %v5044 = vpop.f32.mrb[0].mxu0
      %v5045 = vadd.f32 %v4852, %v5044
      %5046 = vmatprep.mubr.bf16.mxu0 %v4704
      %5047 = vmatmul.mubr.bf16.gmra.mrb[0].mxu0 %v4351
      %v5048 = vpop.f32.mrb[0].mxu0
      %v5049 = vadd.f32 %v4856, %v5048
      %v5050 = vpop.f32.mrb[0].mxu0
      %v5051 = vadd.f32 %v4858, %v5050
      %v5052 = vpop.f32.mrb[0].mxu0
      %v5053 = vadd.f32 %v4860, %v5052
      %v5054 = vpop.f32.mrb[0].mxu0
      %v5055 = vadd.f32 %v4862, %v5054
      %5056 = vmatprep.mubr.bf16.mxu0 %v4707
      %5057 = vmatmul.mubr.bf16.gmra.mrb[0].mxu0 %v4355
      %v5058 = vpop.f32.mrb[0].mxu0
      %v5059 = vadd.f32 %v4866, %v5058
      %v5060 = vpop.f32.mrb[0].mxu0
      %v5061 = vadd.f32 %v4868, %v5060
      %v5062 = vpop.f32.mrb[0].mxu0
      %v5063 = vadd.f32 %v4870, %v5062
      %v5064 = vpop.f32.mrb[0].mxu0
      %v5065 = vadd.f32 %v4872, %v5064
      %5066 = vmatprep.mubr.bf16.mxu0 %v4710
      %5067 = vmatmul.mubr.bf16.gmra.mrb[0].mxu0 %v4359
      %v5068 = vpop.f32.mrb[0].mxu0
      %v5069 = vadd.f32 %v4876, %v5068
      %v5070 = vpop.f32.mrb[0].mxu0
      %v5071 = vadd.f32 %v4878, %v5070
      %v5072 = vpop.f32.mrb[0].mxu0
      %v5073 = vadd.f32 %v4880, %v5072
      %v5074 = vpop.f32.mrb[0].mxu0
      %v5075 = vadd.f32 %v4882, %v5074
      %5076 = vmatprep.mubr.bf16.mxu0 %v4713
      %5077 = vmatmul.mubr.bf16.gmra.mrb[0].mxu0 %v4363
      %v5078 = vpop.f32.mrb[0].mxu0
      %v5079 = vadd.f32 %v4886, %v5078
      %v5080 = vpop.f32.mrb[0].mxu0
      %v5081 = vadd.f32 %v4888, %v5080
      %v5082 = vpop.f32.mrb[0].mxu0
      %v5083 = vadd.f32 %v4890, %v5082
      %v5084 = vpop.f32.mrb[0].mxu0
      %v5085 = vadd.f32 %v4892, %v5084
      %5086 = vmatprep.mubr.bf16.mxu0 %v4716
      %5087 = vmatmul.mubr.bf16.gmra.mrb[0].mxu0 %v4367
      %v5088 = vpop.f32.mrb[0].mxu0
      %v5089 = vadd.f32 %v4896, %v5088
      %v5090 = vpop.f32.mrb[0].mxu0
      %v5091 = vadd.f32 %v4898, %v5090
      %v5092 = vpop.f32.mrb[0].mxu0
      %v5093 = vadd.f32 %v4900, %v5092
      %v5094 = vpop.f32.mrb[0].mxu0
      %v5095 = vadd.f32 %v4902, %v5094
      %5096 = vmatprep.mubr.bf16.mxu0 %v4719
      %5097 = vmatmul.mubr.bf16.gmra.mrb[0].mxu0 %v4371
      %v5098 = vpop.f32.mrb[0].mxu0
      %v5099 = vadd.f32 %v4906, %v5098
      %v5100 = vpop.f32.mrb[0].mxu0
      %v5101 = vadd.f32 %v4908, %v5100
      %v5102 = vpop.f32.mrb[0].mxu0
      %v5103 = vadd.f32 %v4910, %v5102
      %v5104 = vpop.f32.mrb[0].mxu0
      %v5105 = vadd.f32 %v4912, %v5104
      %5106 = vdwg.mxu0
      %v5107 = vpack.c.bf16 %v4953, %v4949
      %v5108 = vpack.c.bf16 %v4955, %v4951
      %v5109 = vpack.c.bf16 %v4963, %v4959
      %v5110 = vpack.c.bf16 %v4965, %v4961
      %v5111 = vpack.c.bf16 %v4973, %v4969
      %v5112 = vpack.c.bf16 %v4975, %v4971
      %v5113 = vpack.c.bf16 %v4983, %v4979
      %v5114 = vpack.c.bf16 %v4985, %v4981
      %v5115 = vpack.c.bf16 %v4993, %v4989
      %v5116 = vpack.c.bf16 %v4995, %v4991
      %v5117 = vpack.c.bf16 %v5003, %v4999
      %v5118 = vpack.c.bf16 %v5005, %v5001
      %v5119 = vpack.c.bf16 %v5013, %v5009
      %v5120 = vpack.c.bf16 %v5015, %v5011
      %v5121 = vpack.c.bf16 %v5023, %v5019
      %v5122 = vpack.c.bf16 %v5025, %v5021
      %v5123 = vpack.c.bf16 %v5033, %v5029
      %v5124 = vpack.c.bf16 %v5035, %v5031
      %v5125 = vpack.c.bf16 %v5043, %v5039
      %v5126 = vpack.c.bf16 %v5045, %v5041
      %v5127 = vpack.c.bf16 %v5053, %v5049
      %v5128 = vpack.c.bf16 %v5055, %v5051
      %v5129 = vpack.c.bf16 %v5063, %v5059
      %v5130 = vpack.c.bf16 %v5065, %v5061
      %v5131 = vpack.c.bf16 %v5073, %v5069
      %v5132 = vpack.c.bf16 %v5075, %v5071
      %v5133 = vpack.c.bf16 %v5083, %v5079
      %v5134 = vpack.c.bf16 %v5085, %v5081
      %v5135 = vpack.c.bf16 %v5093, %v5089
      %v5136 = vpack.c.bf16 %v5095, %v5091
      %v5137 = vpack.c.bf16 %v5103, %v5099
      %v5138 = vpack.c.bf16 %v5105, %v5101
      %v5139 = vld [vmem:[%s5] sm:$0x3]
      %v5141 = vlaneseq
      %v5142 = vshrl.u32 %v5141, 7
      %v5143 = vsub.s32 0, %v5142
      %v5144 = vrot.slane %v5139, %v5143
      %v5145 = vlaneseq
      %v5146 = vshrl.u32 %v5145, 7
      %v5147 = vsub.s32 1, %v5146
      %v5148 = vrot.slane %v5139, %v5147
      %v5151 = vpack.c.bf16 %v5144, %v5144
      %v5152 = vpack.c.bf16 %v5148, %v5148
      %v5154 = vpack.i.b16 %v5151, %v5151
      %v5156 = vlaneseq
      %v5157 = vshrl.u32 %v5156, 7
      %v5158 = vsub.s32 0, %v5157
      %v5159 = vrot.slane %v5154, %v5158
      %v5161 = vpack.i.b16 %v5152, %v5152
      %v5163 = vlaneseq
      %v5164 = vshrl.u32 %v5163, 7
      %v5165 = vsub.s32 0, %v5164
      %v5166 = vrot.slane %v5161, %v5165
      %v5167 = vadd.bf16 %v5107, %v5159
      %v5168 = vadd.bf16 %v5108, %v5166
      %v5169 = vadd.bf16 %v5109, %v5159
      %v5170 = vadd.bf16 %v5110, %v5166
      %v5171 = vadd.bf16 %v5111, %v5159
      %v5172 = vadd.bf16 %v5112, %v5166
      %v5173 = vadd.bf16 %v5113, %v5159
      %v5174 = vadd.bf16 %v5114, %v5166
      %v5175 = vadd.bf16 %v5115, %v5159
      %v5176 = vadd.bf16 %v5116, %v5166
      %v5177 = vadd.bf16 %v5117, %v5159
      %v5178 = vadd.bf16 %v5118, %v5166
      %v5179 = vadd.bf16 %v5119, %v5159
      %v5180 = vadd.bf16 %v5120, %v5166
      %v5181 = vadd.bf16 %v5121, %v5159
      %v5182 = vadd.bf16 %v5122, %v5166
      %v5183 = vadd.bf16 %v5123, %v5159
      %v5184 = vadd.bf16 %v5124, %v5166
      %v5185 = vadd.bf16 %v5125, %v5159
      %v5186 = vadd.bf16 %v5126, %v5166
      %v5187 = vadd.bf16 %v5127, %v5159
      %v5188 = vadd.bf16 %v5128, %v5166
      %v5189 = vadd.bf16 %v5129, %v5159
      %v5190 = vadd.bf16 %v5130, %v5166
      %v5191 = vadd.bf16 %v5131, %v5159
      %v5192 = vadd.bf16 %v5132, %v5166
      %v5193 = vadd.bf16 %v5133, %v5159
      %v5194 = vadd.bf16 %v5134, %v5166
      %v5195 = vadd.bf16 %v5135, %v5159
      %v5196 = vadd.bf16 %v5136, %v5166
      %v5197 = vadd.bf16 %v5137, %v5159
      %v5198 = vadd.bf16 %v5138, %v5166
      %vm5199 = vcmp.ge.bf16.partialorder %v5167, 0
      %vm5200 = vcmp.ge.bf16.partialorder %v5168, 0
      %vm5201 = vcmp.ge.bf16.partialorder %v5169, 0
      %vm5202 = vcmp.ge.bf16.partialorder %v5170, 0
      %vm5203 = vcmp.ge.bf16.partialorder %v5171, 0
      %vm5204 = vcmp.ge.bf16.partialorder %v5172, 0
      %vm5205 = vcmp.ge.bf16.partialorder %v5173, 0
      %vm5206 = vcmp.ge.bf16.partialorder %v5174, 0
      %vm5207 = vcmp.ge.bf16.partialorder %v5175, 0
      %vm5208 = vcmp.ge.bf16.partialorder %v5176, 0
      %vm5209 = vcmp.ge.bf16.partialorder %v5177, 0
      %vm5210 = vcmp.ge.bf16.partialorder %v5178, 0
      %vm5211 = vcmp.ge.bf16.partialorder %v5179, 0
      %vm5212 = vcmp.ge.bf16.partialorder %v5180, 0
      %vm5213 = vcmp.ge.bf16.partialorder %v5181, 0
      %vm5214 = vcmp.ge.bf16.partialorder %v5182, 0
      %vm5215 = vcmp.ge.bf16.partialorder %v5183, 0
      %vm5216 = vcmp.ge.bf16.partialorder %v5184, 0
      %vm5217 = vcmp.ge.bf16.partialorder %v5185, 0
      %vm5218 = vcmp.ge.bf16.partialorder %v5186, 0
      %vm5219 = vcmp.ge.bf16.partialorder %v5187, 0
      %vm5220 = vcmp.ge.bf16.partialorder %v5188, 0
      %vm5221 = vcmp.ge.bf16.partialorder %v5189, 0
      %vm5222 = vcmp.ge.bf16.partialorder %v5190, 0
      %vm5223 = vcmp.ge.bf16.partialorder %v5191, 0
      %vm5224 = vcmp.ge.bf16.partialorder %v5192, 0
      %vm5225 = vcmp.ge.bf16.partialorder %v5193, 0
      %vm5226 = vcmp.ge.bf16.partialorder %v5194, 0
      %vm5227 = vcmp.ge.bf16.partialorder %v5195, 0
      %vm5228 = vcmp.ge.bf16.partialorder %v5196, 0
      %vm5229 = vcmp.ge.bf16.partialorder %v5197, 0
      %vm5230 = vcmp.ge.bf16.partialorder %v5198, 0
      %v5231 = vmul.bf16 %v5167, 1045249613
      %v5232 = vmul.bf16 %v5168, 1045249613
      %v5233 = vmul.bf16 %v5169, 1045249613
      %v5234 = vmul.bf16 %v5170, 1045249613
      %v5235 = vmul.bf16 %v5171, 1045249613
      %v5236 = vmul.bf16 %v5172, 1045249613
      %v5237 = vmul.bf16 %v5173, 1045249613
      %v5238 = vmul.bf16 %v5174, 1045249613
      %v5239 = vmul.bf16 %v5175, 1045249613
      %v5240 = vmul.bf16 %v5176, 1045249613
      %v5241 = vmul.bf16 %v5177, 1045249613
      %v5242 = vmul.bf16 %v5178, 1045249613
      %v5243 = vmul.bf16 %v5179, 1045249613
      %v5244 = vmul.bf16 %v5180, 1045249613
      %v5245 = vmul.bf16 %v5181, 1045249613
      %v5246 = vmul.bf16 %v5182, 1045249613
      %v5247 = vmul.bf16 %v5183, 1045249613
      %v5248 = vmul.bf16 %v5184, 1045249613
      %v5249 = vmul.bf16 %v5185, 1045249613
      %v5250 = vmul.bf16 %v5186, 1045249613
      %v5251 = vmul.bf16 %v5187, 1045249613
      %v5252 = vmul.bf16 %v5188, 1045249613
      %v5253 = vmul.bf16 %v5189, 1045249613
      %v5254 = vmul.bf16 %v5190, 1045249613
      %v5255 = vmul.bf16 %v5191, 1045249613
      %v5256 = vmul.bf16 %v5192, 1045249613
      %v5257 = vmul.bf16 %v5193, 1045249613
      %v5258 = vmul.bf16 %v5194, 1045249613
      %v5259 = vmul.bf16 %v5195, 1045249613
      %v5260 = vmul.bf16 %v5196, 1045249613
      %v5261 = vmul.bf16 %v5197, 1045249613
      %v5262 = vmul.bf16 %v5198, 1045249613
      %v5263 = vsel %vm5199, %v5167, %v5231
      %v5264 = vsel %vm5200, %v5168, %v5232
      %v5265 = vsel %vm5201, %v5169, %v5233
      %v5266 = vsel %vm5202, %v5170, %v5234
      %v5267 = vsel %vm5203, %v5171, %v5235
      %v5268 = vsel %vm5204, %v5172, %v5236
      %v5269 = vsel %vm5205, %v5173, %v5237
      %v5270 = vsel %vm5206, %v5174, %v5238
      %v5271 = vsel %vm5207, %v5175, %v5239
      %v5272 = vsel %vm5208, %v5176, %v5240
      %v5273 = vsel %vm5209, %v5177, %v5241
      %v5274 = vsel %vm5210, %v5178, %v5242
      %v5275 = vsel %vm5211, %v5179, %v5243
      %v5276 = vsel %vm5212, %v5180, %v5244
      %v5277 = vsel %vm5213, %v5181, %v5245
      %v5278 = vsel %vm5214, %v5182, %v5246
      %v5279 = vsel %vm5215, %v5183, %v5247
      %v5280 = vsel %vm5216, %v5184, %v5248
      %v5281 = vsel %vm5217, %v5185, %v5249
      %v5282 = vsel %vm5218, %v5186, %v5250
      %v5283 = vsel %vm5219, %v5187, %v5251
      %v5284 = vsel %vm5220, %v5188, %v5252
      %v5285 = vsel %vm5221, %v5189, %v5253
      %v5286 = vsel %vm5222, %v5190, %v5254
      %v5287 = vsel %vm5223, %v5191, %v5255
      %v5288 = vsel %vm5224, %v5192, %v5256
      %v5289 = vsel %vm5225, %v5193, %v5257
      %v5290 = vsel %vm5226, %v5194, %v5258
      %v5291 = vsel %vm5227, %v5195, %v5259
      %v5292 = vsel %vm5228, %v5196, %v5260
      %v5293 = vsel %vm5229, %v5197, %v5261
      %v5294 = vsel %vm5230, %v5198, %v5262
      %v5295 = vld [vmem:[%s6] sm:$0xf]
      %v5296 = vld [vmem:[%s6 + $0x4] sm:$0xf]
      %v5297 = vld [vmem:[%s6 + $0x8] sm:$0xf]
      %v5298 = vld [vmem:[%s6 + $0xc] sm:$0xf]
      %v5299 = vld [vmem:[%s6 + $0x10] sm:$0xf]
      %v5300 = vld [vmem:[%s6 + $0x14] sm:$0xf]
      %v5301 = vld [vmem:[%s6 + $0x18] sm:$0xf]
      %v5302 = vld [vmem:[%s6 + $0x1c] sm:$0xf]
      %v5303 = vld [vmem:[%s6 + $0x20] sm:$0xf]
      %v5304 = vld [vmem:[%s6 + $0x24] sm:$0xf]
      %v5305 = vld [vmem:[%s6 + $0x28] sm:$0xf]
      %v5306 = vld [vmem:[%s6 + $0x2c] sm:$0xf]
      %v5307 = vld [vmem:[%s6 + $0x30] sm:$0xf]
      %v5308 = vld [vmem:[%s6 + $0x34] sm:$0xf]
      %v5309 = vld [vmem:[%s6 + $0x38] sm:$0xf]
      %v5310 = vld [vmem:[%s6 + $0x3c] sm:$0xf]
      %v5311 = vld [vmem:[%s6 + $0x40] sm:$0xf]
      %v5312 = vld [vmem:[%s6 + $0x44] sm:$0xf]
      %v5313 = vld [vmem:[%s6 + $0x48] sm:$0xf]
      %v5314 = vld [vmem:[%s6 + $0x4c] sm:$0xf]
      %v5315 = vld [vmem:[%s6 + $0x50] sm:$0xf]
      %v5316 = vld [vmem:[%s6 + $0x54] sm:$0xf]
      %v5317 = vld [vmem:[%s6 + $0x58] sm:$0xf]
      %v5318 = vld [vmem:[%s6 + $0x5c] sm:$0xf]
      %v5319 = vld [vmem:[%s6 + $0x60] sm:$0xf]
      %v5320 = vld [vmem:[%s7] sm:$0x1]
      %v5322 = vlaneseq
      %v5323 = vshrl.u32 %v5322, 7
      %v5324 = vsub.s32 0, %v5323
      %v5325 = vrot.slane %v5320, %v5324
      %v5352 = vunpack.c.l.b16 %v5295
      %v5353 = vunpack.c.l.b16 %v5296
      %v5354 = vunpack.c.l.b16 %v5297
      %v5355 = vunpack.c.l.b16 %v5298
      %v5356 = vunpack.c.l.b16 %v5299
      %v5357 = vunpack.c.l.b16 %v5300
      %v5358 = vunpack.c.l.b16 %v5301
      %v5359 = vunpack.c.l.b16 %v5302
      %v5360 = vunpack.c.l.b16 %v5303
      %v5361 = vunpack.c.l.b16 %v5304
      %v5362 = vunpack.c.l.b16 %v5305
      %v5363 = vunpack.c.l.b16 %v5306
      %v5364 = vunpack.c.l.b16 %v5307
      %v5365 = vunpack.c.l.b16 %v5308
      %v5366 = vunpack.c.l.b16 %v5309
      %v5367 = vunpack.c.l.b16 %v5310
      %v5368 = vunpack.c.l.b16 %v5311
      %v5369 = vunpack.c.l.b16 %v5312
      %v5370 = vunpack.c.l.b16 %v5313
      %v5371 = vunpack.c.l.b16 %v5314
      %v5372 = vunpack.c.l.b16 %v5315
      %v5373 = vunpack.c.l.b16 %v5316
      %v5374 = vunpack.c.l.b16 %v5317
      %v5375 = vunpack.c.l.b16 %v5318
      %v5376 = vunpack.c.l.b16 %v5319
      %v5377 = vpack.c.b16 %v5353, %v5352
      %v5378 = vpack.c.b16 %v5355, %v5354
      %v5379 = vpack.c.b16 %v5357, %v5356
      %v5380 = vpack.c.b16 %v5359, %v5358
      %v5381 = vpack.c.b16 %v5361, %v5360
      %v5382 = vpack.c.b16 %v5363, %v5362
      %v5383 = vpack.c.b16 %v5365, %v5364
      %v5384 = vpack.c.b16 %v5367, %v5366
      %v5385 = vpack.c.b16 %v5369, %v5368
      %v5386 = vpack.c.b16 %v5371, %v5370
      %v5387 = vpack.c.b16 %v5373, %v5372
      %v5388 = vpack.c.b16 %v5375, %v5374
      %v5389 = vpack.c.b16 %v5376, %v5376
      %vm5402 = vcmask 588800
      %v5404 = vsel %vm5402, %v5264, 0
      %v5407 = vsel %vm5402, %v5266, 0
      %v5410 = vsel %vm5402, %v5268, 0
      %v5413 = vsel %vm5402, %v5270, 0
      %v5416 = vsel %vm5402, %v5272, 0
      %v5419 = vsel %vm5402, %v5274, 0
      %v5422 = vsel %vm5402, %v5276, 0
      %v5425 = vsel %vm5402, %v5278, 0
      %v5428 = vsel %vm5402, %v5280, 0
      %v5431 = vsel %vm5402, %v5282, 0
      %v5434 = vsel %vm5402, %v5284, 0
      %v5437 = vsel %vm5402, %v5286, 0
      %v5440 = vsel %vm5402, %v5288, 0
      %v5443 = vsel %vm5402, %v5290, 0
      %v5446 = vsel %vm5402, %v5292, 0
      %v5449 = vsel %vm5402, %v5294, 0
      %vm5451 = vcmask 1043456
      %v5453 = vsel %vm5451, %v5389, 0
      %5455 = vmatprep.subr.bf16.mxu0 0
      %5456 = vmatpush1.bf16.msra.mxu0 %v5377
      %5457 = vmatprep.subr.bf16.mxu0 0
      %5458 = vmatpush1.bf16.msra.mxu0 %v5378
      %5459 = vmatprep.subr.bf16.mxu0 0
      %5460 = vmatpush1.bf16.msra.mxu0 %v5379
      %5461 = vmatprep.subr.bf16.mxu0 0
      %5462 = vmatpush1.bf16.msra.mxu0 %v5380
      %5463 = vmatprep.subr.bf16.mxu0 0
      %5464 = vmatpush1.bf16.msra.mxu0 %v5381
      %5465 = vmatprep.subr.bf16.mxu0 0
      %5466 = vmatpush1.bf16.msra.mxu0 %v5382
      %5467 = vmatprep.subr.bf16.mxu0 0
      %5468 = vmatpush1.bf16.msra.mxu0 %v5383
      %5469 = vmatprep.subr.bf16.mxu0 0
      %5470 = vmatpush1.bf16.msra.mxu0 %v5384
      %5471 = vmatprep.subr.bf16.mxu0 0
      %5472 = vmatpush1.bf16.msra.mxu0 %v5385
      %5473 = vmatprep.subr.bf16.mxu0 0
      %5474 = vmatpush1.bf16.msra.mxu0 %v5386
      %5475 = vmatprep.subr.bf16.mxu0 0
      %5476 = vmatpush1.bf16.msra.mxu0 %v5387
      %5477 = vmatprep.subr.bf16.mxu0 0
      %5478 = vmatpush1.bf16.msra.mxu0 %v5388
      %5479 = vmatprep.subr.bf16.mxu0 0
      %5480 = vmatpush1.bf16.msra.mxu0 %v5453
      %5481 = vmatprep.subr.bf16.mxu0 0
      %5482 = vmatpush1.bf16.msra.mxu0 0
      %5483 = vmatprep.subr.bf16.mxu0 0
      %5484 = vmatpush1.bf16.msra.mxu0 0
      %5485 = vmatprep.subr.bf16.mxu0 0
      %5486 = vmatpush1.bf16.msra.mxu0 0
      %5487 = vmatprep.mubr.bf16.mxu0 %v5404
      %5488 = vmatmul.mubr.bf16.gmra.mrb[0].mxu0 %v5263
      %v5489 = vpop.f32.mrb[0].mxu0
      %v5490 = vadd.f32 %v5325, %v5489
      %v5491 = vpop.f32.mrb[0].mxu0
      %v5492 = vpop.f32.mrb[0].mxu0
      %v5493 = vadd.f32 %v5325, %v5492
      %v5494 = vpop.f32.mrb[0].mxu0
      %5495 = vmatprep.mubr.bf16.mxu0 %v5407
      %5496 = vmatmul.mubr.bf16.gmra.mrb[0].mxu0 %v5265
      %v5497 = vpop.f32.mrb[0].mxu0
      %v5498 = vadd.f32 %v5325, %v5497
      %v5499 = vpop.f32.mrb[0].mxu0
      %v5500 = vpop.f32.mrb[0].mxu0
      %v5501 = vadd.f32 %v5325, %v5500
      %v5502 = vpop.f32.mrb[0].mxu0
      %5503 = vmatprep.mubr.bf16.mxu0 %v5410
      %5504 = vmatmul.mubr.bf16.gmra.mrb[0].mxu0 %v5267
      %v5505 = vpop.f32.mrb[0].mxu0
      %v5506 = vadd.f32 %v5325, %v5505
      %v5507 = vpop.f32.mrb[0].mxu0
      %v5508 = vpop.f32.mrb[0].mxu0
      %v5509 = vadd.f32 %v5325, %v5508
      %v5510 = vpop.f32.mrb[0].mxu0
      %5511 = vmatprep.mubr.bf16.mxu0 %v5413
      %5512 = vmatmul.mubr.bf16.gmra.mrb[0].mxu0 %v5269
      %v5513 = vpop.f32.mrb[0].mxu0
      %v5514 = vadd.f32 %v5325, %v5513
      %v5515 = vpop.f32.mrb[0].mxu0
      %v5516 = vpop.f32.mrb[0].mxu0
      %v5517 = vadd.f32 %v5325, %v5516
      %v5518 = vpop.f32.mrb[0].mxu0
      %5519 = vmatprep.mubr.bf16.mxu0 %v5416
      %5520 = vmatmul.mubr.bf16.gmra.mrb[0].mxu0 %v5271
      %v5521 = vpop.f32.mrb[0].mxu0
      %v5522 = vadd.f32 %v5325, %v5521
      %v5523 = vpop.f32.mrb[0].mxu0
      %v5524 = vpop.f32.mrb[0].mxu0
      %v5525 = vadd.f32 %v5325, %v5524
      %v5526 = vpop.f32.mrb[0].mxu0
      %5527 = vmatprep.mubr.bf16.mxu0 %v5419
      %5528 = vmatmul.mubr.bf16.gmra.mrb[0].mxu0 %v5273
      %v5529 = vpop.f32.mrb[0].mxu0
      %v5530 = vadd.f32 %v5325, %v5529
      %v5531 = vpop.f32.mrb[0].mxu0
      %v5532 = vpop.f32.mrb[0].mxu0
      %v5533 = vadd.f32 %v5325, %v5532
      %v5534 = vpop.f32.mrb[0].mxu0
      %5535 = vmatprep.mubr.bf16.mxu0 %v5422
      %5536 = vmatmul.mubr.bf16.gmra.mrb[0].mxu0 %v5275
      %v5537 = vpop.f32.mrb[0].mxu0
      %v5538 = vadd.f32 %v5325, %v5537
      %v5539 = vpop.f32.mrb[0].mxu0
      %v5540 = vpop.f32.mrb[0].mxu0
      %v5541 = vadd.f32 %v5325, %v5540
      %v5542 = vpop.f32.mrb[0].mxu0
      %5543 = vmatprep.mubr.bf16.mxu0 %v5425
      %5544 = vmatmul.mubr.bf16.gmra.mrb[0].mxu0 %v5277
      %v5545 = vpop.f32.mrb[0].mxu0
      %v5546 = vadd.f32 %v5325, %v5545
      %v5547 = vpop.f32.mrb[0].mxu0
      %v5548 = vpop.f32.mrb[0].mxu0
      %v5549 = vadd.f32 %v5325, %v5548
      %v5550 = vpop.f32.mrb[0].mxu0
      %5551 = vmatprep.mubr.bf16.mxu0 %v5428
      %5552 = vmatmul.mubr.bf16.gmra.mrb[0].mxu0 %v5279
      %v5553 = vpop.f32.mrb[0].mxu0
      %v5554 = vadd.f32 %v5325, %v5553
      %v5555 = vpop.f32.mrb[0].mxu0
      %v5556 = vpop.f32.mrb[0].mxu0
      %v5557 = vadd.f32 %v5325, %v5556
      %v5558 = vpop.f32.mrb[0].mxu0
      %5559 = vmatprep.mubr.bf16.mxu0 %v5431
      %5560 = vmatmul.mubr.bf16.gmra.mrb[0].mxu0 %v5281
      %v5561 = vpop.f32.mrb[0].mxu0
      %v5562 = vadd.f32 %v5325, %v5561
      %v5563 = vpop.f32.mrb[0].mxu0
      %v5564 = vpop.f32.mrb[0].mxu0
      %v5565 = vadd.f32 %v5325, %v5564
      %v5566 = vpop.f32.mrb[0].mxu0
      %5567 = vmatprep.mubr.bf16.mxu0 %v5434
      %5568 = vmatmul.mubr.bf16.gmra.mrb[0].mxu0 %v5283
      %v5569 = vpop.f32.mrb[0].mxu0
      %v5570 = vadd.f32 %v5325, %v5569
      %v5571 = vpop.f32.mrb[0].mxu0
      %v5572 = vpop.f32.mrb[0].mxu0
      %v5573 = vadd.f32 %v5325, %v5572
      %v5574 = vpop.f32.mrb[0].mxu0
      %5575 = vmatprep.mubr.bf16.mxu0 %v5437
      %5576 = vmatmul.mubr.bf16.gmra.mrb[0].mxu0 %v5285
      %v5577 = vpop.f32.mrb[0].mxu0
      %v5578 = vadd.f32 %v5325, %v5577
      %v5579 = vpop.f32.mrb[0].mxu0
      %v5580 = vpop.f32.mrb[0].mxu0
      %v5581 = vadd.f32 %v5325, %v5580
      %v5582 = vpop.f32.mrb[0].mxu0
      %5583 = vmatprep.mubr.bf16.mxu0 %v5440
      %5584 = vmatmul.mubr.bf16.gmra.mrb[0].mxu0 %v5287
      %v5585 = vpop.f32.mrb[0].mxu0
      %v5586 = vadd.f32 %v5325, %v5585
      %v5587 = vpop.f32.mrb[0].mxu0
      %v5588 = vpop.f32.mrb[0].mxu0
      %v5589 = vadd.f32 %v5325, %v5588
      %v5590 = vpop.f32.mrb[0].mxu0
      %5591 = vmatprep.mubr.bf16.mxu0 %v5443
      %5592 = vmatmul.mubr.bf16.gmra.mrb[0].mxu0 %v5289
      %v5593 = vpop.f32.mrb[0].mxu0
      %v5594 = vadd.f32 %v5325, %v5593
      %v5595 = vpop.f32.mrb[0].mxu0
      %v5596 = vpop.f32.mrb[0].mxu0
      %v5597 = vadd.f32 %v5325, %v5596
      %v5598 = vpop.f32.mrb[0].mxu0
      %5599 = vmatprep.mubr.bf16.mxu0 %v5446
      %5600 = vmatmul.mubr.bf16.gmra.mrb[0].mxu0 %v5291
      %v5601 = vpop.f32.mrb[0].mxu0
      %v5602 = vadd.f32 %v5325, %v5601
      %v5603 = vpop.f32.mrb[0].mxu0
      %v5604 = vpop.f32.mrb[0].mxu0
      %v5605 = vadd.f32 %v5325, %v5604
      %v5606 = vpop.f32.mrb[0].mxu0
      %5607 = vmatprep.mubr.bf16.mxu0 %v5449
      %5608 = vmatmul.mubr.bf16.gmra.mrb[0].mxu0 %v5293
      %v5609 = vpop.f32.mrb[0].mxu0
      %v5610 = vadd.f32 %v5325, %v5609
      %v5611 = vpop.f32.mrb[0].mxu0
      %v5612 = vpop.f32.mrb[0].mxu0
      %v5613 = vadd.f32 %v5325, %v5612
      %v5614 = vpop.f32.mrb[0].mxu0
      %5615 = vdwg.mxu0
      %v5616 = vld [vmem:[%s524] sm:$0xff]
      %v5617 = vld [vmem:[%s524 + $0x8] sm:$0xff]
      %v5618 = vld [vmem:[%s524 + $0x10] sm:$0xff]
      %v5619 = vld [vmem:[%s524 + $0x18] sm:$0xff]
      %v5620 = vld [vmem:[%s524 + $0x20] sm:$0xff]
      %v5621 = vld [vmem:[%s524 + $0x28] sm:$0xff]
      %v5622 = vld [vmem:[%s524 + $0x30] sm:$0xff]
      %v5623 = vld [vmem:[%s524 + $0x38] sm:$0xff]
      %v5624 = vld [vmem:[%s524 + $0x40] sm:$0xff]
      %v5625 = vld [vmem:[%s524 + $0x48] sm:$0xff]
      %v5626 = vld [vmem:[%s524 + $0x50] sm:$0xff]
      %v5627 = vld [vmem:[%s524 + $0x58] sm:$0xff]
      %v5628 = vld [vmem:[%s524 + $0x60] sm:$0xff]
      %v5629 = vld [vmem:[%s524 + $0x68] sm:$0xff]
      %v5630 = vld [vmem:[%s524 + $0x70] sm:$0xff]
      %v5631 = vld [vmem:[%s524 + $0x78] sm:$0xff]
      %v5632 = vld [vmem:[%s524 + $0x80] sm:$0xff]
      %v5633 = vld [vmem:[%s524 + $0x88] sm:$0xff]
      %v5634 = vld [vmem:[%s524 + $0x90] sm:$0xff]
      %v5635 = vld [vmem:[%s524 + $0x98] sm:$0xff]
      %v5636 = vld [vmem:[%s524 + $0xa0] sm:$0xff]
      %v5637 = vld [vmem:[%s524 + $0xa8] sm:$0xff]
      %v5638 = vld [vmem:[%s524 + $0xb0] sm:$0xff]
      %v5639 = vld [vmem:[%s524 + $0xb8] sm:$0xff]
      %v5640 = vld [vmem:[%s524 + $0xc0] sm:$0xff]
      %v5641 = vld [vmem:[%s524 + $0xc8] sm:$0xff]
      %v5642 = vld [vmem:[%s524 + $0xd0] sm:$0xff]
      %v5643 = vld [vmem:[%s524 + $0xd8] sm:$0xff]
      %v5644 = vld [vmem:[%s524 + $0xe0] sm:$0xff]
      %v5645 = vld [vmem:[%s524 + $0xe8] sm:$0xff]
      %v5646 = vld [vmem:[%s524 + $0xf0] sm:$0xff]
      %v5647 = vld [vmem:[%s524 + $0xf8] sm:$0xff]
      %5680 = vrot.lane.b32.xlu0 %v5616, 2
      %v5681 = vpop.permute.xlu0 %5680
      %5682 = vrot.lane.b32.xlu0 %v5617, 2
      %v5683 = vpop.permute.xlu0 %5682
      %5684 = vrot.lane.b32.xlu0 %v5618, 2
      %v5685 = vpop.permute.xlu0 %5684
      %5686 = vrot.lane.b32.xlu0 %v5619, 2
      %v5687 = vpop.permute.xlu0 %5686
      %5688 = vrot.lane.b32.xlu0 %v5620, 2
      %v5689 = vpop.permute.xlu0 %5688
      %5690 = vrot.lane.b32.xlu0 %v5621, 2
      %v5691 = vpop.permute.xlu0 %5690
      %5692 = vrot.lane.b32.xlu0 %v5622, 2
      %v5693 = vpop.permute.xlu0 %5692
      %5694 = vrot.lane.b32.xlu0 %v5623, 2
      %v5695 = vpop.permute.xlu0 %5694
      %5696 = vrot.lane.b32.xlu0 %v5624, 2
      %v5697 = vpop.permute.xlu0 %5696
      %5698 = vrot.lane.b32.xlu0 %v5625, 2
      %v5699 = vpop.permute.xlu0 %5698
      %5700 = vrot.lane.b32.xlu0 %v5626, 2
      %v5701 = vpop.permute.xlu0 %5700
      %5702 = vrot.lane.b32.xlu0 %v5627, 2
      %v5703 = vpop.permute.xlu0 %5702
      %5704 = vrot.lane.b32.xlu0 %v5628, 2
      %v5705 = vpop.permute.xlu0 %5704
      %5706 = vrot.lane.b32.xlu0 %v5629, 2
      %v5707 = vpop.permute.xlu0 %5706
      %5708 = vrot.lane.b32.xlu0 %v5630, 2
      %v5709 = vpop.permute.xlu0 %5708
      %5710 = vrot.lane.b32.xlu0 %v5631, 2
      %v5711 = vpop.permute.xlu0 %5710
      %5712 = vrot.lane.b32.xlu0 %v5632, 2
      %v5713 = vpop.permute.xlu0 %5712
      %5714 = vrot.lane.b32.xlu0 %v5633, 2
      %v5715 = vpop.permute.xlu0 %5714
      %5716 = vrot.lane.b32.xlu0 %v5634, 2
      %v5717 = vpop.permute.xlu0 %5716
      %5718 = vrot.lane.b32.xlu0 %v5635, 2
      %v5719 = vpop.permute.xlu0 %5718
      %5720 = vrot.lane.b32.xlu0 %v5636, 2
      %v5721 = vpop.permute.xlu0 %5720
      %5722 = vrot.lane.b32.xlu0 %v5637, 2
      %v5723 = vpop.permute.xlu0 %5722
      %5724 = vrot.lane.b32.xlu0 %v5638, 2
      %v5725 = vpop.permute.xlu0 %5724
      %5726 = vrot.lane.b32.xlu0 %v5639, 2
      %v5727 = vpop.permute.xlu0 %5726
      %5728 = vrot.lane.b32.xlu0 %v5640, 2
      %v5729 = vpop.permute.xlu0 %5728
      %5730 = vrot.lane.b32.xlu0 %v5641, 2
      %v5731 = vpop.permute.xlu0 %5730
      %5732 = vrot.lane.b32.xlu0 %v5642, 2
      %v5733 = vpop.permute.xlu0 %5732
      %5734 = vrot.lane.b32.xlu0 %v5643, 2
      %v5735 = vpop.permute.xlu0 %5734
      %5736 = vrot.lane.b32.xlu0 %v5644, 2
      %v5737 = vpop.permute.xlu0 %5736
      %5738 = vrot.lane.b32.xlu0 %v5645, 2
      %v5739 = vpop.permute.xlu0 %5738
      %5740 = vrot.lane.b32.xlu0 %v5646, 2
      %v5741 = vpop.permute.xlu0 %5740
      %5742 = vrot.lane.b32.xlu0 %v5647, 2
      %v5743 = vpop.permute.xlu0 %5742
      %v5776 = vmul.f32 %v5490, %v5681
      %v5777 = vmul.f32 %v5493, %v5683
      %v5778 = vmul.f32 %v5498, %v5685
      %v5779 = vmul.f32 %v5501, %v5687
      %v5780 = vmul.f32 %v5506, %v5689
      %v5781 = vmul.f32 %v5509, %v5691
      %v5782 = vmul.f32 %v5514, %v5693
      %v5783 = vmul.f32 %v5517, %v5695
      %v5784 = vmul.f32 %v5522, %v5697
      %v5785 = vmul.f32 %v5525, %v5699
      %v5786 = vmul.f32 %v5530, %v5701
      %v5787 = vmul.f32 %v5533, %v5703
      %v5788 = vmul.f32 %v5538, %v5705
      %v5789 = vmul.f32 %v5541, %v5707
      %v5790 = vmul.f32 %v5546, %v5709
      %v5791 = vmul.f32 %v5549, %v5711
      %v5792 = vmul.f32 %v5554, %v5713
      %v5793 = vmul.f32 %v5557, %v5715
      %v5794 = vmul.f32 %v5562, %v5717
      %v5795 = vmul.f32 %v5565, %v5719
      %v5796 = vmul.f32 %v5570, %v5721
      %v5797 = vmul.f32 %v5573, %v5723
      %v5798 = vmul.f32 %v5578, %v5725
      %v5799 = vmul.f32 %v5581, %v5727
      %v5800 = vmul.f32 %v5586, %v5729
      %v5801 = vmul.f32 %v5589, %v5731
      %v5802 = vmul.f32 %v5594, %v5733
      %v5803 = vmul.f32 %v5597, %v5735
      %v5804 = vmul.f32 %v5602, %v5737
      %v5805 = vmul.f32 %v5605, %v5739
      %v5806 = vmul.f32 %v5610, %v5741
      %v5807 = vmul.f32 %v5613, %v5743
      %5840 = vrot.lane.b32.xlu0 %v5776, 126
      %v5841 = vpop.permute.xlu0 %5840
      %5842 = vrot.lane.b32.xlu0 %v5777, 126
      %v5843 = vpop.permute.xlu0 %5842
      %5844 = vrot.lane.b32.xlu0 %v5778, 126
      %v5845 = vpop.permute.xlu0 %5844
      %5846 = vrot.lane.b32.xlu0 %v5779, 126
      %v5847 = vpop.permute.xlu0 %5846
      %5848 = vrot.lane.b32.xlu0 %v5780, 126
      %v5849 = vpop.permute.xlu0 %5848
      %5850 = vrot.lane.b32.xlu0 %v5781, 126
      %v5851 = vpop.permute.xlu0 %5850
      %5852 = vrot.lane.b32.xlu0 %v5782, 126
      %v5853 = vpop.permute.xlu0 %5852
      %5854 = vrot.lane.b32.xlu0 %v5783, 126
      %v5855 = vpop.permute.xlu0 %5854
      %5856 = vrot.lane.b32.xlu0 %v5784, 126
      %v5857 = vpop.permute.xlu0 %5856
      %5858 = vrot.lane.b32.xlu0 %v5785, 126
      %v5859 = vpop.permute.xlu0 %5858
      %5860 = vrot.lane.b32.xlu0 %v5786, 126
      %v5861 = vpop.permute.xlu0 %5860
      %5862 = vrot.lane.b32.xlu0 %v5787, 126
      %v5863 = vpop.permute.xlu0 %5862
      %5864 = vrot.lane.b32.xlu0 %v5788, 126
      %v5865 = vpop.permute.xlu0 %5864
      %5866 = vrot.lane.b32.xlu0 %v5789, 126
      %v5867 = vpop.permute.xlu0 %5866
      %5868 = vrot.lane.b32.xlu0 %v5790, 126
      %v5869 = vpop.permute.xlu0 %5868
      %5870 = vrot.lane.b32.xlu0 %v5791, 126
      %v5871 = vpop.permute.xlu0 %5870
      %5872 = vrot.lane.b32.xlu0 %v5792, 126
      %v5873 = vpop.permute.xlu0 %5872
      %5874 = vrot.lane.b32.xlu0 %v5793, 126
      %v5875 = vpop.permute.xlu0 %5874
      %5876 = vrot.lane.b32.xlu0 %v5794, 126
      %v5877 = vpop.permute.xlu0 %5876
      %5878 = vrot.lane.b32.xlu0 %v5795, 126
      %v5879 = vpop.permute.xlu0 %5878
      %5880 = vrot.lane.b32.xlu0 %v5796, 126
      %v5881 = vpop.permute.xlu0 %5880
      %5882 = vrot.lane.b32.xlu0 %v5797, 126
      %v5883 = vpop.permute.xlu0 %5882
      %5884 = vrot.lane.b32.xlu0 %v5798, 126
      %v5885 = vpop.permute.xlu0 %5884
      %5886 = vrot.lane.b32.xlu0 %v5799, 126
      %v5887 = vpop.permute.xlu0 %5886
      %5888 = vrot.lane.b32.xlu0 %v5800, 126
      %v5889 = vpop.permute.xlu0 %5888
      %5890 = vrot.lane.b32.xlu0 %v5801, 126
      %v5891 = vpop.permute.xlu0 %5890
      %5892 = vrot.lane.b32.xlu0 %v5802, 126
      %v5893 = vpop.permute.xlu0 %5892
      %5894 = vrot.lane.b32.xlu0 %v5803, 126
      %v5895 = vpop.permute.xlu0 %5894
      %5896 = vrot.lane.b32.xlu0 %v5804, 126
      %v5897 = vpop.permute.xlu0 %5896
      %5898 = vrot.lane.b32.xlu0 %v5805, 126
      %v5899 = vpop.permute.xlu0 %5898
      %5900 = vrot.lane.b32.xlu0 %v5806, 126
      %v5901 = vpop.permute.xlu0 %5900
      %5902 = vrot.lane.b32.xlu0 %v5807, 126
      %v5903 = vpop.permute.xlu0 %5902
      %v5936 = vadd.f32 %v5490, %v5841
      %v5937 = vadd.f32 %v5493, %v5843
      %v5938 = vadd.f32 %v5498, %v5845
      %v5939 = vadd.f32 %v5501, %v5847
      %v5940 = vadd.f32 %v5506, %v5849
      %v5941 = vadd.f32 %v5509, %v5851
      %v5942 = vadd.f32 %v5514, %v5853
      %v5943 = vadd.f32 %v5517, %v5855
      %v5944 = vadd.f32 %v5522, %v5857
      %v5945 = vadd.f32 %v5525, %v5859
      %v5946 = vadd.f32 %v5530, %v5861
      %v5947 = vadd.f32 %v5533, %v5863
      %v5948 = vadd.f32 %v5538, %v5865
      %v5949 = vadd.f32 %v5541, %v5867
      %v5950 = vadd.f32 %v5546, %v5869
      %v5951 = vadd.f32 %v5549, %v5871
      %v5952 = vadd.f32 %v5554, %v5873
      %v5953 = vadd.f32 %v5557, %v5875
      %v5954 = vadd.f32 %v5562, %v5877
      %v5955 = vadd.f32 %v5565, %v5879
      %v5956 = vadd.f32 %v5570, %v5881
      %v5957 = vadd.f32 %v5573, %v5883
      %v5958 = vadd.f32 %v5578, %v5885
      %v5959 = vadd.f32 %v5581, %v5887
      %v5960 = vadd.f32 %v5586, %v5889
      %v5961 = vadd.f32 %v5589, %v5891
      %v5962 = vadd.f32 %v5594, %v5893
      %v5963 = vadd.f32 %v5597, %v5895
      %v5964 = vadd.f32 %v5602, %v5897
      %v5965 = vadd.f32 %v5605, %v5899
      %v5966 = vadd.f32 %v5610, %v5901
      %v5967 = vadd.f32 %v5613, %v5903
      %v5968 = vld [vmem:[%s8] sm:$0x3]
      %v5969 = vunpack.c.l.bf16 %v5968
      %5971 = vset.pattern.permute.xlu0 0
      %5972 = vperm.xlu0 %5971, %v5936
      %v5973 = vpop.permute.xlu0 %5972
      %5976 = vset.pattern.permute.xlu0 0
      %5977 = vperm.xlu0 %5976, %v5937
      %v5978 = vpop.permute.xlu0 %5977
      %5981 = vset.pattern.permute.xlu0 0
      %5982 = vperm.xlu0 %5981, %v5938
      %v5983 = vpop.permute.xlu0 %5982
      %5986 = vset.pattern.permute.xlu0 0
      %5987 = vperm.xlu0 %5986, %v5939
      %v5988 = vpop.permute.xlu0 %5987
      %5991 = vset.pattern.permute.xlu0 0
      %5992 = vperm.xlu0 %5991, %v5940
      %v5993 = vpop.permute.xlu0 %5992
      %5996 = vset.pattern.permute.xlu0 0
      %5997 = vperm.xlu0 %5996, %v5941
      %v5998 = vpop.permute.xlu0 %5997
      %6001 = vset.pattern.permute.xlu0 0
      %6002 = vperm.xlu0 %6001, %v5942
      %v6003 = vpop.permute.xlu0 %6002
      %6006 = vset.pattern.permute.xlu0 0
      %6007 = vperm.xlu0 %6006, %v5943
      %v6008 = vpop.permute.xlu0 %6007
      %6011 = vset.pattern.permute.xlu0 0
      %6012 = vperm.xlu0 %6011, %v5944
      %v6013 = vpop.permute.xlu0 %6012
      %6016 = vset.pattern.permute.xlu0 0
      %6017 = vperm.xlu0 %6016, %v5945
      %v6018 = vpop.permute.xlu0 %6017
      %6021 = vset.pattern.permute.xlu0 0
      %6022 = vperm.xlu0 %6021, %v5946
      %v6023 = vpop.permute.xlu0 %6022
      %6026 = vset.pattern.permute.xlu0 0
      %6027 = vperm.xlu0 %6026, %v5947
      %v6028 = vpop.permute.xlu0 %6027
      %6031 = vset.pattern.permute.xlu0 0
      %6032 = vperm.xlu0 %6031, %v5948
      %v6033 = vpop.permute.xlu0 %6032
      %6036 = vset.pattern.permute.xlu0 0
      %6037 = vperm.xlu0 %6036, %v5949
      %v6038 = vpop.permute.xlu0 %6037
      %6041 = vset.pattern.permute.xlu0 0
      %6042 = vperm.xlu0 %6041, %v5950
      %v6043 = vpop.permute.xlu0 %6042
      %6046 = vset.pattern.permute.xlu0 0
      %6047 = vperm.xlu0 %6046, %v5951
      %v6048 = vpop.permute.xlu0 %6047
      %6051 = vset.pattern.permute.xlu0 0
      %6052 = vperm.xlu0 %6051, %v5952
      %v6053 = vpop.permute.xlu0 %6052
      %6056 = vset.pattern.permute.xlu0 0
      %6057 = vperm.xlu0 %6056, %v5953
      %v6058 = vpop.permute.xlu0 %6057
      %6061 = vset.pattern.permute.xlu0 0
      %6062 = vperm.xlu0 %6061, %v5954
      %v6063 = vpop.permute.xlu0 %6062
      %6066 = vset.pattern.permute.xlu0 0
      %6067 = vperm.xlu0 %6066, %v5955
      %v6068 = vpop.permute.xlu0 %6067
      %6071 = vset.pattern.permute.xlu0 0
      %6072 = vperm.xlu0 %6071, %v5956
      %v6073 = vpop.permute.xlu0 %6072
      %6076 = vset.pattern.permute.xlu0 0
      %6077 = vperm.xlu0 %6076, %v5957
      %v6078 = vpop.permute.xlu0 %6077
      %6081 = vset.pattern.permute.xlu0 0
      %6082 = vperm.xlu0 %6081, %v5958
      %v6083 = vpop.permute.xlu0 %6082
      %6086 = vset.pattern.permute.xlu0 0
      %6087 = vperm.xlu0 %6086, %v5959
      %v6088 = vpop.permute.xlu0 %6087
      %6091 = vset.pattern.permute.xlu0 0
      %6092 = vperm.xlu0 %6091, %v5960
      %v6093 = vpop.permute.xlu0 %6092
      %6096 = vset.pattern.permute.xlu0 0
      %6097 = vperm.xlu0 %6096, %v5961
      %v6098 = vpop.permute.xlu0 %6097
      %6101 = vset.pattern.permute.xlu0 0
      %6102 = vperm.xlu0 %6101, %v5962
      %v6103 = vpop.permute.xlu0 %6102
      %6106 = vset.pattern.permute.xlu0 0
      %6107 = vperm.xlu0 %6106, %v5963
      %v6108 = vpop.permute.xlu0 %6107
      %6111 = vset.pattern.permute.xlu0 0
      %6112 = vperm.xlu0 %6111, %v5964
      %v6113 = vpop.permute.xlu0 %6112
      %6116 = vset.pattern.permute.xlu0 0
      %6117 = vperm.xlu0 %6116, %v5965
      %v6118 = vpop.permute.xlu0 %6117
      %6121 = vset.pattern.permute.xlu0 0
      %6122 = vperm.xlu0 %6121, %v5966
      %v6123 = vpop.permute.xlu0 %6122
      %6126 = vset.pattern.permute.xlu0 0
      %6127 = vperm.xlu0 %6126, %v5967
      %v6128 = vpop.permute.xlu0 %6127
      %v6131 = vlaneseq
      %v6132 = vshrl.u32 %v6131, 7
      %v6133 = vsub.s32 0, %v6132
      %v6134 = vrot.slane %v5969, %v6133
      %v6135 = vlaneseq
      %v6136 = vshrl.u32 %v6135, 7
      %v6137 = vsub.s32 2, %v6136
      %v6138 = vrot.slane %v5969, %v6137
      %v6141 = vlaneseq
      %v6142 = vshrl.u32 %v6141, 7
      %v6143 = vsub.s32 0, %v6142
      %v6144 = vrot.slane %v6134, %v6143
      %v6145 = vlaneseq
      %v6146 = vshrl.u32 %v6145, 7
      %v6147 = vsub.s32 0, %v6146
      %v6148 = vrot.slane %v6138, %v6147
      %v6149 = vmul.f32 %v5973, %v6144
      %v6150 = vmul.f32 %v5973, %v6148
      %v6151 = vmul.f32 %v5978, %v6144
      %v6152 = vmul.f32 %v5978, %v6148
      %v6153 = vmul.f32 %v5983, %v6144
      %v6154 = vmul.f32 %v5983, %v6148
      %v6155 = vmul.f32 %v5988, %v6144
      %v6156 = vmul.f32 %v5988, %v6148
      %v6157 = vmul.f32 %v5993, %v6144
      %v6158 = vmul.f32 %v5993, %v6148
      %v6159 = vmul.f32 %v5998, %v6144
      %v6160 = vmul.f32 %v5998, %v6148
      %v6161 = vmul.f32 %v6003, %v6144
      %v6162 = vmul.f32 %v6003, %v6148
      %v6163 = vmul.f32 %v6008, %v6144
      %v6164 = vmul.f32 %v6008, %v6148
      %v6165 = vmul.f32 %v6013, %v6144
      %v6166 = vmul.f32 %v6013, %v6148
      %v6167 = vmul.f32 %v6018, %v6144
      %v6168 = vmul.f32 %v6018, %v6148
      %v6169 = vmul.f32 %v6023, %v6144
      %v6170 = vmul.f32 %v6023, %v6148
      %v6171 = vmul.f32 %v6028, %v6144
      %v6172 = vmul.f32 %v6028, %v6148
      %v6173 = vmul.f32 %v6033, %v6144
      %v6174 = vmul.f32 %v6033, %v6148
      %v6175 = vmul.f32 %v6038, %v6144
      %v6176 = vmul.f32 %v6038, %v6148
      %v6177 = vmul.f32 %v6043, %v6144
      %v6178 = vmul.f32 %v6043, %v6148
      %v6179 = vmul.f32 %v6048, %v6144
      %v6180 = vmul.f32 %v6048, %v6148
      %v6181 = vmul.f32 %v6053, %v6144
      %v6182 = vmul.f32 %v6053, %v6148
      %v6183 = vmul.f32 %v6058, %v6144
      %v6184 = vmul.f32 %v6058, %v6148
      %v6185 = vmul.f32 %v6063, %v6144
      %v6186 = vmul.f32 %v6063, %v6148
      %v6187 = vmul.f32 %v6068, %v6144
      %v6188 = vmul.f32 %v6068, %v6148
      %v6189 = vmul.f32 %v6073, %v6144
      %v6190 = vmul.f32 %v6073, %v6148
      %v6191 = vmul.f32 %v6078, %v6144
      %v6192 = vmul.f32 %v6078, %v6148
      %v6193 = vmul.f32 %v6083, %v6144
      %v6194 = vmul.f32 %v6083, %v6148
      %v6195 = vmul.f32 %v6088, %v6144
      %v6196 = vmul.f32 %v6088, %v6148
      %v6197 = vmul.f32 %v6093, %v6144
      %v6198 = vmul.f32 %v6093, %v6148
      %v6199 = vmul.f32 %v6098, %v6144
      %v6200 = vmul.f32 %v6098, %v6148
      %v6201 = vmul.f32 %v6103, %v6144
      %v6202 = vmul.f32 %v6103, %v6148
      %v6203 = vmul.f32 %v6108, %v6144
      %v6204 = vmul.f32 %v6108, %v6148
      %v6205 = vmul.f32 %v6113, %v6144
      %v6206 = vmul.f32 %v6113, %v6148
      %v6207 = vmul.f32 %v6118, %v6144
      %v6208 = vmul.f32 %v6118, %v6148
      %v6209 = vmul.f32 %v6123, %v6144
      %v6210 = vmul.f32 %v6123, %v6148
      %v6211 = vmul.f32 %v6128, %v6144
      %v6212 = vmul.f32 %v6128, %v6148
      %6213 = vset.pattern.permute.xlu0 1
      %6214 = vperm.xlu0 %6213, %v5936
      %v6215 = vpop.permute.xlu0 %6214
      %6217 = vset.pattern.permute.xlu0 1
      %6218 = vperm.xlu0 %6217, %v5937
      %v6219 = vpop.permute.xlu0 %6218
      %6221 = vset.pattern.permute.xlu0 1
      %6222 = vperm.xlu0 %6221, %v5938
      %v6223 = vpop.permute.xlu0 %6222
      %6225 = vset.pattern.permute.xlu0 1
      %6226 = vperm.xlu0 %6225, %v5939
      %v6227 = vpop.permute.xlu0 %6226
      %6229 = vset.pattern.permute.xlu0 1
      %6230 = vperm.xlu0 %6229, %v5940
      %v6231 = vpop.permute.xlu0 %6230
      %6233 = vset.pattern.permute.xlu0 1
      %6234 = vperm.xlu0 %6233, %v5941
      %v6235 = vpop.permute.xlu0 %6234
      %6237 = vset.pattern.permute.xlu0 1
      %6238 = vperm.xlu0 %6237, %v5942
      %v6239 = vpop.permute.xlu0 %6238
      %6241 = vset.pattern.permute.xlu0 1
      %6242 = vperm.xlu0 %6241, %v5943
      %v6243 = vpop.permute.xlu0 %6242
      %6245 = vset.pattern.permute.xlu0 1
      %6246 = vperm.xlu0 %6245, %v5944
      %v6247 = vpop.permute.xlu0 %6246
      %6249 = vset.pattern.permute.xlu0 1
      %6250 = vperm.xlu0 %6249, %v5945
      %v6251 = vpop.permute.xlu0 %6250
      %6253 = vset.pattern.permute.xlu0 1
      %6254 = vperm.xlu0 %6253, %v5946
      %v6255 = vpop.permute.xlu0 %6254
      %6257 = vset.pattern.permute.xlu0 1
      %6258 = vperm.xlu0 %6257, %v5947
      %v6259 = vpop.permute.xlu0 %6258
      %6261 = vset.pattern.permute.xlu0 1
      %6262 = vperm.xlu0 %6261, %v5948
      %v6263 = vpop.permute.xlu0 %6262
      %6265 = vset.pattern.permute.xlu0 1
      %6266 = vperm.xlu0 %6265, %v5949
      %v6267 = vpop.permute.xlu0 %6266
      %6269 = vset.pattern.permute.xlu0 1
      %6270 = vperm.xlu0 %6269, %v5950
      %v6271 = vpop.permute.xlu0 %6270
      %6273 = vset.pattern.permute.xlu0 1
      %6274 = vperm.xlu0 %6273, %v5951
      %v6275 = vpop.permute.xlu0 %6274
      %6277 = vset.pattern.permute.xlu0 1
      %6278 = vperm.xlu0 %6277, %v5952
      %v6279 = vpop.permute.xlu0 %6278
      %6281 = vset.pattern.permute.xlu0 1
      %6282 = vperm.xlu0 %6281, %v5953
      %v6283 = vpop.permute.xlu0 %6282
      %6285 = vset.pattern.permute.xlu0 1
      %6286 = vperm.xlu0 %6285, %v5954
      %v6287 = vpop.permute.xlu0 %6286
      %6289 = vset.pattern.permute.xlu0 1
      %6290 = vperm.xlu0 %6289, %v5955
      %v6291 = vpop.permute.xlu0 %6290
      %6293 = vset.pattern.permute.xlu0 1
      %6294 = vperm.xlu0 %6293, %v5956
      %v6295 = vpop.permute.xlu0 %6294
      %6297 = vset.pattern.permute.xlu0 1
      %6298 = vperm.xlu0 %6297, %v5957
      %v6299 = vpop.permute.xlu0 %6298
      %6301 = vset.pattern.permute.xlu0 1
      %6302 = vperm.xlu0 %6301, %v5958
      %v6303 = vpop.permute.xlu0 %6302
      %6305 = vset.pattern.permute.xlu0 1
      %6306 = vperm.xlu0 %6305, %v5959
      %v6307 = vpop.permute.xlu0 %6306
      %6309 = vset.pattern.permute.xlu0 1
      %6310 = vperm.xlu0 %6309, %v5960
      %v6311 = vpop.permute.xlu0 %6310
      %6313 = vset.pattern.permute.xlu0 1
      %6314 = vperm.xlu0 %6313, %v5961
      %v6315 = vpop.permute.xlu0 %6314
      %6317 = vset.pattern.permute.xlu0 1
      %6318 = vperm.xlu0 %6317, %v5962
      %v6319 = vpop.permute.xlu0 %6318
      %6321 = vset.pattern.permute.xlu0 1
      %6322 = vperm.xlu0 %6321, %v5963
      %v6323 = vpop.permute.xlu0 %6322
      %6325 = vset.pattern.permute.xlu0 1
      %6326 = vperm.xlu0 %6325, %v5964
      %v6327 = vpop.permute.xlu0 %6326
      %6329 = vset.pattern.permute.xlu0 1
      %6330 = vperm.xlu0 %6329, %v5965
      %v6331 = vpop.permute.xlu0 %6330
      %6333 = vset.pattern.permute.xlu0 1
      %6334 = vperm.xlu0 %6333, %v5966
      %v6335 = vpop.permute.xlu0 %6334
      %6337 = vset.pattern.permute.xlu0 1
      %6338 = vperm.xlu0 %6337, %v5967
      %v6339 = vpop.permute.xlu0 %6338
      %v6341 = vlaneseq
      %v6342 = vshrl.u32 %v6341, 7
      %v6343 = vsub.s32 1, %v6342
      %v6344 = vrot.slane %v5969, %v6343
      %v6345 = vlaneseq
      %v6346 = vshrl.u32 %v6345, 7
      %v6347 = vsub.s32 3, %v6346
      %v6348 = vrot.slane %v5969, %v6347
      %v6351 = vlaneseq
      %v6352 = vshrl.u32 %v6351, 7
      %v6353 = vsub.s32 1, %v6352
      %v6354 = vrot.slane %v6344, %v6353
      %v6355 = vlaneseq
      %v6356 = vshrl.u32 %v6355, 7
      %v6357 = vsub.s32 1, %v6356
      %v6358 = vrot.slane %v6348, %v6357
      %v6359 = vmul.f32 %v6215, %v6354
      %v6360 = vmul.f32 %v6215, %v6358
      %v6361 = vmul.f32 %v6219, %v6354
      %v6362 = vmul.f32 %v6219, %v6358
      %v6363 = vmul.f32 %v6223, %v6354
      %v6364 = vmul.f32 %v6223, %v6358
      %v6365 = vmul.f32 %v6227, %v6354
      %v6366 = vmul.f32 %v6227, %v6358
      %v6367 = vmul.f32 %v6231, %v6354
      %v6368 = vmul.f32 %v6231, %v6358
      %v6369 = vmul.f32 %v6235, %v6354
      %v6370 = vmul.f32 %v6235, %v6358
      %v6371 = vmul.f32 %v6239, %v6354
      %v6372 = vmul.f32 %v6239, %v6358
      %v6373 = vmul.f32 %v6243, %v6354
      %v6374 = vmul.f32 %v6243, %v6358
      %v6375 = vmul.f32 %v6247, %v6354
      %v6376 = vmul.f32 %v6247, %v6358
      %v6377 = vmul.f32 %v6251, %v6354
      %v6378 = vmul.f32 %v6251, %v6358
      %v6379 = vmul.f32 %v6255, %v6354
      %v6380 = vmul.f32 %v6255, %v6358
      %v6381 = vmul.f32 %v6259, %v6354
      %v6382 = vmul.f32 %v6259, %v6358
      %v6383 = vmul.f32 %v6263, %v6354
      %v6384 = vmul.f32 %v6263, %v6358
      %v6385 = vmul.f32 %v6267, %v6354
      %v6386 = vmul.f32 %v6267, %v6358
      %v6387 = vmul.f32 %v6271, %v6354
      %v6388 = vmul.f32 %v6271, %v6358
      %v6389 = vmul.f32 %v6275, %v6354
      %v6390 = vmul.f32 %v6275, %v6358
      %v6391 = vmul.f32 %v6279, %v6354
      %v6392 = vmul.f32 %v6279, %v6358
      %v6393 = vmul.f32 %v6283, %v6354
      %v6394 = vmul.f32 %v6283, %v6358
      %v6395 = vmul.f32 %v6287, %v6354
      %v6396 = vmul.f32 %v6287, %v6358
      %v6397 = vmul.f32 %v6291, %v6354
      %v6398 = vmul.f32 %v6291, %v6358
      %v6399 = vmul.f32 %v6295, %v6354
      %v6400 = vmul.f32 %v6295, %v6358
      %v6401 = vmul.f32 %v6299, %v6354
      %v6402 = vmul.f32 %v6299, %v6358
      %v6403 = vmul.f32 %v6303, %v6354
      %v6404 = vmul.f32 %v6303, %v6358
      %v6405 = vmul.f32 %v6307, %v6354
      %v6406 = vmul.f32 %v6307, %v6358
      %v6407 = vmul.f32 %v6311, %v6354
      %v6408 = vmul.f32 %v6311, %v6358
      %v6409 = vmul.f32 %v6315, %v6354
      %v6410 = vmul.f32 %v6315, %v6358
      %v6411 = vmul.f32 %v6319, %v6354
      %v6412 = vmul.f32 %v6319, %v6358
      %v6413 = vmul.f32 %v6323, %v6354
      %v6414 = vmul.f32 %v6323, %v6358
      %v6415 = vmul.f32 %v6327, %v6354
      %v6416 = vmul.f32 %v6327, %v6358
      %v6417 = vmul.f32 %v6331, %v6354
      %v6418 = vmul.f32 %v6331, %v6358
      %v6419 = vmul.f32 %v6335, %v6354
      %v6420 = vmul.f32 %v6335, %v6358
      %v6421 = vmul.f32 %v6339, %v6354
      %v6422 = vmul.f32 %v6339, %v6358
      %v6423 = vadd.f32 %v6149, %v6359
      %v6424 = vadd.f32 %v6150, %v6360
      %v6425 = vadd.f32 %v6151, %v6361
      %v6426 = vadd.f32 %v6152, %v6362
      %v6427 = vadd.f32 %v6153, %v6363
      %v6428 = vadd.f32 %v6154, %v6364
      %v6429 = vadd.f32 %v6155, %v6365
      %v6430 = vadd.f32 %v6156, %v6366
      %v6431 = vadd.f32 %v6157, %v6367
      %v6432 = vadd.f32 %v6158, %v6368
      %v6433 = vadd.f32 %v6159, %v6369
      %v6434 = vadd.f32 %v6160, %v6370
      %v6435 = vadd.f32 %v6161, %v6371
      %v6436 = vadd.f32 %v6162, %v6372
      %v6437 = vadd.f32 %v6163, %v6373
      %v6438 = vadd.f32 %v6164, %v6374
      %v6439 = vadd.f32 %v6165, %v6375
      %v6440 = vadd.f32 %v6166, %v6376
      %v6441 = vadd.f32 %v6167, %v6377
      %v6442 = vadd.f32 %v6168, %v6378
      %v6443 = vadd.f32 %v6169, %v6379
      %v6444 = vadd.f32 %v6170, %v6380
      %v6445 = vadd.f32 %v6171, %v6381
      %v6446 = vadd.f32 %v6172, %v6382
      %v6447 = vadd.f32 %v6173, %v6383
      %v6448 = vadd.f32 %v6174, %v6384
      %v6449 = vadd.f32 %v6175, %v6385
      %v6450 = vadd.f32 %v6176, %v6386
      %v6451 = vadd.f32 %v6177, %v6387
      %v6452 = vadd.f32 %v6178, %v6388
      %v6453 = vadd.f32 %v6179, %v6389
      %v6454 = vadd.f32 %v6180, %v6390
      %v6455 = vadd.f32 %v6181, %v6391
      %v6456 = vadd.f32 %v6182, %v6392
      %v6457 = vadd.f32 %v6183, %v6393
      %v6458 = vadd.f32 %v6184, %v6394
      %v6459 = vadd.f32 %v6185, %v6395
      %v6460 = vadd.f32 %v6186, %v6396
      %v6461 = vadd.f32 %v6187, %v6397
      %v6462 = vadd.f32 %v6188, %v6398
      %v6463 = vadd.f32 %v6189, %v6399
      %v6464 = vadd.f32 %v6190, %v6400
      %v6465 = vadd.f32 %v6191, %v6401
      %v6466 = vadd.f32 %v6192, %v6402
      %v6467 = vadd.f32 %v6193, %v6403
      %v6468 = vadd.f32 %v6194, %v6404
      %v6469 = vadd.f32 %v6195, %v6405
      %v6470 = vadd.f32 %v6196, %v6406
      %v6471 = vadd.f32 %v6197, %v6407
      %v6472 = vadd.f32 %v6198, %v6408
      %v6473 = vadd.f32 %v6199, %v6409
      %v6474 = vadd.f32 %v6200, %v6410
      %v6475 = vadd.f32 %v6201, %v6411
      %v6476 = vadd.f32 %v6202, %v6412
      %v6477 = vadd.f32 %v6203, %v6413
      %v6478 = vadd.f32 %v6204, %v6414
      %v6479 = vadd.f32 %v6205, %v6415
      %v6480 = vadd.f32 %v6206, %v6416
      %v6481 = vadd.f32 %v6207, %v6417
      %v6482 = vadd.f32 %v6208, %v6418
      %v6483 = vadd.f32 %v6209, %v6419
      %v6484 = vadd.f32 %v6210, %v6420
      %v6485 = vadd.f32 %v6211, %v6421
      %v6486 = vadd.f32 %v6212, %v6422
      %v6487 = vld [vmem:[%s9] sm:$0x3]
      %v6489 = vlaneseq
      %v6490 = vshrl.u32 %v6489, 7
      %v6491 = vsub.s32 0, %v6490
      %v6492 = vrot.slane %v6487, %v6491
      %v6493 = vlaneseq
      %v6494 = vshrl.u32 %v6493, 7
      %v6495 = vsub.s32 1, %v6494
      %v6496 = vrot.slane %v6487, %v6495
      %v6499 = vadd.f32 %v6423, %v6492
      %v6500 = vadd.f32 %v6424, %v6496
      %v6501 = vadd.f32 %v6425, %v6492
      %v6502 = vadd.f32 %v6426, %v6496
      %v6503 = vadd.f32 %v6427, %v6492
      %v6504 = vadd.f32 %v6428, %v6496
      %v6505 = vadd.f32 %v6429, %v6492
      %v6506 = vadd.f32 %v6430, %v6496
      %v6507 = vadd.f32 %v6431, %v6492
      %v6508 = vadd.f32 %v6432, %v6496
      %v6509 = vadd.f32 %v6433, %v6492
      %v6510 = vadd.f32 %v6434, %v6496
      %v6511 = vadd.f32 %v6435, %v6492
      %v6512 = vadd.f32 %v6436, %v6496
      %v6513 = vadd.f32 %v6437, %v6492
      %v6514 = vadd.f32 %v6438, %v6496
      %v6515 = vadd.f32 %v6439, %v6492
      %v6516 = vadd.f32 %v6440, %v6496
      %v6517 = vadd.f32 %v6441, %v6492
      %v6518 = vadd.f32 %v6442, %v6496
      %v6519 = vadd.f32 %v6443, %v6492
      %v6520 = vadd.f32 %v6444, %v6496
      %v6521 = vadd.f32 %v6445, %v6492
      %v6522 = vadd.f32 %v6446, %v6496
      %v6523 = vadd.f32 %v6447, %v6492
      %v6524 = vadd.f32 %v6448, %v6496
      %v6525 = vadd.f32 %v6449, %v6492
      %v6526 = vadd.f32 %v6450, %v6496
      %v6527 = vadd.f32 %v6451, %v6492
      %v6528 = vadd.f32 %v6452, %v6496
      %v6529 = vadd.f32 %v6453, %v6492
      %v6530 = vadd.f32 %v6454, %v6496
      %v6531 = vadd.f32 %v6455, %v6492
      %v6532 = vadd.f32 %v6456, %v6496
      %v6533 = vadd.f32 %v6457, %v6492
      %v6534 = vadd.f32 %v6458, %v6496
      %v6535 = vadd.f32 %v6459, %v6492
      %v6536 = vadd.f32 %v6460, %v6496
      %v6537 = vadd.f32 %v6461, %v6492
      %v6538 = vadd.f32 %v6462, %v6496
      %v6539 = vadd.f32 %v6463, %v6492
      %v6540 = vadd.f32 %v6464, %v6496
      %v6541 = vadd.f32 %v6465, %v6492
      %v6542 = vadd.f32 %v6466, %v6496
      %v6543 = vadd.f32 %v6467, %v6492
      %v6544 = vadd.f32 %v6468, %v6496
      %v6545 = vadd.f32 %v6469, %v6492
      %v6546 = vadd.f32 %v6470, %v6496
      %v6547 = vadd.f32 %v6471, %v6492
      %v6548 = vadd.f32 %v6472, %v6496
      %v6549 = vadd.f32 %v6473, %v6492
      %v6550 = vadd.f32 %v6474, %v6496
      %v6551 = vadd.f32 %v6475, %v6492
      %v6552 = vadd.f32 %v6476, %v6496
      %v6553 = vadd.f32 %v6477, %v6492
      %v6554 = vadd.f32 %v6478, %v6496
      %v6555 = vadd.f32 %v6479, %v6492
      %v6556 = vadd.f32 %v6480, %v6496
      %v6557 = vadd.f32 %v6481, %v6492
      %v6558 = vadd.f32 %v6482, %v6496
      %v6559 = vadd.f32 %v6483, %v6492
      %v6560 = vadd.f32 %v6484, %v6496
      %v6561 = vadd.f32 %v6485, %v6492
      %v6562 = vadd.f32 %v6486, %v6496
      %vm6563 = vcmp.ge.f32.partialorder %v6499, 0.0
      %vm6564 = vcmp.ge.f32.partialorder %v6500, 0.0
      %vm6565 = vcmp.ge.f32.partialorder %v6501, 0.0
      %vm6566 = vcmp.ge.f32.partialorder %v6502, 0.0
      %vm6567 = vcmp.ge.f32.partialorder %v6503, 0.0
      %vm6568 = vcmp.ge.f32.partialorder %v6504, 0.0
      %vm6569 = vcmp.ge.f32.partialorder %v6505, 0.0
      %vm6570 = vcmp.ge.f32.partialorder %v6506, 0.0
      %vm6571 = vcmp.ge.f32.partialorder %v6507, 0.0
      %vm6572 = vcmp.ge.f32.partialorder %v6508, 0.0
      %vm6573 = vcmp.ge.f32.partialorder %v6509, 0.0
      %vm6574 = vcmp.ge.f32.partialorder %v6510, 0.0
      %vm6575 = vcmp.ge.f32.partialorder %v6511, 0.0
      %vm6576 = vcmp.ge.f32.partialorder %v6512, 0.0
      %vm6577 = vcmp.ge.f32.partialorder %v6513, 0.0
      %vm6578 = vcmp.ge.f32.partialorder %v6514, 0.0
      %vm6579 = vcmp.ge.f32.partialorder %v6515, 0.0
      %vm6580 = vcmp.ge.f32.partialorder %v6516, 0.0
      %vm6581 = vcmp.ge.f32.partialorder %v6517, 0.0
      %vm6582 = vcmp.ge.f32.partialorder %v6518, 0.0
      %vm6583 = vcmp.ge.f32.partialorder %v6519, 0.0
      %vm6584 = vcmp.ge.f32.partialorder %v6520, 0.0
      %vm6585 = vcmp.ge.f32.partialorder %v6521, 0.0
      %vm6586 = vcmp.ge.f32.partialorder %v6522, 0.0
      %vm6587 = vcmp.ge.f32.partialorder %v6523, 0.0
      %vm6588 = vcmp.ge.f32.partialorder %v6524, 0.0
      %vm6589 = vcmp.ge.f32.partialorder %v6525, 0.0
      %vm6590 = vcmp.ge.f32.partialorder %v6526, 0.0
      %vm6591 = vcmp.ge.f32.partialorder %v6527, 0.0
      %vm6592 = vcmp.ge.f32.partialorder %v6528, 0.0
      %vm6593 = vcmp.ge.f32.partialorder %v6529, 0.0
      %vm6594 = vcmp.ge.f32.partialorder %v6530, 0.0
      %vm6595 = vcmp.ge.f32.partialorder %v6531, 0.0
      %vm6596 = vcmp.ge.f32.partialorder %v6532, 0.0
      %vm6597 = vcmp.ge.f32.partialorder %v6533, 0.0
      %vm6598 = vcmp.ge.f32.partialorder %v6534, 0.0
      %vm6599 = vcmp.ge.f32.partialorder %v6535, 0.0
      %vm6600 = vcmp.ge.f32.partialorder %v6536, 0.0
      %vm6601 = vcmp.ge.f32.partialorder %v6537, 0.0
      %vm6602 = vcmp.ge.f32.partialorder %v6538, 0.0
      %vm6603 = vcmp.ge.f32.partialorder %v6539, 0.0
      %vm6604 = vcmp.ge.f32.partialorder %v6540, 0.0
      %vm6605 = vcmp.ge.f32.partialorder %v6541, 0.0
      %vm6606 = vcmp.ge.f32.partialorder %v6542, 0.0
      %vm6607 = vcmp.ge.f32.partialorder %v6543, 0.0
      %vm6608 = vcmp.ge.f32.partialorder %v6544, 0.0
      %vm6609 = vcmp.ge.f32.partialorder %v6545, 0.0
      %vm6610 = vcmp.ge.f32.partialorder %v6546, 0.0
      %vm6611 = vcmp.ge.f32.partialorder %v6547, 0.0
      %vm6612 = vcmp.ge.f32.partialorder %v6548, 0.0
      %vm6613 = vcmp.ge.f32.partialorder %v6549, 0.0
      %vm6614 = vcmp.ge.f32.partialorder %v6550, 0.0
      %vm6615 = vcmp.ge.f32.partialorder %v6551, 0.0
      %vm6616 = vcmp.ge.f32.partialorder %v6552, 0.0
      %vm6617 = vcmp.ge.f32.partialorder %v6553, 0.0
      %vm6618 = vcmp.ge.f32.partialorder %v6554, 0.0
      %vm6619 = vcmp.ge.f32.partialorder %v6555, 0.0
      %vm6620 = vcmp.ge.f32.partialorder %v6556, 0.0
      %vm6621 = vcmp.ge.f32.partialorder %v6557, 0.0
      %vm6622 = vcmp.ge.f32.partialorder %v6558, 0.0
      %vm6623 = vcmp.ge.f32.partialorder %v6559, 0.0
      %vm6624 = vcmp.ge.f32.partialorder %v6560, 0.0
      %vm6625 = vcmp.ge.f32.partialorder %v6561, 0.0
      %vm6626 = vcmp.ge.f32.partialorder %v6562, 0.0
      %v6627 = vmul.f32 %v6499, 0.2
      %v6628 = vmul.f32 %v6500, 0.2
      %v6629 = vmul.f32 %v6501, 0.2
      %v6630 = vmul.f32 %v6502, 0.2
      %v6631 = vmul.f32 %v6503, 0.2
      %v6632 = vmul.f32 %v6504, 0.2
      %v6633 = vmul.f32 %v6505, 0.2
      %v6634 = vmul.f32 %v6506, 0.2
      %v6635 = vmul.f32 %v6507, 0.2
      %v6636 = vmul.f32 %v6508, 0.2
      %v6637 = vmul.f32 %v6509, 0.2
      %v6638 = vmul.f32 %v6510, 0.2
      %v6639 = vmul.f32 %v6511, 0.2
      %v6640 = vmul.f32 %v6512, 0.2
      %v6641 = vmul.f32 %v6513, 0.2
      %v6642 = vmul.f32 %v6514, 0.2
      %v6643 = vmul.f32 %v6515, 0.2
      %v6644 = vmul.f32 %v6516, 0.2
      %v6645 = vmul.f32 %v6517, 0.2
      %v6646 = vmul.f32 %v6518, 0.2
      %v6647 = vmul.f32 %v6519, 0.2
      %v6648 = vmul.f32 %v6520, 0.2
      %v6649 = vmul.f32 %v6521, 0.2
      %v6650 = vmul.f32 %v6522, 0.2
      %v6651 = vmul.f32 %v6523, 0.2
      %v6652 = vmul.f32 %v6524, 0.2
      %v6653 = vmul.f32 %v6525, 0.2
      %v6654 = vmul.f32 %v6526, 0.2
      %v6655 = vmul.f32 %v6527, 0.2
      %v6656 = vmul.f32 %v6528, 0.2
      %v6657 = vmul.f32 %v6529, 0.2
      %v6658 = vmul.f32 %v6530, 0.2
      %v6659 = vmul.f32 %v6531, 0.2
      %v6660 = vmul.f32 %v6532, 0.2
      %v6661 = vmul.f32 %v6533, 0.2
      %v6662 = vmul.f32 %v6534, 0.2
      %v6663 = vmul.f32 %v6535, 0.2
      %v6664 = vmul.f32 %v6536, 0.2
      %v6665 = vmul.f32 %v6537, 0.2
      %v6666 = vmul.f32 %v6538, 0.2
      %v6667 = vmul.f32 %v6539, 0.2
      %v6668 = vmul.f32 %v6540, 0.2
      %v6669 = vmul.f32 %v6541, 0.2
      %v6670 = vmul.f32 %v6542, 0.2
      %v6671 = vmul.f32 %v6543, 0.2
      %v6672 = vmul.f32 %v6544, 0.2
      %v6673 = vmul.f32 %v6545, 0.2
      %v6674 = vmul.f32 %v6546, 0.2
      %v6675 = vmul.f32 %v6547, 0.2
      %v6676 = vmul.f32 %v6548, 0.2
      %v6677 = vmul.f32 %v6549, 0.2
      %v6678 = vmul.f32 %v6550, 0.2
      %v6679 = vmul.f32 %v6551, 0.2
      %v6680 = vmul.f32 %v6552, 0.2
      %v6681 = vmul.f32 %v6553, 0.2
      %v6682 = vmul.f32 %v6554, 0.2
      %v6683 = vmul.f32 %v6555, 0.2
      %v6684 = vmul.f32 %v6556, 0.2
      %v6685 = vmul.f32 %v6557, 0.2
      %v6686 = vmul.f32 %v6558, 0.2
      %v6687 = vmul.f32 %v6559, 0.2
      %v6688 = vmul.f32 %v6560, 0.2
      %v6689 = vmul.f32 %v6561, 0.2
      %v6690 = vmul.f32 %v6562, 0.2
      %v6691 = vsel %vm6563, %v6499, %v6627
      %v6692 = vsel %vm6564, %v6500, %v6628
      %v6693 = vsel %vm6565, %v6501, %v6629
      %v6694 = vsel %vm6566, %v6502, %v6630
      %v6695 = vsel %vm6567, %v6503, %v6631
      %v6696 = vsel %vm6568, %v6504, %v6632
      %v6697 = vsel %vm6569, %v6505, %v6633
      %v6698 = vsel %vm6570, %v6506, %v6634
      %v6699 = vsel %vm6571, %v6507, %v6635
      %v6700 = vsel %vm6572, %v6508, %v6636
      %v6701 = vsel %vm6573, %v6509, %v6637
      %v6702 = vsel %vm6574, %v6510, %v6638
      %v6703 = vsel %vm6575, %v6511, %v6639
      %v6704 = vsel %vm6576, %v6512, %v6640
      %v6705 = vsel %vm6577, %v6513, %v6641
      %v6706 = vsel %vm6578, %v6514, %v6642
      %v6707 = vsel %vm6579, %v6515, %v6643
      %v6708 = vsel %vm6580, %v6516, %v6644
      %v6709 = vsel %vm6581, %v6517, %v6645
      %v6710 = vsel %vm6582, %v6518, %v6646
      %v6711 = vsel %vm6583, %v6519, %v6647
      %v6712 = vsel %vm6584, %v6520, %v6648
      %v6713 = vsel %vm6585, %v6521, %v6649
      %v6714 = vsel %vm6586, %v6522, %v6650
      %v6715 = vsel %vm6587, %v6523, %v6651
      %v6716 = vsel %vm6588, %v6524, %v6652
      %v6717 = vsel %vm6589, %v6525, %v6653
      %v6718 = vsel %vm6590, %v6526, %v6654
      %v6719 = vsel %vm6591, %v6527, %v6655
      %v6720 = vsel %vm6592, %v6528, %v6656
      %v6721 = vsel %vm6593, %v6529, %v6657
      %v6722 = vsel %vm6594, %v6530, %v6658
      %v6723 = vsel %vm6595, %v6531, %v6659
      %v6724 = vsel %vm6596, %v6532, %v6660
      %v6725 = vsel %vm6597, %v6533, %v6661
      %v6726 = vsel %vm6598, %v6534, %v6662
      %v6727 = vsel %vm6599, %v6535, %v6663
      %v6728 = vsel %vm6600, %v6536, %v6664
      %v6729 = vsel %vm6601, %v6537, %v6665
      %v6730 = vsel %vm6602, %v6538, %v6666
      %v6731 = vsel %vm6603, %v6539, %v6667
      %v6732 = vsel %vm6604, %v6540, %v6668
      %v6733 = vsel %vm6605, %v6541, %v6669
      %v6734 = vsel %vm6606, %v6542, %v6670
      %v6735 = vsel %vm6607, %v6543, %v6671
      %v6736 = vsel %vm6608, %v6544, %v6672
      %v6737 = vsel %vm6609, %v6545, %v6673
      %v6738 = vsel %vm6610, %v6546, %v6674
      %v6739 = vsel %vm6611, %v6547, %v6675
      %v6740 = vsel %vm6612, %v6548, %v6676
      %v6741 = vsel %vm6613, %v6549, %v6677
      %v6742 = vsel %vm6614, %v6550, %v6678
      %v6743 = vsel %vm6615, %v6551, %v6679
      %v6744 = vsel %vm6616, %v6552, %v6680
      %v6745 = vsel %vm6617, %v6553, %v6681
      %v6746 = vsel %vm6618, %v6554, %v6682
      %v6747 = vsel %vm6619, %v6555, %v6683
      %v6748 = vsel %vm6620, %v6556, %v6684
      %v6749 = vsel %vm6621, %v6557, %v6685
      %v6750 = vsel %vm6622, %v6558, %v6686
      %v6751 = vsel %vm6623, %v6559, %v6687
      %v6752 = vsel %vm6624, %v6560, %v6688
      %v6753 = vsel %vm6625, %v6561, %v6689
      %v6754 = vsel %vm6626, %v6562, %v6690
      %v6755 = vpack.c.bf16 %v6693, %v6691
      %v6756 = vpack.c.bf16 %v6694, %v6692
      %v6757 = vpack.c.bf16 %v6697, %v6695
      %v6758 = vpack.c.bf16 %v6698, %v6696
      %v6759 = vpack.c.bf16 %v6701, %v6699
      %v6760 = vpack.c.bf16 %v6702, %v6700
      %v6761 = vpack.c.bf16 %v6705, %v6703
      %v6762 = vpack.c.bf16 %v6706, %v6704
      %v6763 = vpack.c.bf16 %v6709, %v6707
      %v6764 = vpack.c.bf16 %v6710, %v6708
      %v6765 = vpack.c.bf16 %v6713, %v6711
      %v6766 = vpack.c.bf16 %v6714, %v6712
      %v6767 = vpack.c.bf16 %v6717, %v6715
      %v6768 = vpack.c.bf16 %v6718, %v6716
      %v6769 = vpack.c.bf16 %v6721, %v6719
      %v6770 = vpack.c.bf16 %v6722, %v6720
      %v6771 = vpack.c.bf16 %v6725, %v6723
      %v6772 = vpack.c.bf16 %v6726, %v6724
      %v6773 = vpack.c.bf16 %v6729, %v6727
      %v6774 = vpack.c.bf16 %v6730, %v6728
      %v6775 = vpack.c.bf16 %v6733, %v6731
      %v6776 = vpack.c.bf16 %v6734, %v6732
      %v6777 = vpack.c.bf16 %v6737, %v6735
      %v6778 = vpack.c.bf16 %v6738, %v6736
      %v6779 = vpack.c.bf16 %v6741, %v6739
      %v6780 = vpack.c.bf16 %v6742, %v6740
      %v6781 = vpack.c.bf16 %v6745, %v6743
      %v6782 = vpack.c.bf16 %v6746, %v6744
      %v6783 = vpack.c.bf16 %v6749, %v6747
      %v6784 = vpack.c.bf16 %v6750, %v6748
      %v6785 = vpack.c.bf16 %v6753, %v6751
      %v6786 = vpack.c.bf16 %v6754, %v6752
      %v6787 = vld [vmem:[%s10] sm:$0xff]
      %v6788 = vld [vmem:[%s10 + $0x8] sm:$0xff]
      %v6789 = vld [vmem:[%s10 + $0x10] sm:$0xff]
      %v6790 = vld [vmem:[%s10 + $0x18] sm:$0xff]
      %v6791 = vld [vmem:[%s10 + $0x20] sm:$0xff]
      %v6792 = vld [vmem:[%s10 + $0x28] sm:$0xff]
      %v6793 = vld [vmem:[%s10 + $0x30] sm:$0xff]
      %v6794 = vld [vmem:[%s10 + $0x38] sm:$0xff]
      %v6795 = vld [vmem:[%s10 + $0x40] sm:$0xff]
      %v6796 = vld [vmem:[%s10 + $0x48] sm:$0xff]
      %v6797 = vld [vmem:[%s10 + $0x50] sm:$0xff]
      %v6798 = vld [vmem:[%s10 + $0x58] sm:$0xff]
      %v6799 = vld [vmem:[%s10 + $0x60] sm:$0xff]
      %v6800 = vld [vmem:[%s10 + $0x68] sm:$0xff]
      %v6801 = vld [vmem:[%s10 + $0x70] sm:$0xff]
      %v6802 = vld [vmem:[%s10 + $0x78] sm:$0xff]
      %v6803 = vld [vmem:[%s10 + $0x80] sm:$0xff]
      %v6804 = vld [vmem:[%s10 + $0x88] sm:$0xff]
      %v6805 = vld [vmem:[%s10 + $0x90] sm:$0xff]
      %v6806 = vld [vmem:[%s10 + $0x98] sm:$0xff]
      %v6807 = vld [vmem:[%s10 + $0xa0] sm:$0xff]
      %v6808 = vld [vmem:[%s10 + $0xa8] sm:$0xff]
      %v6809 = vld [vmem:[%s10 + $0xb0] sm:$0xff]
      %v6810 = vld [vmem:[%s10 + $0xb8] sm:$0xff]
      %v6811 = vld [vmem:[%s10 + $0xc0] sm:$0xff]
      %v6812 = vld [vmem:[%s10 + $0xc8] sm:$0xff]
      %v6813 = vld [vmem:[%s10 + $0xd0] sm:$0xff]
      %v6814 = vld [vmem:[%s10 + $0xd8] sm:$0xff]
      %v6815 = vld [vmem:[%s10 + $0xe0] sm:$0xff]
      %v6816 = vld [vmem:[%s10 + $0xe8] sm:$0xff]
      %v6817 = vld [vmem:[%s10 + $0xf0] sm:$0xff]
      %v6818 = vld [vmem:[%s10 + $0xf8] sm:$0xff]
      %v6819 = vld [vmem:[%s10 + $0x100] sm:$0xff]
      %v6820 = vld [vmem:[%s10 + $0x108] sm:$0xff]
      %v6821 = vld [vmem:[%s10 + $0x110] sm:$0xff]
      %v6822 = vld [vmem:[%s10 + $0x118] sm:$0xff]
      %v6823 = vld [vmem:[%s10 + $0x120] sm:$0xff]
      %v6824 = vld [vmem:[%s10 + $0x128] sm:$0xff]
      %v6825 = vld [vmem:[%s10 + $0x130] sm:$0xff]
      %v6826 = vld [vmem:[%s10 + $0x138] sm:$0xff]
      %v6827 = vld [vmem:[%s10 + $0x140] sm:$0xff]
      %v6828 = vld [vmem:[%s10 + $0x148] sm:$0xff]
      %v6829 = vld [vmem:[%s10 + $0x150] sm:$0xff]
      %v6830 = vld [vmem:[%s10 + $0x158] sm:$0xff]
      %v6831 = vld [vmem:[%s10 + $0x160] sm:$0xff]
      %v6832 = vld [vmem:[%s10 + $0x168] sm:$0xff]
      %v6833 = vld [vmem:[%s10 + $0x170] sm:$0xff]
      %v6834 = vld [vmem:[%s10 + $0x178] sm:$0xff]
      %v6835 = vld [vmem:[%s10 + $0x180] sm:$0xff]
      %v6836 = vld [vmem:[%s10 + $0x188] sm:$0xff]
      %v6887 = vunpack.c.l.b16 %v6787
      %v6888 = vunpack.c.h.b16 %v6787
      %v6889 = vunpack.c.l.b16 %v6788
      %v6890 = vunpack.c.h.b16 %v6788
      %v6891 = vunpack.c.l.b16 %v6789
      %v6892 = vunpack.c.h.b16 %v6789
      %v6893 = vunpack.c.l.b16 %v6790
      %v6894 = vunpack.c.h.b16 %v6790
      %v6895 = vunpack.c.l.b16 %v6791
      %v6896 = vunpack.c.h.b16 %v6791
      %v6897 = vunpack.c.l.b16 %v6792
      %v6898 = vunpack.c.h.b16 %v6792
      %v6899 = vunpack.c.l.b16 %v6793
      %v6900 = vunpack.c.h.b16 %v6793
      %v6901 = vunpack.c.l.b16 %v6794
      %v6902 = vunpack.c.h.b16 %v6794
      %v6903 = vunpack.c.l.b16 %v6795
      %v6904 = vunpack.c.h.b16 %v6795
      %v6905 = vunpack.c.l.b16 %v6796
      %v6906 = vunpack.c.h.b16 %v6796
      %v6907 = vunpack.c.l.b16 %v6797
      %v6908 = vunpack.c.h.b16 %v6797
      %v6909 = vunpack.c.l.b16 %v6798
      %v6910 = vunpack.c.h.b16 %v6798
      %v6911 = vunpack.c.l.b16 %v6799
      %v6912 = vunpack.c.h.b16 %v6799
      %v6913 = vunpack.c.l.b16 %v6800
      %v6914 = vunpack.c.h.b16 %v6800
      %v6915 = vunpack.c.l.b16 %v6801
      %v6916 = vunpack.c.h.b16 %v6801
      %v6917 = vunpack.c.l.b16 %v6802
      %v6918 = vunpack.c.h.b16 %v6802
      %v6919 = vunpack.c.l.b16 %v6803
      %v6920 = vunpack.c.h.b16 %v6803
      %v6921 = vunpack.c.l.b16 %v6804
      %v6922 = vunpack.c.h.b16 %v6804
      %v6923 = vunpack.c.l.b16 %v6805
      %v6924 = vunpack.c.h.b16 %v6805
      %v6925 = vunpack.c.l.b16 %v6806
      %v6926 = vunpack.c.h.b16 %v6806
      %v6927 = vunpack.c.l.b16 %v6807
      %v6928 = vunpack.c.h.b16 %v6807
      %v6929 = vunpack.c.l.b16 %v6808
      %v6930 = vunpack.c.h.b16 %v6808
      %v6931 = vunpack.c.l.b16 %v6809
      %v6932 = vunpack.c.h.b16 %v6809
      %v6933 = vunpack.c.l.b16 %v6810
      %v6934 = vunpack.c.h.b16 %v6810
      %v6935 = vunpack.c.l.b16 %v6811
      %v6936 = vunpack.c.h.b16 %v6811
      %v6937 = vunpack.c.l.b16 %v6812
      %v6938 = vunpack.c.h.b16 %v6812
      %v6939 = vunpack.c.l.b16 %v6813
      %v6940 = vunpack.c.h.b16 %v6813
      %v6941 = vunpack.c.l.b16 %v6814
      %v6942 = vunpack.c.h.b16 %v6814
      %v6943 = vunpack.c.l.b16 %v6815
      %v6944 = vunpack.c.h.b16 %v6815
      %v6945 = vunpack.c.l.b16 %v6816
      %v6946 = vunpack.c.h.b16 %v6816
      %v6947 = vunpack.c.l.b16 %v6817
      %v6948 = vunpack.c.h.b16 %v6817
      %v6949 = vunpack.c.l.b16 %v6818
      %v6950 = vunpack.c.h.b16 %v6818
      %v6951 = vunpack.c.l.b16 %v6819
      %v6952 = vunpack.c.h.b16 %v6819
      %v6953 = vunpack.c.l.b16 %v6820
      %v6954 = vunpack.c.h.b16 %v6820
      %v6955 = vunpack.c.l.b16 %v6821
      %v6956 = vunpack.c.h.b16 %v6821
      %v6957 = vunpack.c.l.b16 %v6822
      %v6958 = vunpack.c.h.b16 %v6822
      %v6959 = vunpack.c.l.b16 %v6823
      %v6960 = vunpack.c.h.b16 %v6823
      %v6961 = vunpack.c.l.b16 %v6824
      %v6962 = vunpack.c.h.b16 %v6824
      %v6963 = vunpack.c.l.b16 %v6825
      %v6964 = vunpack.c.h.b16 %v6825
      %v6965 = vunpack.c.l.b16 %v6826
      %v6966 = vunpack.c.h.b16 %v6826
      %v6967 = vunpack.c.l.b16 %v6827
      %v6968 = vunpack.c.h.b16 %v6827
      %v6969 = vunpack.c.l.b16 %v6828
      %v6970 = vunpack.c.h.b16 %v6828
      %v6971 = vunpack.c.l.b16 %v6829
      %v6972 = vunpack.c.h.b16 %v6829
      %v6973 = vunpack.c.l.b16 %v6830
      %v6974 = vunpack.c.h.b16 %v6830
      %v6975 = vunpack.c.l.b16 %v6831
      %v6976 = vunpack.c.h.b16 %v6831
      %v6977 = vunpack.c.l.b16 %v6832
      %v6978 = vunpack.c.h.b16 %v6832
      %v6979 = vunpack.c.l.b16 %v6833
      %v6980 = vunpack.c.h.b16 %v6833
      %v6981 = vunpack.c.l.b16 %v6834
      %v6982 = vunpack.c.h.b16 %v6834
      %v6983 = vunpack.c.l.b16 %v6835
      %v6984 = vunpack.c.h.b16 %v6835
      %v6985 = vunpack.c.l.b16 %v6836
      %v6986 = vunpack.c.h.b16 %v6836
      %v6987 = vpack.c.b16 %v6891, %v6887
      %v6988 = vpack.c.b16 %v6892, %v6888
      %v6989 = vpack.c.b16 %v6893, %v6889
      %v6990 = vpack.c.b16 %v6894, %v6890
      %v6991 = vpack.c.b16 %v6899, %v6895
      %v6992 = vpack.c.b16 %v6900, %v6896
      %v6993 = vpack.c.b16 %v6901, %v6897
      %v6994 = vpack.c.b16 %v6902, %v6898
      %v6995 = vpack.c.b16 %v6907, %v6903
      %v6996 = vpack.c.b16 %v6908, %v6904
      %v6997 = vpack.c.b16 %v6909, %v6905
      %v6998 = vpack.c.b16 %v6910, %v6906
      %v6999 = vpack.c.b16 %v6915, %v6911
      %v7000 = vpack.c.b16 %v6916, %v6912
      %v7001 = vpack.c.b16 %v6917, %v6913
      %v7002 = vpack.c.b16 %v6918, %v6914
      %v7003 = vpack.c.b16 %v6923, %v6919
      %v7004 = vpack.c.b16 %v6924, %v6920
      %v7005 = vpack.c.b16 %v6925, %v6921
      %v7006 = vpack.c.b16 %v6926, %v6922
      %v7007 = vpack.c.b16 %v6931, %v6927
      %v7008 = vpack.c.b16 %v6932, %v6928
      %v7009 = vpack.c.b16 %v6933, %v6929
      %v7010 = vpack.c.b16 %v6934, %v6930
      %v7011 = vpack.c.b16 %v6939, %v6935
      %v7012 = vpack.c.b16 %v6940, %v6936
      %v7013 = vpack.c.b16 %v6941, %v6937
      %v7014 = vpack.c.b16 %v6942, %v6938
      %v7015 = vpack.c.b16 %v6947, %v6943
      %v7016 = vpack.c.b16 %v6948, %v6944
      %v7017 = vpack.c.b16 %v6949, %v6945
      %v7018 = vpack.c.b16 %v6950, %v6946
      %v7019 = vpack.c.b16 %v6955, %v6951
      %v7020 = vpack.c.b16 %v6956, %v6952
      %v7021 = vpack.c.b16 %v6957, %v6953
      %v7022 = vpack.c.b16 %v6958, %v6954
      %v7023 = vpack.c.b16 %v6963, %v6959
      %v7024 = vpack.c.b16 %v6964, %v6960
      %v7025 = vpack.c.b16 %v6965, %v6961
      %v7026 = vpack.c.b16 %v6966, %v6962
      %v7027 = vpack.c.b16 %v6971, %v6967
      %v7028 = vpack.c.b16 %v6972, %v6968
      %v7029 = vpack.c.b16 %v6973, %v6969
      %v7030 = vpack.c.b16 %v6974, %v6970
      %v7031 = vpack.c.b16 %v6979, %v6975
      %v7032 = vpack.c.b16 %v6980, %v6976
      %v7033 = vpack.c.b16 %v6981, %v6977
      %v7034 = vpack.c.b16 %v6982, %v6978
      %v7035 = vpack.c.b16 %v6983, %v6983
      %v7036 = vpack.c.b16 %v6984, %v6984
      %v7037 = vpack.c.b16 %v6985, %v6985
      %v7038 = vpack.c.b16 %v6986, %v6986
      %v7088 = vsel %vm5402, %v6756, 0
      %v7091 = vsel %vm5402, %v6758, 0
      %v7094 = vsel %vm5402, %v6760, 0
      %v7097 = vsel %vm5402, %v6762, 0
      %v7100 = vsel %vm5402, %v6764, 0
      %v7103 = vsel %vm5402, %v6766, 0
      %v7106 = vsel %vm5402, %v6768, 0
      %v7109 = vsel %vm5402, %v6770, 0
      %v7112 = vsel %vm5402, %v6772, 0
      %v7115 = vsel %vm5402, %v6774, 0
      %v7118 = vsel %vm5402, %v6776, 0
      %v7121 = vsel %vm5402, %v6778, 0
      %v7124 = vsel %vm5402, %v6780, 0
      %v7127 = vsel %vm5402, %v6782, 0
      %v7130 = vsel %vm5402, %v6784, 0
      %v7133 = vsel %vm5402, %v6786, 0
      %v7136 = vsel %vm5451, %v7035, 0
      %v7139 = vsel %vm5451, %v7036, 0
      %v7142 = vsel %vm5451, %v7037, 0
      %v7145 = vsel %vm5451, %v7038, 0
      %7147 = vmatprep.subr.bf16.mxu0 %v6988
      %7148 = vmatpush1.bf16.msra.mxu0 %v6987
      %7149 = vmatprep.subr.bf16.mxu0 %v6992
      %7150 = vmatpush1.bf16.msra.mxu0 %v6991
      %7151 = vmatprep.subr.bf16.mxu0 %v6996
      %7152 = vmatpush1.bf16.msra.mxu0 %v6995
      %7153 = vmatprep.subr.bf16.mxu0 %v7000
      %7154 = vmatpush1.bf16.msra.mxu0 %v6999
      %7155 = vmatprep.subr.bf16.mxu0 %v7004
      %7156 = vmatpush1.bf16.msra.mxu0 %v7003
      %7157 = vmatprep.subr.bf16.mxu0 %v7008
      %7158 = vmatpush1.bf16.msra.mxu0 %v7007
      %7159 = vmatprep.subr.bf16.mxu0 %v7012
      %7160 = vmatpush1.bf16.msra.mxu0 %v7011
      %7161 = vmatprep.subr.bf16.mxu0 %v7016
      %7162 = vmatpush1.bf16.msra.mxu0 %v7015
      %7163 = vmatprep.subr.bf16.mxu0 %v7020
      %7164 = vmatpush1.bf16.msra.mxu0 %v7019
      %7165 = vmatprep.subr.bf16.mxu0 %v7024
      %7166 = vmatpush1.bf16.msra.mxu0 %v7023
      %7167 = vmatprep.subr.bf16.mxu0 %v7028
      %7168 = vmatpush1.bf16.msra.mxu0 %v7027
      %7169 = vmatprep.subr.bf16.mxu0 %v7032
      %7170 = vmatpush1.bf16.msra.mxu0 %v7031
      %7171 = vmatprep.subr.bf16.mxu0 %v7139
      %7172 = vmatpush1.bf16.msra.mxu0 %v7136
      %7173 = vmatprep.subr.bf16.mxu0 0
      %7174 = vmatpush1.bf16.msra.mxu0 0
      %7175 = vmatprep.subr.bf16.mxu0 0
      %7176 = vmatpush1.bf16.msra.mxu0 0
      %7177 = vmatprep.subr.bf16.mxu0 0
      %7178 = vmatpush1.bf16.msra.mxu0 0
      %7179 = vmatprep.mubr.bf16.mxu0 %v7088
      %7180 = vmatmul.mubr.bf16.gmra.mrb[0].mxu0 %v6755
      %v7181 = vpop.f32.mrb[0].mxu0
      %v7182 = vadd.f32 0.0, %v7181
      %v7183 = vpop.f32.mrb[0].mxu0
      %v7184 = vadd.f32 0.0, %v7183
      %v7185 = vpop.f32.mrb[0].mxu0
      %v7186 = vadd.f32 0.0, %v7185
      %v7187 = vpop.f32.mrb[0].mxu0
      %v7188 = vadd.f32 0.0, %v7187
      %7189 = vmatprep.mubr.bf16.mxu0 %v7091
      %7190 = vmatmul.mubr.bf16.gmra.mrb[0].mxu0 %v6757
      %v7191 = vpop.f32.mrb[0].mxu0
      %v7192 = vadd.f32 0.0, %v7191
      %v7193 = vpop.f32.mrb[0].mxu0
      %v7194 = vadd.f32 0.0, %v7193
      %v7195 = vpop.f32.mrb[0].mxu0
      %v7196 = vadd.f32 0.0, %v7195
      %v7197 = vpop.f32.mrb[0].mxu0
      %v7198 = vadd.f32 0.0, %v7197
      %7199 = vmatprep.mubr.bf16.mxu0 %v7094
      %7200 = vmatmul.mubr.bf16.gmra.mrb[0].mxu0 %v6759
      %v7201 = vpop.f32.mrb[0].mxu0
      %v7202 = vadd.f32 0.0, %v7201
      %v7203 = vpop.f32.mrb[0].mxu0
      %v7204 = vadd.f32 0.0, %v7203
      %v7205 = vpop.f32.mrb[0].mxu0
      %v7206 = vadd.f32 0.0, %v7205
      %v7207 = vpop.f32.mrb[0].mxu0
      %v7208 = vadd.f32 0.0, %v7207
      %7209 = vmatprep.mubr.bf16.mxu0 %v7097
      %7210 = vmatmul.mubr.bf16.gmra.mrb[0].mxu0 %v6761
      %v7211 = vpop.f32.mrb[0].mxu0
      %v7212 = vadd.f32 0.0, %v7211
      %v7213 = vpop.f32.mrb[0].mxu0
      %v7214 = vadd.f32 0.0, %v7213
      %v7215 = vpop.f32.mrb[0].mxu0
      %v7216 = vadd.f32 0.0, %v7215
      %v7217 = vpop.f32.mrb[0].mxu0
      %v7218 = vadd.f32 0.0, %v7217
      %7219 = vmatprep.mubr.bf16.mxu0 %v7100
      %7220 = vmatmul.mubr.bf16.gmra.mrb[0].mxu0 %v6763
      %v7221 = vpop.f32.mrb[0].mxu0
      %v7222 = vadd.f32 0.0, %v7221
      %v7223 = vpop.f32.mrb[0].mxu0
      %v7224 = vadd.f32 0.0, %v7223
      %v7225 = vpop.f32.mrb[0].mxu0
      %v7226 = vadd.f32 0.0, %v7225
      %v7227 = vpop.f32.mrb[0].mxu0
      %v7228 = vadd.f32 0.0, %v7227
      %7229 = vmatprep.mubr.bf16.mxu0 %v7103
      %7230 = vmatmul.mubr.bf16.gmra.mrb[0].mxu0 %v6765
      %v7231 = vpop.f32.mrb[0].mxu0
      %v7232 = vadd.f32 0.0, %v7231
      %v7233 = vpop.f32.mrb[0].mxu0
      %v7234 = vadd.f32 0.0, %v7233
      %v7235 = vpop.f32.mrb[0].mxu0
      %v7236 = vadd.f32 0.0, %v7235
      %v7237 = vpop.f32.mrb[0].mxu0
      %v7238 = vadd.f32 0.0, %v7237
      %7239 = vmatprep.mubr.bf16.mxu0 %v7106
      %7240 = vmatmul.mubr.bf16.gmra.mrb[0].mxu0 %v6767
      %v7241 = vpop.f32.mrb[0].mxu0
      %v7242 = vadd.f32 0.0, %v7241
      %v7243 = vpop.f32.mrb[0].mxu0
      %v7244 = vadd.f32 0.0, %v7243
      %v7245 = vpop.f32.mrb[0].mxu0
      %v7246 = vadd.f32 0.0, %v7245
      %v7247 = vpop.f32.mrb[0].mxu0
      %v7248 = vadd.f32 0.0, %v7247
      %7249 = vmatprep.mubr.bf16.mxu0 %v7109
      %7250 = vmatmul.mubr.bf16.gmra.mrb[0].mxu0 %v6769
      %v7251 = vpop.f32.mrb[0].mxu0
      %v7252 = vadd.f32 0.0, %v7251
      %v7253 = vpop.f32.mrb[0].mxu0
      %v7254 = vadd.f32 0.0, %v7253
      %v7255 = vpop.f32.mrb[0].mxu0
      %v7256 = vadd.f32 0.0, %v7255
      %v7257 = vpop.f32.mrb[0].mxu0
      %v7258 = vadd.f32 0.0, %v7257
      %7259 = vmatprep.mubr.bf16.mxu0 %v7112
      %7260 = vmatmul.mubr.bf16.gmra.mrb[0].mxu0 %v6771
      %v7261 = vpop.f32.mrb[0].mxu0
      %v7262 = vadd.f32 0.0, %v7261
      %v7263 = vpop.f32.mrb[0].mxu0
      %v7264 = vadd.f32 0.0, %v7263
      %v7265 = vpop.f32.mrb[0].mxu0
      %v7266 = vadd.f32 0.0, %v7265
      %v7267 = vpop.f32.mrb[0].mxu0
      %v7268 = vadd.f32 0.0, %v7267
      %7269 = vmatprep.mubr.bf16.mxu0 %v7115
      %7270 = vmatmul.mubr.bf16.gmra.mrb[0].mxu0 %v6773
      %v7271 = vpop.f32.mrb[0].mxu0
      %v7272 = vadd.f32 0.0, %v7271
      %v7273 = vpop.f32.mrb[0].mxu0
      %v7274 = vadd.f32 0.0, %v7273
      %v7275 = vpop.f32.mrb[0].mxu0
      %v7276 = vadd.f32 0.0, %v7275
      %v7277 = vpop.f32.mrb[0].mxu0
      %v7278 = vadd.f32 0.0, %v7277
      %7279 = vmatprep.mubr.bf16.mxu0 %v7118
      %7280 = vmatmul.mubr.bf16.gmra.mrb[0].mxu0 %v6775
      %v7281 = vpop.f32.mrb[0].mxu0
      %v7282 = vadd.f32 0.0, %v7281
      %v7283 = vpop.f32.mrb[0].mxu0
      %v7284 = vadd.f32 0.0, %v7283
      %v7285 = vpop.f32.mrb[0].mxu0
      %v7286 = vadd.f32 0.0, %v7285
      %v7287 = vpop.f32.mrb[0].mxu0
      %v7288 = vadd.f32 0.0, %v7287
      %7289 = vmatprep.mubr.bf16.mxu0 %v7121
      %7290 = vmatmul.mubr.bf16.gmra.mrb[0].mxu0 %v6777
      %v7291 = vpop.f32.mrb[0].mxu0
      %v7292 = vadd.f32 0.0, %v7291
      %v7293 = vpop.f32.mrb[0].mxu0
      %v7294 = vadd.f32 0.0, %v7293
      %v7295 = vpop.f32.mrb[0].mxu0
      %v7296 = vadd.f32 0.0, %v7295
      %v7297 = vpop.f32.mrb[0].mxu0
      %v7298 = vadd.f32 0.0, %v7297
      %7299 = vmatprep.mubr.bf16.mxu0 %v7124
      %7300 = vmatmul.mubr.bf16.gmra.mrb[0].mxu0 %v6779
      %v7301 = vpop.f32.mrb[0].mxu0
      %v7302 = vadd.f32 0.0, %v7301
      %v7303 = vpop.f32.mrb[0].mxu0
      %v7304 = vadd.f32 0.0, %v7303
      %v7305 = vpop.f32.mrb[0].mxu0
      %v7306 = vadd.f32 0.0, %v7305
      %v7307 = vpop.f32.mrb[0].mxu0
      %v7308 = vadd.f32 0.0, %v7307
      %7309 = vmatprep.mubr.bf16.mxu0 %v7127
      %7310 = vmatmul.mubr.bf16.gmra.mrb[0].mxu0 %v6781
      %v7311 = vpop.f32.mrb[0].mxu0
      %v7312 = vadd.f32 0.0, %v7311
      %v7313 = vpop.f32.mrb[0].mxu0
      %v7314 = vadd.f32 0.0, %v7313
      %v7315 = vpop.f32.mrb[0].mxu0
      %v7316 = vadd.f32 0.0, %v7315
      %v7317 = vpop.f32.mrb[0].mxu0
      %v7318 = vadd.f32 0.0, %v7317
      %7319 = vmatprep.mubr.bf16.mxu0 %v7130
      %7320 = vmatmul.mubr.bf16.gmra.mrb[0].mxu0 %v6783
      %v7321 = vpop.f32.mrb[0].mxu0
      %v7322 = vadd.f32 0.0, %v7321
      %v7323 = vpop.f32.mrb[0].mxu0
      %v7324 = vadd.f32 0.0, %v7323
      %v7325 = vpop.f32.mrb[0].mxu0
      %v7326 = vadd.f32 0.0, %v7325
      %v7327 = vpop.f32.mrb[0].mxu0
      %v7328 = vadd.f32 0.0, %v7327
      %7329 = vmatprep.mubr.bf16.mxu0 %v7133
      %7330 = vmatmul.mubr.bf16.gmra.mrb[0].mxu0 %v6785
      %v7331 = vpop.f32.mrb[0].mxu0
      %v7332 = vadd.f32 0.0, %v7331
      %v7333 = vpop.f32.mrb[0].mxu0
      %v7334 = vadd.f32 0.0, %v7333
      %v7335 = vpop.f32.mrb[0].mxu0
      %v7336 = vadd.f32 0.0, %v7335
      %v7337 = vpop.f32.mrb[0].mxu0
      %v7338 = vadd.f32 0.0, %v7337
      %7339 = vdwg.mxu0
      %7340 = vmatprep.subr.bf16.mxu0 %v6990
      %7341 = vmatpush1.bf16.msra.mxu0 %v6989
      %7342 = vmatprep.subr.bf16.mxu0 %v6994
      %7343 = vmatpush1.bf16.msra.mxu0 %v6993
      %7344 = vmatprep.subr.bf16.mxu0 %v6998
      %7345 = vmatpush1.bf16.msra.mxu0 %v6997
      %7346 = vmatprep.subr.bf16.mxu0 %v7002
      %7347 = vmatpush1.bf16.msra.mxu0 %v7001
      %7348 = vmatprep.subr.bf16.mxu0 %v7006
      %7349 = vmatpush1.bf16.msra.mxu0 %v7005
      %7350 = vmatprep.subr.bf16.mxu0 %v7010
      %7351 = vmatpush1.bf16.msra.mxu0 %v7009
      %7352 = vmatprep.subr.bf16.mxu0 %v7014
      %7353 = vmatpush1.bf16.msra.mxu0 %v7013
      %7354 = vmatprep.subr.bf16.mxu0 %v7018
      %7355 = vmatpush1.bf16.msra.mxu0 %v7017
      %7356 = vmatprep.subr.bf16.mxu0 %v7022
      %7357 = vmatpush1.bf16.msra.mxu0 %v7021
      %7358 = vmatprep.subr.bf16.mxu0 %v7026
      %7359 = vmatpush1.bf16.msra.mxu0 %v7025
      %7360 = vmatprep.subr.bf16.mxu0 %v7030
      %7361 = vmatpush1.bf16.msra.mxu0 %v7029
      %7362 = vmatprep.subr.bf16.mxu0 %v7034
      %7363 = vmatpush1.bf16.msra.mxu0 %v7033
      %7364 = vmatprep.subr.bf16.mxu0 %v7145
      %7365 = vmatpush1.bf16.msra.mxu0 %v7142
      %7366 = vmatprep.subr.bf16.mxu0 0
      %7367 = vmatpush1.bf16.msra.mxu0 0
      %7368 = vmatprep.subr.bf16.mxu0 0
      %7369 = vmatpush1.bf16.msra.mxu0 0
      %7370 = vmatprep.subr.bf16.mxu0 0
      %7371 = vmatpush1.bf16.msra.mxu0 0
      %7372 = vmatprep.mubr.bf16.mxu0 %v7088
      %7373 = vmatmul.mubr.bf16.gmra.mrb[0].mxu0 %v6755
      %v7374 = vpop.f32.mrb[0].mxu0
      %v7375 = vadd.f32 0.0, %v7374
      %v7376 = vpop.f32.mrb[0].mxu0
      %v7377 = vadd.f32 0.0, %v7376
      %v7378 = vpop.f32.mrb[0].mxu0
      %v7379 = vadd.f32 0.0, %v7378
      %v7380 = vpop.f32.mrb[0].mxu0
      %v7381 = vadd.f32 0.0, %v7380
      %7382 = vmatprep.mubr.bf16.mxu0 %v7091
      %7383 = vmatmul.mubr.bf16.gmra.mrb[0].mxu0 %v6757
      %v7384 = vpop.f32.mrb[0].mxu0
      %v7385 = vadd.f32 0.0, %v7384
      %v7386 = vpop.f32.mrb[0].mxu0
      %v7387 = vadd.f32 0.0, %v7386
      %v7388 = vpop.f32.mrb[0].mxu0
      %v7389 = vadd.f32 0.0, %v7388
      %v7390 = vpop.f32.mrb[0].mxu0
      %v7391 = vadd.f32 0.0, %v7390
      %7392 = vmatprep.mubr.bf16.mxu0 %v7094
      %7393 = vmatmul.mubr.bf16.gmra.mrb[0].mxu0 %v6759
      %v7394 = vpop.f32.mrb[0].mxu0
      %v7395 = vadd.f32 0.0, %v7394
      %v7396 = vpop.f32.mrb[0].mxu0
      %v7397 = vadd.f32 0.0, %v7396
      %v7398 = vpop.f32.mrb[0].mxu0
      %v7399 = vadd.f32 0.0, %v7398
      %v7400 = vpop.f32.mrb[0].mxu0
      %v7401 = vadd.f32 0.0, %v7400
      %7402 = vmatprep.mubr.bf16.mxu0 %v7097
      %7403 = vmatmul.mubr.bf16.gmra.mrb[0].mxu0 %v6761
      %v7404 = vpop.f32.mrb[0].mxu0
      %v7405 = vadd.f32 0.0, %v7404
      %v7406 = vpop.f32.mrb[0].mxu0
      %v7407 = vadd.f32 0.0, %v7406
      %v7408 = vpop.f32.mrb[0].mxu0
      %v7409 = vadd.f32 0.0, %v7408
      %v7410 = vpop.f32.mrb[0].mxu0
      %v7411 = vadd.f32 0.0, %v7410
      %7412 = vmatprep.mubr.bf16.mxu0 %v7100
      %7413 = vmatmul.mubr.bf16.gmra.mrb[0].mxu0 %v6763
      %v7414 = vpop.f32.mrb[0].mxu0
      %v7415 = vadd.f32 0.0, %v7414
      %v7416 = vpop.f32.mrb[0].mxu0
      %v7417 = vadd.f32 0.0, %v7416
      %v7418 = vpop.f32.mrb[0].mxu0
      %v7419 = vadd.f32 0.0, %v7418
      %v7420 = vpop.f32.mrb[0].mxu0
      %v7421 = vadd.f32 0.0, %v7420
      %7422 = vmatprep.mubr.bf16.mxu0 %v7103
      %7423 = vmatmul.mubr.bf16.gmra.mrb[0].mxu0 %v6765
      %v7424 = vpop.f32.mrb[0].mxu0
      %v7425 = vadd.f32 0.0, %v7424
      %v7426 = vpop.f32.mrb[0].mxu0
      %v7427 = vadd.f32 0.0, %v7426
      %v7428 = vpop.f32.mrb[0].mxu0
      %v7429 = vadd.f32 0.0, %v7428
      %v7430 = vpop.f32.mrb[0].mxu0
      %v7431 = vadd.f32 0.0, %v7430
      %7432 = vmatprep.mubr.bf16.mxu0 %v7106
      %7433 = vmatmul.mubr.bf16.gmra.mrb[0].mxu0 %v6767
      %v7434 = vpop.f32.mrb[0].mxu0
      %v7435 = vadd.f32 0.0, %v7434
      %v7436 = vpop.f32.mrb[0].mxu0
      %v7437 = vadd.f32 0.0, %v7436
      %v7438 = vpop.f32.mrb[0].mxu0
      %v7439 = vadd.f32 0.0, %v7438
      %v7440 = vpop.f32.mrb[0].mxu0
      %v7441 = vadd.f32 0.0, %v7440
      %7442 = vmatprep.mubr.bf16.mxu0 %v7109
      %7443 = vmatmul.mubr.bf16.gmra.mrb[0].mxu0 %v6769
      %v7444 = vpop.f32.mrb[0].mxu0
      %v7445 = vadd.f32 0.0, %v7444
      %v7446 = vpop.f32.mrb[0].mxu0
      %v7447 = vadd.f32 0.0, %v7446
      %v7448 = vpop.f32.mrb[0].mxu0
      %v7449 = vadd.f32 0.0, %v7448
      %v7450 = vpop.f32.mrb[0].mxu0
      %v7451 = vadd.f32 0.0, %v7450
      %7452 = vmatprep.mubr.bf16.mxu0 %v7112
      %7453 = vmatmul.mubr.bf16.gmra.mrb[0].mxu0 %v6771
      %v7454 = vpop.f32.mrb[0].mxu0
      %v7455 = vadd.f32 0.0, %v7454
      %v7456 = vpop.f32.mrb[0].mxu0
      %v7457 = vadd.f32 0.0, %v7456
      %v7458 = vpop.f32.mrb[0].mxu0
      %v7459 = vadd.f32 0.0, %v7458
      %v7460 = vpop.f32.mrb[0].mxu0
      %v7461 = vadd.f32 0.0, %v7460
      %7462 = vmatprep.mubr.bf16.mxu0 %v7115
      %7463 = vmatmul.mubr.bf16.gmra.mrb[0].mxu0 %v6773
      %v7464 = vpop.f32.mrb[0].mxu0
      %v7465 = vadd.f32 0.0, %v7464
      %v7466 = vpop.f32.mrb[0].mxu0
      %v7467 = vadd.f32 0.0, %v7466
      %v7468 = vpop.f32.mrb[0].mxu0
      %v7469 = vadd.f32 0.0, %v7468
      %v7470 = vpop.f32.mrb[0].mxu0
      %v7471 = vadd.f32 0.0, %v7470
      %7472 = vmatprep.mubr.bf16.mxu0 %v7118
      %7473 = vmatmul.mubr.bf16.gmra.mrb[0].mxu0 %v6775
      %v7474 = vpop.f32.mrb[0].mxu0
      %v7475 = vadd.f32 0.0, %v7474
      %v7476 = vpop.f32.mrb[0].mxu0
      %v7477 = vadd.f32 0.0, %v7476
      %v7478 = vpop.f32.mrb[0].mxu0
      %v7479 = vadd.f32 0.0, %v7478
      %v7480 = vpop.f32.mrb[0].mxu0
      %v7481 = vadd.f32 0.0, %v7480
      %7482 = vmatprep.mubr.bf16.mxu0 %v7121
      %7483 = vmatmul.mubr.bf16.gmra.mrb[0].mxu0 %v6777
      %v7484 = vpop.f32.mrb[0].mxu0
      %v7485 = vadd.f32 0.0, %v7484
      %v7486 = vpop.f32.mrb[0].mxu0
      %v7487 = vadd.f32 0.0, %v7486
      %v7488 = vpop.f32.mrb[0].mxu0
      %v7489 = vadd.f32 0.0, %v7488
      %v7490 = vpop.f32.mrb[0].mxu0
      %v7491 = vadd.f32 0.0, %v7490
      %7492 = vmatprep.mubr.bf16.mxu0 %v7124
      %7493 = vmatmul.mubr.bf16.gmra.mrb[0].mxu0 %v6779
      %v7494 = vpop.f32.mrb[0].mxu0
      %v7495 = vadd.f32 0.0, %v7494
      %v7496 = vpop.f32.mrb[0].mxu0
      %v7497 = vadd.f32 0.0, %v7496
      %v7498 = vpop.f32.mrb[0].mxu0
      %v7499 = vadd.f32 0.0, %v7498
      %v7500 = vpop.f32.mrb[0].mxu0
      %v7501 = vadd.f32 0.0, %v7500
      %7502 = vmatprep.mubr.bf16.mxu0 %v7127
      %7503 = vmatmul.mubr.bf16.gmra.mrb[0].mxu0 %v6781
      %v7504 = vpop.f32.mrb[0].mxu0
      %v7505 = vadd.f32 0.0, %v7504
      %v7506 = vpop.f32.mrb[0].mxu0
      %v7507 = vadd.f32 0.0, %v7506
      %v7508 = vpop.f32.mrb[0].mxu0
      %v7509 = vadd.f32 0.0, %v7508
      %v7510 = vpop.f32.mrb[0].mxu0
      %v7511 = vadd.f32 0.0, %v7510
      %7512 = vmatprep.mubr.bf16.mxu0 %v7130
      %7513 = vmatmul.mubr.bf16.gmra.mrb[0].mxu0 %v6783
      %v7514 = vpop.f32.mrb[0].mxu0
      %v7515 = vadd.f32 0.0, %v7514
      %v7516 = vpop.f32.mrb[0].mxu0
      %v7517 = vadd.f32 0.0, %v7516
      %v7518 = vpop.f32.mrb[0].mxu0
      %v7519 = vadd.f32 0.0, %v7518
      %v7520 = vpop.f32.mrb[0].mxu0
      %v7521 = vadd.f32 0.0, %v7520
      %7522 = vmatprep.mubr.bf16.mxu0 %v7133
      %7523 = vmatmul.mubr.bf16.gmra.mrb[0].mxu0 %v6785
      %v7524 = vpop.f32.mrb[0].mxu0
      %v7525 = vadd.f32 0.0, %v7524
      %v7526 = vpop.f32.mrb[0].mxu0
      %v7527 = vadd.f32 0.0, %v7526
      %v7528 = vpop.f32.mrb[0].mxu0
      %v7529 = vadd.f32 0.0, %v7528
      %v7530 = vpop.f32.mrb[0].mxu0
      %v7531 = vadd.f32 0.0, %v7530
      %7532 = vdwg.mxu0
      %v7533 = vpack.c.bf16 %v7186, %v7182
      %v7534 = vpack.c.bf16 %v7188, %v7184
      %v7535 = vpack.c.bf16 %v7379, %v7375
      %v7536 = vpack.c.bf16 %v7381, %v7377
      %v7537 = vpack.c.bf16 %v7196, %v7192
      %v7538 = vpack.c.bf16 %v7198, %v7194
      %v7539 = vpack.c.bf16 %v7389, %v7385
      %v7540 = vpack.c.bf16 %v7391, %v7387
      %v7541 = vpack.c.bf16 %v7206, %v7202
      %v7542 = vpack.c.bf16 %v7208, %v7204
      %v7543 = vpack.c.bf16 %v7399, %v7395
      %v7544 = vpack.c.bf16 %v7401, %v7397
      %v7545 = vpack.c.bf16 %v7216, %v7212
      %v7546 = vpack.c.bf16 %v7218, %v7214
      %v7547 = vpack.c.bf16 %v7409, %v7405
      %v7548 = vpack.c.bf16 %v7411, %v7407
      %v7549 = vpack.c.bf16 %v7226, %v7222
      %v7550 = vpack.c.bf16 %v7228, %v7224
      %v7551 = vpack.c.bf16 %v7419, %v7415
      %v7552 = vpack.c.bf16 %v7421, %v7417
      %v7553 = vpack.c.bf16 %v7236, %v7232
      %v7554 = vpack.c.bf16 %v7238, %v7234
      %v7555 = vpack.c.bf16 %v7429, %v7425
      %v7556 = vpack.c.bf16 %v7431, %v7427
      %v7557 = vpack.c.bf16 %v7246, %v7242
      %v7558 = vpack.c.bf16 %v7248, %v7244
      %v7559 = vpack.c.bf16 %v7439, %v7435
      %v7560 = vpack.c.bf16 %v7441, %v7437
      %v7561 = vpack.c.bf16 %v7256, %v7252
      %v7562 = vpack.c.bf16 %v7258, %v7254
      %v7563 = vpack.c.bf16 %v7449, %v7445
      %v7564 = vpack.c.bf16 %v7451, %v7447
      %v7565 = vpack.c.bf16 %v7266, %v7262
      %v7566 = vpack.c.bf16 %v7268, %v7264
      %v7567 = vpack.c.bf16 %v7459, %v7455
      %v7568 = vpack.c.bf16 %v7461, %v7457
      %v7569 = vpack.c.bf16 %v7276, %v7272
      %v7570 = vpack.c.bf16 %v7278, %v7274
      %v7571 = vpack.c.bf16 %v7469, %v7465
      %v7572 = vpack.c.bf16 %v7471, %v7467
      %v7573 = vpack.c.bf16 %v7286, %v7282
      %v7574 = vpack.c.bf16 %v7288, %v7284
      %v7575 = vpack.c.bf16 %v7479, %v7475
      %v7576 = vpack.c.bf16 %v7481, %v7477
      %v7577 = vpack.c.bf16 %v7296, %v7292
      %v7578 = vpack.c.bf16 %v7298, %v7294
      %v7579 = vpack.c.bf16 %v7489, %v7485
      %v7580 = vpack.c.bf16 %v7491, %v7487
      %v7581 = vpack.c.bf16 %v7306, %v7302
      %v7582 = vpack.c.bf16 %v7308, %v7304
      %v7583 = vpack.c.bf16 %v7499, %v7495
      %v7584 = vpack.c.bf16 %v7501, %v7497
      %v7585 = vpack.c.bf16 %v7316, %v7312
      %v7586 = vpack.c.bf16 %v7318, %v7314
      %v7587 = vpack.c.bf16 %v7509, %v7505
      %v7588 = vpack.c.bf16 %v7511, %v7507
      %v7589 = vpack.c.bf16 %v7326, %v7322
      %v7590 = vpack.c.bf16 %v7328, %v7324
      %v7591 = vpack.c.bf16 %v7519, %v7515
      %v7592 = vpack.c.bf16 %v7521, %v7517
      %v7593 = vpack.c.bf16 %v7336, %v7332
      %v7594 = vpack.c.bf16 %v7338, %v7334
      %v7595 = vpack.c.bf16 %v7529, %v7525
      %v7596 = vpack.c.bf16 %v7531, %v7527
      %v7597 = vld [vmem:[%s11] sm:$0xf]
      %v7599 = vlaneseq
      %v7600 = vshrl.u32 %v7599, 7
      %v7601 = vsub.s32 0, %v7600
      %v7602 = vrot.slane %v7597, %v7601
      %v7603 = vlaneseq
      %v7604 = vshrl.u32 %v7603, 7
      %v7605 = vsub.s32 1, %v7604
      %v7606 = vrot.slane %v7597, %v7605
      %v7607 = vlaneseq
      %v7608 = vshrl.u32 %v7607, 7
      %v7609 = vsub.s32 2, %v7608
      %v7610 = vrot.slane %v7597, %v7609
      %v7611 = vlaneseq
      %v7612 = vshrl.u32 %v7611, 7
      %v7613 = vsub.s32 3, %v7612
      %v7614 = vrot.slane %v7597, %v7613
      %v7619 = vpack.c.bf16 %v7602, %v7602
      %v7620 = vpack.c.bf16 %v7606, %v7606
      %v7621 = vpack.c.bf16 %v7610, %v7610
      %v7622 = vpack.c.bf16 %v7614, %v7614
      %v7624 = vpack.i.b16 %v7619, %v7619
      %v7626 = vlaneseq
      %v7627 = vshrl.u32 %v7626, 7
      %v7628 = vsub.s32 0, %v7627
      %v7629 = vrot.slane %v7624, %v7628
      %v7631 = vpack.i.b16 %v7620, %v7620
      %v7633 = vlaneseq
      %v7634 = vshrl.u32 %v7633, 7
      %v7635 = vsub.s32 0, %v7634
      %v7636 = vrot.slane %v7631, %v7635
      %v7638 = vpack.i.b16 %v7621, %v7621
      %v7640 = vlaneseq
      %v7641 = vshrl.u32 %v7640, 7
      %v7642 = vsub.s32 0, %v7641
      %v7643 = vrot.slane %v7638, %v7642
      %v7645 = vpack.i.b16 %v7622, %v7622
      %v7647 = vlaneseq
      %v7648 = vshrl.u32 %v7647, 7
      %v7649 = vsub.s32 0, %v7648
      %v7650 = vrot.slane %v7645, %v7649
      %v7651 = vadd.bf16 %v7533, %v7629
      %v7652 = vadd.bf16 %v7534, %v7636
      %v7653 = vadd.bf16 %v7535, %v7643
      %v7654 = vadd.bf16 %v7536, %v7650
      %v7655 = vadd.bf16 %v7537, %v7629
      %v7656 = vadd.bf16 %v7538, %v7636
      %v7657 = vadd.bf16 %v7539, %v7643
      %v7658 = vadd.bf16 %v7540, %v7650
      %v7659 = vadd.bf16 %v7541, %v7629
      %v7660 = vadd.bf16 %v7542, %v7636
      %v7661 = vadd.bf16 %v7543, %v7643
      %v7662 = vadd.bf16 %v7544, %v7650
      %v7663 = vadd.bf16 %v7545, %v7629
      %v7664 = vadd.bf16 %v7546, %v7636
      %v7665 = vadd.bf16 %v7547, %v7643
      %v7666 = vadd.bf16 %v7548, %v7650
      %v7667 = vadd.bf16 %v7549, %v7629
      %v7668 = vadd.bf16 %v7550, %v7636
      %v7669 = vadd.bf16 %v7551, %v7643
      %v7670 = vadd.bf16 %v7552, %v7650
      %v7671 = vadd.bf16 %v7553, %v7629
      %v7672 = vadd.bf16 %v7554, %v7636
      %v7673 = vadd.bf16 %v7555, %v7643
      %v7674 = vadd.bf16 %v7556, %v7650
      %v7675 = vadd.bf16 %v7557, %v7629
      %v7676 = vadd.bf16 %v7558, %v7636
      %v7677 = vadd.bf16 %v7559, %v7643
      %v7678 = vadd.bf16 %v7560, %v7650
      %v7679 = vadd.bf16 %v7561, %v7629
      %v7680 = vadd.bf16 %v7562, %v7636
      %v7681 = vadd.bf16 %v7563, %v7643
      %v7682 = vadd.bf16 %v7564, %v7650
      %v7683 = vadd.bf16 %v7565, %v7629
      %v7684 = vadd.bf16 %v7566, %v7636
      %v7685 = vadd.bf16 %v7567, %v7643
      %v7686 = vadd.bf16 %v7568, %v7650
      %v7687 = vadd.bf16 %v7569, %v7629
      %v7688 = vadd.bf16 %v7570, %v7636
      %v7689 = vadd.bf16 %v7571, %v7643
      %v7690 = vadd.bf16 %v7572, %v7650
      %v7691 = vadd.bf16 %v7573, %v7629
      %v7692 = vadd.bf16 %v7574, %v7636
      %v7693 = vadd.bf16 %v7575, %v7643
      %v7694 = vadd.bf16 %v7576, %v7650
      %v7695 = vadd.bf16 %v7577, %v7629
      %v7696 = vadd.bf16 %v7578, %v7636
      %v7697 = vadd.bf16 %v7579, %v7643
      %v7698 = vadd.bf16 %v7580, %v7650
      %v7699 = vadd.bf16 %v7581, %v7629
      %v7700 = vadd.bf16 %v7582, %v7636
      %v7701 = vadd.bf16 %v7583, %v7643
      %v7702 = vadd.bf16 %v7584, %v7650
      %v7703 = vadd.bf16 %v7585, %v7629
      %v7704 = vadd.bf16 %v7586, %v7636
      %v7705 = vadd.bf16 %v7587, %v7643
      %v7706 = vadd.bf16 %v7588, %v7650
      %v7707 = vadd.bf16 %v7589, %v7629
      %v7708 = vadd.bf16 %v7590, %v7636
      %v7709 = vadd.bf16 %v7591, %v7643
      %v7710 = vadd.bf16 %v7592, %v7650
      %v7711 = vadd.bf16 %v7593, %v7629
      %v7712 = vadd.bf16 %v7594, %v7636
      %v7713 = vadd.bf16 %v7595, %v7643
      %v7714 = vadd.bf16 %v7596, %v7650
      %vm7715 = vcmp.ge.bf16.partialorder %v7651, 0
      %vm7716 = vcmp.ge.bf16.partialorder %v7652, 0
      %vm7717 = vcmp.ge.bf16.partialorder %v7653, 0
      %vm7718 = vcmp.ge.bf16.partialorder %v7654, 0
      %vm7719 = vcmp.ge.bf16.partialorder %v7655, 0
      %vm7720 = vcmp.ge.bf16.partialorder %v7656, 0
      %vm7721 = vcmp.ge.bf16.partialorder %v7657, 0
      %vm7722 = vcmp.ge.bf16.partialorder %v7658, 0
      %vm7723 = vcmp.ge.bf16.partialorder %v7659, 0
      %vm7724 = vcmp.ge.bf16.partialorder %v7660, 0
      %vm7725 = vcmp.ge.bf16.partialorder %v7661, 0
      %vm7726 = vcmp.ge.bf16.partialorder %v7662, 0
      %vm7727 = vcmp.ge.bf16.partialorder %v7663, 0
      %vm7728 = vcmp.ge.bf16.partialorder %v7664, 0
      %vm7729 = vcmp.ge.bf16.partialorder %v7665, 0
      %vm7730 = vcmp.ge.bf16.partialorder %v7666, 0
      %vm7731 = vcmp.ge.bf16.partialorder %v7667, 0
      %vm7732 = vcmp.ge.bf16.partialorder %v7668, 0
      %vm7733 = vcmp.ge.bf16.partialorder %v7669, 0
      %vm7734 = vcmp.ge.bf16.partialorder %v7670, 0
      %vm7735 = vcmp.ge.bf16.partialorder %v7671, 0
      %vm7736 = vcmp.ge.bf16.partialorder %v7672, 0
      %vm7737 = vcmp.ge.bf16.partialorder %v7673, 0
      %vm7738 = vcmp.ge.bf16.partialorder %v7674, 0
      %vm7739 = vcmp.ge.bf16.partialorder %v7675, 0
      %vm7740 = vcmp.ge.bf16.partialorder %v7676, 0
      %vm7741 = vcmp.ge.bf16.partialorder %v7677, 0
      %vm7742 = vcmp.ge.bf16.partialorder %v7678, 0
      %vm7743 = vcmp.ge.bf16.partialorder %v7679, 0
      %vm7744 = vcmp.ge.bf16.partialorder %v7680, 0
      %vm7745 = vcmp.ge.bf16.partialorder %v7681, 0
      %vm7746 = vcmp.ge.bf16.partialorder %v7682, 0
      %vm7747 = vcmp.ge.bf16.partialorder %v7683, 0
      %vm7748 = vcmp.ge.bf16.partialorder %v7684, 0
      %vm7749 = vcmp.ge.bf16.partialorder %v7685, 0
      %vm7750 = vcmp.ge.bf16.partialorder %v7686, 0
      %vm7751 = vcmp.ge.bf16.partialorder %v7687, 0
      %vm7752 = vcmp.ge.bf16.partialorder %v7688, 0
      %vm7753 = vcmp.ge.bf16.partialorder %v7689, 0
      %vm7754 = vcmp.ge.bf16.partialorder %v7690, 0
      %vm7755 = vcmp.ge.bf16.partialorder %v7691, 0
      %vm7756 = vcmp.ge.bf16.partialorder %v7692, 0
      %vm7757 = vcmp.ge.bf16.partialorder %v7693, 0
      %vm7758 = vcmp.ge.bf16.partialorder %v7694, 0
      %vm7759 = vcmp.ge.bf16.partialorder %v7695, 0
      %vm7760 = vcmp.ge.bf16.partialorder %v7696, 0
      %vm7761 = vcmp.ge.bf16.partialorder %v7697, 0
      %vm7762 = vcmp.ge.bf16.partialorder %v7698, 0
      %vm7763 = vcmp.ge.bf16.partialorder %v7699, 0
      %vm7764 = vcmp.ge.bf16.partialorder %v7700, 0
      %vm7765 = vcmp.ge.bf16.partialorder %v7701, 0
      %vm7766 = vcmp.ge.bf16.partialorder %v7702, 0
      %vm7767 = vcmp.ge.bf16.partialorder %v7703, 0
      %vm7768 = vcmp.ge.bf16.partialorder %v7704, 0
      %vm7769 = vcmp.ge.bf16.partialorder %v7705, 0
      %vm7770 = vcmp.ge.bf16.partialorder %v7706, 0
      %vm7771 = vcmp.ge.bf16.partialorder %v7707, 0
      %vm7772 = vcmp.ge.bf16.partialorder %v7708, 0
      %vm7773 = vcmp.ge.bf16.partialorder %v7709, 0
      %vm7774 = vcmp.ge.bf16.partialorder %v7710, 0
      %vm7775 = vcmp.ge.bf16.partialorder %v7711, 0
      %vm7776 = vcmp.ge.bf16.partialorder %v7712, 0
      %vm7777 = vcmp.ge.bf16.partialorder %v7713, 0
      %vm7778 = vcmp.ge.bf16.partialorder %v7714, 0
      %v7779 = vmul.bf16 %v7651, 1045249613
      %v7780 = vmul.bf16 %v7652, 1045249613
      %v7781 = vmul.bf16 %v7653, 1045249613
      %v7782 = vmul.bf16 %v7654, 1045249613
      %v7783 = vmul.bf16 %v7655, 1045249613
      %v7784 = vmul.bf16 %v7656, 1045249613
      %v7785 = vmul.bf16 %v7657, 1045249613
      %v7786 = vmul.bf16 %v7658, 1045249613
      %v7787 = vmul.bf16 %v7659, 1045249613
      %v7788 = vmul.bf16 %v7660, 1045249613
      %v7789 = vmul.bf16 %v7661, 1045249613
      %v7790 = vmul.bf16 %v7662, 1045249613
      %v7791 = vmul.bf16 %v7663, 1045249613
      %v7792 = vmul.bf16 %v7664, 1045249613
      %v7793 = vmul.bf16 %v7665, 1045249613
      %v7794 = vmul.bf16 %v7666, 1045249613
      %v7795 = vmul.bf16 %v7667, 1045249613
      %v7796 = vmul.bf16 %v7668, 1045249613
      %v7797 = vmul.bf16 %v7669, 1045249613
      %v7798 = vmul.bf16 %v7670, 1045249613
      %v7799 = vmul.bf16 %v7671, 1045249613
      %v7800 = vmul.bf16 %v7672, 1045249613
      %v7801 = vmul.bf16 %v7673, 1045249613
      %v7802 = vmul.bf16 %v7674, 1045249613
      %v7803 = vmul.bf16 %v7675, 1045249613
      %v7804 = vmul.bf16 %v7676, 1045249613
      %v7805 = vmul.bf16 %v7677, 1045249613
      %v7806 = vmul.bf16 %v7678, 1045249613
      %v7807 = vmul.bf16 %v7679, 1045249613
      %v7808 = vmul.bf16 %v7680, 1045249613
      %v7809 = vmul.bf16 %v7681, 1045249613
      %v7810 = vmul.bf16 %v7682, 1045249613
      %v7811 = vmul.bf16 %v7683, 1045249613
      %v7812 = vmul.bf16 %v7684, 1045249613
      %v7813 = vmul.bf16 %v7685, 1045249613
      %v7814 = vmul.bf16 %v7686, 1045249613
      %v7815 = vmul.bf16 %v7687, 1045249613
      %v7816 = vmul.bf16 %v7688, 1045249613
      %v7817 = vmul.bf16 %v7689, 1045249613
      %v7818 = vmul.bf16 %v7690, 1045249613
      %v7819 = vmul.bf16 %v7691, 1045249613
      %v7820 = vmul.bf16 %v7692, 1045249613
      %v7821 = vmul.bf16 %v7693, 1045249613
      %v7822 = vmul.bf16 %v7694, 1045249613
      %v7823 = vmul.bf16 %v7695, 1045249613
      %v7824 = vmul.bf16 %v7696, 1045249613
      %v7825 = vmul.bf16 %v7697, 1045249613
      %v7826 = vmul.bf16 %v7698, 1045249613
      %v7827 = vmul.bf16 %v7699, 1045249613
      %v7828 = vmul.bf16 %v7700, 1045249613
      %v7829 = vmul.bf16 %v7701, 1045249613
      %v7830 = vmul.bf16 %v7702, 1045249613
      %v7831 = vmul.bf16 %v7703, 1045249613
      %v7832 = vmul.bf16 %v7704, 1045249613
      %v7833 = vmul.bf16 %v7705, 1045249613
      %v7834 = vmul.bf16 %v7706, 1045249613
      %v7835 = vmul.bf16 %v7707, 1045249613
      %v7836 = vmul.bf16 %v7708, 1045249613
      %v7837 = vmul.bf16 %v7709, 1045249613
      %v7838 = vmul.bf16 %v7710, 1045249613
      %v7839 = vmul.bf16 %v7711, 1045249613
      %v7840 = vmul.bf16 %v7712, 1045249613
      %v7841 = vmul.bf16 %v7713, 1045249613
      %v7842 = vmul.bf16 %v7714, 1045249613
      %v7843 = vsel %vm7715, %v7651, %v7779
      %v7844 = vsel %vm7716, %v7652, %v7780
      %v7845 = vsel %vm7717, %v7653, %v7781
      %v7846 = vsel %vm7718, %v7654, %v7782
      %v7847 = vsel %vm7719, %v7655, %v7783
      %v7848 = vsel %vm7720, %v7656, %v7784
      %v7849 = vsel %vm7721, %v7657, %v7785
      %v7850 = vsel %vm7722, %v7658, %v7786
      %v7851 = vsel %vm7723, %v7659, %v7787
      %v7852 = vsel %vm7724, %v7660, %v7788
      %v7853 = vsel %vm7725, %v7661, %v7789
      %v7854 = vsel %vm7726, %v7662, %v7790
      %v7855 = vsel %vm7727, %v7663, %v7791
      %v7856 = vsel %vm7728, %v7664, %v7792
      %v7857 = vsel %vm7729, %v7665, %v7793
      %v7858 = vsel %vm7730, %v7666, %v7794
      %v7859 = vsel %vm7731, %v7667, %v7795
      %v7860 = vsel %vm7732, %v7668, %v7796
      %v7861 = vsel %vm7733, %v7669, %v7797
      %v7862 = vsel %vm7734, %v7670, %v7798
      %v7863 = vsel %vm7735, %v7671, %v7799
      %v7864 = vsel %vm7736, %v7672, %v7800
      %v7865 = vsel %vm7737, %v7673, %v7801
      %v7866 = vsel %vm7738, %v7674, %v7802
      %v7867 = vsel %vm7739, %v7675, %v7803
      %v7868 = vsel %vm7740, %v7676, %v7804
      %v7869 = vsel %vm7741, %v7677, %v7805
      %v7870 = vsel %vm7742, %v7678, %v7806
      %v7871 = vsel %vm7743, %v7679, %v7807
      %v7872 = vsel %vm7744, %v7680, %v7808
      %v7873 = vsel %vm7745, %v7681, %v7809
      %v7874 = vsel %vm7746, %v7682, %v7810
      %v7875 = vsel %vm7747, %v7683, %v7811
      %v7876 = vsel %vm7748, %v7684, %v7812
      %v7877 = vsel %vm7749, %v7685, %v7813
      %v7878 = vsel %vm7750, %v7686, %v7814
      %v7879 = vsel %vm7751, %v7687, %v7815
      %v7880 = vsel %vm7752, %v7688, %v7816
      %v7881 = vsel %vm7753, %v7689, %v7817
      %v7882 = vsel %vm7754, %v7690, %v7818
      %v7883 = vsel %vm7755, %v7691, %v7819
      %v7884 = vsel %vm7756, %v7692, %v7820
      %v7885 = vsel %vm7757, %v7693, %v7821
      %v7886 = vsel %vm7758, %v7694, %v7822
      %v7887 = vsel %vm7759, %v7695, %v7823
      %v7888 = vsel %vm7760, %v7696, %v7824
      %v7889 = vsel %vm7761, %v7697, %v7825
      %v7890 = vsel %vm7762, %v7698, %v7826
      %v7891 = vsel %vm7763, %v7699, %v7827
      %v7892 = vsel %vm7764, %v7700, %v7828
      %v7893 = vsel %vm7765, %v7701, %v7829
      %v7894 = vsel %vm7766, %v7702, %v7830
      %v7895 = vsel %vm7767, %v7703, %v7831
      %v7896 = vsel %vm7768, %v7704, %v7832
      %v7897 = vsel %vm7769, %v7705, %v7833
      %v7898 = vsel %vm7770, %v7706, %v7834
      %v7899 = vsel %vm7771, %v7707, %v7835
      %v7900 = vsel %vm7772, %v7708, %v7836
      %v7901 = vsel %vm7773, %v7709, %v7837
      %v7902 = vsel %vm7774, %v7710, %v7838
      %v7903 = vsel %vm7775, %v7711, %v7839
      %v7904 = vsel %vm7776, %v7712, %v7840
      %v7905 = vsel %vm7777, %v7713, %v7841
      %v7906 = vsel %vm7778, %v7714, %v7842
      %v7907 = vld [vmem:[%s12] sm:$0xff]
      %v7908 = vld [vmem:[%s12 + $0x8] sm:$0xff]
      %v7909 = vld [vmem:[%s12 + $0x10] sm:$0xff]
      %v7910 = vld [vmem:[%s12 + $0x18] sm:$0xf]
      %v7911 = vld [vmem:[%s12 + $0x1c] sm:$0xff]
      %v7912 = vld [vmem:[%s12 + $0x24] sm:$0xff]
      %v7913 = vld [vmem:[%s12 + $0x2c] sm:$0xff]
      %v7914 = vld [vmem:[%s12 + $0x34] sm:$0xf]
      %v7915 = vld [vmem:[%s12 + $0x38] sm:$0xff]
      %v7916 = vld [vmem:[%s12 + $0x40] sm:$0xff]
      %v7917 = vld [vmem:[%s12 + $0x48] sm:$0xff]
      %v7918 = vld [vmem:[%s12 + $0x50] sm:$0xf]
      %v7919 = vld [vmem:[%s12 + $0x54] sm:$0xff]
      %v7920 = vld [vmem:[%s12 + $0x5c] sm:$0xff]
      %v7921 = vld [vmem:[%s12 + $0x64] sm:$0xff]
      %v7922 = vld [vmem:[%s12 + $0x6c] sm:$0xf]
      %v7923 = vld [vmem:[%s12 + $0x70] sm:$0xff]
      %v7924 = vld [vmem:[%s12 + $0x78] sm:$0xff]
      %v7925 = vld [vmem:[%s12 + $0x80] sm:$0xff]
      %v7926 = vld [vmem:[%s12 + $0x88] sm:$0xf]
      %v7927 = vld [vmem:[%s12 + $0x8c] sm:$0xff]
      %v7928 = vld [vmem:[%s12 + $0x94] sm:$0xff]
      %v7929 = vld [vmem:[%s12 + $0x9c] sm:$0xff]
      %v7930 = vld [vmem:[%s12 + $0xa4] sm:$0xf]
      %v7931 = vld [vmem:[%s12 + $0xa8] sm:$0xff]
      %v7932 = vld [vmem:[%s12 + $0xb0] sm:$0xff]
      %v7933 = vld [vmem:[%s12 + $0xb8] sm:$0xff]
      %v7934 = vld [vmem:[%s12 + $0xc0] sm:$0xf]
      %v7935 = vld [vmem:[%s12 + $0xc4] sm:$0xff]
      %v7936 = vld [vmem:[%s12 + $0xcc] sm:$0xff]
      %v7937 = vld [vmem:[%s12 + $0xd4] sm:$0xff]
      %v7938 = vld [vmem:[%s12 + $0xdc] sm:$0xf]
      %v7939 = vld [vmem:[%s12 + $0xe0] sm:$0xff]
      %v7940 = vld [vmem:[%s12 + $0xe8] sm:$0xff]
      %v7941 = vld [vmem:[%s12 + $0xf0] sm:$0xff]
      %v7942 = vld [vmem:[%s12 + $0xf8] sm:$0xf]
      %v7943 = vld [vmem:[%s12 + $0xfc] sm:$0xff]
      %v7944 = vld [vmem:[%s12 + $0x104] sm:$0xff]
      %v7945 = vld [vmem:[%s12 + $0x10c] sm:$0xff]
      %v7946 = vld [vmem:[%s12 + $0x114] sm:$0xf]
      %v7947 = vld [vmem:[%s12 + $0x118] sm:$0xff]
      %v7948 = vld [vmem:[%s12 + $0x120] sm:$0xff]
      %v7949 = vld [vmem:[%s12 + $0x128] sm:$0xff]
      %v7950 = vld [vmem:[%s12 + $0x130] sm:$0xf]
      %v7951 = vld [vmem:[%s12 + $0x134] sm:$0xff]
      %v7952 = vld [vmem:[%s12 + $0x13c] sm:$0xff]
      %v7953 = vld [vmem:[%s12 + $0x144] sm:$0xff]
      %v7954 = vld [vmem:[%s12 + $0x14c] sm:$0xf]
      %v7955 = vld [vmem:[%s12 + $0x150] sm:$0xff]
      %v7956 = vld [vmem:[%s12 + $0x158] sm:$0xff]
      %v7957 = vld [vmem:[%s12 + $0x160] sm:$0xff]
      %v7958 = vld [vmem:[%s12 + $0x168] sm:$0xf]
      %v7959 = vld [vmem:[%s12 + $0x16c] sm:$0xff]
      %v7960 = vld [vmem:[%s12 + $0x174] sm:$0xff]
      %v7961 = vld [vmem:[%s12 + $0x17c] sm:$0xff]
      %v7962 = vld [vmem:[%s12 + $0x184] sm:$0xf]
      %v7963 = vld [vmem:[%s12 + $0x188] sm:$0xff]
      %v7964 = vld [vmem:[%s12 + $0x190] sm:$0xff]
      %v7965 = vld [vmem:[%s12 + $0x198] sm:$0xff]
      %v7966 = vld [vmem:[%s12 + $0x1a0] sm:$0xf]
      %v7967 = vld [vmem:[%s12 + $0x1a4] sm:$0xff]
      %v7968 = vld [vmem:[%s12 + $0x1ac] sm:$0xff]
      %v7969 = vld [vmem:[%s12 + $0x1b4] sm:$0xff]
      %v7970 = vld [vmem:[%s12 + $0x1bc] sm:$0xf]
      %v7971 = vld [vmem:[%s12 + $0x1c0] sm:$0xff]
      %v7972 = vld [vmem:[%s12 + $0x1c8] sm:$0xff]
      %v7973 = vld [vmem:[%s12 + $0x1d0] sm:$0xff]
      %v7974 = vld [vmem:[%s12 + $0x1d8] sm:$0xf]
      %v7975 = vld [vmem:[%s12 + $0x1dc] sm:$0xff]
      %v7976 = vld [vmem:[%s12 + $0x1e4] sm:$0xff]
      %v7977 = vld [vmem:[%s12 + $0x1ec] sm:$0xff]
      %v7978 = vld [vmem:[%s12 + $0x1f4] sm:$0xf]
      %v7979 = vld [vmem:[%s12 + $0x1f8] sm:$0xff]
      %v7980 = vld [vmem:[%s12 + $0x200] sm:$0xff]
      %v7981 = vld [vmem:[%s12 + $0x208] sm:$0xff]
      %v7982 = vld [vmem:[%s12 + $0x210] sm:$0xf]
      %v7983 = vld [vmem:[%s12 + $0x214] sm:$0xff]
      %v7984 = vld [vmem:[%s12 + $0x21c] sm:$0xff]
      %v7985 = vld [vmem:[%s12 + $0x224] sm:$0xff]
      %v7986 = vld [vmem:[%s12 + $0x22c] sm:$0xf]
      %v7987 = vld [vmem:[%s12 + $0x230] sm:$0xff]
      %v7988 = vld [vmem:[%s12 + $0x238] sm:$0xff]
      %v7989 = vld [vmem:[%s12 + $0x240] sm:$0xff]
      %v7990 = vld [vmem:[%s12 + $0x248] sm:$0xf]
      %v7991 = vld [vmem:[%s12 + $0x24c] sm:$0xff]
      %v7992 = vld [vmem:[%s12 + $0x254] sm:$0xff]
      %v7993 = vld [vmem:[%s12 + $0x25c] sm:$0xff]
      %v7994 = vld [vmem:[%s12 + $0x264] sm:$0xf]
      %v7995 = vld [vmem:[%s12 + $0x268] sm:$0xff]
      %v7996 = vld [vmem:[%s12 + $0x270] sm:$0xff]
      %v7997 = vld [vmem:[%s12 + $0x278] sm:$0xff]
      %v7998 = vld [vmem:[%s12 + $0x280] sm:$0xf]
      %v7999 = vld [vmem:[%s12 + $0x284] sm:$0xff]
      %v8000 = vld [vmem:[%s12 + $0x28c] sm:$0xff]
      %v8001 = vld [vmem:[%s12 + $0x294] sm:$0xff]
      %v8002 = vld [vmem:[%s12 + $0x29c] sm:$0xf]
      %v8003 = vld [vmem:[%s12 + $0x2a0] sm:$0xff]
      %v8004 = vld [vmem:[%s12 + $0x2a8] sm:$0xff]
      %v8005 = vld [vmem:[%s12 + $0x2b0] sm:$0xff]
      %v8006 = vld [vmem:[%s12 + $0x2b8] sm:$0xf]
      %v8007 = vld [vmem:[%s12 + $0x2bc] sm:$0xff]
      %v8008 = vld [vmem:[%s12 + $0x2c4] sm:$0xff]
      %v8009 = vld [vmem:[%s12 + $0x2cc] sm:$0xff]
      %v8010 = vld [vmem:[%s12 + $0x2d4] sm:$0xf]
      %v8011 = vld [vmem:[%s12 + $0x2d8] sm:$0xff]
      %v8012 = vld [vmem:[%s12 + $0x2e0] sm:$0xff]
      %v8013 = vld [vmem:[%s12 + $0x2e8] sm:$0xff]
      %v8014 = vld [vmem:[%s12 + $0x2f0] sm:$0xf]
      %v8015 = vld [vmem:[%s12 + $0x2f4] sm:$0xff]
      %v8016 = vld [vmem:[%s12 + $0x2fc] sm:$0xff]
      %v8017 = vld [vmem:[%s12 + $0x304] sm:$0xff]
      %v8018 = vld [vmem:[%s12 + $0x30c] sm:$0xf]
      %v8019 = vld [vmem:[%s12 + $0x310] sm:$0xff]
      %v8020 = vld [vmem:[%s12 + $0x318] sm:$0xff]
      %v8021 = vld [vmem:[%s12 + $0x320] sm:$0xff]
      %v8022 = vld [vmem:[%s12 + $0x328] sm:$0xf]
      %v8023 = vld [vmem:[%s12 + $0x32c] sm:$0xff]
      %v8024 = vld [vmem:[%s12 + $0x334] sm:$0xff]
      %v8025 = vld [vmem:[%s12 + $0x33c] sm:$0xff]
      %v8026 = vld [vmem:[%s12 + $0x344] sm:$0xf]
      %v8027 = vld [vmem:[%s12 + $0x348] sm:$0xff]
      %v8028 = vld [vmem:[%s12 + $0x350] sm:$0xff]
      %v8029 = vld [vmem:[%s12 + $0x358] sm:$0xff]
      %v8030 = vld [vmem:[%s12 + $0x360] sm:$0xf]
      %v8031 = vld [vmem:[%s12 + $0x364] sm:$0xff]
      %v8032 = vld [vmem:[%s12 + $0x36c] sm:$0xff]
      %v8033 = vld [vmem:[%s12 + $0x374] sm:$0xff]
      %v8034 = vld [vmem:[%s12 + $0x37c] sm:$0xf]
      %v8035 = vld [vmem:[%s12 + $0x380] sm:$0xff]
      %v8036 = vld [vmem:[%s12 + $0x388] sm:$0xff]
      %v8037 = vld [vmem:[%s12 + $0x390] sm:$0xff]
      %v8038 = vld [vmem:[%s12 + $0x398] sm:$0xf]
      %v8039 = vld [vmem:[%s12 + $0x39c] sm:$0xff]
      %v8040 = vld [vmem:[%s12 + $0x3a4] sm:$0xff]
      %v8041 = vld [vmem:[%s12 + $0x3ac] sm:$0xff]
      %v8042 = vld [vmem:[%s12 + $0x3b4] sm:$0xf]
      %v8043 = vld [vmem:[%s12 + $0x3b8] sm:$0xff]
      %v8044 = vld [vmem:[%s12 + $0x3c0] sm:$0xff]
      %v8045 = vld [vmem:[%s12 + $0x3c8] sm:$0xff]
      %v8046 = vld [vmem:[%s12 + $0x3d0] sm:$0xf]
      %v8047 = vld [vmem:[%s12 + $0x3d4] sm:$0xff]
      %v8048 = vld [vmem:[%s12 + $0x3dc] sm:$0xff]
      %v8049 = vld [vmem:[%s12 + $0x3e4] sm:$0xff]
      %v8050 = vld [vmem:[%s12 + $0x3ec] sm:$0xf]
      %v8051 = vld [vmem:[%s12 + $0x3f0] sm:$0xff]
      %v8052 = vld [vmem:[%s12 + $0x3f8] sm:$0xff]
      %v8053 = vld [vmem:[%s12 + $0x400] sm:$0xff]
      %v8054 = vld [vmem:[%s12 + $0x408] sm:$0xf]
      %v8055 = vld [vmem:[%s12 + $0x40c] sm:$0xff]
      %v8056 = vld [vmem:[%s12 + $0x414] sm:$0xff]
      %v8057 = vld [vmem:[%s12 + $0x41c] sm:$0xff]
      %v8058 = vld [vmem:[%s12 + $0x424] sm:$0xf]
      %v8059 = vld [vmem:[%s12 + $0x428] sm:$0xff]
      %v8060 = vld [vmem:[%s12 + $0x430] sm:$0xff]
      %v8061 = vld [vmem:[%s12 + $0x438] sm:$0xff]
      %v8062 = vld [vmem:[%s12 + $0x440] sm:$0xf]
      %v8063 = vld [vmem:[%s12 + $0x444] sm:$0xff]
      %v8064 = vld [vmem:[%s12 + $0x44c] sm:$0xff]
      %v8065 = vld [vmem:[%s12 + $0x454] sm:$0xff]
      %v8066 = vld [vmem:[%s12 + $0x45c] sm:$0xf]
      %v8067 = vld [vmem:[%s12 + $0x460] sm:$0xff]
      %v8068 = vld [vmem:[%s12 + $0x468] sm:$0xff]
      %v8069 = vld [vmem:[%s12 + $0x470] sm:$0xff]
      %v8070 = vld [vmem:[%s12 + $0x478] sm:$0xf]
      %v8071 = vld [vmem:[%s12 + $0x47c] sm:$0xff]
      %v8072 = vld [vmem:[%s12 + $0x484] sm:$0xff]
      %v8073 = vld [vmem:[%s12 + $0x48c] sm:$0xff]
      %v8074 = vld [vmem:[%s12 + $0x494] sm:$0xf]
      %v8075 = vld [vmem:[%s12 + $0x498] sm:$0xff]
      %v8076 = vld [vmem:[%s12 + $0x4a0] sm:$0xff]
      %v8077 = vld [vmem:[%s12 + $0x4a8] sm:$0xff]
      %v8078 = vld [vmem:[%s12 + $0x4b0] sm:$0xf]
      %v8079 = vld [vmem:[%s12 + $0x4b4] sm:$0xff]
      %v8080 = vld [vmem:[%s12 + $0x4bc] sm:$0xff]
      %v8081 = vld [vmem:[%s12 + $0x4c4] sm:$0xff]
      %v8082 = vld [vmem:[%s12 + $0x4cc] sm:$0xf]
      %v8083 = vld [vmem:[%s12 + $0x4d0] sm:$0xff]
      %v8084 = vld [vmem:[%s12 + $0x4d8] sm:$0xff]
      %v8085 = vld [vmem:[%s12 + $0x4e0] sm:$0xff]
      %v8086 = vld [vmem:[%s12 + $0x4e8] sm:$0xf]
      %v8087 = vld [vmem:[%s12 + $0x4ec] sm:$0xff]
      %v8088 = vld [vmem:[%s12 + $0x4f4] sm:$0xff]
      %v8089 = vld [vmem:[%s12 + $0x4fc] sm:$0xff]
      %v8090 = vld [vmem:[%s12 + $0x504] sm:$0xf]
      %v8091 = vld [vmem:[%s12 + $0x508] sm:$0xff]
      %v8092 = vld [vmem:[%s12 + $0x510] sm:$0xff]
      %v8093 = vld [vmem:[%s12 + $0x518] sm:$0xff]
      %v8094 = vld [vmem:[%s12 + $0x520] sm:$0xf]
      %v8095 = vld [vmem:[%s12 + $0x524] sm:$0xff]
      %v8096 = vld [vmem:[%s12 + $0x52c] sm:$0xff]
      %v8097 = vld [vmem:[%s12 + $0x534] sm:$0xff]
      %v8098 = vld [vmem:[%s12 + $0x53c] sm:$0xf]
      %v8099 = vld [vmem:[%s12 + $0x540] sm:$0xff]
      %v8100 = vld [vmem:[%s12 + $0x548] sm:$0xff]
      %v8101 = vld [vmem:[%s12 + $0x550] sm:$0xff]
      %v8102 = vld [vmem:[%s12 + $0x558] sm:$0xf]
      %v8103 = vld [vmem:[%s12 + $0x55c] sm:$0xff]
      %v8104 = vld [vmem:[%s12 + $0x564] sm:$0xff]
      %v8105 = vld [vmem:[%s12 + $0x56c] sm:$0xff]
      %v8106 = vld [vmem:[%s12 + $0x574] sm:$0xf]
      %v8307 = vunpack.c.l.b16 %v7907
      %v8308 = vunpack.c.h.b16 %v7907
      %v8309 = vunpack.c.l.b16 %v7908
      %v8310 = vunpack.c.h.b16 %v7908
      %v8311 = vunpack.c.l.b16 %v7909
      %v8312 = vunpack.c.h.b16 %v7909
      %v8313 = vunpack.c.l.b16 %v7910
      %v8314 = vunpack.c.l.b16 %v7911
      %v8315 = vunpack.c.h.b16 %v7911
      %v8316 = vunpack.c.l.b16 %v7912
      %v8317 = vunpack.c.h.b16 %v7912
      %v8318 = vunpack.c.l.b16 %v7913
      %v8319 = vunpack.c.h.b16 %v7913
      %v8320 = vunpack.c.l.b16 %v7914
      %v8321 = vunpack.c.l.b16 %v7915
      %v8322 = vunpack.c.h.b16 %v7915
      %v8323 = vunpack.c.l.b16 %v7916
      %v8324 = vunpack.c.h.b16 %v7916
      %v8325 = vunpack.c.l.b16 %v7917
      %v8326 = vunpack.c.h.b16 %v7917
      %v8327 = vunpack.c.l.b16 %v7918
      %v8328 = vunpack.c.l.b16 %v7919
      %v8329 = vunpack.c.h.b16 %v7919
      %v8330 = vunpack.c.l.b16 %v7920
      %v8331 = vunpack.c.h.b16 %v7920
      %v8332 = vunpack.c.l.b16 %v7921
      %v8333 = vunpack.c.h.b16 %v7921
      %v8334 = vunpack.c.l.b16 %v7922
      %v8335 = vunpack.c.l.b16 %v7923
      %v8336 = vunpack.c.h.b16 %v7923
      %v8337 = vunpack.c.l.b16 %v7924
      %v8338 = vunpack.c.h.b16 %v7924
      %v8339 = vunpack.c.l.b16 %v7925
      %v8340 = vunpack.c.h.b16 %v7925
      %v8341 = vunpack.c.l.b16 %v7926
      %v8342 = vunpack.c.l.b16 %v7927
      %v8343 = vunpack.c.h.b16 %v7927
      %v8344 = vunpack.c.l.b16 %v7928
      %v8345 = vunpack.c.h.b16 %v7928
      %v8346 = vunpack.c.l.b16 %v7929
      %v8347 = vunpack.c.h.b16 %v7929
      %v8348 = vunpack.c.l.b16 %v7930
      %v8349 = vunpack.c.l.b16 %v7931
      %v8350 = vunpack.c.h.b16 %v7931
      %v8351 = vunpack.c.l.b16 %v7932
      %v8352 = vunpack.c.h.b16 %v7932
      %v8353 = vunpack.c.l.b16 %v7933
      %v8354 = vunpack.c.h.b16 %v7933
      %v8355 = vunpack.c.l.b16 %v7934
      %v8356 = vunpack.c.l.b16 %v7935
      %v8357 = vunpack.c.h.b16 %v7935
      %v8358 = vunpack.c.l.b16 %v7936
      %v8359 = vunpack.c.h.b16 %v7936
      %v8360 = vunpack.c.l.b16 %v7937
      %v8361 = vunpack.c.h.b16 %v7937
      %v8362 = vunpack.c.l.b16 %v7938
      %v8363 = vunpack.c.l.b16 %v7939
      %v8364 = vunpack.c.h.b16 %v7939
      %v8365 = vunpack.c.l.b16 %v7940
      %v8366 = vunpack.c.h.b16 %v7940
      %v8367 = vunpack.c.l.b16 %v7941
      %v8368 = vunpack.c.h.b16 %v7941
      %v8369 = vunpack.c.l.b16 %v7942
      %v8370 = vunpack.c.l.b16 %v7943
      %v8371 = vunpack.c.h.b16 %v7943
      %v8372 = vunpack.c.l.b16 %v7944
      %v8373 = vunpack.c.h.b16 %v7944
      %v8374 = vunpack.c.l.b16 %v7945
      %v8375 = vunpack.c.h.b16 %v7945
      %v8376 = vunpack.c.l.b16 %v7946
      %v8377 = vunpack.c.l.b16 %v7947
      %v8378 = vunpack.c.h.b16 %v7947
      %v8379 = vunpack.c.l.b16 %v7948
      %v8380 = vunpack.c.h.b16 %v7948
      %v8381 = vunpack.c.l.b16 %v7949
      %v8382 = vunpack.c.h.b16 %v7949
      %v8383 = vunpack.c.l.b16 %v7950
      %v8384 = vunpack.c.l.b16 %v7951
      %v8385 = vunpack.c.h.b16 %v7951
      %v8386 = vunpack.c.l.b16 %v7952
      %v8387 = vunpack.c.h.b16 %v7952
      %v8388 = vunpack.c.l.b16 %v7953
      %v8389 = vunpack.c.h.b16 %v7953
      %v8390 = vunpack.c.l.b16 %v7954
      %v8391 = vunpack.c.l.b16 %v7955
      %v8392 = vunpack.c.h.b16 %v7955
      %v8393 = vunpack.c.l.b16 %v7956
      %v8394 = vunpack.c.h.b16 %v7956
      %v8395 = vunpack.c.l.b16 %v7957
      %v8396 = vunpack.c.h.b16 %v7957
      %v8397 = vunpack.c.l.b16 %v7958
      %v8398 = vunpack.c.l.b16 %v7959
      %v8399 = vunpack.c.h.b16 %v7959
      %v8400 = vunpack.c.l.b16 %v7960
      %v8401 = vunpack.c.h.b16 %v7960
      %v8402 = vunpack.c.l.b16 %v7961
      %v8403 = vunpack.c.h.b16 %v7961
      %v8404 = vunpack.c.l.b16 %v7962
      %v8405 = vunpack.c.l.b16 %v7963
      %v8406 = vunpack.c.h.b16 %v7963
      %v8407 = vunpack.c.l.b16 %v7964
      %v8408 = vunpack.c.h.b16 %v7964
      %v8409 = vunpack.c.l.b16 %v7965
      %v8410 = vunpack.c.h.b16 %v7965
      %v8411 = vunpack.c.l.b16 %v7966
      %v8412 = vunpack.c.l.b16 %v7967
      %v8413 = vunpack.c.h.b16 %v7967
      %v8414 = vunpack.c.l.b16 %v7968
      %v8415 = vunpack.c.h.b16 %v7968
      %v8416 = vunpack.c.l.b16 %v7969
      %v8417 = vunpack.c.h.b16 %v7969
      %v8418 = vunpack.c.l.b16 %v7970
      %v8419 = vunpack.c.l.b16 %v7971
      %v8420 = vunpack.c.h.b16 %v7971
      %v8421 = vunpack.c.l.b16 %v7972
      %v8422 = vunpack.c.h.b16 %v7972
      %v8423 = vunpack.c.l.b16 %v7973
      %v8424 = vunpack.c.h.b16 %v7973
      %v8425 = vunpack.c.l.b16 %v7974
      %v8426 = vunpack.c.l.b16 %v7975
      %v8427 = vunpack.c.h.b16 %v7975
      %v8428 = vunpack.c.l.b16 %v7976
      %v8429 = vunpack.c.h.b16 %v7976
      %v8430 = vunpack.c.l.b16 %v7977
      %v8431 = vunpack.c.h.b16 %v7977
      %v8432 = vunpack.c.l.b16 %v7978
      %v8433 = vunpack.c.l.b16 %v7979
      %v8434 = vunpack.c.h.b16 %v7979
      %v8435 = vunpack.c.l.b16 %v7980
      %v8436 = vunpack.c.h.b16 %v7980
      %v8437 = vunpack.c.l.b16 %v7981
      %v8438 = vunpack.c.h.b16 %v7981
      %v8439 = vunpack.c.l.b16 %v7982
      %v8440 = vunpack.c.l.b16 %v7983
      %v8441 = vunpack.c.h.b16 %v7983
      %v8442 = vunpack.c.l.b16 %v7984
      %v8443 = vunpack.c.h.b16 %v7984
      %v8444 = vunpack.c.l.b16 %v7985
      %v8445 = vunpack.c.h.b16 %v7985
      %v8446 = vunpack.c.l.b16 %v7986
      %v8447 = vunpack.c.l.b16 %v7987
      %v8448 = vunpack.c.h.b16 %v7987
      %v8449 = vunpack.c.l.b16 %v7988
      %v8450 = vunpack.c.h.b16 %v7988
      %v8451 = vunpack.c.l.b16 %v7989
      %v8452 = vunpack.c.h.b16 %v7989
      %v8453 = vunpack.c.l.b16 %v7990
      %v8454 = vunpack.c.l.b16 %v7991
      %v8455 = vunpack.c.h.b16 %v7991
      %v8456 = vunpack.c.l.b16 %v7992
      %v8457 = vunpack.c.h.b16 %v7992
      %v8458 = vunpack.c.l.b16 %v7993
      %v8459 = vunpack.c.h.b16 %v7993
      %v8460 = vunpack.c.l.b16 %v7994
      %v8461 = vunpack.c.l.b16 %v7995
      %v8462 = vunpack.c.h.b16 %v7995
      %v8463 = vunpack.c.l.b16 %v7996
      %v8464 = vunpack.c.h.b16 %v7996
      %v8465 = vunpack.c.l.b16 %v7997
      %v8466 = vunpack.c.h.b16 %v7997
      %v8467 = vunpack.c.l.b16 %v7998
      %v8468 = vunpack.c.l.b16 %v7999
      %v8469 = vunpack.c.h.b16 %v7999
      %v8470 = vunpack.c.l.b16 %v8000
      %v8471 = vunpack.c.h.b16 %v8000
      %v8472 = vunpack.c.l.b16 %v8001
      %v8473 = vunpack.c.h.b16 %v8001
      %v8474 = vunpack.c.l.b16 %v8002
      %v8475 = vunpack.c.l.b16 %v8003
      %v8476 = vunpack.c.h.b16 %v8003
      %v8477 = vunpack.c.l.b16 %v8004
      %v8478 = vunpack.c.h.b16 %v8004
      %v8479 = vunpack.c.l.b16 %v8005
      %v8480 = vunpack.c.h.b16 %v8005
      %v8481 = vunpack.c.l.b16 %v8006
      %v8482 = vunpack.c.l.b16 %v8007
      %v8483 = vunpack.c.h.b16 %v8007
      %v8484 = vunpack.c.l.b16 %v8008
      %v8485 = vunpack.c.h.b16 %v8008
      %v8486 = vunpack.c.l.b16 %v8009
      %v8487 = vunpack.c.h.b16 %v8009
      %v8488 = vunpack.c.l.b16 %v8010
      %v8489 = vunpack.c.l.b16 %v8011
      %v8490 = vunpack.c.h.b16 %v8011
      %v8491 = vunpack.c.l.b16 %v8012
      %v8492 = vunpack.c.h.b16 %v8012
      %v8493 = vunpack.c.l.b16 %v8013
      %v8494 = vunpack.c.h.b16 %v8013
      %v8495 = vunpack.c.l.b16 %v8014
      %v8496 = vunpack.c.l.b16 %v8015
      %v8497 = vunpack.c.h.b16 %v8015
      %v8498 = vunpack.c.l.b16 %v8016
      %v8499 = vunpack.c.h.b16 %v8016
      %v8500 = vunpack.c.l.b16 %v8017
      %v8501 = vunpack.c.h.b16 %v8017
      %v8502 = vunpack.c.l.b16 %v8018
      %v8503 = vunpack.c.l.b16 %v8019
      %v8504 = vunpack.c.h.b16 %v8019
      %v8505 = vunpack.c.l.b16 %v8020
      %v8506 = vunpack.c.h.b16 %v8020
      %v8507 = vunpack.c.l.b16 %v8021
      %v8508 = vunpack.c.h.b16 %v8021
      %v8509 = vunpack.c.l.b16 %v8022
      %v8510 = vunpack.c.l.b16 %v8023
      %v8511 = vunpack.c.h.b16 %v8023
      %v8512 = vunpack.c.l.b16 %v8024
      %v8513 = vunpack.c.h.b16 %v8024
      %v8514 = vunpack.c.l.b16 %v8025
      %v8515 = vunpack.c.h.b16 %v8025
      %v8516 = vunpack.c.l.b16 %v8026
      %v8517 = vunpack.c.l.b16 %v8027
      %v8518 = vunpack.c.h.b16 %v8027
      %v8519 = vunpack.c.l.b16 %v8028
      %v8520 = vunpack.c.h.b16 %v8028
      %v8521 = vunpack.c.l.b16 %v8029
      %v8522 = vunpack.c.h.b16 %v8029
      %v8523 = vunpack.c.l.b16 %v8030
      %v8524 = vunpack.c.l.b16 %v8031
      %v8525 = vunpack.c.h.b16 %v8031
      %v8526 = vunpack.c.l.b16 %v8032
      %v8527 = vunpack.c.h.b16 %v8032
      %v8528 = vunpack.c.l.b16 %v8033
      %v8529 = vunpack.c.h.b16 %v8033
      %v8530 = vunpack.c.l.b16 %v8034
      %v8531 = vunpack.c.l.b16 %v8035
      %v8532 = vunpack.c.h.b16 %v8035
      %v8533 = vunpack.c.l.b16 %v8036
      %v8534 = vunpack.c.h.b16 %v8036
      %v8535 = vunpack.c.l.b16 %v8037
      %v8536 = vunpack.c.h.b16 %v8037
      %v8537 = vunpack.c.l.b16 %v8038
      %v8538 = vunpack.c.l.b16 %v8039
      %v8539 = vunpack.c.h.b16 %v8039
      %v8540 = vunpack.c.l.b16 %v8040
      %v8541 = vunpack.c.h.b16 %v8040
      %v8542 = vunpack.c.l.b16 %v8041
      %v8543 = vunpack.c.h.b16 %v8041
      %v8544 = vunpack.c.l.b16 %v8042
      %v8545 = vunpack.c.l.b16 %v8043
      %v8546 = vunpack.c.h.b16 %v8043
      %v8547 = vunpack.c.l.b16 %v8044
      %v8548 = vunpack.c.h.b16 %v8044
      %v8549 = vunpack.c.l.b16 %v8045
      %v8550 = vunpack.c.h.b16 %v8045
      %v8551 = vunpack.c.l.b16 %v8046
      %v8552 = vunpack.c.l.b16 %v8047
      %v8553 = vunpack.c.h.b16 %v8047
      %v8554 = vunpack.c.l.b16 %v8048
      %v8555 = vunpack.c.h.b16 %v8048
      %v8556 = vunpack.c.l.b16 %v8049
      %v8557 = vunpack.c.h.b16 %v8049
      %v8558 = vunpack.c.l.b16 %v8050
      %v8559 = vunpack.c.l.b16 %v8051
      %v8560 = vunpack.c.h.b16 %v8051
      %v8561 = vunpack.c.l.b16 %v8052
      %v8562 = vunpack.c.h.b16 %v8052
      %v8563 = vunpack.c.l.b16 %v8053
      %v8564 = vunpack.c.h.b16 %v8053
      %v8565 = vunpack.c.l.b16 %v8054
      %v8566 = vunpack.c.l.b16 %v8055
      %v8567 = vunpack.c.h.b16 %v8055
      %v8568 = vunpack.c.l.b16 %v8056
      %v8569 = vunpack.c.h.b16 %v8056
      %v8570 = vunpack.c.l.b16 %v8057
      %v8571 = vunpack.c.h.b16 %v8057
      %v8572 = vunpack.c.l.b16 %v8058
      %v8573 = vunpack.c.l.b16 %v8059
      %v8574 = vunpack.c.h.b16 %v8059
      %v8575 = vunpack.c.l.b16 %v8060
      %v8576 = vunpack.c.h.b16 %v8060
      %v8577 = vunpack.c.l.b16 %v8061
      %v8578 = vunpack.c.h.b16 %v8061
      %v8579 = vunpack.c.l.b16 %v8062
      %v8580 = vunpack.c.l.b16 %v8063
      %v8581 = vunpack.c.h.b16 %v8063
      %v8582 = vunpack.c.l.b16 %v8064
      %v8583 = vunpack.c.h.b16 %v8064
      %v8584 = vunpack.c.l.b16 %v8065
      %v8585 = vunpack.c.h.b16 %v8065
      %v8586 = vunpack.c.l.b16 %v8066
      %v8587 = vunpack.c.l.b16 %v8067
      %v8588 = vunpack.c.h.b16 %v8067
      %v8589 = vunpack.c.l.b16 %v8068
      %v8590 = vunpack.c.h.b16 %v8068
      %v8591 = vunpack.c.l.b16 %v8069
      %v8592 = vunpack.c.h.b16 %v8069
      %v8593 = vunpack.c.l.b16 %v8070
      %v8594 = vunpack.c.l.b16 %v8071
      %v8595 = vunpack.c.h.b16 %v8071
      %v8596 = vunpack.c.l.b16 %v8072
      %v8597 = vunpack.c.h.b16 %v8072
      %v8598 = vunpack.c.l.b16 %v8073
      %v8599 = vunpack.c.h.b16 %v8073
      %v8600 = vunpack.c.l.b16 %v8074
      %v8601 = vunpack.c.l.b16 %v8075
      %v8602 = vunpack.c.h.b16 %v8075
      %v8603 = vunpack.c.l.b16 %v8076
      %v8604 = vunpack.c.h.b16 %v8076
      %v8605 = vunpack.c.l.b16 %v8077
      %v8606 = vunpack.c.h.b16 %v8077
      %v8607 = vunpack.c.l.b16 %v8078
      %v8608 = vunpack.c.l.b16 %v8079
      %v8609 = vunpack.c.h.b16 %v8079
      %v8610 = vunpack.c.l.b16 %v8080
      %v8611 = vunpack.c.h.b16 %v8080
      %v8612 = vunpack.c.l.b16 %v8081
      %v8613 = vunpack.c.h.b16 %v8081
      %v8614 = vunpack.c.l.b16 %v8082
      %v8615 = vunpack.c.l.b16 %v8083
      %v8616 = vunpack.c.h.b16 %v8083
      %v8617 = vunpack.c.l.b16 %v8084
      %v8618 = vunpack.c.h.b16 %v8084
      %v8619 = vunpack.c.l.b16 %v8085
      %v8620 = vunpack.c.h.b16 %v8085
      %v8621 = vunpack.c.l.b16 %v8086
      %v8622 = vunpack.c.l.b16 %v8087
      %v8623 = vunpack.c.h.b16 %v8087
      %v8624 = vunpack.c.l.b16 %v8088
      %v8625 = vunpack.c.h.b16 %v8088
      %v8626 = vunpack.c.l.b16 %v8089
      %v8627 = vunpack.c.h.b16 %v8089
      %v8628 = vunpack.c.l.b16 %v8090
      %v8629 = vunpack.c.l.b16 %v8091
      %v8630 = vunpack.c.h.b16 %v8091
      %v8631 = vunpack.c.l.b16 %v8092
      %v8632 = vunpack.c.h.b16 %v8092
      %v8633 = vunpack.c.l.b16 %v8093
      %v8634 = vunpack.c.h.b16 %v8093
      %v8635 = vunpack.c.l.b16 %v8094
      %v8636 = vunpack.c.l.b16 %v8095
      %v8637 = vunpack.c.h.b16 %v8095
      %v8638 = vunpack.c.l.b16 %v8096
      %v8639 = vunpack.c.h.b16 %v8096
      %v8640 = vunpack.c.l.b16 %v8097
      %v8641 = vunpack.c.h.b16 %v8097
      %v8642 = vunpack.c.l.b16 %v8098
      %v8643 = vunpack.c.l.b16 %v8099
      %v8644 = vunpack.c.h.b16 %v8099
      %v8645 = vunpack.c.l.b16 %v8100
      %v8646 = vunpack.c.h.b16 %v8100
      %v8647 = vunpack.c.l.b16 %v8101
      %v8648 = vunpack.c.h.b16 %v8101
      %v8649 = vunpack.c.l.b16 %v8102
      %v8650 = vunpack.c.l.b16 %v8103
      %v8651 = vunpack.c.h.b16 %v8103
      %v8652 = vunpack.c.l.b16 %v8104
      %v8653 = vunpack.c.h.b16 %v8104
      %v8654 = vunpack.c.l.b16 %v8105
      %v8655 = vunpack.c.h.b16 %v8105
      %v8656 = vunpack.c.l.b16 %v8106
      %v8657 = vpack.c.b16 %v8314, %v8307
      %v8658 = vpack.c.b16 %v8315, %v8308
      %v8659 = vpack.c.b16 %v8316, %v8309
      %v8660 = vpack.c.b16 %v8317, %v8310
      %v8661 = vpack.c.b16 %v8318, %v8311
      %v8662 = vpack.c.b16 %v8319, %v8312
      %v8663 = vpack.c.b16 %v8320, %v8313
      %v8664 = vpack.c.b16 %v8328, %v8321
      %v8665 = vpack.c.b16 %v8329, %v8322
      %v8666 = vpack.c.b16 %v8330, %v8323
      %v8667 = vpack.c.b16 %v8331, %v8324
      %v8668 = vpack.c.b16 %v8332, %v8325
      %v8669 = vpack.c.b16 %v8333, %v8326
      %v8670 = vpack.c.b16 %v8334, %v8327
      %v8671 = vpack.c.b16 %v8342, %v8335
      %v8672 = vpack.c.b16 %v8343, %v8336
      %v8673 = vpack.c.b16 %v8344, %v8337
      %v8674 = vpack.c.b16 %v8345, %v8338
      %v8675 = vpack.c.b16 %v8346, %v8339
      %v8676 = vpack.c.b16 %v8347, %v8340
      %v8677 = vpack.c.b16 %v8348, %v8341
      %v8678 = vpack.c.b16 %v8356, %v8349
      %v8679 = vpack.c.b16 %v8357, %v8350
      %v8680 = vpack.c.b16 %v8358, %v8351
      %v8681 = vpack.c.b16 %v8359, %v8352
      %v8682 = vpack.c.b16 %v8360, %v8353
      %v8683 = vpack.c.b16 %v8361, %v8354
      %v8684 = vpack.c.b16 %v8362, %v8355
      %v8685 = vpack.c.b16 %v8370, %v8363
      %v8686 = vpack.c.b16 %v8371, %v8364
      %v8687 = vpack.c.b16 %v8372, %v8365
      %v8688 = vpack.c.b16 %v8373, %v8366
      %v8689 = vpack.c.b16 %v8374, %v8367
      %v8690 = vpack.c.b16 %v8375, %v8368
      %v8691 = vpack.c.b16 %v8376, %v8369
      %v8692 = vpack.c.b16 %v8384, %v8377
      %v8693 = vpack.c.b16 %v8385, %v8378
      %v8694 = vpack.c.b16 %v8386, %v8379
      %v8695 = vpack.c.b16 %v8387, %v8380
      %v8696 = vpack.c.b16 %v8388, %v8381
      %v8697 = vpack.c.b16 %v8389, %v8382
      %v8698 = vpack.c.b16 %v8390, %v8383
      %v8699 = vpack.c.b16 %v8398, %v8391
      %v8700 = vpack.c.b16 %v8399, %v8392
      %v8701 = vpack.c.b16 %v8400, %v8393
      %v8702 = vpack.c.b16 %v8401, %v8394
      %v8703 = vpack.c.b16 %v8402, %v8395
      %v8704 = vpack.c.b16 %v8403, %v8396
      %v8705 = vpack.c.b16 %v8404, %v8397
      %v8706 = vpack.c.b16 %v8412, %v8405
      %v8707 = vpack.c.b16 %v8413, %v8406
      %v8708 = vpack.c.b16 %v8414, %v8407
      %v8709 = vpack.c.b16 %v8415, %v8408
      %v8710 = vpack.c.b16 %v8416, %v8409
      %v8711 = vpack.c.b16 %v8417, %v8410
      %v8712 = vpack.c.b16 %v8418, %v8411
      %v8713 = vpack.c.b16 %v8426, %v8419
      %v8714 = vpack.c.b16 %v8427, %v8420
      %v8715 = vpack.c.b16 %v8428, %v8421
      %v8716 = vpack.c.b16 %v8429, %v8422
      %v8717 = vpack.c.b16 %v8430, %v8423
      %v8718 = vpack.c.b16 %v8431, %v8424
      %v8719 = vpack.c.b16 %v8432, %v8425
      %v8720 = vpack.c.b16 %v8440, %v8433
      %v8721 = vpack.c.b16 %v8441, %v8434
      %v8722 = vpack.c.b16 %v8442, %v8435
      %v8723 = vpack.c.b16 %v8443, %v8436
      %v8724 = vpack.c.b16 %v8444, %v8437
      %v8725 = vpack.c.b16 %v8445, %v8438
      %v8726 = vpack.c.b16 %v8446, %v8439
      %v8727 = vpack.c.b16 %v8454, %v8447
      %v8728 = vpack.c.b16 %v8455, %v8448
      %v8729 = vpack.c.b16 %v8456, %v8449
      %v8730 = vpack.c.b16 %v8457, %v8450
      %v8731 = vpack.c.b16 %v8458, %v8451
      %v8732 = vpack.c.b16 %v8459, %v8452
      %v8733 = vpack.c.b16 %v8460, %v8453
      %v8734 = vpack.c.b16 %v8468, %v8461
      %v8735 = vpack.c.b16 %v8469, %v8462
      %v8736 = vpack.c.b16 %v8470, %v8463
      %v8737 = vpack.c.b16 %v8471, %v8464
      %v8738 = vpack.c.b16 %v8472, %v8465
      %v8739 = vpack.c.b16 %v8473, %v8466
      %v8740 = vpack.c.b16 %v8474, %v8467
      %v8741 = vpack.c.b16 %v8482, %v8475
      %v8742 = vpack.c.b16 %v8483, %v8476
      %v8743 = vpack.c.b16 %v8484, %v8477
      %v8744 = vpack.c.b16 %v8485, %v8478
      %v8745 = vpack.c.b16 %v8486, %v8479
      %v8746 = vpack.c.b16 %v8487, %v8480
      %v8747 = vpack.c.b16 %v8488, %v8481
      %v8748 = vpack.c.b16 %v8496, %v8489
      %v8749 = vpack.c.b16 %v8497, %v8490
      %v8750 = vpack.c.b16 %v8498, %v8491
      %v8751 = vpack.c.b16 %v8499, %v8492
      %v8752 = vpack.c.b16 %v8500, %v8493
      %v8753 = vpack.c.b16 %v8501, %v8494
      %v8754 = vpack.c.b16 %v8502, %v8495
      %v8755 = vpack.c.b16 %v8510, %v8503
      %v8756 = vpack.c.b16 %v8511, %v8504
      %v8757 = vpack.c.b16 %v8512, %v8505
      %v8758 = vpack.c.b16 %v8513, %v8506
      %v8759 = vpack.c.b16 %v8514, %v8507
      %v8760 = vpack.c.b16 %v8515, %v8508
      %v8761 = vpack.c.b16 %v8516, %v8509
      %v8762 = vpack.c.b16 %v8524, %v8517
      %v8763 = vpack.c.b16 %v8525, %v8518
      %v8764 = vpack.c.b16 %v8526, %v8519
      %v8765 = vpack.c.b16 %v8527, %v8520
      %v8766 = vpack.c.b16 %v8528, %v8521
      %v8767 = vpack.c.b16 %v8529, %v8522
      %v8768 = vpack.c.b16 %v8530, %v8523
      %v8769 = vpack.c.b16 %v8538, %v8531
      %v8770 = vpack.c.b16 %v8539, %v8532
      %v8771 = vpack.c.b16 %v8540, %v8533
      %v8772 = vpack.c.b16 %v8541, %v8534
      %v8773 = vpack.c.b16 %v8542, %v8535
      %v8774 = vpack.c.b16 %v8543, %v8536
      %v8775 = vpack.c.b16 %v8544, %v8537
      %v8776 = vpack.c.b16 %v8552, %v8545
      %v8777 = vpack.c.b16 %v8553, %v8546
      %v8778 = vpack.c.b16 %v8554, %v8547
      %v8779 = vpack.c.b16 %v8555, %v8548
      %v8780 = vpack.c.b16 %v8556, %v8549
      %v8781 = vpack.c.b16 %v8557, %v8550
      %v8782 = vpack.c.b16 %v8558, %v8551
      %v8783 = vpack.c.b16 %v8566, %v8559
      %v8784 = vpack.c.b16 %v8567, %v8560
      %v8785 = vpack.c.b16 %v8568, %v8561
      %v8786 = vpack.c.b16 %v8569, %v8562
      %v8787 = vpack.c.b16 %v8570, %v8563
      %v8788 = vpack.c.b16 %v8571, %v8564
      %v8789 = vpack.c.b16 %v8572, %v8565
      %v8790 = vpack.c.b16 %v8580, %v8573
      %v8791 = vpack.c.b16 %v8581, %v8574
      %v8792 = vpack.c.b16 %v8582, %v8575
      %v8793 = vpack.c.b16 %v8583, %v8576
      %v8794 = vpack.c.b16 %v8584, %v8577
      %v8795 = vpack.c.b16 %v8585, %v8578
      %v8796 = vpack.c.b16 %v8586, %v8579
      %v8797 = vpack.c.b16 %v8594, %v8587
      %v8798 = vpack.c.b16 %v8595, %v8588
      %v8799 = vpack.c.b16 %v8596, %v8589
      %v8800 = vpack.c.b16 %v8597, %v8590
      %v8801 = vpack.c.b16 %v8598, %v8591
      %v8802 = vpack.c.b16 %v8599, %v8592
      %v8803 = vpack.c.b16 %v8600, %v8593
      %v8804 = vpack.c.b16 %v8608, %v8601
      %v8805 = vpack.c.b16 %v8609, %v8602
      %v8806 = vpack.c.b16 %v8610, %v8603
      %v8807 = vpack.c.b16 %v8611, %v8604
      %v8808 = vpack.c.b16 %v8612, %v8605
      %v8809 = vpack.c.b16 %v8613, %v8606
      %v8810 = vpack.c.b16 %v8614, %v8607
      %v8811 = vpack.c.b16 %v8622, %v8615
      %v8812 = vpack.c.b16 %v8623, %v8616
      %v8813 = vpack.c.b16 %v8624, %v8617
      %v8814 = vpack.c.b16 %v8625, %v8618
      %v8815 = vpack.c.b16 %v8626, %v8619
      %v8816 = vpack.c.b16 %v8627, %v8620
      %v8817 = vpack.c.b16 %v8628, %v8621
      %v8818 = vpack.c.b16 %v8636, %v8629
      %v8819 = vpack.c.b16 %v8637, %v8630
      %v8820 = vpack.c.b16 %v8638, %v8631
      %v8821 = vpack.c.b16 %v8639, %v8632
      %v8822 = vpack.c.b16 %v8640, %v8633
      %v8823 = vpack.c.b16 %v8641, %v8634
      %v8824 = vpack.c.b16 %v8642, %v8635
      %v8825 = vpack.c.b16 %v8650, %v8643
      %v8826 = vpack.c.b16 %v8651, %v8644
      %v8827 = vpack.c.b16 %v8652, %v8645
      %v8828 = vpack.c.b16 %v8653, %v8646
      %v8829 = vpack.c.b16 %v8654, %v8647
      %v8830 = vpack.c.b16 %v8655, %v8648
      %v8831 = vpack.c.b16 %v8656, %v8649
      %v9008 = vsel %vm2406, %v7846, 0
      %v9011 = vsel %vm2406, %v7850, 0
      %v9014 = vsel %vm2406, %v7854, 0
      %v9017 = vsel %vm2406, %v7858, 0
      %v9020 = vsel %vm2406, %v7862, 0
      %v9023 = vsel %vm2406, %v7866, 0
      %v9026 = vsel %vm2406, %v7870, 0
      %v9029 = vsel %vm2406, %v7874, 0
      %v9032 = vsel %vm2406, %v7878, 0
      %v9035 = vsel %vm2406, %v7882, 0
      %v9038 = vsel %vm2406, %v7886, 0
      %v9041 = vsel %vm2406, %v7890, 0
      %v9044 = vsel %vm2406, %v7894, 0
      %v9047 = vsel %vm2406, %v7898, 0
      %v9050 = vsel %vm2406, %v7902, 0
      %v9053 = vsel %vm2406, %v7906, 0
      %9055 = vmatprep.subr.bf16.mxu0 %v8658
      %9056 = vmatpush1.bf16.msra.mxu0 %v8657
      %9057 = vmatprep.subr.bf16.mxu0 %v8665
      %9058 = vmatpush1.bf16.msra.mxu0 %v8664
      %9059 = vmatprep.subr.bf16.mxu0 %v8672
      %9060 = vmatpush1.bf16.msra.mxu0 %v8671
      %9061 = vmatprep.subr.bf16.mxu0 %v8679
      %9062 = vmatpush1.bf16.msra.mxu0 %v8678
      %9063 = vmatprep.subr.bf16.mxu0 %v8686
      %9064 = vmatpush1.bf16.msra.mxu0 %v8685
      %9065 = vmatprep.subr.bf16.mxu0 %v8693
      %9066 = vmatpush1.bf16.msra.mxu0 %v8692
      %9067 = vmatprep.subr.bf16.mxu0 %v8700
      %9068 = vmatpush1.bf16.msra.mxu0 %v8699
      %9069 = vmatprep.subr.bf16.mxu0 %v8707
      %9070 = vmatpush1.bf16.msra.mxu0 %v8706
      %9071 = vmatprep.subr.bf16.mxu0 %v8714
      %9072 = vmatpush1.bf16.msra.mxu0 %v8713
      %9073 = vmatprep.subr.bf16.mxu0 %v8721
      %9074 = vmatpush1.bf16.msra.mxu0 %v8720
      %9075 = vmatprep.subr.bf16.mxu0 %v8728
      %9076 = vmatpush1.bf16.msra.mxu0 %v8727
      %9077 = vmatprep.subr.bf16.mxu0 %v8735
      %9078 = vmatpush1.bf16.msra.mxu0 %v8734
      %9079 = vmatprep.subr.bf16.mxu0 %v8742
      %9080 = vmatpush1.bf16.msra.mxu0 %v8741
      %9081 = vmatprep.subr.bf16.mxu0 %v8749
      %9082 = vmatpush1.bf16.msra.mxu0 %v8748
      %9083 = vmatprep.subr.bf16.mxu0 %v8756
      %9084 = vmatpush1.bf16.msra.mxu0 %v8755
      %9085 = vmatprep.subr.bf16.mxu0 %v8763
      %9086 = vmatpush1.bf16.msra.mxu0 %v8762
      %9087 = vmatprep.mubr.bf16.mxu0 %v7844
      %9088 = vmatmul.mubr.bf16.gmra.mrb[0].mxu0 %v7843
      %v9089 = vpop.f32.mrb[0].mxu0
      %v9090 = vadd.f32 0.0, %v9089
      %v9091 = vpop.f32.mrb[0].mxu0
      %v9092 = vadd.f32 0.0, %v9091
      %v9093 = vpop.f32.mrb[0].mxu0
      %v9094 = vadd.f32 0.0, %v9093
      %v9095 = vpop.f32.mrb[0].mxu0
      %v9096 = vadd.f32 0.0, %v9095
      %9097 = vmatprep.mubr.bf16.mxu0 %v7848
      %9098 = vmatmul.mubr.bf16.gmra.mrb[0].mxu0 %v7847
      %v9099 = vpop.f32.mrb[0].mxu0
      %v9100 = vadd.f32 0.0, %v9099
      %v9101 = vpop.f32.mrb[0].mxu0
      %v9102 = vadd.f32 0.0, %v9101
      %v9103 = vpop.f32.mrb[0].mxu0
      %v9104 = vadd.f32 0.0, %v9103
      %v9105 = vpop.f32.mrb[0].mxu0
      %v9106 = vadd.f32 0.0, %v9105
      %9107 = vmatprep.mubr.bf16.mxu0 %v7852
      %9108 = vmatmul.mubr.bf16.gmra.mrb[0].mxu0 %v7851
      %v9109 = vpop.f32.mrb[0].mxu0
      %v9110 = vadd.f32 0.0, %v9109
      %v9111 = vpop.f32.mrb[0].mxu0
      %v9112 = vadd.f32 0.0, %v9111
      %v9113 = vpop.f32.mrb[0].mxu0
      %v9114 = vadd.f32 0.0, %v9113
      %v9115 = vpop.f32.mrb[0].mxu0
      %v9116 = vadd.f32 0.0, %v9115
      %9117 = vmatprep.mubr.bf16.mxu0 %v7856
      %9118 = vmatmul.mubr.bf16.gmra.mrb[0].mxu0 %v7855
      %v9119 = vpop.f32.mrb[0].mxu0
      %v9120 = vadd.f32 0.0, %v9119
      %v9121 = vpop.f32.mrb[0].mxu0
      %v9122 = vadd.f32 0.0, %v9121
      %v9123 = vpop.f32.mrb[0].mxu0
      %v9124 = vadd.f32 0.0, %v9123
      %v9125 = vpop.f32.mrb[0].mxu0
      %v9126 = vadd.f32 0.0, %v9125
      %9127 = vmatprep.mubr.bf16.mxu0 %v7860
      %9128 = vmatmul.mubr.bf16.gmra.mrb[0].mxu0 %v7859
      %v9129 = vpop.f32.mrb[0].mxu0
      %v9130 = vadd.f32 0.0, %v9129
      %v9131 = vpop.f32.mrb[0].mxu0
      %v9132 = vadd.f32 0.0, %v9131
      %v9133 = vpop.f32.mrb[0].mxu0
      %v9134 = vadd.f32 0.0, %v9133
      %v9135 = vpop.f32.mrb[0].mxu0
      %v9136 = vadd.f32 0.0, %v9135
      %9137 = vmatprep.mubr.bf16.mxu0 %v7864
      %9138 = vmatmul.mubr.bf16.gmra.mrb[0].mxu0 %v7863
      %v9139 = vpop.f32.mrb[0].mxu0
      %v9140 = vadd.f32 0.0, %v9139
      %v9141 = vpop.f32.mrb[0].mxu0
      %v9142 = vadd.f32 0.0, %v9141
      %v9143 = vpop.f32.mrb[0].mxu0
      %v9144 = vadd.f32 0.0, %v9143
      %v9145 = vpop.f32.mrb[0].mxu0
      %v9146 = vadd.f32 0.0, %v9145
      %9147 = vmatprep.mubr.bf16.mxu0 %v7868
      %9148 = vmatmul.mubr.bf16.gmra.mrb[0].mxu0 %v7867
      %v9149 = vpop.f32.mrb[0].mxu0
      %v9150 = vadd.f32 0.0, %v9149
      %v9151 = vpop.f32.mrb[0].mxu0
      %v9152 = vadd.f32 0.0, %v9151
      %v9153 = vpop.f32.mrb[0].mxu0
      %v9154 = vadd.f32 0.0, %v9153
      %v9155 = vpop.f32.mrb[0].mxu0
      %v9156 = vadd.f32 0.0, %v9155
      %9157 = vmatprep.mubr.bf16.mxu0 %v7872
      %9158 = vmatmul.mubr.bf16.gmra.mrb[0].mxu0 %v7871
      %v9159 = vpop.f32.mrb[0].mxu0
      %v9160 = vadd.f32 0.0, %v9159
      %v9161 = vpop.f32.mrb[0].mxu0
      %v9162 = vadd.f32 0.0, %v9161
      %v9163 = vpop.f32.mrb[0].mxu0
      %v9164 = vadd.f32 0.0, %v9163
      %v9165 = vpop.f32.mrb[0].mxu0
      %v9166 = vadd.f32 0.0, %v9165
      %9167 = vmatprep.mubr.bf16.mxu0 %v7876
      %9168 = vmatmul.mubr.bf16.gmra.mrb[0].mxu0 %v7875
      %v9169 = vpop.f32.mrb[0].mxu0
      %v9170 = vadd.f32 0.0, %v9169
      %v9171 = vpop.f32.mrb[0].mxu0
      %v9172 = vadd.f32 0.0, %v9171
      %v9173 = vpop.f32.mrb[0].mxu0
      %v9174 = vadd.f32 0.0, %v9173
      %v9175 = vpop.f32.mrb[0].mxu0
      %v9176 = vadd.f32 0.0, %v9175
      %9177 = vmatprep.mubr.bf16.mxu0 %v7880
      %9178 = vmatmul.mubr.bf16.gmra.mrb[0].mxu0 %v7879
      %v9179 = vpop.f32.mrb[0].mxu0
      %v9180 = vadd.f32 0.0, %v9179
      %v9181 = vpop.f32.mrb[0].mxu0
      %v9182 = vadd.f32 0.0, %v9181
      %v9183 = vpop.f32.mrb[0].mxu0
      %v9184 = vadd.f32 0.0, %v9183
      %v9185 = vpop.f32.mrb[0].mxu0
      %v9186 = vadd.f32 0.0, %v9185
      %9187 = vmatprep.mubr.bf16.mxu0 %v7884
      %9188 = vmatmul.mubr.bf16.gmra.mrb[0].mxu0 %v7883
      %v9189 = vpop.f32.mrb[0].mxu0
      %v9190 = vadd.f32 0.0, %v9189
      %v9191 = vpop.f32.mrb[0].mxu0
      %v9192 = vadd.f32 0.0, %v9191
      %v9193 = vpop.f32.mrb[0].mxu0
      %v9194 = vadd.f32 0.0, %v9193
      %v9195 = vpop.f32.mrb[0].mxu0
      %v9196 = vadd.f32 0.0, %v9195
      %9197 = vmatprep.mubr.bf16.mxu0 %v7888
      %9198 = vmatmul.mubr.bf16.gmra.mrb[0].mxu0 %v7887
      %v9199 = vpop.f32.mrb[0].mxu0
      %v9200 = vadd.f32 0.0, %v9199
      %v9201 = vpop.f32.mrb[0].mxu0
      %v9202 = vadd.f32 0.0, %v9201
      %v9203 = vpop.f32.mrb[0].mxu0
      %v9204 = vadd.f32 0.0, %v9203
      %v9205 = vpop.f32.mrb[0].mxu0
      %v9206 = vadd.f32 0.0, %v9205
      %9207 = vmatprep.mubr.bf16.mxu0 %v7892
      %9208 = vmatmul.mubr.bf16.gmra.mrb[0].mxu0 %v7891
      %v9209 = vpop.f32.mrb[0].mxu0
      %v9210 = vadd.f32 0.0, %v9209
      %v9211 = vpop.f32.mrb[0].mxu0
      %v9212 = vadd.f32 0.0, %v9211
      %v9213 = vpop.f32.mrb[0].mxu0
      %v9214 = vadd.f32 0.0, %v9213
      %v9215 = vpop.f32.mrb[0].mxu0
      %v9216 = vadd.f32 0.0, %v9215
      %9217 = vmatprep.mubr.bf16.mxu0 %v7896
      %9218 = vmatmul.mubr.bf16.gmra.mrb[0].mxu0 %v7895
      %v9219 = vpop.f32.mrb[0].mxu0
      %v9220 = vadd.f32 0.0, %v9219
      %v9221 = vpop.f32.mrb[0].mxu0
      %v9222 = vadd.f32 0.0, %v9221
      %v9223 = vpop.f32.mrb[0].mxu0
      %v9224 = vadd.f32 0.0, %v9223
      %v9225 = vpop.f32.mrb[0].mxu0
      %v9226 = vadd.f32 0.0, %v9225
      %9227 = vmatprep.mubr.bf16.mxu0 %v7900
      %9228 = vmatmul.mubr.bf16.gmra.mrb[0].mxu0 %v7899
      %v9229 = vpop.f32.mrb[0].mxu0
      %v9230 = vadd.f32 0.0, %v9229
      %v9231 = vpop.f32.mrb[0].mxu0
      %v9232 = vadd.f32 0.0, %v9231
      %v9233 = vpop.f32.mrb[0].mxu0
      %v9234 = vadd.f32 0.0, %v9233
      %v9235 = vpop.f32.mrb[0].mxu0
      %v9236 = vadd.f32 0.0, %v9235
      %9237 = vmatprep.mubr.bf16.mxu0 %v7904
      %9238 = vmatmul.mubr.bf16.gmra.mrb[0].mxu0 %v7903
      %v9239 = vpop.f32.mrb[0].mxu0
      %v9240 = vadd.f32 0.0, %v9239
      %v9241 = vpop.f32.mrb[0].mxu0
      %v9242 = vadd.f32 0.0, %v9241
      %v9243 = vpop.f32.mrb[0].mxu0
      %v9244 = vadd.f32 0.0, %v9243
      %v9245 = vpop.f32.mrb[0].mxu0
      %v9246 = vadd.f32 0.0, %v9245
      %9247 = vdwg.mxu0
      %9248 = vmatprep.subr.bf16.mxu0 %v8770
      %9249 = vmatpush1.bf16.msra.mxu0 %v8769
      %9250 = vmatprep.subr.bf16.mxu0 %v8777
      %9251 = vmatpush1.bf16.msra.mxu0 %v8776
      %9252 = vmatprep.subr.bf16.mxu0 %v8784
      %9253 = vmatpush1.bf16.msra.mxu0 %v8783
      %9254 = vmatprep.subr.bf16.mxu0 %v8791
      %9255 = vmatpush1.bf16.msra.mxu0 %v8790
      %9256 = vmatprep.subr.bf16.mxu0 %v8798
      %9257 = vmatpush1.bf16.msra.mxu0 %v8797
      %9258 = vmatprep.subr.bf16.mxu0 %v8805
      %9259 = vmatpush1.bf16.msra.mxu0 %v8804
      %9260 = vmatprep.subr.bf16.mxu0 %v8812
      %9261 = vmatpush1.bf16.msra.mxu0 %v8811
      %9262 = vmatprep.subr.bf16.mxu0 %v8819
      %9263 = vmatpush1.bf16.msra.mxu0 %v8818
      %9264 = vmatprep.subr.bf16.mxu0 %v8826
      %9265 = vmatpush1.bf16.msra.mxu0 %v8825
      %9266 = vmatprep.subr.bf16.mxu0 0
      %9267 = vmatpush1.bf16.msra.mxu0 0
      %9268 = vmatprep.subr.bf16.mxu0 0
      %9269 = vmatpush1.bf16.msra.mxu0 0
      %9270 = vmatprep.subr.bf16.mxu0 0
      %9271 = vmatpush1.bf16.msra.mxu0 0
      %9272 = vmatprep.subr.bf16.mxu0 0
      %9273 = vmatpush1.bf16.msra.mxu0 0
      %9274 = vmatprep.subr.bf16.mxu0 0
      %9275 = vmatpush1.bf16.msra.mxu0 0
      %9276 = vmatprep.subr.bf16.mxu0 0
      %9277 = vmatpush1.bf16.msra.mxu0 0
      %9278 = vmatprep.subr.bf16.mxu0 0
      %9279 = vmatpush1.bf16.msra.mxu0 0
      %9280 = vmatprep.mubr.bf16.mxu0 %v9008
      %9281 = vmatmul.mubr.bf16.gmra.mrb[0].mxu0 %v7845
      %v9282 = vpop.f32.mrb[0].mxu0
      %v9283 = vadd.f32 %v9090, %v9282
      %v9284 = vpop.f32.mrb[0].mxu0
      %v9285 = vadd.f32 %v9092, %v9284
      %v9286 = vpop.f32.mrb[0].mxu0
      %v9287 = vadd.f32 %v9094, %v9286
      %v9288 = vpop.f32.mrb[0].mxu0
      %v9289 = vadd.f32 %v9096, %v9288
      %9290 = vmatprep.mubr.bf16.mxu0 %v9011
      %9291 = vmatmul.mubr.bf16.gmra.mrb[0].mxu0 %v7849
      %v9292 = vpop.f32.mrb[0].mxu0
      %v9293 = vadd.f32 %v9100, %v9292
      %v9294 = vpop.f32.mrb[0].mxu0
      %v9295 = vadd.f32 %v9102, %v9294
      %v9296 = vpop.f32.mrb[0].mxu0
      %v9297 = vadd.f32 %v9104, %v9296
      %v9298 = vpop.f32.mrb[0].mxu0
      %v9299 = vadd.f32 %v9106, %v9298
      %9300 = vmatprep.mubr.bf16.mxu0 %v9014
      %9301 = vmatmul.mubr.bf16.gmra.mrb[0].mxu0 %v7853
      %v9302 = vpop.f32.mrb[0].mxu0
      %v9303 = vadd.f32 %v9110, %v9302
      %v9304 = vpop.f32.mrb[0].mxu0
      %v9305 = vadd.f32 %v9112, %v9304
      %v9306 = vpop.f32.mrb[0].mxu0
      %v9307 = vadd.f32 %v9114, %v9306
      %v9308 = vpop.f32.mrb[0].mxu0
      %v9309 = vadd.f32 %v9116, %v9308
      %9310 = vmatprep.mubr.bf16.mxu0 %v9017
      %9311 = vmatmul.mubr.bf16.gmra.mrb[0].mxu0 %v7857
      %v9312 = vpop.f32.mrb[0].mxu0
      %v9313 = vadd.f32 %v9120, %v9312
      %v9314 = vpop.f32.mrb[0].mxu0
      %v9315 = vadd.f32 %v9122, %v9314
      %v9316 = vpop.f32.mrb[0].mxu0
      %v9317 = vadd.f32 %v9124, %v9316
      %v9318 = vpop.f32.mrb[0].mxu0
      %v9319 = vadd.f32 %v9126, %v9318
      %9320 = vmatprep.mubr.bf16.mxu0 %v9020
      %9321 = vmatmul.mubr.bf16.gmra.mrb[0].mxu0 %v7861
      %v9322 = vpop.f32.mrb[0].mxu0
      %v9323 = vadd.f32 %v9130, %v9322
      %v9324 = vpop.f32.mrb[0].mxu0
      %v9325 = vadd.f32 %v9132, %v9324
      %v9326 = vpop.f32.mrb[0].mxu0
      %v9327 = vadd.f32 %v9134, %v9326
      %v9328 = vpop.f32.mrb[0].mxu0
      %v9329 = vadd.f32 %v9136, %v9328
      %9330 = vmatprep.mubr.bf16.mxu0 %v9023
      %9331 = vmatmul.mubr.bf16.gmra.mrb[0].mxu0 %v7865
      %v9332 = vpop.f32.mrb[0].mxu0
      %v9333 = vadd.f32 %v9140, %v9332
      %v9334 = vpop.f32.mrb[0].mxu0
      %v9335 = vadd.f32 %v9142, %v9334
      %v9336 = vpop.f32.mrb[0].mxu0
      %v9337 = vadd.f32 %v9144, %v9336
      %v9338 = vpop.f32.mrb[0].mxu0
      %v9339 = vadd.f32 %v9146, %v9338
      %9340 = vmatprep.mubr.bf16.mxu0 %v9026
      %9341 = vmatmul.mubr.bf16.gmra.mrb[0].mxu0 %v7869
      %v9342 = vpop.f32.mrb[0].mxu0
      %v9343 = vadd.f32 %v9150, %v9342
      %v9344 = vpop.f32.mrb[0].mxu0
      %v9345 = vadd.f32 %v9152, %v9344
      %v9346 = vpop.f32.mrb[0].mxu0
      %v9347 = vadd.f32 %v9154, %v9346
      %v9348 = vpop.f32.mrb[0].mxu0
      %v9349 = vadd.f32 %v9156, %v9348
      %9350 = vmatprep.mubr.bf16.mxu0 %v9029
      %9351 = vmatmul.mubr.bf16.gmra.mrb[0].mxu0 %v7873
      %v9352 = vpop.f32.mrb[0].mxu0
      %v9353 = vadd.f32 %v9160, %v9352
      %v9354 = vpop.f32.mrb[0].mxu0
      %v9355 = vadd.f32 %v9162, %v9354
      %v9356 = vpop.f32.mrb[0].mxu0
      %v9357 = vadd.f32 %v9164, %v9356
      %v9358 = vpop.f32.mrb[0].mxu0
      %v9359 = vadd.f32 %v9166, %v9358
      %9360 = vmatprep.mubr.bf16.mxu0 %v9032
      %9361 = vmatmul.mubr.bf16.gmra.mrb[0].mxu0 %v7877
      %v9362 = vpop.f32.mrb[0].mxu0
      %v9363 = vadd.f32 %v9170, %v9362
      %v9364 = vpop.f32.mrb[0].mxu0
      %v9365 = vadd.f32 %v9172, %v9364
      %v9366 = vpop.f32.mrb[0].mxu0
      %v9367 = vadd.f32 %v9174, %v9366
      %v9368 = vpop.f32.mrb[0].mxu0
      %v9369 = vadd.f32 %v9176, %v9368
      %9370 = vmatprep.mubr.bf16.mxu0 %v9035
      %9371 = vmatmul.mubr.bf16.gmra.mrb[0].mxu0 %v7881
      %v9372 = vpop.f32.mrb[0].mxu0
      %v9373 = vadd.f32 %v9180, %v9372
      %v9374 = vpop.f32.mrb[0].mxu0
      %v9375 = vadd.f32 %v9182, %v9374
      %v9376 = vpop.f32.mrb[0].mxu0
      %v9377 = vadd.f32 %v9184, %v9376
      %v9378 = vpop.f32.mrb[0].mxu0
      %v9379 = vadd.f32 %v9186, %v9378
      %9380 = vmatprep.mubr.bf16.mxu0 %v9038
      %9381 = vmatmul.mubr.bf16.gmra.mrb[0].mxu0 %v7885
      %v9382 = vpop.f32.mrb[0].mxu0
      %v9383 = vadd.f32 %v9190, %v9382
      %v9384 = vpop.f32.mrb[0].mxu0
      %v9385 = vadd.f32 %v9192, %v9384
      %v9386 = vpop.f32.mrb[0].mxu0
      %v9387 = vadd.f32 %v9194, %v9386
      %v9388 = vpop.f32.mrb[0].mxu0
      %v9389 = vadd.f32 %v9196, %v9388
      %9390 = vmatprep.mubr.bf16.mxu0 %v9041
      %9391 = vmatmul.mubr.bf16.gmra.mrb[0].mxu0 %v7889
      %v9392 = vpop.f32.mrb[0].mxu0
      %v9393 = vadd.f32 %v9200, %v9392
      %v9394 = vpop.f32.mrb[0].mxu0
      %v9395 = vadd.f32 %v9202, %v9394
      %v9396 = vpop.f32.mrb[0].mxu0
      %v9397 = vadd.f32 %v9204, %v9396
      %v9398 = vpop.f32.mrb[0].mxu0
      %v9399 = vadd.f32 %v9206, %v9398
      %9400 = vmatprep.mubr.bf16.mxu0 %v9044
      %9401 = vmatmul.mubr.bf16.gmra.mrb[0].mxu0 %v7893
      %v9402 = vpop.f32.mrb[0].mxu0
      %v9403 = vadd.f32 %v9210, %v9402
      %v9404 = vpop.f32.mrb[0].mxu0
      %v9405 = vadd.f32 %v9212, %v9404
      %v9406 = vpop.f32.mrb[0].mxu0
      %v9407 = vadd.f32 %v9214, %v9406
      %v9408 = vpop.f32.mrb[0].mxu0
      %v9409 = vadd.f32 %v9216, %v9408
      %9410 = vmatprep.mubr.bf16.mxu0 %v9047
      %9411 = vmatmul.mubr.bf16.gmra.mrb[0].mxu0 %v7897
      %v9412 = vpop.f32.mrb[0].mxu0
      %v9413 = vadd.f32 %v9220, %v9412
      %v9414 = vpop.f32.mrb[0].mxu0
      %v9415 = vadd.f32 %v9222, %v9414
      %v9416 = vpop.f32.mrb[0].mxu0
      %v9417 = vadd.f32 %v9224, %v9416
      %v9418 = vpop.f32.mrb[0].mxu0
      %v9419 = vadd.f32 %v9226, %v9418
      %9420 = vmatprep.mubr.bf16.mxu0 %v9050
      %9421 = vmatmul.mubr.bf16.gmra.mrb[0].mxu0 %v7901
      %v9422 = vpop.f32.mrb[0].mxu0
      %v9423 = vadd.f32 %v9230, %v9422
      %v9424 = vpop.f32.mrb[0].mxu0
      %v9425 = vadd.f32 %v9232, %v9424
      %v9426 = vpop.f32.mrb[0].mxu0
      %v9427 = vadd.f32 %v9234, %v9426
      %v9428 = vpop.f32.mrb[0].mxu0
      %v9429 = vadd.f32 %v9236, %v9428
      %9430 = vmatprep.mubr.bf16.mxu0 %v9053
      %9431 = vmatmul.mubr.bf16.gmra.mrb[0].mxu0 %v7905
      %v9432 = vpop.f32.mrb[0].mxu0
      %v9433 = vadd.f32 %v9240, %v9432
      %v9434 = vpop.f32.mrb[0].mxu0
      %v9435 = vadd.f32 %v9242, %v9434
      %v9436 = vpop.f32.mrb[0].mxu0
      %v9437 = vadd.f32 %v9244, %v9436
      %v9438 = vpop.f32.mrb[0].mxu0
      %v9439 = vadd.f32 %v9246, %v9438
      %9440 = vdwg.mxu0
      %9441 = vmatprep.subr.bf16.mxu0 %v8660
      %9442 = vmatpush1.bf16.msra.mxu0 %v8659
      %9443 = vmatprep.subr.bf16.mxu0 %v8667
      %9444 = vmatpush1.bf16.msra.mxu0 %v8666
      %9445 = vmatprep.subr.bf16.mxu0 %v8674
      %9446 = vmatpush1.bf16.msra.mxu0 %v8673
      %9447 = vmatprep.subr.bf16.mxu0 %v8681
      %9448 = vmatpush1.bf16.msra.mxu0 %v8680
      %9449 = vmatprep.subr.bf16.mxu0 %v8688
      %9450 = vmatpush1.bf16.msra.mxu0 %v8687
      %9451 = vmatprep.subr.bf16.mxu0 %v8695
      %9452 = vmatpush1.bf16.msra.mxu0 %v8694
      %9453 = vmatprep.subr.bf16.mxu0 %v8702
      %9454 = vmatpush1.bf16.msra.mxu0 %v8701
      %9455 = vmatprep.subr.bf16.mxu0 %v8709
      %9456 = vmatpush1.bf16.msra.mxu0 %v8708
      %9457 = vmatprep.subr.bf16.mxu0 %v8716
      %9458 = vmatpush1.bf16.msra.mxu0 %v8715
      %9459 = vmatprep.subr.bf16.mxu0 %v8723
      %9460 = vmatpush1.bf16.msra.mxu0 %v8722
      %9461 = vmatprep.subr.bf16.mxu0 %v8730
      %9462 = vmatpush1.bf16.msra.mxu0 %v8729
      %9463 = vmatprep.subr.bf16.mxu0 %v8737
      %9464 = vmatpush1.bf16.msra.mxu0 %v8736
      %9465 = vmatprep.subr.bf16.mxu0 %v8744
      %9466 = vmatpush1.bf16.msra.mxu0 %v8743
      %9467 = vmatprep.subr.bf16.mxu0 %v8751
      %9468 = vmatpush1.bf16.msra.mxu0 %v8750
      %9469 = vmatprep.subr.bf16.mxu0 %v8758
      %9470 = vmatpush1.bf16.msra.mxu0 %v8757
      %9471 = vmatprep.subr.bf16.mxu0 %v8765
      %9472 = vmatpush1.bf16.msra.mxu0 %v8764
      %9473 = vmatprep.mubr.bf16.mxu0 %v7844
      %9474 = vmatmul.mubr.bf16.gmra.mrb[0].mxu0 %v7843
      %v9475 = vpop.f32.mrb[0].mxu0
      %v9476 = vadd.f32 0.0, %v9475
      %v9477 = vpop.f32.mrb[0].mxu0
      %v9478 = vadd.f32 0.0, %v9477
      %v9479 = vpop.f32.mrb[0].mxu0
      %v9480 = vadd.f32 0.0, %v9479
      %v9481 = vpop.f32.mrb[0].mxu0
      %v9482 = vadd.f32 0.0, %v9481
      %9483 = vmatprep.mubr.bf16.mxu0 %v7848
      %9484 = vmatmul.mubr.bf16.gmra.mrb[0].mxu0 %v7847
      %v9485 = vpop.f32.mrb[0].mxu0
      %v9486 = vadd.f32 0.0, %v9485
      %v9487 = vpop.f32.mrb[0].mxu0
      %v9488 = vadd.f32 0.0, %v9487
      %v9489 = vpop.f32.mrb[0].mxu0
      %v9490 = vadd.f32 0.0, %v9489
      %v9491 = vpop.f32.mrb[0].mxu0
      %v9492 = vadd.f32 0.0, %v9491
      %9493 = vmatprep.mubr.bf16.mxu0 %v7852
      %9494 = vmatmul.mubr.bf16.gmra.mrb[0].mxu0 %v7851
      %v9495 = vpop.f32.mrb[0].mxu0
      %v9496 = vadd.f32 0.0, %v9495
      %v9497 = vpop.f32.mrb[0].mxu0
      %v9498 = vadd.f32 0.0, %v9497
      %v9499 = vpop.f32.mrb[0].mxu0
      %v9500 = vadd.f32 0.0, %v9499
      %v9501 = vpop.f32.mrb[0].mxu0
      %v9502 = vadd.f32 0.0, %v9501
      %9503 = vmatprep.mubr.bf16.mxu0 %v7856
      %9504 = vmatmul.mubr.bf16.gmra.mrb[0].mxu0 %v7855
      %v9505 = vpop.f32.mrb[0].mxu0
      %v9506 = vadd.f32 0.0, %v9505
      %v9507 = vpop.f32.mrb[0].mxu0
      %v9508 = vadd.f32 0.0, %v9507
      %v9509 = vpop.f32.mrb[0].mxu0
      %v9510 = vadd.f32 0.0, %v9509
      %v9511 = vpop.f32.mrb[0].mxu0
      %v9512 = vadd.f32 0.0, %v9511
      %9513 = vmatprep.mubr.bf16.mxu0 %v7860
      %9514 = vmatmul.mubr.bf16.gmra.mrb[0].mxu0 %v7859
      %v9515 = vpop.f32.mrb[0].mxu0
      %v9516 = vadd.f32 0.0, %v9515
      %v9517 = vpop.f32.mrb[0].mxu0
      %v9518 = vadd.f32 0.0, %v9517
      %v9519 = vpop.f32.mrb[0].mxu0
      %v9520 = vadd.f32 0.0, %v9519
      %v9521 = vpop.f32.mrb[0].mxu0
      %v9522 = vadd.f32 0.0, %v9521
      %9523 = vmatprep.mubr.bf16.mxu0 %v7864
      %9524 = vmatmul.mubr.bf16.gmra.mrb[0].mxu0 %v7863
      %v9525 = vpop.f32.mrb[0].mxu0
      %v9526 = vadd.f32 0.0, %v9525
      %v9527 = vpop.f32.mrb[0].mxu0
      %v9528 = vadd.f32 0.0, %v9527
      %v9529 = vpop.f32.mrb[0].mxu0
      %v9530 = vadd.f32 0.0, %v9529
      %v9531 = vpop.f32.mrb[0].mxu0
      %v9532 = vadd.f32 0.0, %v9531
      %9533 = vmatprep.mubr.bf16.mxu0 %v7868
      %9534 = vmatmul.mubr.bf16.gmra.mrb[0].mxu0 %v7867
      %v9535 = vpop.f32.mrb[0].mxu0
      %v9536 = vadd.f32 0.0, %v9535
      %v9537 = vpop.f32.mrb[0].mxu0
      %v9538 = vadd.f32 0.0, %v9537
      %v9539 = vpop.f32.mrb[0].mxu0
      %v9540 = vadd.f32 0.0, %v9539
      %v9541 = vpop.f32.mrb[0].mxu0
      %v9542 = vadd.f32 0.0, %v9541
      %9543 = vmatprep.mubr.bf16.mxu0 %v7872
      %9544 = vmatmul.mubr.bf16.gmra.mrb[0].mxu0 %v7871
      %v9545 = vpop.f32.mrb[0].mxu0
      %v9546 = vadd.f32 0.0, %v9545
      %v9547 = vpop.f32.mrb[0].mxu0
      %v9548 = vadd.f32 0.0, %v9547
      %v9549 = vpop.f32.mrb[0].mxu0
      %v9550 = vadd.f32 0.0, %v9549
      %v9551 = vpop.f32.mrb[0].mxu0
      %v9552 = vadd.f32 0.0, %v9551
      %9553 = vmatprep.mubr.bf16.mxu0 %v7876
      %9554 = vmatmul.mubr.bf16.gmra.mrb[0].mxu0 %v7875
      %v9555 = vpop.f32.mrb[0].mxu0
      %v9556 = vadd.f32 0.0, %v9555
      %v9557 = vpop.f32.mrb[0].mxu0
      %v9558 = vadd.f32 0.0, %v9557
      %v9559 = vpop.f32.mrb[0].mxu0
      %v9560 = vadd.f32 0.0, %v9559
      %v9561 = vpop.f32.mrb[0].mxu0
      %v9562 = vadd.f32 0.0, %v9561
      %9563 = vmatprep.mubr.bf16.mxu0 %v7880
      %9564 = vmatmul.mubr.bf16.gmra.mrb[0].mxu0 %v7879
      %v9565 = vpop.f32.mrb[0].mxu0
      %v9566 = vadd.f32 0.0, %v9565
      %v9567 = vpop.f32.mrb[0].mxu0
      %v9568 = vadd.f32 0.0, %v9567
      %v9569 = vpop.f32.mrb[0].mxu0
      %v9570 = vadd.f32 0.0, %v9569
      %v9571 = vpop.f32.mrb[0].mxu0
      %v9572 = vadd.f32 0.0, %v9571
      %9573 = vmatprep.mubr.bf16.mxu0 %v7884
      %9574 = vmatmul.mubr.bf16.gmra.mrb[0].mxu0 %v7883
      %v9575 = vpop.f32.mrb[0].mxu0
      %v9576 = vadd.f32 0.0, %v9575
      %v9577 = vpop.f32.mrb[0].mxu0
      %v9578 = vadd.f32 0.0, %v9577
      %v9579 = vpop.f32.mrb[0].mxu0
      %v9580 = vadd.f32 0.0, %v9579
      %v9581 = vpop.f32.mrb[0].mxu0
      %v9582 = vadd.f32 0.0, %v9581
      %9583 = vmatprep.mubr.bf16.mxu0 %v7888
      %9584 = vmatmul.mubr.bf16.gmra.mrb[0].mxu0 %v7887
      %v9585 = vpop.f32.mrb[0].mxu0
      %v9586 = vadd.f32 0.0, %v9585
      %v9587 = vpop.f32.mrb[0].mxu0
      %v9588 = vadd.f32 0.0, %v9587
      %v9589 = vpop.f32.mrb[0].mxu0
      %v9590 = vadd.f32 0.0, %v9589
      %v9591 = vpop.f32.mrb[0].mxu0
      %v9592 = vadd.f32 0.0, %v9591
      %9593 = vmatprep.mubr.bf16.mxu0 %v7892
      %9594 = vmatmul.mubr.bf16.gmra.mrb[0].mxu0 %v7891
      %v9595 = vpop.f32.mrb[0].mxu0
      %v9596 = vadd.f32 0.0, %v9595
      %v9597 = vpop.f32.mrb[0].mxu0
      %v9598 = vadd.f32 0.0, %v9597
      %v9599 = vpop.f32.mrb[0].mxu0
      %v9600 = vadd.f32 0.0, %v9599
      %v9601 = vpop.f32.mrb[0].mxu0
      %v9602 = vadd.f32 0.0, %v9601
      %9603 = vmatprep.mubr.bf16.mxu0 %v7896
      %9604 = vmatmul.mubr.bf16.gmra.mrb[0].mxu0 %v7895
      %v9605 = vpop.f32.mrb[0].mxu0
      %v9606 = vadd.f32 0.0, %v9605
      %v9607 = vpop.f32.mrb[0].mxu0
      %v9608 = vadd.f32 0.0, %v9607
      %v9609 = vpop.f32.mrb[0].mxu0
      %v9610 = vadd.f32 0.0, %v9609
      %v9611 = vpop.f32.mrb[0].mxu0
      %v9612 = vadd.f32 0.0, %v9611
      %9613 = vmatprep.mubr.bf16.mxu0 %v7900
      %9614 = vmatmul.mubr.bf16.gmra.mrb[0].mxu0 %v7899
      %v9615 = vpop.f32.mrb[0].mxu0
      %v9616 = vadd.f32 0.0, %v9615
      %v9617 = vpop.f32.mrb[0].mxu0
      %v9618 = vadd.f32 0.0, %v9617
      %v9619 = vpop.f32.mrb[0].mxu0
      %v9620 = vadd.f32 0.0, %v9619
      %v9621 = vpop.f32.mrb[0].mxu0
      %v9622 = vadd.f32 0.0, %v9621
      %9623 = vmatprep.mubr.bf16.mxu0 %v7904
      %9624 = vmatmul.mubr.bf16.gmra.mrb[0].mxu0 %v7903
      %v9625 = vpop.f32.mrb[0].mxu0
      %v9626 = vadd.f32 0.0, %v9625
      %v9627 = vpop.f32.mrb[0].mxu0
      %v9628 = vadd.f32 0.0, %v9627
      %v9629 = vpop.f32.mrb[0].mxu0
      %v9630 = vadd.f32 0.0, %v9629
      %v9631 = vpop.f32.mrb[0].mxu0
      %v9632 = vadd.f32 0.0, %v9631
      %9633 = vdwg.mxu0
      %9634 = vmatprep.subr.bf16.mxu0 %v8772
      %9635 = vmatpush1.bf16.msra.mxu0 %v8771
      %9636 = vmatprep.subr.bf16.mxu0 %v8779
      %9637 = vmatpush1.bf16.msra.mxu0 %v8778
      %9638 = vmatprep.subr.bf16.mxu0 %v8786
      %9639 = vmatpush1.bf16.msra.mxu0 %v8785
      %9640 = vmatprep.subr.bf16.mxu0 %v8793
      %9641 = vmatpush1.bf16.msra.mxu0 %v8792
      %9642 = vmatprep.subr.bf16.mxu0 %v8800
      %9643 = vmatpush1.bf16.msra.mxu0 %v8799
      %9644 = vmatprep.subr.bf16.mxu0 %v8807
      %9645 = vmatpush1.bf16.msra.mxu0 %v8806
      %9646 = vmatprep.subr.bf16.mxu0 %v8814
      %9647 = vmatpush1.bf16.msra.mxu0 %v8813
      %9648 = vmatprep.subr.bf16.mxu0 %v8821
      %9649 = vmatpush1.bf16.msra.mxu0 %v8820
      %9650 = vmatprep.subr.bf16.mxu0 %v8828
      %9651 = vmatpush1.bf16.msra.mxu0 %v8827
      %9652 = vmatprep.subr.bf16.mxu0 0
      %9653 = vmatpush1.bf16.msra.mxu0 0
      %9654 = vmatprep.subr.bf16.mxu0 0
      %9655 = vmatpush1.bf16.msra.mxu0 0
      %9656 = vmatprep.subr.bf16.mxu0 0
      %9657 = vmatpush1.bf16.msra.mxu0 0
      %9658 = vmatprep.subr.bf16.mxu0 0
      %9659 = vmatpush1.bf16.msra.mxu0 0
      %9660 = vmatprep.subr.bf16.mxu0 0
      %9661 = vmatpush1.bf16.msra.mxu0 0
      %9662 = vmatprep.subr.bf16.mxu0 0
      %9663 = vmatpush1.bf16.msra.mxu0 0
      %9664 = vmatprep.subr.bf16.mxu0 0
      %9665 = vmatpush1.bf16.msra.mxu0 0
      %9666 = vmatprep.mubr.bf16.mxu0 %v9008
      %9667 = vmatmul.mubr.bf16.gmra.mrb[0].mxu0 %v7845
      %v9668 = vpop.f32.mrb[0].mxu0
      %v9669 = vadd.f32 %v9476, %v9668
      %v9670 = vpop.f32.mrb[0].mxu0
      %v9671 = vadd.f32 %v9478, %v9670
      %v9672 = vpop.f32.mrb[0].mxu0
      %v9673 = vadd.f32 %v9480, %v9672
      %v9674 = vpop.f32.mrb[0].mxu0
      %v9675 = vadd.f32 %v9482, %v9674
      %9676 = vmatprep.mubr.bf16.mxu0 %v9011
      %9677 = vmatmul.mubr.bf16.gmra.mrb[0].mxu0 %v7849
      %v9678 = vpop.f32.mrb[0].mxu0
      %v9679 = vadd.f32 %v9486, %v9678
      %v9680 = vpop.f32.mrb[0].mxu0
      %v9681 = vadd.f32 %v9488, %v9680
      %v9682 = vpop.f32.mrb[0].mxu0
      %v9683 = vadd.f32 %v9490, %v9682
      %v9684 = vpop.f32.mrb[0].mxu0
      %v9685 = vadd.f32 %v9492, %v9684
      %9686 = vmatprep.mubr.bf16.mxu0 %v9014
      %9687 = vmatmul.mubr.bf16.gmra.mrb[0].mxu0 %v7853
      %v9688 = vpop.f32.mrb[0].mxu0
      %v9689 = vadd.f32 %v9496, %v9688
      %v9690 = vpop.f32.mrb[0].mxu0
      %v9691 = vadd.f32 %v9498, %v9690
      %v9692 = vpop.f32.mrb[0].mxu0
      %v9693 = vadd.f32 %v9500, %v9692
      %v9694 = vpop.f32.mrb[0].mxu0
      %v9695 = vadd.f32 %v9502, %v9694
      %9696 = vmatprep.mubr.bf16.mxu0 %v9017
      %9697 = vmatmul.mubr.bf16.gmra.mrb[0].mxu0 %v7857
      %v9698 = vpop.f32.mrb[0].mxu0
      %v9699 = vadd.f32 %v9506, %v9698
      %v9700 = vpop.f32.mrb[0].mxu0
      %v9701 = vadd.f32 %v9508, %v9700
      %v9702 = vpop.f32.mrb[0].mxu0
      %v9703 = vadd.f32 %v9510, %v9702
      %v9704 = vpop.f32.mrb[0].mxu0
      %v9705 = vadd.f32 %v9512, %v9704
      %9706 = vmatprep.mubr.bf16.mxu0 %v9020
      %9707 = vmatmul.mubr.bf16.gmra.mrb[0].mxu0 %v7861
      %v9708 = vpop.f32.mrb[0].mxu0
      %v9709 = vadd.f32 %v9516, %v9708
      %v9710 = vpop.f32.mrb[0].mxu0
      %v9711 = vadd.f32 %v9518, %v9710
      %v9712 = vpop.f32.mrb[0].mxu0
      %v9713 = vadd.f32 %v9520, %v9712
      %v9714 = vpop.f32.mrb[0].mxu0
      %v9715 = vadd.f32 %v9522, %v9714
      %9716 = vmatprep.mubr.bf16.mxu0 %v9023
      %9717 = vmatmul.mubr.bf16.gmra.mrb[0].mxu0 %v7865
      %v9718 = vpop.f32.mrb[0].mxu0
      %v9719 = vadd.f32 %v9526, %v9718
      %v9720 = vpop.f32.mrb[0].mxu0
      %v9721 = vadd.f32 %v9528, %v9720
      %v9722 = vpop.f32.mrb[0].mxu0
      %v9723 = vadd.f32 %v9530, %v9722
      %v9724 = vpop.f32.mrb[0].mxu0
      %v9725 = vadd.f32 %v9532, %v9724
      %9726 = vmatprep.mubr.bf16.mxu0 %v9026
      %9727 = vmatmul.mubr.bf16.gmra.mrb[0].mxu0 %v7869
      %v9728 = vpop.f32.mrb[0].mxu0
      %v9729 = vadd.f32 %v9536, %v9728
      %v9730 = vpop.f32.mrb[0].mxu0
      %v9731 = vadd.f32 %v9538, %v9730
      %v9732 = vpop.f32.mrb[0].mxu0
      %v9733 = vadd.f32 %v9540, %v9732
      %v9734 = vpop.f32.mrb[0].mxu0
      %v9735 = vadd.f32 %v9542, %v9734
      %9736 = vmatprep.mubr.bf16.mxu0 %v9029
      %9737 = vmatmul.mubr.bf16.gmra.mrb[0].mxu0 %v7873
      %v9738 = vpop.f32.mrb[0].mxu0
      %v9739 = vadd.f32 %v9546, %v9738
      %v9740 = vpop.f32.mrb[0].mxu0
      %v9741 = vadd.f32 %v9548, %v9740
      %v9742 = vpop.f32.mrb[0].mxu0
      %v9743 = vadd.f32 %v9550, %v9742
      %v9744 = vpop.f32.mrb[0].mxu0
      %v9745 = vadd.f32 %v9552, %v9744
      %9746 = vmatprep.mubr.bf16.mxu0 %v9032
      %9747 = vmatmul.mubr.bf16.gmra.mrb[0].mxu0 %v7877
      %v9748 = vpop.f32.mrb[0].mxu0
      %v9749 = vadd.f32 %v9556, %v9748
      %v9750 = vpop.f32.mrb[0].mxu0
      %v9751 = vadd.f32 %v9558, %v9750
      %v9752 = vpop.f32.mrb[0].mxu0
      %v9753 = vadd.f32 %v9560, %v9752
      %v9754 = vpop.f32.mrb[0].mxu0
      %v9755 = vadd.f32 %v9562, %v9754
      %9756 = vmatprep.mubr.bf16.mxu0 %v9035
      %9757 = vmatmul.mubr.bf16.gmra.mrb[0].mxu0 %v7881
      %v9758 = vpop.f32.mrb[0].mxu0
      %v9759 = vadd.f32 %v9566, %v9758
      %v9760 = vpop.f32.mrb[0].mxu0
      %v9761 = vadd.f32 %v9568, %v9760
      %v9762 = vpop.f32.mrb[0].mxu0
      %v9763 = vadd.f32 %v9570, %v9762
      %v9764 = vpop.f32.mrb[0].mxu0
      %v9765 = vadd.f32 %v9572, %v9764
      %9766 = vmatprep.mubr.bf16.mxu0 %v9038
      %9767 = vmatmul.mubr.bf16.gmra.mrb[0].mxu0 %v7885
      %v9768 = vpop.f32.mrb[0].mxu0
      %v9769 = vadd.f32 %v9576, %v9768
      %v9770 = vpop.f32.mrb[0].mxu0
      %v9771 = vadd.f32 %v9578, %v9770
      %v9772 = vpop.f32.mrb[0].mxu0
      %v9773 = vadd.f32 %v9580, %v9772
      %v9774 = vpop.f32.mrb[0].mxu0
      %v9775 = vadd.f32 %v9582, %v9774
      %9776 = vmatprep.mubr.bf16.mxu0 %v9041
      %9777 = vmatmul.mubr.bf16.gmra.mrb[0].mxu0 %v7889
      %v9778 = vpop.f32.mrb[0].mxu0
      %v9779 = vadd.f32 %v9586, %v9778
      %v9780 = vpop.f32.mrb[0].mxu0
      %v9781 = vadd.f32 %v9588, %v9780
      %v9782 = vpop.f32.mrb[0].mxu0
      %v9783 = vadd.f32 %v9590, %v9782
      %v9784 = vpop.f32.mrb[0].mxu0
      %v9785 = vadd.f32 %v9592, %v9784
      %9786 = vmatprep.mubr.bf16.mxu0 %v9044
      %9787 = vmatmul.mubr.bf16.gmra.mrb[0].mxu0 %v7893
      %v9788 = vpop.f32.mrb[0].mxu0
      %v9789 = vadd.f32 %v9596, %v9788
      %v9790 = vpop.f32.mrb[0].mxu0
      %v9791 = vadd.f32 %v9598, %v9790
      %v9792 = vpop.f32.mrb[0].mxu0
      %v9793 = vadd.f32 %v9600, %v9792
      %v9794 = vpop.f32.mrb[0].mxu0
      %v9795 = vadd.f32 %v9602, %v9794
      %9796 = vmatprep.mubr.bf16.mxu0 %v9047
      %9797 = vmatmul.mubr.bf16.gmra.mrb[0].mxu0 %v7897
      %v9798 = vpop.f32.mrb[0].mxu0
      %v9799 = vadd.f32 %v9606, %v9798
      %v9800 = vpop.f32.mrb[0].mxu0
      %v9801 = vadd.f32 %v9608, %v9800
      %v9802 = vpop.f32.mrb[0].mxu0
      %v9803 = vadd.f32 %v9610, %v9802
      %v9804 = vpop.f32.mrb[0].mxu0
      %v9805 = vadd.f32 %v9612, %v9804
      %9806 = vmatprep.mubr.bf16.mxu0 %v9050
      %9807 = vmatmul.mubr.bf16.gmra.mrb[0].mxu0 %v7901
      %v9808 = vpop.f32.mrb[0].mxu0
      %v9809 = vadd.f32 %v9616, %v9808
      %v9810 = vpop.f32.mrb[0].mxu0
      %v9811 = vadd.f32 %v9618, %v9810
      %v9812 = vpop.f32.mrb[0].mxu0
      %v9813 = vadd.f32 %v9620, %v9812
      %v9814 = vpop.f32.mrb[0].mxu0
      %v9815 = vadd.f32 %v9622, %v9814
      %9816 = vmatprep.mubr.bf16.mxu0 %v9053
      %9817 = vmatmul.mubr.bf16.gmra.mrb[0].mxu0 %v7905
      %v9818 = vpop.f32.mrb[0].mxu0
      %v9819 = vadd.f32 %v9626, %v9818
      %v9820 = vpop.f32.mrb[0].mxu0
      %v9821 = vadd.f32 %v9628, %v9820
      %v9822 = vpop.f32.mrb[0].mxu0
      %v9823 = vadd.f32 %v9630, %v9822
      %v9824 = vpop.f32.mrb[0].mxu0
      %v9825 = vadd.f32 %v9632, %v9824
      %9826 = vdwg.mxu0
      %9827 = vmatprep.subr.bf16.mxu0 %v8662
      %9828 = vmatpush1.bf16.msra.mxu0 %v8661
      %9829 = vmatprep.subr.bf16.mxu0 %v8669
      %9830 = vmatpush1.bf16.msra.mxu0 %v8668
      %9831 = vmatprep.subr.bf16.mxu0 %v8676
      %9832 = vmatpush1.bf16.msra.mxu0 %v8675
      %9833 = vmatprep.subr.bf16.mxu0 %v8683
      %9834 = vmatpush1.bf16.msra.mxu0 %v8682
      %9835 = vmatprep.subr.bf16.mxu0 %v8690
      %9836 = vmatpush1.bf16.msra.mxu0 %v8689
      %9837 = vmatprep.subr.bf16.mxu0 %v8697
      %9838 = vmatpush1.bf16.msra.mxu0 %v8696
      %9839 = vmatprep.subr.bf16.mxu0 %v8704
      %9840 = vmatpush1.bf16.msra.mxu0 %v8703
      %9841 = vmatprep.subr.bf16.mxu0 %v8711
      %9842 = vmatpush1.bf16.msra.mxu0 %v8710
      %9843 = vmatprep.subr.bf16.mxu0 %v8718
      %9844 = vmatpush1.bf16.msra.mxu0 %v8717
      %9845 = vmatprep.subr.bf16.mxu0 %v8725
      %9846 = vmatpush1.bf16.msra.mxu0 %v8724
      %9847 = vmatprep.subr.bf16.mxu0 %v8732
      %9848 = vmatpush1.bf16.msra.mxu0 %v8731
      %9849 = vmatprep.subr.bf16.mxu0 %v8739
      %9850 = vmatpush1.bf16.msra.mxu0 %v8738
      %9851 = vmatprep.subr.bf16.mxu0 %v8746
      %9852 = vmatpush1.bf16.msra.mxu0 %v8745
      %9853 = vmatprep.subr.bf16.mxu0 %v8753
      %9854 = vmatpush1.bf16.msra.mxu0 %v8752
      %9855 = vmatprep.subr.bf16.mxu0 %v8760
      %9856 = vmatpush1.bf16.msra.mxu0 %v8759
      %9857 = vmatprep.subr.bf16.mxu0 %v8767
      %9858 = vmatpush1.bf16.msra.mxu0 %v8766
      %9859 = vmatprep.mubr.bf16.mxu0 %v7844
      %9860 = vmatmul.mubr.bf16.gmra.mrb[0].mxu0 %v7843
      %v9861 = vpop.f32.mrb[0].mxu0
      %v9862 = vadd.f32 0.0, %v9861
      %v9863 = vpop.f32.mrb[0].mxu0
      %v9864 = vadd.f32 0.0, %v9863
      %v9865 = vpop.f32.mrb[0].mxu0
      %v9866 = vadd.f32 0.0, %v9865
      %v9867 = vpop.f32.mrb[0].mxu0
      %v9868 = vadd.f32 0.0, %v9867
      %9869 = vmatprep.mubr.bf16.mxu0 %v7848
      %9870 = vmatmul.mubr.bf16.gmra.mrb[0].mxu0 %v7847
      %v9871 = vpop.f32.mrb[0].mxu0
      %v9872 = vadd.f32 0.0, %v9871
      %v9873 = vpop.f32.mrb[0].mxu0
      %v9874 = vadd.f32 0.0, %v9873
      %v9875 = vpop.f32.mrb[0].mxu0
      %v9876 = vadd.f32 0.0, %v9875
      %v9877 = vpop.f32.mrb[0].mxu0
      %v9878 = vadd.f32 0.0, %v9877
      %9879 = vmatprep.mubr.bf16.mxu0 %v7852
      %9880 = vmatmul.mubr.bf16.gmra.mrb[0].mxu0 %v7851
      %v9881 = vpop.f32.mrb[0].mxu0
      %v9882 = vadd.f32 0.0, %v9881
      %v9883 = vpop.f32.mrb[0].mxu0
      %v9884 = vadd.f32 0.0, %v9883
      %v9885 = vpop.f32.mrb[0].mxu0
      %v9886 = vadd.f32 0.0, %v9885
      %v9887 = vpop.f32.mrb[0].mxu0
      %v9888 = vadd.f32 0.0, %v9887
      %9889 = vmatprep.mubr.bf16.mxu0 %v7856
      %9890 = vmatmul.mubr.bf16.gmra.mrb[0].mxu0 %v7855
      %v9891 = vpop.f32.mrb[0].mxu0
      %v9892 = vadd.f32 0.0, %v9891
      %v9893 = vpop.f32.mrb[0].mxu0
      %v9894 = vadd.f32 0.0, %v9893
      %v9895 = vpop.f32.mrb[0].mxu0
      %v9896 = vadd.f32 0.0, %v9895
      %v9897 = vpop.f32.mrb[0].mxu0
      %v9898 = vadd.f32 0.0, %v9897
      %9899 = vmatprep.mubr.bf16.mxu0 %v7860
      %9900 = vmatmul.mubr.bf16.gmra.mrb[0].mxu0 %v7859
      %v9901 = vpop.f32.mrb[0].mxu0
      %v9902 = vadd.f32 0.0, %v9901
      %v9903 = vpop.f32.mrb[0].mxu0
      %v9904 = vadd.f32 0.0, %v9903
      %v9905 = vpop.f32.mrb[0].mxu0
      %v9906 = vadd.f32 0.0, %v9905
      %v9907 = vpop.f32.mrb[0].mxu0
      %v9908 = vadd.f32 0.0, %v9907
      %9909 = vmatprep.mubr.bf16.mxu0 %v7864
      %9910 = vmatmul.mubr.bf16.gmra.mrb[0].mxu0 %v7863
      %v9911 = vpop.f32.mrb[0].mxu0
      %v9912 = vadd.f32 0.0, %v9911
      %v9913 = vpop.f32.mrb[0].mxu0
      %v9914 = vadd.f32 0.0, %v9913
      %v9915 = vpop.f32.mrb[0].mxu0
      %v9916 = vadd.f32 0.0, %v9915
      %v9917 = vpop.f32.mrb[0].mxu0
      %v9918 = vadd.f32 0.0, %v9917
      %9919 = vmatprep.mubr.bf16.mxu0 %v7868
      %9920 = vmatmul.mubr.bf16.gmra.mrb[0].mxu0 %v7867
      %v9921 = vpop.f32.mrb[0].mxu0
      %v9922 = vadd.f32 0.0, %v9921
      %v9923 = vpop.f32.mrb[0].mxu0
      %v9924 = vadd.f32 0.0, %v9923
      %v9925 = vpop.f32.mrb[0].mxu0
      %v9926 = vadd.f32 0.0, %v9925
      %v9927 = vpop.f32.mrb[0].mxu0
      %v9928 = vadd.f32 0.0, %v9927
      %9929 = vmatprep.mubr.bf16.mxu0 %v7872
      %9930 = vmatmul.mubr.bf16.gmra.mrb[0].mxu0 %v7871
      %v9931 = vpop.f32.mrb[0].mxu0
      %v9932 = vadd.f32 0.0, %v9931
      %v9933 = vpop.f32.mrb[0].mxu0
      %v9934 = vadd.f32 0.0, %v9933
      %v9935 = vpop.f32.mrb[0].mxu0
      %v9936 = vadd.f32 0.0, %v9935
      %v9937 = vpop.f32.mrb[0].mxu0
      %v9938 = vadd.f32 0.0, %v9937
      %9939 = vmatprep.mubr.bf16.mxu0 %v7876
      %9940 = vmatmul.mubr.bf16.gmra.mrb[0].mxu0 %v7875
      %v9941 = vpop.f32.mrb[0].mxu0
      %v9942 = vadd.f32 0.0, %v9941
      %v9943 = vpop.f32.mrb[0].mxu0
      %v9944 = vadd.f32 0.0, %v9943
      %v9945 = vpop.f32.mrb[0].mxu0
      %v9946 = vadd.f32 0.0, %v9945
      %v9947 = vpop.f32.mrb[0].mxu0
      %v9948 = vadd.f32 0.0, %v9947
      %9949 = vmatprep.mubr.bf16.mxu0 %v7880
      %9950 = vmatmul.mubr.bf16.gmra.mrb[0].mxu0 %v7879
      %v9951 = vpop.f32.mrb[0].mxu0
      %v9952 = vadd.f32 0.0, %v9951
      %v9953 = vpop.f32.mrb[0].mxu0
      %v9954 = vadd.f32 0.0, %v9953
      %v9955 = vpop.f32.mrb[0].mxu0
      %v9956 = vadd.f32 0.0, %v9955
      %v9957 = vpop.f32.mrb[0].mxu0
      %v9958 = vadd.f32 0.0, %v9957
      %9959 = vmatprep.mubr.bf16.mxu0 %v7884
      %9960 = vmatmul.mubr.bf16.gmra.mrb[0].mxu0 %v7883
      %v9961 = vpop.f32.mrb[0].mxu0
      %v9962 = vadd.f32 0.0, %v9961
      %v9963 = vpop.f32.mrb[0].mxu0
      %v9964 = vadd.f32 0.0, %v9963
      %v9965 = vpop.f32.mrb[0].mxu0
      %v9966 = vadd.f32 0.0, %v9965
      %v9967 = vpop.f32.mrb[0].mxu0
      %v9968 = vadd.f32 0.0, %v9967
      %9969 = vmatprep.mubr.bf16.mxu0 %v7888
      %9970 = vmatmul.mubr.bf16.gmra.mrb[0].mxu0 %v7887
      %v9971 = vpop.f32.mrb[0].mxu0
      %v9972 = vadd.f32 0.0, %v9971
      %v9973 = vpop.f32.mrb[0].mxu0
      %v9974 = vadd.f32 0.0, %v9973
      %v9975 = vpop.f32.mrb[0].mxu0
      %v9976 = vadd.f32 0.0, %v9975
      %v9977 = vpop.f32.mrb[0].mxu0
      %v9978 = vadd.f32 0.0, %v9977
      %9979 = vmatprep.mubr.bf16.mxu0 %v7892
      %9980 = vmatmul.mubr.bf16.gmra.mrb[0].mxu0 %v7891
      %v9981 = vpop.f32.mrb[0].mxu0
      %v9982 = vadd.f32 0.0, %v9981
      %v9983 = vpop.f32.mrb[0].mxu0
      %v9984 = vadd.f32 0.0, %v9983
      %v9985 = vpop.f32.mrb[0].mxu0
      %v9986 = vadd.f32 0.0, %v9985
      %v9987 = vpop.f32.mrb[0].mxu0
      %v9988 = vadd.f32 0.0, %v9987
      %9989 = vmatprep.mubr.bf16.mxu0 %v7896
      %9990 = vmatmul.mubr.bf16.gmra.mrb[0].mxu0 %v7895
      %v9991 = vpop.f32.mrb[0].mxu0
      %v9992 = vadd.f32 0.0, %v9991
      %v9993 = vpop.f32.mrb[0].mxu0
      %v9994 = vadd.f32 0.0, %v9993
      %v9995 = vpop.f32.mrb[0].mxu0
      %v9996 = vadd.f32 0.0, %v9995
      %v9997 = vpop.f32.mrb[0].mxu0
      %v9998 = vadd.f32 0.0, %v9997
      %9999 = vmatprep.mubr.bf16.mxu0 %v7900
      %10000 = vmatmul.mubr.bf16.gmra.mrb[0].mxu0 %v7899
      %v10001 = vpop.f32.mrb[0].mxu0
      %v10002 = vadd.f32 0.0, %v10001
      %v10003 = vpop.f32.mrb[0].mxu0
      %v10004 = vadd.f32 0.0, %v10003
      %v10005 = vpop.f32.mrb[0].mxu0
      %v10006 = vadd.f32 0.0, %v10005
      %v10007 = vpop.f32.mrb[0].mxu0
      %v10008 = vadd.f32 0.0, %v10007
      %10009 = vmatprep.mubr.bf16.mxu0 %v7904
      %10010 = vmatmul.mubr.bf16.gmra.mrb[0].mxu0 %v7903
      %v10011 = vpop.f32.mrb[0].mxu0
      %v10012 = vadd.f32 0.0, %v10011
      %v10013 = vpop.f32.mrb[0].mxu0
      %v10014 = vadd.f32 0.0, %v10013
      %v10015 = vpop.f32.mrb[0].mxu0
      %v10016 = vadd.f32 0.0, %v10015
      %v10017 = vpop.f32.mrb[0].mxu0
      %v10018 = vadd.f32 0.0, %v10017
      %10019 = vdwg.mxu0
      %10020 = vmatprep.subr.bf16.mxu0 %v8774
      %10021 = vmatpush1.bf16.msra.mxu0 %v8773
      %10022 = vmatprep.subr.bf16.mxu0 %v8781
      %10023 = vmatpush1.bf16.msra.mxu0 %v8780
      %10024 = vmatprep.subr.bf16.mxu0 %v8788
      %10025 = vmatpush1.bf16.msra.mxu0 %v8787
      %10026 = vmatprep.subr.bf16.mxu0 %v8795
      %10027 = vmatpush1.bf16.msra.mxu0 %v8794
      %10028 = vmatprep.subr.bf16.mxu0 %v8802
      %10029 = vmatpush1.bf16.msra.mxu0 %v8801
      %10030 = vmatprep.subr.bf16.mxu0 %v8809
      %10031 = vmatpush1.bf16.msra.mxu0 %v8808
      %10032 = vmatprep.subr.bf16.mxu0 %v8816
      %10033 = vmatpush1.bf16.msra.mxu0 %v8815
      %10034 = vmatprep.subr.bf16.mxu0 %v8823
      %10035 = vmatpush1.bf16.msra.mxu0 %v8822
      %10036 = vmatprep.subr.bf16.mxu0 %v8830
      %10037 = vmatpush1.bf16.msra.mxu0 %v8829
      %10038 = vmatprep.subr.bf16.mxu0 0
      %10039 = vmatpush1.bf16.msra.mxu0 0
      %10040 = vmatprep.subr.bf16.mxu0 0
      %10041 = vmatpush1.bf16.msra.mxu0 0
      %10042 = vmatprep.subr.bf16.mxu0 0
      %10043 = vmatpush1.bf16.msra.mxu0 0
      %10044 = vmatprep.subr.bf16.mxu0 0
      %10045 = vmatpush1.bf16.msra.mxu0 0
      %10046 = vmatprep.subr.bf16.mxu0 0
      %10047 = vmatpush1.bf16.msra.mxu0 0
      %10048 = vmatprep.subr.bf16.mxu0 0
      %10049 = vmatpush1.bf16.msra.mxu0 0
      %10050 = vmatprep.subr.bf16.mxu0 0
      %10051 = vmatpush1.bf16.msra.mxu0 0
      %10052 = vmatprep.mubr.bf16.mxu0 %v9008
      %10053 = vmatmul.mubr.bf16.gmra.mrb[0].mxu0 %v7845
      %v10054 = vpop.f32.mrb[0].mxu0
      %v10055 = vadd.f32 %v9862, %v10054
      %v10056 = vpop.f32.mrb[0].mxu0
      %v10057 = vadd.f32 %v9864, %v10056
      %v10058 = vpop.f32.mrb[0].mxu0
      %v10059 = vadd.f32 %v9866, %v10058
      %v10060 = vpop.f32.mrb[0].mxu0
      %v10061 = vadd.f32 %v9868, %v10060
      %10062 = vmatprep.mubr.bf16.mxu0 %v9011
      %10063 = vmatmul.mubr.bf16.gmra.mrb[0].mxu0 %v7849
      %v10064 = vpop.f32.mrb[0].mxu0
      %v10065 = vadd.f32 %v9872, %v10064
      %v10066 = vpop.f32.mrb[0].mxu0
      %v10067 = vadd.f32 %v9874, %v10066
      %v10068 = vpop.f32.mrb[0].mxu0
      %v10069 = vadd.f32 %v9876, %v10068
      %v10070 = vpop.f32.mrb[0].mxu0
      %v10071 = vadd.f32 %v9878, %v10070
      %10072 = vmatprep.mubr.bf16.mxu0 %v9014
      %10073 = vmatmul.mubr.bf16.gmra.mrb[0].mxu0 %v7853
      %v10074 = vpop.f32.mrb[0].mxu0
      %v10075 = vadd.f32 %v9882, %v10074
      %v10076 = vpop.f32.mrb[0].mxu0
      %v10077 = vadd.f32 %v9884, %v10076
      %v10078 = vpop.f32.mrb[0].mxu0
      %v10079 = vadd.f32 %v9886, %v10078
      %v10080 = vpop.f32.mrb[0].mxu0
      %v10081 = vadd.f32 %v9888, %v10080
      %10082 = vmatprep.mubr.bf16.mxu0 %v9017
      %10083 = vmatmul.mubr.bf16.gmra.mrb[0].mxu0 %v7857
      %v10084 = vpop.f32.mrb[0].mxu0
      %v10085 = vadd.f32 %v9892, %v10084
      %v10086 = vpop.f32.mrb[0].mxu0
      %v10087 = vadd.f32 %v9894, %v10086
      %v10088 = vpop.f32.mrb[0].mxu0
      %v10089 = vadd.f32 %v9896, %v10088
      %v10090 = vpop.f32.mrb[0].mxu0
      %v10091 = vadd.f32 %v9898, %v10090
      %10092 = vmatprep.mubr.bf16.mxu0 %v9020
      %10093 = vmatmul.mubr.bf16.gmra.mrb[0].mxu0 %v7861
      %v10094 = vpop.f32.mrb[0].mxu0
      %v10095 = vadd.f32 %v9902, %v10094
      %v10096 = vpop.f32.mrb[0].mxu0
      %v10097 = vadd.f32 %v9904, %v10096
      %v10098 = vpop.f32.mrb[0].mxu0
      %v10099 = vadd.f32 %v9906, %v10098
      %v10100 = vpop.f32.mrb[0].mxu0
      %v10101 = vadd.f32 %v9908, %v10100
      %10102 = vmatprep.mubr.bf16.mxu0 %v9023
      %10103 = vmatmul.mubr.bf16.gmra.mrb[0].mxu0 %v7865
      %v10104 = vpop.f32.mrb[0].mxu0
      %v10105 = vadd.f32 %v9912, %v10104
      %v10106 = vpop.f32.mrb[0].mxu0
      %v10107 = vadd.f32 %v9914, %v10106
      %v10108 = vpop.f32.mrb[0].mxu0
      %v10109 = vadd.f32 %v9916, %v10108
      %v10110 = vpop.f32.mrb[0].mxu0
      %v10111 = vadd.f32 %v9918, %v10110
      %10112 = vmatprep.mubr.bf16.mxu0 %v9026
      %10113 = vmatmul.mubr.bf16.gmra.mrb[0].mxu0 %v7869
      %v10114 = vpop.f32.mrb[0].mxu0
      %v10115 = vadd.f32 %v9922, %v10114
      %v10116 = vpop.f32.mrb[0].mxu0
      %v10117 = vadd.f32 %v9924, %v10116
      %v10118 = vpop.f32.mrb[0].mxu0
      %v10119 = vadd.f32 %v9926, %v10118
      %v10120 = vpop.f32.mrb[0].mxu0
      %v10121 = vadd.f32 %v9928, %v10120
      %10122 = vmatprep.mubr.bf16.mxu0 %v9029
      %10123 = vmatmul.mubr.bf16.gmra.mrb[0].mxu0 %v7873
      %v10124 = vpop.f32.mrb[0].mxu0
      %v10125 = vadd.f32 %v9932, %v10124
      %v10126 = vpop.f32.mrb[0].mxu0
      %v10127 = vadd.f32 %v9934, %v10126
      %v10128 = vpop.f32.mrb[0].mxu0
      %v10129 = vadd.f32 %v9936, %v10128
      %v10130 = vpop.f32.mrb[0].mxu0
      %v10131 = vadd.f32 %v9938, %v10130
      %10132 = vmatprep.mubr.bf16.mxu0 %v9032
      %10133 = vmatmul.mubr.bf16.gmra.mrb[0].mxu0 %v7877
      %v10134 = vpop.f32.mrb[0].mxu0
      %v10135 = vadd.f32 %v9942, %v10134
      %v10136 = vpop.f32.mrb[0].mxu0
      %v10137 = vadd.f32 %v9944, %v10136
      %v10138 = vpop.f32.mrb[0].mxu0
      %v10139 = vadd.f32 %v9946, %v10138
      %v10140 = vpop.f32.mrb[0].mxu0
      %v10141 = vadd.f32 %v9948, %v10140
      %10142 = vmatprep.mubr.bf16.mxu0 %v9035
      %10143 = vmatmul.mubr.bf16.gmra.mrb[0].mxu0 %v7881
      %v10144 = vpop.f32.mrb[0].mxu0
      %v10145 = vadd.f32 %v9952, %v10144
      %v10146 = vpop.f32.mrb[0].mxu0
      %v10147 = vadd.f32 %v9954, %v10146
      %v10148 = vpop.f32.mrb[0].mxu0
      %v10149 = vadd.f32 %v9956, %v10148
      %v10150 = vpop.f32.mrb[0].mxu0
      %v10151 = vadd.f32 %v9958, %v10150
      %10152 = vmatprep.mubr.bf16.mxu0 %v9038
      %10153 = vmatmul.mubr.bf16.gmra.mrb[0].mxu0 %v7885
      %v10154 = vpop.f32.mrb[0].mxu0
      %v10155 = vadd.f32 %v9962, %v10154
      %v10156 = vpop.f32.mrb[0].mxu0
      %v10157 = vadd.f32 %v9964, %v10156
      %v10158 = vpop.f32.mrb[0].mxu0
      %v10159 = vadd.f32 %v9966, %v10158
      %v10160 = vpop.f32.mrb[0].mxu0
      %v10161 = vadd.f32 %v9968, %v10160
      %10162 = vmatprep.mubr.bf16.mxu0 %v9041
      %10163 = vmatmul.mubr.bf16.gmra.mrb[0].mxu0 %v7889
      %v10164 = vpop.f32.mrb[0].mxu0
      %v10165 = vadd.f32 %v9972, %v10164
      %v10166 = vpop.f32.mrb[0].mxu0
      %v10167 = vadd.f32 %v9974, %v10166
      %v10168 = vpop.f32.mrb[0].mxu0
      %v10169 = vadd.f32 %v9976, %v10168
      %v10170 = vpop.f32.mrb[0].mxu0
      %v10171 = vadd.f32 %v9978, %v10170
      %10172 = vmatprep.mubr.bf16.mxu0 %v9044
      %10173 = vmatmul.mubr.bf16.gmra.mrb[0].mxu0 %v7893
      %v10174 = vpop.f32.mrb[0].mxu0
      %v10175 = vadd.f32 %v9982, %v10174
      %v10176 = vpop.f32.mrb[0].mxu0
      %v10177 = vadd.f32 %v9984, %v10176
      %v10178 = vpop.f32.mrb[0].mxu0
      %v10179 = vadd.f32 %v9986, %v10178
      %v10180 = vpop.f32.mrb[0].mxu0
      %v10181 = vadd.f32 %v9988, %v10180
      %10182 = vmatprep.mubr.bf16.mxu0 %v9047
      %10183 = vmatmul.mubr.bf16.gmra.mrb[0].mxu0 %v7897
      %v10184 = vpop.f32.mrb[0].mxu0
      %v10185 = vadd.f32 %v9992, %v10184
      %v10186 = vpop.f32.mrb[0].mxu0
      %v10187 = vadd.f32 %v9994, %v10186
      %v10188 = vpop.f32.mrb[0].mxu0
      %v10189 = vadd.f32 %v9996, %v10188
      %v10190 = vpop.f32.mrb[0].mxu0
      %v10191 = vadd.f32 %v9998, %v10190
      %10192 = vmatprep.mubr.bf16.mxu0 %v9050
      %10193 = vmatmul.mubr.bf16.gmra.mrb[0].mxu0 %v7901
      %v10194 = vpop.f32.mrb[0].mxu0
      %v10195 = vadd.f32 %v10002, %v10194
      %v10196 = vpop.f32.mrb[0].mxu0
      %v10197 = vadd.f32 %v10004, %v10196
      %v10198 = vpop.f32.mrb[0].mxu0
      %v10199 = vadd.f32 %v10006, %v10198
      %v10200 = vpop.f32.mrb[0].mxu0
      %v10201 = vadd.f32 %v10008, %v10200
      %10202 = vmatprep.mubr.bf16.mxu0 %v9053
      %10203 = vmatmul.mubr.bf16.gmra.mrb[0].mxu0 %v7905
      %v10204 = vpop.f32.mrb[0].mxu0
      %v10205 = vadd.f32 %v10012, %v10204
      %v10206 = vpop.f32.mrb[0].mxu0
      %v10207 = vadd.f32 %v10014, %v10206
      %v10208 = vpop.f32.mrb[0].mxu0
      %v10209 = vadd.f32 %v10016, %v10208
      %v10210 = vpop.f32.mrb[0].mxu0
      %v10211 = vadd.f32 %v10018, %v10210
      %10212 = vdwg.mxu0
      %10213 = vmatprep.subr.bf16.mxu0 0
      %10214 = vmatpush1.bf16.msra.mxu0 %v8663
      %10215 = vmatprep.subr.bf16.mxu0 0
      %10216 = vmatpush1.bf16.msra.mxu0 %v8670
      %10217 = vmatprep.subr.bf16.mxu0 0
      %10218 = vmatpush1.bf16.msra.mxu0 %v8677
      %10219 = vmatprep.subr.bf16.mxu0 0
      %10220 = vmatpush1.bf16.msra.mxu0 %v8684
      %10221 = vmatprep.subr.bf16.mxu0 0
      %10222 = vmatpush1.bf16.msra.mxu0 %v8691
      %10223 = vmatprep.subr.bf16.mxu0 0
      %10224 = vmatpush1.bf16.msra.mxu0 %v8698
      %10225 = vmatprep.subr.bf16.mxu0 0
      %10226 = vmatpush1.bf16.msra.mxu0 %v8705
      %10227 = vmatprep.subr.bf16.mxu0 0
      %10228 = vmatpush1.bf16.msra.mxu0 %v8712
      %10229 = vmatprep.subr.bf16.mxu0 0
      %10230 = vmatpush1.bf16.msra.mxu0 %v8719
      %10231 = vmatprep.subr.bf16.mxu0 0
      %10232 = vmatpush1.bf16.msra.mxu0 %v8726
      %10233 = vmatprep.subr.bf16.mxu0 0
      %10234 = vmatpush1.bf16.msra.mxu0 %v8733
      %10235 = vmatprep.subr.bf16.mxu0 0
      %10236 = vmatpush1.bf16.msra.mxu0 %v8740
      %10237 = vmatprep.subr.bf16.mxu0 0
      %10238 = vmatpush1.bf16.msra.mxu0 %v8747
      %10239 = vmatprep.subr.bf16.mxu0 0
      %10240 = vmatpush1.bf16.msra.mxu0 %v8754
      %10241 = vmatprep.subr.bf16.mxu0 0
      %10242 = vmatpush1.bf16.msra.mxu0 %v8761
      %10243 = vmatprep.subr.bf16.mxu0 0
      %10244 = vmatpush1.bf16.msra.mxu0 %v8768
      %10245 = vmatprep.mubr.bf16.mxu0 %v7844
      %10246 = vmatmul.mubr.bf16.gmra.mrb[0].mxu0 %v7843
      %v10247 = vpop.f32.mrb[0].mxu0
      %v10248 = vadd.f32 0.0, %v10247
      %v10249 = vpop.f32.mrb[0].mxu0
      %v10250 = vpop.f32.mrb[0].mxu0
      %v10251 = vadd.f32 0.0, %v10250
      %v10252 = vpop.f32.mrb[0].mxu0
      %10253 = vmatprep.mubr.bf16.mxu0 %v7848
      %10254 = vmatmul.mubr.bf16.gmra.mrb[0].mxu0 %v7847
      %v10255 = vpop.f32.mrb[0].mxu0
      %v10256 = vadd.f32 0.0, %v10255
      %v10257 = vpop.f32.mrb[0].mxu0
      %v10258 = vpop.f32.mrb[0].mxu0
      %v10259 = vadd.f32 0.0, %v10258
      %v10260 = vpop.f32.mrb[0].mxu0
      %10261 = vmatprep.mubr.bf16.mxu0 %v7852
      %10262 = vmatmul.mubr.bf16.gmra.mrb[0].mxu0 %v7851
      %v10263 = vpop.f32.mrb[0].mxu0
      %v10264 = vadd.f32 0.0, %v10263
      %v10265 = vpop.f32.mrb[0].mxu0
      %v10266 = vpop.f32.mrb[0].mxu0
      %v10267 = vadd.f32 0.0, %v10266
      %v10268 = vpop.f32.mrb[0].mxu0
      %10269 = vmatprep.mubr.bf16.mxu0 %v7856
      %10270 = vmatmul.mubr.bf16.gmra.mrb[0].mxu0 %v7855
      %v10271 = vpop.f32.mrb[0].mxu0
      %v10272 = vadd.f32 0.0, %v10271
      %v10273 = vpop.f32.mrb[0].mxu0
      %v10274 = vpop.f32.mrb[0].mxu0
      %v10275 = vadd.f32 0.0, %v10274
      %v10276 = vpop.f32.mrb[0].mxu0
      %10277 = vmatprep.mubr.bf16.mxu0 %v7860
      %10278 = vmatmul.mubr.bf16.gmra.mrb[0].mxu0 %v7859
      %v10279 = vpop.f32.mrb[0].mxu0
      %v10280 = vadd.f32 0.0, %v10279
      %v10281 = vpop.f32.mrb[0].mxu0
      %v10282 = vpop.f32.mrb[0].mxu0
      %v10283 = vadd.f32 0.0, %v10282
      %v10284 = vpop.f32.mrb[0].mxu0
      %10285 = vmatprep.mubr.bf16.mxu0 %v7864
      %10286 = vmatmul.mubr.bf16.gmra.mrb[0].mxu0 %v7863
      %v10287 = vpop.f32.mrb[0].mxu0
      %v10288 = vadd.f32 0.0, %v10287
      %v10289 = vpop.f32.mrb[0].mxu0
      %v10290 = vpop.f32.mrb[0].mxu0
      %v10291 = vadd.f32 0.0, %v10290
      %v10292 = vpop.f32.mrb[0].mxu0
      %10293 = vmatprep.mubr.bf16.mxu0 %v7868
      %10294 = vmatmul.mubr.bf16.gmra.mrb[0].mxu0 %v7867
      %v10295 = vpop.f32.mrb[0].mxu0
      %v10296 = vadd.f32 0.0, %v10295
      %v10297 = vpop.f32.mrb[0].mxu0
      %v10298 = vpop.f32.mrb[0].mxu0
      %v10299 = vadd.f32 0.0, %v10298
      %v10300 = vpop.f32.mrb[0].mxu0
      %10301 = vmatprep.mubr.bf16.mxu0 %v7872
      %10302 = vmatmul.mubr.bf16.gmra.mrb[0].mxu0 %v7871
      %v10303 = vpop.f32.mrb[0].mxu0
      %v10304 = vadd.f32 0.0, %v10303
      %v10305 = vpop.f32.mrb[0].mxu0
      %v10306 = vpop.f32.mrb[0].mxu0
      %v10307 = vadd.f32 0.0, %v10306
      %v10308 = vpop.f32.mrb[0].mxu0
      %10309 = vmatprep.mubr.bf16.mxu0 %v7876
      %10310 = vmatmul.mubr.bf16.gmra.mrb[0].mxu0 %v7875
      %v10311 = vpop.f32.mrb[0].mxu0
      %v10312 = vadd.f32 0.0, %v10311
      %v10313 = vpop.f32.mrb[0].mxu0
      %v10314 = vpop.f32.mrb[0].mxu0
      %v10315 = vadd.f32 0.0, %v10314
      %v10316 = vpop.f32.mrb[0].mxu0
      %10317 = vmatprep.mubr.bf16.mxu0 %v7880
      %10318 = vmatmul.mubr.bf16.gmra.mrb[0].mxu0 %v7879
      %v10319 = vpop.f32.mrb[0].mxu0
      %v10320 = vadd.f32 0.0, %v10319
      %v10321 = vpop.f32.mrb[0].mxu0
      %v10322 = vpop.f32.mrb[0].mxu0
      %v10323 = vadd.f32 0.0, %v10322
      %v10324 = vpop.f32.mrb[0].mxu0
      %10325 = vmatprep.mubr.bf16.mxu0 %v7884
      %10326 = vmatmul.mubr.bf16.gmra.mrb[0].mxu0 %v7883
      %v10327 = vpop.f32.mrb[0].mxu0
      %v10328 = vadd.f32 0.0, %v10327
      %v10329 = vpop.f32.mrb[0].mxu0
      %v10330 = vpop.f32.mrb[0].mxu0
      %v10331 = vadd.f32 0.0, %v10330
      %v10332 = vpop.f32.mrb[0].mxu0
      %10333 = vmatprep.mubr.bf16.mxu0 %v7888
      %10334 = vmatmul.mubr.bf16.gmra.mrb[0].mxu0 %v7887
      %v10335 = vpop.f32.mrb[0].mxu0
      %v10336 = vadd.f32 0.0, %v10335
      %v10337 = vpop.f32.mrb[0].mxu0
      %v10338 = vpop.f32.mrb[0].mxu0
      %v10339 = vadd.f32 0.0, %v10338
      %v10340 = vpop.f32.mrb[0].mxu0
      %10341 = vmatprep.mubr.bf16.mxu0 %v7892
      %10342 = vmatmul.mubr.bf16.gmra.mrb[0].mxu0 %v7891
      %v10343 = vpop.f32.mrb[0].mxu0
      %v10344 = vadd.f32 0.0, %v10343
      %v10345 = vpop.f32.mrb[0].mxu0
      %v10346 = vpop.f32.mrb[0].mxu0
      %v10347 = vadd.f32 0.0, %v10346
      %v10348 = vpop.f32.mrb[0].mxu0
      %10349 = vmatprep.mubr.bf16.mxu0 %v7896
      %10350 = vmatmul.mubr.bf16.gmra.mrb[0].mxu0 %v7895
      %v10351 = vpop.f32.mrb[0].mxu0
      %v10352 = vadd.f32 0.0, %v10351
      %v10353 = vpop.f32.mrb[0].mxu0
      %v10354 = vpop.f32.mrb[0].mxu0
      %v10355 = vadd.f32 0.0, %v10354
      %v10356 = vpop.f32.mrb[0].mxu0
      %10357 = vmatprep.mubr.bf16.mxu0 %v7900
      %10358 = vmatmul.mubr.bf16.gmra.mrb[0].mxu0 %v7899
      %v10359 = vpop.f32.mrb[0].mxu0
      %v10360 = vadd.f32 0.0, %v10359
      %v10361 = vpop.f32.mrb[0].mxu0
      %v10362 = vpop.f32.mrb[0].mxu0
      %v10363 = vadd.f32 0.0, %v10362
      %v10364 = vpop.f32.mrb[0].mxu0
      %10365 = vmatprep.mubr.bf16.mxu0 %v7904
      %10366 = vmatmul.mubr.bf16.gmra.mrb[0].mxu0 %v7903
      %v10367 = vpop.f32.mrb[0].mxu0
      %v10368 = vadd.f32 0.0, %v10367
      %v10369 = vpop.f32.mrb[0].mxu0
      %v10370 = vpop.f32.mrb[0].mxu0
      %v10371 = vadd.f32 0.0, %v10370
      %v10372 = vpop.f32.mrb[0].mxu0
      %10373 = vdwg.mxu0
      %10374 = vmatprep.subr.bf16.mxu0 0
      %10375 = vmatpush1.bf16.msra.mxu0 %v8775
      %10376 = vmatprep.subr.bf16.mxu0 0
      %10377 = vmatpush1.bf16.msra.mxu0 %v8782
      %10378 = vmatprep.subr.bf16.mxu0 0
      %10379 = vmatpush1.bf16.msra.mxu0 %v8789
      %10380 = vmatprep.subr.bf16.mxu0 0
      %10381 = vmatpush1.bf16.msra.mxu0 %v8796
      %10382 = vmatprep.subr.bf16.mxu0 0
      %10383 = vmatpush1.bf16.msra.mxu0 %v8803
      %10384 = vmatprep.subr.bf16.mxu0 0
      %10385 = vmatpush1.bf16.msra.mxu0 %v8810
      %10386 = vmatprep.subr.bf16.mxu0 0
      %10387 = vmatpush1.bf16.msra.mxu0 %v8817
      %10388 = vmatprep.subr.bf16.mxu0 0
      %10389 = vmatpush1.bf16.msra.mxu0 %v8824
      %10390 = vmatprep.subr.bf16.mxu0 0
      %10391 = vmatpush1.bf16.msra.mxu0 %v8831
      %10392 = vmatprep.subr.bf16.mxu0 0
      %10393 = vmatpush1.bf16.msra.mxu0 0
      %10394 = vmatprep.subr.bf16.mxu0 0
      %10395 = vmatpush1.bf16.msra.mxu0 0
      %10396 = vmatprep.subr.bf16.mxu0 0
      %10397 = vmatpush1.bf16.msra.mxu0 0
      %10398 = vmatprep.subr.bf16.mxu0 0
      %10399 = vmatpush1.bf16.msra.mxu0 0
      %10400 = vmatprep.subr.bf16.mxu0 0
      %10401 = vmatpush1.bf16.msra.mxu0 0
      %10402 = vmatprep.subr.bf16.mxu0 0
      %10403 = vmatpush1.bf16.msra.mxu0 0
      %10404 = vmatprep.subr.bf16.mxu0 0
      %10405 = vmatpush1.bf16.msra.mxu0 0
      %10406 = vmatprep.mubr.bf16.mxu0 %v9008
      %10407 = vmatmul.mubr.bf16.gmra.mrb[0].mxu0 %v7845
      %v10408 = vpop.f32.mrb[0].mxu0
      %v10409 = vadd.f32 %v10248, %v10408
      %v10410 = vpop.f32.mrb[0].mxu0
      %v10411 = vpop.f32.mrb[0].mxu0
      %v10412 = vadd.f32 %v10251, %v10411
      %v10413 = vpop.f32.mrb[0].mxu0
      %10414 = vmatprep.mubr.bf16.mxu0 %v9011
      %10415 = vmatmul.mubr.bf16.gmra.mrb[0].mxu0 %v7849
      %v10416 = vpop.f32.mrb[0].mxu0
      %v10417 = vadd.f32 %v10256, %v10416
      %v10418 = vpop.f32.mrb[0].mxu0
      %v10419 = vpop.f32.mrb[0].mxu0
      %v10420 = vadd.f32 %v10259, %v10419
      %v10421 = vpop.f32.mrb[0].mxu0
      %10422 = vmatprep.mubr.bf16.mxu0 %v9014
      %10423 = vmatmul.mubr.bf16.gmra.mrb[0].mxu0 %v7853
      %v10424 = vpop.f32.mrb[0].mxu0
      %v10425 = vadd.f32 %v10264, %v10424
      %v10426 = vpop.f32.mrb[0].mxu0
      %v10427 = vpop.f32.mrb[0].mxu0
      %v10428 = vadd.f32 %v10267, %v10427
      %v10429 = vpop.f32.mrb[0].mxu0
      %10430 = vmatprep.mubr.bf16.mxu0 %v9017
      %10431 = vmatmul.mubr.bf16.gmra.mrb[0].mxu0 %v7857
      %v10432 = vpop.f32.mrb[0].mxu0
      %v10433 = vadd.f32 %v10272, %v10432
      %v10434 = vpop.f32.mrb[0].mxu0
      %v10435 = vpop.f32.mrb[0].mxu0
      %v10436 = vadd.f32 %v10275, %v10435
      %v10437 = vpop.f32.mrb[0].mxu0
      %10438 = vmatprep.mubr.bf16.mxu0 %v9020
      %10439 = vmatmul.mubr.bf16.gmra.mrb[0].mxu0 %v7861
      %v10440 = vpop.f32.mrb[0].mxu0
      %v10441 = vadd.f32 %v10280, %v10440
      %v10442 = vpop.f32.mrb[0].mxu0
      %v10443 = vpop.f32.mrb[0].mxu0
      %v10444 = vadd.f32 %v10283, %v10443
      %v10445 = vpop.f32.mrb[0].mxu0
      %10446 = vmatprep.mubr.bf16.mxu0 %v9023
      %10447 = vmatmul.mubr.bf16.gmra.mrb[0].mxu0 %v7865
      %v10448 = vpop.f32.mrb[0].mxu0
      %v10449 = vadd.f32 %v10288, %v10448
      %v10450 = vpop.f32.mrb[0].mxu0
      %v10451 = vpop.f32.mrb[0].mxu0
      %v10452 = vadd.f32 %v10291, %v10451
      %v10453 = vpop.f32.mrb[0].mxu0
      %10454 = vmatprep.mubr.bf16.mxu0 %v9026
      %10455 = vmatmul.mubr.bf16.gmra.mrb[0].mxu0 %v7869
      %v10456 = vpop.f32.mrb[0].mxu0
      %v10457 = vadd.f32 %v10296, %v10456
      %v10458 = vpop.f32.mrb[0].mxu0
      %v10459 = vpop.f32.mrb[0].mxu0
      %v10460 = vadd.f32 %v10299, %v10459
      %v10461 = vpop.f32.mrb[0].mxu0
      %10462 = vmatprep.mubr.bf16.mxu0 %v9029
      %10463 = vmatmul.mubr.bf16.gmra.mrb[0].mxu0 %v7873
      %v10464 = vpop.f32.mrb[0].mxu0
      %v10465 = vadd.f32 %v10304, %v10464
      %v10466 = vpop.f32.mrb[0].mxu0
      %v10467 = vpop.f32.mrb[0].mxu0
      %v10468 = vadd.f32 %v10307, %v10467
      %v10469 = vpop.f32.mrb[0].mxu0
      %10470 = vmatprep.mubr.bf16.mxu0 %v9032
      %10471 = vmatmul.mubr.bf16.gmra.mrb[0].mxu0 %v7877
      %v10472 = vpop.f32.mrb[0].mxu0
      %v10473 = vadd.f32 %v10312, %v10472
      %v10474 = vpop.f32.mrb[0].mxu0
      %v10475 = vpop.f32.mrb[0].mxu0
      %v10476 = vadd.f32 %v10315, %v10475
      %v10477 = vpop.f32.mrb[0].mxu0
      %10478 = vmatprep.mubr.bf16.mxu0 %v9035
      %10479 = vmatmul.mubr.bf16.gmra.mrb[0].mxu0 %v7881
      %v10480 = vpop.f32.mrb[0].mxu0
      %v10481 = vadd.f32 %v10320, %v10480
      %v10482 = vpop.f32.mrb[0].mxu0
      %v10483 = vpop.f32.mrb[0].mxu0
      %v10484 = vadd.f32 %v10323, %v10483
      %v10485 = vpop.f32.mrb[0].mxu0
      %10486 = vmatprep.mubr.bf16.mxu0 %v9038
      %10487 = vmatmul.mubr.bf16.gmra.mrb[0].mxu0 %v7885
      %v10488 = vpop.f32.mrb[0].mxu0
      %v10489 = vadd.f32 %v10328, %v10488
      %v10490 = vpop.f32.mrb[0].mxu0
      %v10491 = vpop.f32.mrb[0].mxu0
      %v10492 = vadd.f32 %v10331, %v10491
      %v10493 = vpop.f32.mrb[0].mxu0
      %10494 = vmatprep.mubr.bf16.mxu0 %v9041
      %10495 = vmatmul.mubr.bf16.gmra.mrb[0].mxu0 %v7889
      %v10496 = vpop.f32.mrb[0].mxu0
      %v10497 = vadd.f32 %v10336, %v10496
      %v10498 = vpop.f32.mrb[0].mxu0
      %v10499 = vpop.f32.mrb[0].mxu0
      %v10500 = vadd.f32 %v10339, %v10499
      %v10501 = vpop.f32.mrb[0].mxu0
      %10502 = vmatprep.mubr.bf16.mxu0 %v9044
      %10503 = vmatmul.mubr.bf16.gmra.mrb[0].mxu0 %v7893
      %v10504 = vpop.f32.mrb[0].mxu0
      %v10505 = vadd.f32 %v10344, %v10504
      %v10506 = vpop.f32.mrb[0].mxu0
      %v10507 = vpop.f32.mrb[0].mxu0
      %v10508 = vadd.f32 %v10347, %v10507
      %v10509 = vpop.f32.mrb[0].mxu0
      %10510 = vmatprep.mubr.bf16.mxu0 %v9047
      %10511 = vmatmul.mubr.bf16.gmra.mrb[0].mxu0 %v7897
      %v10512 = vpop.f32.mrb[0].mxu0
      %v10513 = vadd.f32 %v10352, %v10512
      %v10514 = vpop.f32.mrb[0].mxu0
      %v10515 = vpop.f32.mrb[0].mxu0
      %v10516 = vadd.f32 %v10355, %v10515
      %v10517 = vpop.f32.mrb[0].mxu0
      %10518 = vmatprep.mubr.bf16.mxu0 %v9050
      %10519 = vmatmul.mubr.bf16.gmra.mrb[0].mxu0 %v7901
      %v10520 = vpop.f32.mrb[0].mxu0
      %v10521 = vadd.f32 %v10360, %v10520
      %v10522 = vpop.f32.mrb[0].mxu0
      %v10523 = vpop.f32.mrb[0].mxu0
      %v10524 = vadd.f32 %v10363, %v10523
      %v10525 = vpop.f32.mrb[0].mxu0
      %10526 = vmatprep.mubr.bf16.mxu0 %v9053
      %10527 = vmatmul.mubr.bf16.gmra.mrb[0].mxu0 %v7905
      %v10528 = vpop.f32.mrb[0].mxu0
      %v10529 = vadd.f32 %v10368, %v10528
      %v10530 = vpop.f32.mrb[0].mxu0
      %v10531 = vpop.f32.mrb[0].mxu0
      %v10532 = vadd.f32 %v10371, %v10531
      %v10533 = vpop.f32.mrb[0].mxu0
      %10534 = vdwg.mxu0
      %v10535 = vpack.c.bf16 %v9287, %v9283
      %v10536 = vpack.c.bf16 %v9289, %v9285
      %v10537 = vpack.c.bf16 %v9673, %v9669
      %v10538 = vpack.c.bf16 %v9675, %v9671
      %v10539 = vpack.c.bf16 %v10059, %v10055
      %v10540 = vpack.c.bf16 %v10061, %v10057
      %v10541 = vpack.c.bf16 %v10412, %v10409
      %v10542 = vpack.c.bf16 %v9297, %v9293
      %v10543 = vpack.c.bf16 %v9299, %v9295
      %v10544 = vpack.c.bf16 %v9683, %v9679
      %v10545 = vpack.c.bf16 %v9685, %v9681
      %v10546 = vpack.c.bf16 %v10069, %v10065
      %v10547 = vpack.c.bf16 %v10071, %v10067
      %v10548 = vpack.c.bf16 %v10420, %v10417
      %v10549 = vpack.c.bf16 %v9307, %v9303
      %v10550 = vpack.c.bf16 %v9309, %v9305
      %v10551 = vpack.c.bf16 %v9693, %v9689
      %v10552 = vpack.c.bf16 %v9695, %v9691
      %v10553 = vpack.c.bf16 %v10079, %v10075
      %v10554 = vpack.c.bf16 %v10081, %v10077
      %v10555 = vpack.c.bf16 %v10428, %v10425
      %v10556 = vpack.c.bf16 %v9317, %v9313
      %v10557 = vpack.c.bf16 %v9319, %v9315
      %v10558 = vpack.c.bf16 %v9703, %v9699
      %v10559 = vpack.c.bf16 %v9705, %v9701
      %v10560 = vpack.c.bf16 %v10089, %v10085
      %v10561 = vpack.c.bf16 %v10091, %v10087
      %v10562 = vpack.c.bf16 %v10436, %v10433
      %v10563 = vpack.c.bf16 %v9327, %v9323
      %v10564 = vpack.c.bf16 %v9329, %v9325
      %v10565 = vpack.c.bf16 %v9713, %v9709
      %v10566 = vpack.c.bf16 %v9715, %v9711
      %v10567 = vpack.c.bf16 %v10099, %v10095
      %v10568 = vpack.c.bf16 %v10101, %v10097
      %v10569 = vpack.c.bf16 %v10444, %v10441
      %v10570 = vpack.c.bf16 %v9337, %v9333
      %v10571 = vpack.c.bf16 %v9339, %v9335
      %v10572 = vpack.c.bf16 %v9723, %v9719
      %v10573 = vpack.c.bf16 %v9725, %v9721
      %v10574 = vpack.c.bf16 %v10109, %v10105
      %v10575 = vpack.c.bf16 %v10111, %v10107
      %v10576 = vpack.c.bf16 %v10452, %v10449
      %v10577 = vpack.c.bf16 %v9347, %v9343
      %v10578 = vpack.c.bf16 %v9349, %v9345
      %v10579 = vpack.c.bf16 %v9733, %v9729
      %v10580 = vpack.c.bf16 %v9735, %v9731
      %v10581 = vpack.c.bf16 %v10119, %v10115
      %v10582 = vpack.c.bf16 %v10121, %v10117
      %v10583 = vpack.c.bf16 %v10460, %v10457
      %v10584 = vpack.c.bf16 %v9357, %v9353
      %v10585 = vpack.c.bf16 %v9359, %v9355
      %v10586 = vpack.c.bf16 %v9743, %v9739
      %v10587 = vpack.c.bf16 %v9745, %v9741
      %v10588 = vpack.c.bf16 %v10129, %v10125
      %v10589 = vpack.c.bf16 %v10131, %v10127
      %v10590 = vpack.c.bf16 %v10468, %v10465
      %v10591 = vpack.c.bf16 %v9367, %v9363
      %v10592 = vpack.c.bf16 %v9369, %v9365
      %v10593 = vpack.c.bf16 %v9753, %v9749
      %v10594 = vpack.c.bf16 %v9755, %v9751
      %v10595 = vpack.c.bf16 %v10139, %v10135
      %v10596 = vpack.c.bf16 %v10141, %v10137
      %v10597 = vpack.c.bf16 %v10476, %v10473
      %v10598 = vpack.c.bf16 %v9377, %v9373
      %v10599 = vpack.c.bf16 %v9379, %v9375
      %v10600 = vpack.c.bf16 %v9763, %v9759
      %v10601 = vpack.c.bf16 %v9765, %v9761
      %v10602 = vpack.c.bf16 %v10149, %v10145
      %v10603 = vpack.c.bf16 %v10151, %v10147
      %v10604 = vpack.c.bf16 %v10484, %v10481
      %v10605 = vpack.c.bf16 %v9387, %v9383
      %v10606 = vpack.c.bf16 %v9389, %v9385
      %v10607 = vpack.c.bf16 %v9773, %v9769
      %v10608 = vpack.c.bf16 %v9775, %v9771
      %v10609 = vpack.c.bf16 %v10159, %v10155
      %v10610 = vpack.c.bf16 %v10161, %v10157
      %v10611 = vpack.c.bf16 %v10492, %v10489
      %v10612 = vpack.c.bf16 %v9397, %v9393
      %v10613 = vpack.c.bf16 %v9399, %v9395
      %v10614 = vpack.c.bf16 %v9783, %v9779
      %v10615 = vpack.c.bf16 %v9785, %v9781
      %v10616 = vpack.c.bf16 %v10169, %v10165
      %v10617 = vpack.c.bf16 %v10171, %v10167
      %v10618 = vpack.c.bf16 %v10500, %v10497
      %v10619 = vpack.c.bf16 %v9407, %v9403
      %v10620 = vpack.c.bf16 %v9409, %v9405
      %v10621 = vpack.c.bf16 %v9793, %v9789
      %v10622 = vpack.c.bf16 %v9795, %v9791
      %v10623 = vpack.c.bf16 %v10179, %v10175
      %v10624 = vpack.c.bf16 %v10181, %v10177
      %v10625 = vpack.c.bf16 %v10508, %v10505
      %v10626 = vpack.c.bf16 %v9417, %v9413
      %v10627 = vpack.c.bf16 %v9419, %v9415
      %v10628 = vpack.c.bf16 %v9803, %v9799
      %v10629 = vpack.c.bf16 %v9805, %v9801
      %v10630 = vpack.c.bf16 %v10189, %v10185
      %v10631 = vpack.c.bf16 %v10191, %v10187
      %v10632 = vpack.c.bf16 %v10516, %v10513
      %v10633 = vpack.c.bf16 %v9427, %v9423
      %v10634 = vpack.c.bf16 %v9429, %v9425
      %v10635 = vpack.c.bf16 %v9813, %v9809
      %v10636 = vpack.c.bf16 %v9815, %v9811
      %v10637 = vpack.c.bf16 %v10199, %v10195
      %v10638 = vpack.c.bf16 %v10201, %v10197
      %v10639 = vpack.c.bf16 %v10524, %v10521
      %v10640 = vpack.c.bf16 %v9437, %v9433
      %v10641 = vpack.c.bf16 %v9439, %v9435
      %v10642 = vpack.c.bf16 %v9823, %v9819
      %v10643 = vpack.c.bf16 %v9825, %v9821
      %v10644 = vpack.c.bf16 %v10209, %v10205
      %v10645 = vpack.c.bf16 %v10211, %v10207
      %v10646 = vpack.c.bf16 %v10532, %v10529
      %v10647 = vld [vmem:[%s13] sm:$0x7f]
      %v10649 = vlaneseq
      %v10650 = vshrl.u32 %v10649, 7
      %v10651 = vsub.s32 0, %v10650
      %v10652 = vrot.slane %v10647, %v10651
      %v10653 = vlaneseq
      %v10654 = vshrl.u32 %v10653, 7
      %v10655 = vsub.s32 1, %v10654
      %v10656 = vrot.slane %v10647, %v10655
      %v10657 = vlaneseq
      %v10658 = vshrl.u32 %v10657, 7
      %v10659 = vsub.s32 2, %v10658
      %v10660 = vrot.slane %v10647, %v10659
      %v10661 = vlaneseq
      %v10662 = vshrl.u32 %v10661, 7
      %v10663 = vsub.s32 3, %v10662
      %v10664 = vrot.slane %v10647, %v10663
      %v10665 = vlaneseq
      %v10666 = vshrl.u32 %v10665, 7
      %v10667 = vsub.s32 4, %v10666
      %v10668 = vrot.slane %v10647, %v10667
      %v10669 = vlaneseq
      %v10670 = vshrl.u32 %v10669, 7
      %v10671 = vsub.s32 5, %v10670
      %v10672 = vrot.slane %v10647, %v10671
      %v10673 = vlaneseq
      %v10674 = vshrl.u32 %v10673, 7
      %v10675 = vsub.s32 6, %v10674
      %v10676 = vrot.slane %v10647, %v10675
      %v10684 = vpack.c.bf16 %v10652, %v10652
      %v10685 = vpack.c.bf16 %v10656, %v10656
      %v10686 = vpack.c.bf16 %v10660, %v10660
      %v10687 = vpack.c.bf16 %v10664, %v10664
      %v10688 = vpack.c.bf16 %v10668, %v10668
      %v10689 = vpack.c.bf16 %v10672, %v10672
      %v10690 = vpack.c.bf16 %v10676, %v10676
      %v10692 = vpack.i.b16 %v10684, %v10684
      %v10694 = vlaneseq
      %v10695 = vshrl.u32 %v10694, 7
      %v10696 = vsub.s32 0, %v10695
      %v10697 = vrot.slane %v10692, %v10696
      %v10699 = vpack.i.b16 %v10685, %v10685
      %v10701 = vlaneseq
      %v10702 = vshrl.u32 %v10701, 7
      %v10703 = vsub.s32 0, %v10702
      %v10704 = vrot.slane %v10699, %v10703
      %v10706 = vpack.i.b16 %v10686, %v10686
      %v10708 = vlaneseq
      %v10709 = vshrl.u32 %v10708, 7
      %v10710 = vsub.s32 0, %v10709
      %v10711 = vrot.slane %v10706, %v10710
      %v10713 = vpack.i.b16 %v10687, %v10687
      %v10715 = vlaneseq
      %v10716 = vshrl.u32 %v10715, 7
      %v10717 = vsub.s32 0, %v10716
      %v10718 = vrot.slane %v10713, %v10717
      %v10720 = vpack.i.b16 %v10688, %v10688
      %v10722 = vlaneseq
      %v10723 = vshrl.u32 %v10722, 7
      %v10724 = vsub.s32 0, %v10723
      %v10725 = vrot.slane %v10720, %v10724
      %v10727 = vpack.i.b16 %v10689, %v10689
      %v10729 = vlaneseq
      %v10730 = vshrl.u32 %v10729, 7
      %v10731 = vsub.s32 0, %v10730
      %v10732 = vrot.slane %v10727, %v10731
      %v10734 = vpack.i.b16 %v10690, %v10690
      %v10736 = vlaneseq
      %v10737 = vshrl.u32 %v10736, 7
      %v10738 = vsub.s32 0, %v10737
      %v10739 = vrot.slane %v10734, %v10738
      %v10740 = vadd.bf16 %v10535, %v10697
      %v10741 = vadd.bf16 %v10536, %v10704
      %v10742 = vadd.bf16 %v10537, %v10711
      %v10743 = vadd.bf16 %v10538, %v10718
      %v10744 = vadd.bf16 %v10539, %v10725
      %v10745 = vadd.bf16 %v10540, %v10732
      %v10746 = vadd.bf16 %v10541, %v10739
      %v10747 = vadd.bf16 %v10542, %v10697
      %v10748 = vadd.bf16 %v10543, %v10704
      %v10749 = vadd.bf16 %v10544, %v10711
      %v10750 = vadd.bf16 %v10545, %v10718
      %v10751 = vadd.bf16 %v10546, %v10725
      %v10752 = vadd.bf16 %v10547, %v10732
      %v10753 = vadd.bf16 %v10548, %v10739
      %v10754 = vadd.bf16 %v10549, %v10697
      %v10755 = vadd.bf16 %v10550, %v10704
      %v10756 = vadd.bf16 %v10551, %v10711
      %v10757 = vadd.bf16 %v10552, %v10718
      %v10758 = vadd.bf16 %v10553, %v10725
      %v10759 = vadd.bf16 %v10554, %v10732
      %v10760 = vadd.bf16 %v10555, %v10739
      %v10761 = vadd.bf16 %v10556, %v10697
      %v10762 = vadd.bf16 %v10557, %v10704
      %v10763 = vadd.bf16 %v10558, %v10711
      %v10764 = vadd.bf16 %v10559, %v10718
      %v10765 = vadd.bf16 %v10560, %v10725
      %v10766 = vadd.bf16 %v10561, %v10732
      %v10767 = vadd.bf16 %v10562, %v10739
      %v10768 = vadd.bf16 %v10563, %v10697
      %v10769 = vadd.bf16 %v10564, %v10704
      %v10770 = vadd.bf16 %v10565, %v10711
      %v10771 = vadd.bf16 %v10566, %v10718
      %v10772 = vadd.bf16 %v10567, %v10725
      %v10773 = vadd.bf16 %v10568, %v10732
      %v10774 = vadd.bf16 %v10569, %v10739
      %v10775 = vadd.bf16 %v10570, %v10697
      %v10776 = vadd.bf16 %v10571, %v10704
      %v10777 = vadd.bf16 %v10572, %v10711
      %v10778 = vadd.bf16 %v10573, %v10718
      %v10779 = vadd.bf16 %v10574, %v10725
      %v10780 = vadd.bf16 %v10575, %v10732
      %v10781 = vadd.bf16 %v10576, %v10739
      %v10782 = vadd.bf16 %v10577, %v10697
      %v10783 = vadd.bf16 %v10578, %v10704
      %v10784 = vadd.bf16 %v10579, %v10711
      %v10785 = vadd.bf16 %v10580, %v10718
      %v10786 = vadd.bf16 %v10581, %v10725
      %v10787 = vadd.bf16 %v10582, %v10732
      %v10788 = vadd.bf16 %v10583, %v10739
      %v10789 = vadd.bf16 %v10584, %v10697
      %v10790 = vadd.bf16 %v10585, %v10704
      %v10791 = vadd.bf16 %v10586, %v10711
      %v10792 = vadd.bf16 %v10587, %v10718
      %v10793 = vadd.bf16 %v10588, %v10725
      %v10794 = vadd.bf16 %v10589, %v10732
      %v10795 = vadd.bf16 %v10590, %v10739
      %v10796 = vadd.bf16 %v10591, %v10697
      %v10797 = vadd.bf16 %v10592, %v10704
      %v10798 = vadd.bf16 %v10593, %v10711
      %v10799 = vadd.bf16 %v10594, %v10718
      %v10800 = vadd.bf16 %v10595, %v10725
      %v10801 = vadd.bf16 %v10596, %v10732
      %v10802 = vadd.bf16 %v10597, %v10739
      %v10803 = vadd.bf16 %v10598, %v10697
      %v10804 = vadd.bf16 %v10599, %v10704
      %v10805 = vadd.bf16 %v10600, %v10711
      %v10806 = vadd.bf16 %v10601, %v10718
      %v10807 = vadd.bf16 %v10602, %v10725
      %v10808 = vadd.bf16 %v10603, %v10732
      %v10809 = vadd.bf16 %v10604, %v10739
      %v10810 = vadd.bf16 %v10605, %v10697
      %v10811 = vadd.bf16 %v10606, %v10704
      %v10812 = vadd.bf16 %v10607, %v10711
      %v10813 = vadd.bf16 %v10608, %v10718
      %v10814 = vadd.bf16 %v10609, %v10725
      %v10815 = vadd.bf16 %v10610, %v10732
      %v10816 = vadd.bf16 %v10611, %v10739
      %v10817 = vadd.bf16 %v10612, %v10697
      %v10818 = vadd.bf16 %v10613, %v10704
      %v10819 = vadd.bf16 %v10614, %v10711
      %v10820 = vadd.bf16 %v10615, %v10718
      %v10821 = vadd.bf16 %v10616, %v10725
      %v10822 = vadd.bf16 %v10617, %v10732
      %v10823 = vadd.bf16 %v10618, %v10739
      %v10824 = vadd.bf16 %v10619, %v10697
      %v10825 = vadd.bf16 %v10620, %v10704
      %v10826 = vadd.bf16 %v10621, %v10711
      %v10827 = vadd.bf16 %v10622, %v10718
      %v10828 = vadd.bf16 %v10623, %v10725
      %v10829 = vadd.bf16 %v10624, %v10732
      %v10830 = vadd.bf16 %v10625, %v10739
      %v10831 = vadd.bf16 %v10626, %v10697
      %v10832 = vadd.bf16 %v10627, %v10704
      %v10833 = vadd.bf16 %v10628, %v10711
      %v10834 = vadd.bf16 %v10629, %v10718
      %v10835 = vadd.bf16 %v10630, %v10725
      %v10836 = vadd.bf16 %v10631, %v10732
      %v10837 = vadd.bf16 %v10632, %v10739
      %v10838 = vadd.bf16 %v10633, %v10697
      %v10839 = vadd.bf16 %v10634, %v10704
      %v10840 = vadd.bf16 %v10635, %v10711
      %v10841 = vadd.bf16 %v10636, %v10718
      %v10842 = vadd.bf16 %v10637, %v10725
      %v10843 = vadd.bf16 %v10638, %v10732
      %v10844 = vadd.bf16 %v10639, %v10739
      %v10845 = vadd.bf16 %v10640, %v10697
      %v10846 = vadd.bf16 %v10641, %v10704
      %v10847 = vadd.bf16 %v10642, %v10711
      %v10848 = vadd.bf16 %v10643, %v10718
      %v10849 = vadd.bf16 %v10644, %v10725
      %v10850 = vadd.bf16 %v10645, %v10732
      %v10851 = vadd.bf16 %v10646, %v10739
      %v10852 = vxor.u32 %v10740, 2147516416
      %v10853 = vxor.u32 %v10741, 2147516416
      %v10854 = vxor.u32 %v10742, 2147516416
      %v10855 = vxor.u32 %v10743, 2147516416
      %v10856 = vxor.u32 %v10744, 2147516416
      %v10857 = vxor.u32 %v10745, 2147516416
      %v10858 = vxor.u32 %v10746, 2147516416
      %v10859 = vxor.u32 %v10747, 2147516416
      %v10860 = vxor.u32 %v10748, 2147516416
      %v10861 = vxor.u32 %v10749, 2147516416
      %v10862 = vxor.u32 %v10750, 2147516416
      %v10863 = vxor.u32 %v10751, 2147516416
      %v10864 = vxor.u32 %v10752, 2147516416
      %v10865 = vxor.u32 %v10753, 2147516416
      %v10866 = vxor.u32 %v10754, 2147516416
      %v10867 = vxor.u32 %v10755, 2147516416
      %v10868 = vxor.u32 %v10756, 2147516416
      %v10869 = vxor.u32 %v10757, 2147516416
      %v10870 = vxor.u32 %v10758, 2147516416
      %v10871 = vxor.u32 %v10759, 2147516416
      %v10872 = vxor.u32 %v10760, 2147516416
      %v10873 = vxor.u32 %v10761, 2147516416
      %v10874 = vxor.u32 %v10762, 2147516416
      %v10875 = vxor.u32 %v10763, 2147516416
      %v10876 = vxor.u32 %v10764, 2147516416
      %v10877 = vxor.u32 %v10765, 2147516416
      %v10878 = vxor.u32 %v10766, 2147516416
      %v10879 = vxor.u32 %v10767, 2147516416
      %v10880 = vxor.u32 %v10768, 2147516416
      %v10881 = vxor.u32 %v10769, 2147516416
      %v10882 = vxor.u32 %v10770, 2147516416
      %v10883 = vxor.u32 %v10771, 2147516416
      %v10884 = vxor.u32 %v10772, 2147516416
      %v10885 = vxor.u32 %v10773, 2147516416
      %v10886 = vxor.u32 %v10774, 2147516416
      %v10887 = vxor.u32 %v10775, 2147516416
      %v10888 = vxor.u32 %v10776, 2147516416
      %v10889 = vxor.u32 %v10777, 2147516416
      %v10890 = vxor.u32 %v10778, 2147516416
      %v10891 = vxor.u32 %v10779, 2147516416
      %v10892 = vxor.u32 %v10780, 2147516416
      %v10893 = vxor.u32 %v10781, 2147516416
      %v10894 = vxor.u32 %v10782, 2147516416
      %v10895 = vxor.u32 %v10783, 2147516416
      %v10896 = vxor.u32 %v10784, 2147516416
      %v10897 = vxor.u32 %v10785, 2147516416
      %v10898 = vxor.u32 %v10786, 2147516416
      %v10899 = vxor.u32 %v10787, 2147516416
      %v10900 = vxor.u32 %v10788, 2147516416
      %v10901 = vxor.u32 %v10789, 2147516416
      %v10902 = vxor.u32 %v10790, 2147516416
      %v10903 = vxor.u32 %v10791, 2147516416
      %v10904 = vxor.u32 %v10792, 2147516416
      %v10905 = vxor.u32 %v10793, 2147516416
      %v10906 = vxor.u32 %v10794, 2147516416
      %v10907 = vxor.u32 %v10795, 2147516416
      %v10908 = vxor.u32 %v10796, 2147516416
      %v10909 = vxor.u32 %v10797, 2147516416
      %v10910 = vxor.u32 %v10798, 2147516416
      %v10911 = vxor.u32 %v10799, 2147516416
      %v10912 = vxor.u32 %v10800, 2147516416
      %v10913 = vxor.u32 %v10801, 2147516416
      %v10914 = vxor.u32 %v10802, 2147516416
      %v10915 = vxor.u32 %v10803, 2147516416
      %v10916 = vxor.u32 %v10804, 2147516416
      %v10917 = vxor.u32 %v10805, 2147516416
      %v10918 = vxor.u32 %v10806, 2147516416
      %v10919 = vxor.u32 %v10807, 2147516416
      %v10920 = vxor.u32 %v10808, 2147516416
      %v10921 = vxor.u32 %v10809, 2147516416
      %v10922 = vxor.u32 %v10810, 2147516416
      %v10923 = vxor.u32 %v10811, 2147516416
      %v10924 = vxor.u32 %v10812, 2147516416
      %v10925 = vxor.u32 %v10813, 2147516416
      %v10926 = vxor.u32 %v10814, 2147516416
      %v10927 = vxor.u32 %v10815, 2147516416
      %v10928 = vxor.u32 %v10816, 2147516416
      %v10929 = vxor.u32 %v10817, 2147516416
      %v10930 = vxor.u32 %v10818, 2147516416
      %v10931 = vxor.u32 %v10819, 2147516416
      %v10932 = vxor.u32 %v10820, 2147516416
      %v10933 = vxor.u32 %v10821, 2147516416
      %v10934 = vxor.u32 %v10822, 2147516416
      %v10935 = vxor.u32 %v10823, 2147516416
      %v10936 = vxor.u32 %v10824, 2147516416
      %v10937 = vxor.u32 %v10825, 2147516416
      %v10938 = vxor.u32 %v10826, 2147516416
      %v10939 = vxor.u32 %v10827, 2147516416
      %v10940 = vxor.u32 %v10828, 2147516416
      %v10941 = vxor.u32 %v10829, 2147516416
      %v10942 = vxor.u32 %v10830, 2147516416
      %v10943 = vxor.u32 %v10831, 2147516416
      %v10944 = vxor.u32 %v10832, 2147516416
      %v10945 = vxor.u32 %v10833, 2147516416
      %v10946 = vxor.u32 %v10834, 2147516416
      %v10947 = vxor.u32 %v10835, 2147516416
      %v10948 = vxor.u32 %v10836, 2147516416
      %v10949 = vxor.u32 %v10837, 2147516416
      %v10950 = vxor.u32 %v10838, 2147516416
      %v10951 = vxor.u32 %v10839, 2147516416
      %v10952 = vxor.u32 %v10840, 2147516416
      %v10953 = vxor.u32 %v10841, 2147516416
      %v10954 = vxor.u32 %v10842, 2147516416
      %v10955 = vxor.u32 %v10843, 2147516416
      %v10956 = vxor.u32 %v10844, 2147516416
      %v10957 = vxor.u32 %v10845, 2147516416
      %v10958 = vxor.u32 %v10846, 2147516416
      %v10959 = vxor.u32 %v10847, 2147516416
      %v10960 = vxor.u32 %v10848, 2147516416
      %v10961 = vxor.u32 %v10849, 2147516416
      %v10962 = vxor.u32 %v10850, 2147516416
      %v10963 = vxor.u32 %v10851, 2147516416
      %v10965 = vmul.bf16 %v10852, 1069105081
      %v10966 = vpow.bf16.pop %v10965
      %v10968 = vmul.bf16 %v10853, 1069105081
      %v10969 = vpow.bf16.pop %v10968
      %v10971 = vmul.bf16 %v10854, 1069105081
      %v10972 = vpow.bf16.pop %v10971
      %v10974 = vmul.bf16 %v10855, 1069105081
      %v10975 = vpow.bf16.pop %v10974
      %v10977 = vmul.bf16 %v10856, 1069105081
      %v10978 = vpow.bf16.pop %v10977
      %v10980 = vmul.bf16 %v10857, 1069105081
      %v10981 = vpow.bf16.pop %v10980
      %v10983 = vmul.bf16 %v10858, 1069105081
      %v10984 = vpow.bf16.pop %v10983
      %v10986 = vmul.bf16 %v10859, 1069105081
      %v10987 = vpow.bf16.pop %v10986
      %v10989 = vmul.bf16 %v10860, 1069105081
      %v10990 = vpow.bf16.pop %v10989
      %v10992 = vmul.bf16 %v10861, 1069105081
      %v10993 = vpow.bf16.pop %v10992
      %v10995 = vmul.bf16 %v10862, 1069105081
      %v10996 = vpow.bf16.pop %v10995
      %v10998 = vmul.bf16 %v10863, 1069105081
      %v10999 = vpow.bf16.pop %v10998
      %v11001 = vmul.bf16 %v10864, 1069105081
      %v11002 = vpow.bf16.pop %v11001
      %v11004 = vmul.bf16 %v10865, 1069105081
      %v11005 = vpow.bf16.pop %v11004
      %v11007 = vmul.bf16 %v10866, 1069105081
      %v11008 = vpow.bf16.pop %v11007
      %v11010 = vmul.bf16 %v10867, 1069105081
      %v11011 = vpow.bf16.pop %v11010
      %v11013 = vmul.bf16 %v10868, 1069105081
      %v11014 = vpow.bf16.pop %v11013
      %v11016 = vmul.bf16 %v10869, 1069105081
      %v11017 = vpow.bf16.pop %v11016
      %v11019 = vmul.bf16 %v10870, 1069105081
      %v11020 = vpow.bf16.pop %v11019
      %v11022 = vmul.bf16 %v10871, 1069105081
      %v11023 = vpow.bf16.pop %v11022
      %v11025 = vmul.bf16 %v10872, 1069105081
      %v11026 = vpow.bf16.pop %v11025
      %v11028 = vmul.bf16 %v10873, 1069105081
      %v11029 = vpow.bf16.pop %v11028
      %v11031 = vmul.bf16 %v10874, 1069105081
      %v11032 = vpow.bf16.pop %v11031
      %v11034 = vmul.bf16 %v10875, 1069105081
      %v11035 = vpow.bf16.pop %v11034
      %v11037 = vmul.bf16 %v10876, 1069105081
      %v11038 = vpow.bf16.pop %v11037
      %v11040 = vmul.bf16 %v10877, 1069105081
      %v11041 = vpow.bf16.pop %v11040
      %v11043 = vmul.bf16 %v10878, 1069105081
      %v11044 = vpow.bf16.pop %v11043
      %v11046 = vmul.bf16 %v10879, 1069105081
      %v11047 = vpow.bf16.pop %v11046
      %v11049 = vmul.bf16 %v10880, 1069105081
      %v11050 = vpow.bf16.pop %v11049
      %v11052 = vmul.bf16 %v10881, 1069105081
      %v11053 = vpow.bf16.pop %v11052
      %v11055 = vmul.bf16 %v10882, 1069105081
      %v11056 = vpow.bf16.pop %v11055
      %v11058 = vmul.bf16 %v10883, 1069105081
      %v11059 = vpow.bf16.pop %v11058
      %v11061 = vmul.bf16 %v10884, 1069105081
      %v11062 = vpow.bf16.pop %v11061
      %v11064 = vmul.bf16 %v10885, 1069105081
      %v11065 = vpow.bf16.pop %v11064
      %v11067 = vmul.bf16 %v10886, 1069105081
      %v11068 = vpow.bf16.pop %v11067
      %v11070 = vmul.bf16 %v10887, 1069105081
      %v11071 = vpow.bf16.pop %v11070
      %v11073 = vmul.bf16 %v10888, 1069105081
      %v11074 = vpow.bf16.pop %v11073
      %v11076 = vmul.bf16 %v10889, 1069105081
      %v11077 = vpow.bf16.pop %v11076
      %v11079 = vmul.bf16 %v10890, 1069105081
      %v11080 = vpow.bf16.pop %v11079
      %v11082 = vmul.bf16 %v10891, 1069105081
      %v11083 = vpow.bf16.pop %v11082
      %v11085 = vmul.bf16 %v10892, 1069105081
      %v11086 = vpow.bf16.pop %v11085
      %v11088 = vmul.bf16 %v10893, 1069105081
      %v11089 = vpow.bf16.pop %v11088
      %v11091 = vmul.bf16 %v10894, 1069105081
      %v11092 = vpow.bf16.pop %v11091
      %v11094 = vmul.bf16 %v10895, 1069105081
      %v11095 = vpow.bf16.pop %v11094
      %v11097 = vmul.bf16 %v10896, 1069105081
      %v11098 = vpow.bf16.pop %v11097
      %v11100 = vmul.bf16 %v10897, 1069105081
      %v11101 = vpow.bf16.pop %v11100
      %v11103 = vmul.bf16 %v10898, 1069105081
      %v11104 = vpow.bf16.pop %v11103
      %v11106 = vmul.bf16 %v10899, 1069105081
      %v11107 = vpow.bf16.pop %v11106
      %v11109 = vmul.bf16 %v10900, 1069105081
      %v11110 = vpow.bf16.pop %v11109
      %v11112 = vmul.bf16 %v10901, 1069105081
      %v11113 = vpow.bf16.pop %v11112
      %v11115 = vmul.bf16 %v10902, 1069105081
      %v11116 = vpow.bf16.pop %v11115
      %v11118 = vmul.bf16 %v10903, 1069105081
      %v11119 = vpow.bf16.pop %v11118
      %v11121 = vmul.bf16 %v10904, 1069105081
      %v11122 = vpow.bf16.pop %v11121
      %v11124 = vmul.bf16 %v10905, 1069105081
      %v11125 = vpow.bf16.pop %v11124
      %v11127 = vmul.bf16 %v10906, 1069105081
      %v11128 = vpow.bf16.pop %v11127
      %v11130 = vmul.bf16 %v10907, 1069105081
      %v11131 = vpow.bf16.pop %v11130
      %v11133 = vmul.bf16 %v10908, 1069105081
      %v11134 = vpow.bf16.pop %v11133
      %v11136 = vmul.bf16 %v10909, 1069105081
      %v11137 = vpow.bf16.pop %v11136
      %v11139 = vmul.bf16 %v10910, 1069105081
      %v11140 = vpow.bf16.pop %v11139
      %v11142 = vmul.bf16 %v10911, 1069105081
      %v11143 = vpow.bf16.pop %v11142
      %v11145 = vmul.bf16 %v10912, 1069105081
      %v11146 = vpow.bf16.pop %v11145
      %v11148 = vmul.bf16 %v10913, 1069105081
      %v11149 = vpow.bf16.pop %v11148
      %v11151 = vmul.bf16 %v10914, 1069105081
      %v11152 = vpow.bf16.pop %v11151
      %v11154 = vmul.bf16 %v10915, 1069105081
      %v11155 = vpow.bf16.pop %v11154
      %v11157 = vmul.bf16 %v10916, 1069105081
      %v11158 = vpow.bf16.pop %v11157
      %v11160 = vmul.bf16 %v10917, 1069105081
      %v11161 = vpow.bf16.pop %v11160
      %v11163 = vmul.bf16 %v10918, 1069105081
      %v11164 = vpow.bf16.pop %v11163
      %v11166 = vmul.bf16 %v10919, 1069105081
      %v11167 = vpow.bf16.pop %v11166
      %v11169 = vmul.bf16 %v10920, 1069105081
      %v11170 = vpow.bf16.pop %v11169
      %v11172 = vmul.bf16 %v10921, 1069105081
      %v11173 = vpow.bf16.pop %v11172
      %v11175 = vmul.bf16 %v10922, 1069105081
      %v11176 = vpow.bf16.pop %v11175
      %v11178 = vmul.bf16 %v10923, 1069105081
      %v11179 = vpow.bf16.pop %v11178
      %v11181 = vmul.bf16 %v10924, 1069105081
      %v11182 = vpow.bf16.pop %v11181
      %v11184 = vmul.bf16 %v10925, 1069105081
      %v11185 = vpow.bf16.pop %v11184
      %v11187 = vmul.bf16 %v10926, 1069105081
      %v11188 = vpow.bf16.pop %v11187
      %v11190 = vmul.bf16 %v10927, 1069105081
      %v11191 = vpow.bf16.pop %v11190
      %v11193 = vmul.bf16 %v10928, 1069105081
      %v11194 = vpow.bf16.pop %v11193
      %v11196 = vmul.bf16 %v10929, 1069105081
      %v11197 = vpow.bf16.pop %v11196
      %v11199 = vmul.bf16 %v10930, 1069105081
      %v11200 = vpow.bf16.pop %v11199
      %v11202 = vmul.bf16 %v10931, 1069105081
      %v11203 = vpow.bf16.pop %v11202
      %v11205 = vmul.bf16 %v10932, 1069105081
      %v11206 = vpow.bf16.pop %v11205
      %v11208 = vmul.bf16 %v10933, 1069105081
      %v11209 = vpow.bf16.pop %v11208
      %v11211 = vmul.bf16 %v10934, 1069105081
      %v11212 = vpow.bf16.pop %v11211
      %v11214 = vmul.bf16 %v10935, 1069105081
      %v11215 = vpow.bf16.pop %v11214
      %v11217 = vmul.bf16 %v10936, 1069105081
      %v11218 = vpow.bf16.pop %v11217
      %v11220 = vmul.bf16 %v10937, 1069105081
      %v11221 = vpow.bf16.pop %v11220
      %v11223 = vmul.bf16 %v10938, 1069105081
      %v11224 = vpow.bf16.pop %v11223
      %v11226 = vmul.bf16 %v10939, 1069105081
      %v11227 = vpow.bf16.pop %v11226
      %v11229 = vmul.bf16 %v10940, 1069105081
      %v11230 = vpow.bf16.pop %v11229
      %v11232 = vmul.bf16 %v10941, 1069105081
      %v11233 = vpow.bf16.pop %v11232
      %v11235 = vmul.bf16 %v10942, 1069105081
      %v11236 = vpow.bf16.pop %v11235
      %v11238 = vmul.bf16 %v10943, 1069105081
      %v11239 = vpow.bf16.pop %v11238
      %v11241 = vmul.bf16 %v10944, 1069105081
      %v11242 = vpow.bf16.pop %v11241
      %v11244 = vmul.bf16 %v10945, 1069105081
      %v11245 = vpow.bf16.pop %v11244
      %v11247 = vmul.bf16 %v10946, 1069105081
      %v11248 = vpow.bf16.pop %v11247
      %v11250 = vmul.bf16 %v10947, 1069105081
      %v11251 = vpow.bf16.pop %v11250
      %v11253 = vmul.bf16 %v10948, 1069105081
      %v11254 = vpow.bf16.pop %v11253
      %v11256 = vmul.bf16 %v10949, 1069105081
      %v11257 = vpow.bf16.pop %v11256
      %v11259 = vmul.bf16 %v10950, 1069105081
      %v11260 = vpow.bf16.pop %v11259
      %v11262 = vmul.bf16 %v10951, 1069105081
      %v11263 = vpow.bf16.pop %v11262
      %v11265 = vmul.bf16 %v10952, 1069105081
      %v11266 = vpow.bf16.pop %v11265
      %v11268 = vmul.bf16 %v10953, 1069105081
      %v11269 = vpow.bf16.pop %v11268
      %v11271 = vmul.bf16 %v10954, 1069105081
      %v11272 = vpow.bf16.pop %v11271
      %v11274 = vmul.bf16 %v10955, 1069105081
      %v11275 = vpow.bf16.pop %v11274
      %v11277 = vmul.bf16 %v10956, 1069105081
      %v11278 = vpow.bf16.pop %v11277
      %v11280 = vmul.bf16 %v10957, 1069105081
      %v11281 = vpow.bf16.pop %v11280
      %v11283 = vmul.bf16 %v10958, 1069105081
      %v11284 = vpow.bf16.pop %v11283
      %v11286 = vmul.bf16 %v10959, 1069105081
      %v11287 = vpow.bf16.pop %v11286
      %v11289 = vmul.bf16 %v10960, 1069105081
      %v11290 = vpow.bf16.pop %v11289
      %v11292 = vmul.bf16 %v10961, 1069105081
      %v11293 = vpow.bf16.pop %v11292
      %v11295 = vmul.bf16 %v10962, 1069105081
      %v11296 = vpow.bf16.pop %v11295
      %v11298 = vmul.bf16 %v10963, 1069105081
      %v11299 = vpow.bf16.pop %v11298
      %v11300 = vadd.bf16 %v10966, 1065369472
      %v11301 = vadd.bf16 %v10969, 1065369472
      %v11302 = vadd.bf16 %v10972, 1065369472
      %v11303 = vadd.bf16 %v10975, 1065369472
      %v11304 = vadd.bf16 %v10978, 1065369472
      %v11305 = vadd.bf16 %v10981, 1065369472
      %v11306 = vadd.bf16 %v10984, 1065369472
      %v11307 = vadd.bf16 %v10987, 1065369472
      %v11308 = vadd.bf16 %v10990, 1065369472
      %v11309 = vadd.bf16 %v10993, 1065369472
      %v11310 = vadd.bf16 %v10996, 1065369472
      %v11311 = vadd.bf16 %v10999, 1065369472
      %v11312 = vadd.bf16 %v11002, 1065369472
      %v11313 = vadd.bf16 %v11005, 1065369472
      %v11314 = vadd.bf16 %v11008, 1065369472
      %v11315 = vadd.bf16 %v11011, 1065369472
      %v11316 = vadd.bf16 %v11014, 1065369472
      %v11317 = vadd.bf16 %v11017, 1065369472
      %v11318 = vadd.bf16 %v11020, 1065369472
      %v11319 = vadd.bf16 %v11023, 1065369472
      %v11320 = vadd.bf16 %v11026, 1065369472
      %v11321 = vadd.bf16 %v11029, 1065369472
      %v11322 = vadd.bf16 %v11032, 1065369472
      %v11323 = vadd.bf16 %v11035, 1065369472
      %v11324 = vadd.bf16 %v11038, 1065369472
      %v11325 = vadd.bf16 %v11041, 1065369472
      %v11326 = vadd.bf16 %v11044, 1065369472
      %v11327 = vadd.bf16 %v11047, 1065369472
      %v11328 = vadd.bf16 %v11050, 1065369472
      %v11329 = vadd.bf16 %v11053, 1065369472
      %v11330 = vadd.bf16 %v11056, 1065369472
      %v11331 = vadd.bf16 %v11059, 1065369472
      %v11332 = vadd.bf16 %v11062, 1065369472
      %v11333 = vadd.bf16 %v11065, 1065369472
      %v11334 = vadd.bf16 %v11068, 1065369472
      %v11335 = vadd.bf16 %v11071, 1065369472
      %v11336 = vadd.bf16 %v11074, 1065369472
      %v11337 = vadd.bf16 %v11077, 1065369472
      %v11338 = vadd.bf16 %v11080, 1065369472
      %v11339 = vadd.bf16 %v11083, 1065369472
      %v11340 = vadd.bf16 %v11086, 1065369472
      %v11341 = vadd.bf16 %v11089, 1065369472
      %v11342 = vadd.bf16 %v11092, 1065369472
      %v11343 = vadd.bf16 %v11095, 1065369472
      %v11344 = vadd.bf16 %v11098, 1065369472
      %v11345 = vadd.bf16 %v11101, 1065369472
      %v11346 = vadd.bf16 %v11104, 1065369472
      %v11347 = vadd.bf16 %v11107, 1065369472
      %v11348 = vadd.bf16 %v11110, 1065369472
      %v11349 = vadd.bf16 %v11113, 1065369472
      %v11350 = vadd.bf16 %v11116, 1065369472
      %v11351 = vadd.bf16 %v11119, 1065369472
      %v11352 = vadd.bf16 %v11122, 1065369472
      %v11353 = vadd.bf16 %v11125, 1065369472
      %v11354 = vadd.bf16 %v11128, 1065369472
      %v11355 = vadd.bf16 %v11131, 1065369472
      %v11356 = vadd.bf16 %v11134, 1065369472
      %v11357 = vadd.bf16 %v11137, 1065369472
      %v11358 = vadd.bf16 %v11140, 1065369472
      %v11359 = vadd.bf16 %v11143, 1065369472
      %v11360 = vadd.bf16 %v11146, 1065369472
      %v11361 = vadd.bf16 %v11149, 1065369472
      %v11362 = vadd.bf16 %v11152, 1065369472
      %v11363 = vadd.bf16 %v11155, 1065369472
      %v11364 = vadd.bf16 %v11158, 1065369472
      %v11365 = vadd.bf16 %v11161, 1065369472
      %v11366 = vadd.bf16 %v11164, 1065369472
      %v11367 = vadd.bf16 %v11167, 1065369472
      %v11368 = vadd.bf16 %v11170, 1065369472
      %v11369 = vadd.bf16 %v11173, 1065369472
      %v11370 = vadd.bf16 %v11176, 1065369472
      %v11371 = vadd.bf16 %v11179, 1065369472
      %v11372 = vadd.bf16 %v11182, 1065369472
      %v11373 = vadd.bf16 %v11185, 1065369472
      %v11374 = vadd.bf16 %v11188, 1065369472
      %v11375 = vadd.bf16 %v11191, 1065369472
      %v11376 = vadd.bf16 %v11194, 1065369472
      %v11377 = vadd.bf16 %v11197, 1065369472
      %v11378 = vadd.bf16 %v11200, 1065369472
      %v11379 = vadd.bf16 %v11203, 1065369472
      %v11380 = vadd.bf16 %v11206, 1065369472
      %v11381 = vadd.bf16 %v11209, 1065369472
      %v11382 = vadd.bf16 %v11212, 1065369472
      %v11383 = vadd.bf16 %v11215, 1065369472
      %v11384 = vadd.bf16 %v11218, 1065369472
      %v11385 = vadd.bf16 %v11221, 1065369472
      %v11386 = vadd.bf16 %v11224, 1065369472
      %v11387 = vadd.bf16 %v11227, 1065369472
      %v11388 = vadd.bf16 %v11230, 1065369472
      %v11389 = vadd.bf16 %v11233, 1065369472
      %v11390 = vadd.bf16 %v11236, 1065369472
      %v11391 = vadd.bf16 %v11239, 1065369472
      %v11392 = vadd.bf16 %v11242, 1065369472
      %v11393 = vadd.bf16 %v11245, 1065369472
      %v11394 = vadd.bf16 %v11248, 1065369472
      %v11395 = vadd.bf16 %v11251, 1065369472
      %v11396 = vadd.bf16 %v11254, 1065369472
      %v11397 = vadd.bf16 %v11257, 1065369472
      %v11398 = vadd.bf16 %v11260, 1065369472
      %v11399 = vadd.bf16 %v11263, 1065369472
      %v11400 = vadd.bf16 %v11266, 1065369472
      %v11401 = vadd.bf16 %v11269, 1065369472
      %v11402 = vadd.bf16 %v11272, 1065369472
      %v11403 = vadd.bf16 %v11275, 1065369472
      %v11404 = vadd.bf16 %v11278, 1065369472
      %v11405 = vadd.bf16 %v11281, 1065369472
      %v11406 = vadd.bf16 %v11284, 1065369472
      %v11407 = vadd.bf16 %v11287, 1065369472
      %v11408 = vadd.bf16 %v11290, 1065369472
      %v11409 = vadd.bf16 %v11293, 1065369472
      %v11410 = vadd.bf16 %v11296, 1065369472
      %v11411 = vadd.bf16 %v11299, 1065369472
      %v11412 = vrcp.bf16.pop %v11300
      %v11413 = vmul.bf16 1065369472, %v11412
      %v11414 = vrcp.bf16.pop %v11301
      %v11415 = vmul.bf16 1065369472, %v11414
      %v11416 = vrcp.bf16.pop %v11302
      %v11417 = vmul.bf16 1065369472, %v11416
      %v11418 = vrcp.bf16.pop %v11303
      %v11419 = vmul.bf16 1065369472, %v11418
      %v11420 = vrcp.bf16.pop %v11304
      %v11421 = vmul.bf16 1065369472, %v11420
      %v11422 = vrcp.bf16.pop %v11305
      %v11423 = vmul.bf16 1065369472, %v11422
      %v11424 = vrcp.bf16.pop %v11306
      %v11425 = vmul.bf16 1065369472, %v11424
      %v11426 = vrcp.bf16.pop %v11307
      %v11427 = vmul.bf16 1065369472, %v11426
      %v11428 = vrcp.bf16.pop %v11308
      %v11429 = vmul.bf16 1065369472, %v11428
      %v11430 = vrcp.bf16.pop %v11309
      %v11431 = vmul.bf16 1065369472, %v11430
      %v11432 = vrcp.bf16.pop %v11310
      %v11433 = vmul.bf16 1065369472, %v11432
      %v11434 = vrcp.bf16.pop %v11311
      %v11435 = vmul.bf16 1065369472, %v11434
      %v11436 = vrcp.bf16.pop %v11312
      %v11437 = vmul.bf16 1065369472, %v11436
      %v11438 = vrcp.bf16.pop %v11313
      %v11439 = vmul.bf16 1065369472, %v11438
      %v11440 = vrcp.bf16.pop %v11314
      %v11441 = vmul.bf16 1065369472, %v11440
      %v11442 = vrcp.bf16.pop %v11315
      %v11443 = vmul.bf16 1065369472, %v11442
      %v11444 = vrcp.bf16.pop %v11316
      %v11445 = vmul.bf16 1065369472, %v11444
      %v11446 = vrcp.bf16.pop %v11317
      %v11447 = vmul.bf16 1065369472, %v11446
      %v11448 = vrcp.bf16.pop %v11318
      %v11449 = vmul.bf16 1065369472, %v11448
      %v11450 = vrcp.bf16.pop %v11319
      %v11451 = vmul.bf16 1065369472, %v11450
      %v11452 = vrcp.bf16.pop %v11320
      %v11453 = vmul.bf16 1065369472, %v11452
      %v11454 = vrcp.bf16.pop %v11321
      %v11455 = vmul.bf16 1065369472, %v11454
      %v11456 = vrcp.bf16.pop %v11322
      %v11457 = vmul.bf16 1065369472, %v11456
      %v11458 = vrcp.bf16.pop %v11323
      %v11459 = vmul.bf16 1065369472, %v11458
      %v11460 = vrcp.bf16.pop %v11324
      %v11461 = vmul.bf16 1065369472, %v11460
      %v11462 = vrcp.bf16.pop %v11325
      %v11463 = vmul.bf16 1065369472, %v11462
      %v11464 = vrcp.bf16.pop %v11326
      %v11465 = vmul.bf16 1065369472, %v11464
      %v11466 = vrcp.bf16.pop %v11327
      %v11467 = vmul.bf16 1065369472, %v11466
      %v11468 = vrcp.bf16.pop %v11328
      %v11469 = vmul.bf16 1065369472, %v11468
      %v11470 = vrcp.bf16.pop %v11329
      %v11471 = vmul.bf16 1065369472, %v11470
      %v11472 = vrcp.bf16.pop %v11330
      %v11473 = vmul.bf16 1065369472, %v11472
      %v11474 = vrcp.bf16.pop %v11331
      %v11475 = vmul.bf16 1065369472, %v11474
      %v11476 = vrcp.bf16.pop %v11332
      %v11477 = vmul.bf16 1065369472, %v11476
      %v11478 = vrcp.bf16.pop %v11333
      %v11479 = vmul.bf16 1065369472, %v11478
      %v11480 = vrcp.bf16.pop %v11334
      %v11481 = vmul.bf16 1065369472, %v11480
      %v11482 = vrcp.bf16.pop %v11335
      %v11483 = vmul.bf16 1065369472, %v11482
      %v11484 = vrcp.bf16.pop %v11336
      %v11485 = vmul.bf16 1065369472, %v11484
      %v11486 = vrcp.bf16.pop %v11337
      %v11487 = vmul.bf16 1065369472, %v11486
      %v11488 = vrcp.bf16.pop %v11338
      %v11489 = vmul.bf16 1065369472, %v11488
      %v11490 = vrcp.bf16.pop %v11339
      %v11491 = vmul.bf16 1065369472, %v11490
      %v11492 = vrcp.bf16.pop %v11340
      %v11493 = vmul.bf16 1065369472, %v11492
      %v11494 = vrcp.bf16.pop %v11341
      %v11495 = vmul.bf16 1065369472, %v11494
      %v11496 = vrcp.bf16.pop %v11342
      %v11497 = vmul.bf16 1065369472, %v11496
      %v11498 = vrcp.bf16.pop %v11343
      %v11499 = vmul.bf16 1065369472, %v11498
      %v11500 = vrcp.bf16.pop %v11344
      %v11501 = vmul.bf16 1065369472, %v11500
      %v11502 = vrcp.bf16.pop %v11345
      %v11503 = vmul.bf16 1065369472, %v11502
      %v11504 = vrcp.bf16.pop %v11346
      %v11505 = vmul.bf16 1065369472, %v11504
      %v11506 = vrcp.bf16.pop %v11347
      %v11507 = vmul.bf16 1065369472, %v11506
      %v11508 = vrcp.bf16.pop %v11348
      %v11509 = vmul.bf16 1065369472, %v11508
      %v11510 = vrcp.bf16.pop %v11349
      %v11511 = vmul.bf16 1065369472, %v11510
      %v11512 = vrcp.bf16.pop %v11350
      %v11513 = vmul.bf16 1065369472, %v11512
      %v11514 = vrcp.bf16.pop %v11351
      %v11515 = vmul.bf16 1065369472, %v11514
      %v11516 = vrcp.bf16.pop %v11352
      %v11517 = vmul.bf16 1065369472, %v11516
      %v11518 = vrcp.bf16.pop %v11353
      %v11519 = vmul.bf16 1065369472, %v11518
      %v11520 = vrcp.bf16.pop %v11354
      %v11521 = vmul.bf16 1065369472, %v11520
      %v11522 = vrcp.bf16.pop %v11355
      %v11523 = vmul.bf16 1065369472, %v11522
      %v11524 = vrcp.bf16.pop %v11356
      %v11525 = vmul.bf16 1065369472, %v11524
      %v11526 = vrcp.bf16.pop %v11357
      %v11527 = vmul.bf16 1065369472, %v11526
      %v11528 = vrcp.bf16.pop %v11358
      %v11529 = vmul.bf16 1065369472, %v11528
      %v11530 = vrcp.bf16.pop %v11359
      %v11531 = vmul.bf16 1065369472, %v11530
      %v11532 = vrcp.bf16.pop %v11360
      %v11533 = vmul.bf16 1065369472, %v11532
      %v11534 = vrcp.bf16.pop %v11361
      %v11535 = vmul.bf16 1065369472, %v11534
      %v11536 = vrcp.bf16.pop %v11362
      %v11537 = vmul.bf16 1065369472, %v11536
      %v11538 = vrcp.bf16.pop %v11363
      %v11539 = vmul.bf16 1065369472, %v11538
      %v11540 = vrcp.bf16.pop %v11364
      %v11541 = vmul.bf16 1065369472, %v11540
      %v11542 = vrcp.bf16.pop %v11365
      %v11543 = vmul.bf16 1065369472, %v11542
      %v11544 = vrcp.bf16.pop %v11366
      %v11545 = vmul.bf16 1065369472, %v11544
      %v11546 = vrcp.bf16.pop %v11367
      %v11547 = vmul.bf16 1065369472, %v11546
      %v11548 = vrcp.bf16.pop %v11368
      %v11549 = vmul.bf16 1065369472, %v11548
      %v11550 = vrcp.bf16.pop %v11369
      %v11551 = vmul.bf16 1065369472, %v11550
      %v11552 = vrcp.bf16.pop %v11370
      %v11553 = vmul.bf16 1065369472, %v11552
      %v11554 = vrcp.bf16.pop %v11371
      %v11555 = vmul.bf16 1065369472, %v11554
      %v11556 = vrcp.bf16.pop %v11372
      %v11557 = vmul.bf16 1065369472, %v11556
      %v11558 = vrcp.bf16.pop %v11373
      %v11559 = vmul.bf16 1065369472, %v11558
      %v11560 = vrcp.bf16.pop %v11374
      %v11561 = vmul.bf16 1065369472, %v11560
      %v11562 = vrcp.bf16.pop %v11375
      %v11563 = vmul.bf16 1065369472, %v11562
      %v11564 = vrcp.bf16.pop %v11376
      %v11565 = vmul.bf16 1065369472, %v11564
      %v11566 = vrcp.bf16.pop %v11377
      %v11567 = vmul.bf16 1065369472, %v11566
      %v11568 = vrcp.bf16.pop %v11378
      %v11569 = vmul.bf16 1065369472, %v11568
      %v11570 = vrcp.bf16.pop %v11379
      %v11571 = vmul.bf16 1065369472, %v11570
      %v11572 = vrcp.bf16.pop %v11380
      %v11573 = vmul.bf16 1065369472, %v11572
      %v11574 = vrcp.bf16.pop %v11381
      %v11575 = vmul.bf16 1065369472, %v11574
      %v11576 = vrcp.bf16.pop %v11382
      %v11577 = vmul.bf16 1065369472, %v11576
      %v11578 = vrcp.bf16.pop %v11383
      %v11579 = vmul.bf16 1065369472, %v11578
      %v11580 = vrcp.bf16.pop %v11384
      %v11581 = vmul.bf16 1065369472, %v11580
      %v11582 = vrcp.bf16.pop %v11385
      %v11583 = vmul.bf16 1065369472, %v11582
      %v11584 = vrcp.bf16.pop %v11386
      %v11585 = vmul.bf16 1065369472, %v11584
      %v11586 = vrcp.bf16.pop %v11387
      %v11587 = vmul.bf16 1065369472, %v11586
      %v11588 = vrcp.bf16.pop %v11388
      %v11589 = vmul.bf16 1065369472, %v11588
      %v11590 = vrcp.bf16.pop %v11389
      %v11591 = vmul.bf16 1065369472, %v11590
      %v11592 = vrcp.bf16.pop %v11390
      %v11593 = vmul.bf16 1065369472, %v11592
      %v11594 = vrcp.bf16.pop %v11391
      %v11595 = vmul.bf16 1065369472, %v11594
      %v11596 = vrcp.bf16.pop %v11392
      %v11597 = vmul.bf16 1065369472, %v11596
      %v11598 = vrcp.bf16.pop %v11393
      %v11599 = vmul.bf16 1065369472, %v11598
      %v11600 = vrcp.bf16.pop %v11394
      %v11601 = vmul.bf16 1065369472, %v11600
      %v11602 = vrcp.bf16.pop %v11395
      %v11603 = vmul.bf16 1065369472, %v11602
      %v11604 = vrcp.bf16.pop %v11396
      %v11605 = vmul.bf16 1065369472, %v11604
      %v11606 = vrcp.bf16.pop %v11397
      %v11607 = vmul.bf16 1065369472, %v11606
      %v11608 = vrcp.bf16.pop %v11398
      %v11609 = vmul.bf16 1065369472, %v11608
      %v11610 = vrcp.bf16.pop %v11399
      %v11611 = vmul.bf16 1065369472, %v11610
      %v11612 = vrcp.bf16.pop %v11400
      %v11613 = vmul.bf16 1065369472, %v11612
      %v11614 = vrcp.bf16.pop %v11401
      %v11615 = vmul.bf16 1065369472, %v11614
      %v11616 = vrcp.bf16.pop %v11402
      %v11617 = vmul.bf16 1065369472, %v11616
      %v11618 = vrcp.bf16.pop %v11403
      %v11619 = vmul.bf16 1065369472, %v11618
      %v11620 = vrcp.bf16.pop %v11404
      %v11621 = vmul.bf16 1065369472, %v11620
      %v11622 = vrcp.bf16.pop %v11405
      %v11623 = vmul.bf16 1065369472, %v11622
      %v11624 = vrcp.bf16.pop %v11406
      %v11625 = vmul.bf16 1065369472, %v11624
      %v11626 = vrcp.bf16.pop %v11407
      %v11627 = vmul.bf16 1065369472, %v11626
      %v11628 = vrcp.bf16.pop %v11408
      %v11629 = vmul.bf16 1065369472, %v11628
      %v11630 = vrcp.bf16.pop %v11409
      %v11631 = vmul.bf16 1065369472, %v11630
      %v11632 = vrcp.bf16.pop %v11410
      %v11633 = vmul.bf16 1065369472, %v11632
      %v11634 = vrcp.bf16.pop %v11411
      %v11635 = vmul.bf16 1065369472, %v11634
      %v11748 = vunpack.c.l.b16 %v11413
      %v11749 = vunpack.c.l.b16 %v11415
      %v11750 = vunpack.c.l.b16 %v11417
      %v11751 = vunpack.c.l.b16 %v11419
      %v11752 = vunpack.c.l.b16 %v11421
      %v11753 = vunpack.c.l.b16 %v11423
      %v11754 = vunpack.c.l.b16 %v11425
      %v11755 = vunpack.c.h.b16 %v11413
      %v11756 = vunpack.c.h.b16 %v11415
      %v11757 = vunpack.c.h.b16 %v11417
      %v11758 = vunpack.c.h.b16 %v11419
      %v11759 = vunpack.c.h.b16 %v11421
      %v11760 = vunpack.c.h.b16 %v11423
      %v11761 = vunpack.c.h.b16 %v11425
      %v11762 = vunpack.c.l.b16 %v11427
      %v11763 = vunpack.c.l.b16 %v11429
      %v11764 = vunpack.c.l.b16 %v11431
      %v11765 = vunpack.c.l.b16 %v11433
      %v11766 = vunpack.c.l.b16 %v11435
      %v11767 = vunpack.c.l.b16 %v11437
      %v11768 = vunpack.c.l.b16 %v11439
      %v11769 = vunpack.c.h.b16 %v11427
      %v11770 = vunpack.c.h.b16 %v11429
      %v11771 = vunpack.c.h.b16 %v11431
      %v11772 = vunpack.c.h.b16 %v11433
      %v11773 = vunpack.c.h.b16 %v11435
      %v11774 = vunpack.c.h.b16 %v11437
      %v11775 = vunpack.c.h.b16 %v11439
      %v11776 = vunpack.c.l.b16 %v11441
      %v11777 = vunpack.c.l.b16 %v11443
      %v11778 = vunpack.c.l.b16 %v11445
      %v11779 = vunpack.c.l.b16 %v11447
      %v11780 = vunpack.c.l.b16 %v11449
      %v11781 = vunpack.c.l.b16 %v11451
      %v11782 = vunpack.c.l.b16 %v11453
      %v11783 = vunpack.c.h.b16 %v11441
      %v11784 = vunpack.c.h.b16 %v11443
      %v11785 = vunpack.c.h.b16 %v11445
      %v11786 = vunpack.c.h.b16 %v11447
      %v11787 = vunpack.c.h.b16 %v11449
      %v11788 = vunpack.c.h.b16 %v11451
      %v11789 = vunpack.c.h.b16 %v11453
      %v11790 = vunpack.c.l.b16 %v11455
      %v11791 = vunpack.c.l.b16 %v11457
      %v11792 = vunpack.c.l.b16 %v11459
      %v11793 = vunpack.c.l.b16 %v11461
      %v11794 = vunpack.c.l.b16 %v11463
      %v11795 = vunpack.c.l.b16 %v11465
      %v11796 = vunpack.c.l.b16 %v11467
      %v11797 = vunpack.c.h.b16 %v11455
      %v11798 = vunpack.c.h.b16 %v11457
      %v11799 = vunpack.c.h.b16 %v11459
      %v11800 = vunpack.c.h.b16 %v11461
      %v11801 = vunpack.c.h.b16 %v11463
      %v11802 = vunpack.c.h.b16 %v11465
      %v11803 = vunpack.c.h.b16 %v11467
      %v11804 = vunpack.c.l.b16 %v11469
      %v11805 = vunpack.c.l.b16 %v11471
      %v11806 = vunpack.c.l.b16 %v11473
      %v11807 = vunpack.c.l.b16 %v11475
      %v11808 = vunpack.c.l.b16 %v11477
      %v11809 = vunpack.c.l.b16 %v11479
      %v11810 = vunpack.c.l.b16 %v11481
      %v11811 = vunpack.c.h.b16 %v11469
      %v11812 = vunpack.c.h.b16 %v11471
      %v11813 = vunpack.c.h.b16 %v11473
      %v11814 = vunpack.c.h.b16 %v11475
      %v11815 = vunpack.c.h.b16 %v11477
      %v11816 = vunpack.c.h.b16 %v11479
      %v11817 = vunpack.c.h.b16 %v11481
      %v11818 = vunpack.c.l.b16 %v11483
      %v11819 = vunpack.c.l.b16 %v11485
      %v11820 = vunpack.c.l.b16 %v11487
      %v11821 = vunpack.c.l.b16 %v11489
      %v11822 = vunpack.c.l.b16 %v11491
      %v11823 = vunpack.c.l.b16 %v11493
      %v11824 = vunpack.c.l.b16 %v11495
      %v11825 = vunpack.c.h.b16 %v11483
      %v11826 = vunpack.c.h.b16 %v11485
      %v11827 = vunpack.c.h.b16 %v11487
      %v11828 = vunpack.c.h.b16 %v11489
      %v11829 = vunpack.c.h.b16 %v11491
      %v11830 = vunpack.c.h.b16 %v11493
      %v11831 = vunpack.c.h.b16 %v11495
      %v11832 = vunpack.c.l.b16 %v11497
      %v11833 = vunpack.c.l.b16 %v11499
      %v11834 = vunpack.c.l.b16 %v11501
      %v11835 = vunpack.c.l.b16 %v11503
      %v11836 = vunpack.c.l.b16 %v11505
      %v11837 = vunpack.c.l.b16 %v11507
      %v11838 = vunpack.c.l.b16 %v11509
      %v11839 = vunpack.c.h.b16 %v11497
      %v11840 = vunpack.c.h.b16 %v11499
      %v11841 = vunpack.c.h.b16 %v11501
      %v11842 = vunpack.c.h.b16 %v11503
      %v11843 = vunpack.c.h.b16 %v11505
      %v11844 = vunpack.c.h.b16 %v11507
      %v11845 = vunpack.c.h.b16 %v11509
      %v11846 = vunpack.c.l.b16 %v11511
      %v11847 = vunpack.c.l.b16 %v11513
      %v11848 = vunpack.c.l.b16 %v11515
      %v11849 = vunpack.c.l.b16 %v11517
      %v11850 = vunpack.c.l.b16 %v11519
      %v11851 = vunpack.c.l.b16 %v11521
      %v11852 = vunpack.c.l.b16 %v11523
      %v11853 = vunpack.c.h.b16 %v11511
      %v11854 = vunpack.c.h.b16 %v11513
      %v11855 = vunpack.c.h.b16 %v11515
      %v11856 = vunpack.c.h.b16 %v11517
      %v11857 = vunpack.c.h.b16 %v11519
      %v11858 = vunpack.c.h.b16 %v11521
      %v11859 = vunpack.c.h.b16 %v11523
      %v11860 = vunpack.c.l.b16 %v11525
      %v11861 = vunpack.c.l.b16 %v11527
      %v11862 = vunpack.c.l.b16 %v11529
      %v11863 = vunpack.c.l.b16 %v11531
      %v11864 = vunpack.c.l.b16 %v11533
      %v11865 = vunpack.c.l.b16 %v11535
      %v11866 = vunpack.c.l.b16 %v11537
      %v11867 = vunpack.c.h.b16 %v11525
      %v11868 = vunpack.c.h.b16 %v11527
      %v11869 = vunpack.c.h.b16 %v11529
      %v11870 = vunpack.c.h.b16 %v11531
      %v11871 = vunpack.c.h.b16 %v11533
      %v11872 = vunpack.c.h.b16 %v11535
      %v11873 = vunpack.c.h.b16 %v11537
      %v11874 = vunpack.c.l.b16 %v11539
      %v11875 = vunpack.c.l.b16 %v11541
      %v11876 = vunpack.c.l.b16 %v11543
      %v11877 = vunpack.c.l.b16 %v11545
      %v11878 = vunpack.c.l.b16 %v11547
      %v11879 = vunpack.c.l.b16 %v11549
      %v11880 = vunpack.c.l.b16 %v11551
      %v11881 = vunpack.c.h.b16 %v11539
      %v11882 = vunpack.c.h.b16 %v11541
      %v11883 = vunpack.c.h.b16 %v11543
      %v11884 = vunpack.c.h.b16 %v11545
      %v11885 = vunpack.c.h.b16 %v11547
      %v11886 = vunpack.c.h.b16 %v11549
      %v11887 = vunpack.c.h.b16 %v11551
      %v11888 = vunpack.c.l.b16 %v11553
      %v11889 = vunpack.c.l.b16 %v11555
      %v11890 = vunpack.c.l.b16 %v11557
      %v11891 = vunpack.c.l.b16 %v11559
      %v11892 = vunpack.c.l.b16 %v11561
      %v11893 = vunpack.c.l.b16 %v11563
      %v11894 = vunpack.c.l.b16 %v11565
      %v11895 = vunpack.c.h.b16 %v11553
      %v11896 = vunpack.c.h.b16 %v11555
      %v11897 = vunpack.c.h.b16 %v11557
      %v11898 = vunpack.c.h.b16 %v11559
      %v11899 = vunpack.c.h.b16 %v11561
      %v11900 = vunpack.c.h.b16 %v11563
      %v11901 = vunpack.c.h.b16 %v11565
      %v11902 = vunpack.c.l.b16 %v11567
      %v11903 = vunpack.c.l.b16 %v11569
      %v11904 = vunpack.c.l.b16 %v11571
      %v11905 = vunpack.c.l.b16 %v11573
      %v11906 = vunpack.c.l.b16 %v11575
      %v11907 = vunpack.c.l.b16 %v11577
      %v11908 = vunpack.c.l.b16 %v11579
      %v11909 = vunpack.c.h.b16 %v11567
      %v11910 = vunpack.c.h.b16 %v11569
      %v11911 = vunpack.c.h.b16 %v11571
      %v11912 = vunpack.c.h.b16 %v11573
      %v11913 = vunpack.c.h.b16 %v11575
      %v11914 = vunpack.c.h.b16 %v11577
      %v11915 = vunpack.c.h.b16 %v11579
      %v11916 = vunpack.c.l.b16 %v11581
      %v11917 = vunpack.c.l.b16 %v11583
      %v11918 = vunpack.c.l.b16 %v11585
      %v11919 = vunpack.c.l.b16 %v11587
      %v11920 = vunpack.c.l.b16 %v11589
      %v11921 = vunpack.c.l.b16 %v11591
      %v11922 = vunpack.c.l.b16 %v11593
      %v11923 = vunpack.c.h.b16 %v11581
      %v11924 = vunpack.c.h.b16 %v11583
      %v11925 = vunpack.c.h.b16 %v11585
      %v11926 = vunpack.c.h.b16 %v11587
      %v11927 = vunpack.c.h.b16 %v11589
      %v11928 = vunpack.c.h.b16 %v11591
      %v11929 = vunpack.c.h.b16 %v11593
      %v11930 = vunpack.c.l.b16 %v11595
      %v11931 = vunpack.c.l.b16 %v11597
      %v11932 = vunpack.c.l.b16 %v11599
      %v11933 = vunpack.c.l.b16 %v11601
      %v11934 = vunpack.c.l.b16 %v11603
      %v11935 = vunpack.c.l.b16 %v11605
      %v11936 = vunpack.c.l.b16 %v11607
      %v11937 = vunpack.c.h.b16 %v11595
      %v11938 = vunpack.c.h.b16 %v11597
      %v11939 = vunpack.c.h.b16 %v11599
      %v11940 = vunpack.c.h.b16 %v11601
      %v11941 = vunpack.c.h.b16 %v11603
      %v11942 = vunpack.c.h.b16 %v11605
      %v11943 = vunpack.c.h.b16 %v11607
      %v11944 = vunpack.c.l.b16 %v11609
      %v11945 = vunpack.c.l.b16 %v11611
      %v11946 = vunpack.c.l.b16 %v11613
      %v11947 = vunpack.c.l.b16 %v11615
      %v11948 = vunpack.c.l.b16 %v11617
      %v11949 = vunpack.c.l.b16 %v11619
      %v11950 = vunpack.c.l.b16 %v11621
      %v11951 = vunpack.c.h.b16 %v11609
      %v11952 = vunpack.c.h.b16 %v11611
      %v11953 = vunpack.c.h.b16 %v11613
      %v11954 = vunpack.c.h.b16 %v11615
      %v11955 = vunpack.c.h.b16 %v11617
      %v11956 = vunpack.c.h.b16 %v11619
      %v11957 = vunpack.c.h.b16 %v11621
      %v11958 = vunpack.c.l.b16 %v11623
      %v11959 = vunpack.c.l.b16 %v11625
      %v11960 = vunpack.c.l.b16 %v11627
      %v11961 = vunpack.c.l.b16 %v11629
      %v11962 = vunpack.c.l.b16 %v11631
      %v11963 = vunpack.c.l.b16 %v11633
      %v11964 = vunpack.c.l.b16 %v11635
      %v11965 = vunpack.c.h.b16 %v11623
      %v11966 = vunpack.c.h.b16 %v11625
      %v11967 = vunpack.c.h.b16 %v11627
      %v11968 = vunpack.c.h.b16 %v11629
      %v11969 = vunpack.c.h.b16 %v11631
      %v11970 = vunpack.c.h.b16 %v11633
      %v11971 = vunpack.c.h.b16 %v11635
      %v11972 = vpack.c.b16 %v11749, %v11748
      %v11973 = vpack.c.b16 %v11751, %v11750
      %v11974 = vpack.c.b16 %v11753, %v11752
      %v11975 = vpack.c.b16 %v11754, %v11754
      %v11976 = vpack.c.b16 %v11756, %v11755
      %v11977 = vpack.c.b16 %v11758, %v11757
      %v11978 = vpack.c.b16 %v11760, %v11759
      %v11979 = vpack.c.b16 %v11761, %v11761
      %v11980 = vpack.c.b16 %v11763, %v11762
      %v11981 = vpack.c.b16 %v11765, %v11764
      %v11982 = vpack.c.b16 %v11767, %v11766
      %v11983 = vpack.c.b16 %v11768, %v11768
      %v11984 = vpack.c.b16 %v11770, %v11769
      %v11985 = vpack.c.b16 %v11772, %v11771
      %v11986 = vpack.c.b16 %v11774, %v11773
      %v11987 = vpack.c.b16 %v11775, %v11775
      %v11988 = vpack.c.b16 %v11777, %v11776
      %v11989 = vpack.c.b16 %v11779, %v11778
      %v11990 = vpack.c.b16 %v11781, %v11780
      %v11991 = vpack.c.b16 %v11782, %v11782
      %v11992 = vpack.c.b16 %v11784, %v11783
      %v11993 = vpack.c.b16 %v11786, %v11785
      %v11994 = vpack.c.b16 %v11788, %v11787
      %v11995 = vpack.c.b16 %v11789, %v11789
      %v11996 = vpack.c.b16 %v11791, %v11790
      %v11997 = vpack.c.b16 %v11793, %v11792
      %v11998 = vpack.c.b16 %v11795, %v11794
      %v11999 = vpack.c.b16 %v11796, %v11796
      %v12000 = vpack.c.b16 %v11798, %v11797
      %v12001 = vpack.c.b16 %v11800, %v11799
      %v12002 = vpack.c.b16 %v11802, %v11801
      %v12003 = vpack.c.b16 %v11803, %v11803
      %v12004 = vpack.c.b16 %v11805, %v11804
      %v12005 = vpack.c.b16 %v11807, %v11806
      %v12006 = vpack.c.b16 %v11809, %v11808
      %v12007 = vpack.c.b16 %v11810, %v11810
      %v12008 = vpack.c.b16 %v11812, %v11811
      %v12009 = vpack.c.b16 %v11814, %v11813
      %v12010 = vpack.c.b16 %v11816, %v11815
      %v12011 = vpack.c.b16 %v11817, %v11817
      %v12012 = vpack.c.b16 %v11819, %v11818
      %v12013 = vpack.c.b16 %v11821, %v11820
      %v12014 = vpack.c.b16 %v11823, %v11822
      %v12015 = vpack.c.b16 %v11824, %v11824
      %v12016 = vpack.c.b16 %v11826, %v11825
      %v12017 = vpack.c.b16 %v11828, %v11827
      %v12018 = vpack.c.b16 %v11830, %v11829
      %v12019 = vpack.c.b16 %v11831, %v11831
      %v12020 = vpack.c.b16 %v11833, %v11832
      %v12021 = vpack.c.b16 %v11835, %v11834
      %v12022 = vpack.c.b16 %v11837, %v11836
      %v12023 = vpack.c.b16 %v11838, %v11838
      %v12024 = vpack.c.b16 %v11840, %v11839
      %v12025 = vpack.c.b16 %v11842, %v11841
      %v12026 = vpack.c.b16 %v11844, %v11843
      %v12027 = vpack.c.b16 %v11845, %v11845
      %v12028 = vpack.c.b16 %v11847, %v11846
      %v12029 = vpack.c.b16 %v11849, %v11848
      %v12030 = vpack.c.b16 %v11851, %v11850
      %v12031 = vpack.c.b16 %v11852, %v11852
      %v12032 = vpack.c.b16 %v11854, %v11853
      %v12033 = vpack.c.b16 %v11856, %v11855
      %v12034 = vpack.c.b16 %v11858, %v11857
      %v12035 = vpack.c.b16 %v11859, %v11859
      %v12036 = vpack.c.b16 %v11861, %v11860
      %v12037 = vpack.c.b16 %v11863, %v11862
      %v12038 = vpack.c.b16 %v11865, %v11864
      %v12039 = vpack.c.b16 %v11866, %v11866
      %v12040 = vpack.c.b16 %v11868, %v11867
      %v12041 = vpack.c.b16 %v11870, %v11869
      %v12042 = vpack.c.b16 %v11872, %v11871
      %v12043 = vpack.c.b16 %v11873, %v11873
      %v12044 = vpack.c.b16 %v11875, %v11874
      %v12045 = vpack.c.b16 %v11877, %v11876
      %v12046 = vpack.c.b16 %v11879, %v11878
      %v12047 = vpack.c.b16 %v11880, %v11880
      %v12048 = vpack.c.b16 %v11882, %v11881
      %v12049 = vpack.c.b16 %v11884, %v11883
      %v12050 = vpack.c.b16 %v11886, %v11885
      %v12051 = vpack.c.b16 %v11887, %v11887
      %v12052 = vpack.c.b16 %v11889, %v11888
      %v12053 = vpack.c.b16 %v11891, %v11890
      %v12054 = vpack.c.b16 %v11893, %v11892
      %v12055 = vpack.c.b16 %v11894, %v11894
      %v12056 = vpack.c.b16 %v11896, %v11895
      %v12057 = vpack.c.b16 %v11898, %v11897
      %v12058 = vpack.c.b16 %v11900, %v11899
      %v12059 = vpack.c.b16 %v11901, %v11901
      %v12060 = vpack.c.b16 %v11903, %v11902
      %v12061 = vpack.c.b16 %v11905, %v11904
      %v12062 = vpack.c.b16 %v11907, %v11906
      %v12063 = vpack.c.b16 %v11908, %v11908
      %v12064 = vpack.c.b16 %v11910, %v11909
      %v12065 = vpack.c.b16 %v11912, %v11911
      %v12066 = vpack.c.b16 %v11914, %v11913
      %v12067 = vpack.c.b16 %v11915, %v11915
      %v12068 = vpack.c.b16 %v11917, %v11916
      %v12069 = vpack.c.b16 %v11919, %v11918
      %v12070 = vpack.c.b16 %v11921, %v11920
      %v12071 = vpack.c.b16 %v11922, %v11922
      %v12072 = vpack.c.b16 %v11924, %v11923
      %v12073 = vpack.c.b16 %v11926, %v11925
      %v12074 = vpack.c.b16 %v11928, %v11927
      %v12075 = vpack.c.b16 %v11929, %v11929
      %v12076 = vpack.c.b16 %v11931, %v11930
      %v12077 = vpack.c.b16 %v11933, %v11932
      %v12078 = vpack.c.b16 %v11935, %v11934
      %v12079 = vpack.c.b16 %v11936, %v11936
      %v12080 = vpack.c.b16 %v11938, %v11937
      %v12081 = vpack.c.b16 %v11940, %v11939
      %v12082 = vpack.c.b16 %v11942, %v11941
      %v12083 = vpack.c.b16 %v11943, %v11943
      %v12084 = vpack.c.b16 %v11945, %v11944
      %v12085 = vpack.c.b16 %v11947, %v11946
      %v12086 = vpack.c.b16 %v11949, %v11948
      %v12087 = vpack.c.b16 %v11950, %v11950
      %v12088 = vpack.c.b16 %v11952, %v11951
      %v12089 = vpack.c.b16 %v11954, %v11953
      %v12090 = vpack.c.b16 %v11956, %v11955
      %v12091 = vpack.c.b16 %v11957, %v11957
      %v12092 = vpack.c.b16 %v11959, %v11958
      %v12093 = vpack.c.b16 %v11961, %v11960
      %v12094 = vpack.c.b16 %v11963, %v11962
      %v12095 = vpack.c.b16 %v11964, %v11964
      %v12096 = vpack.c.b16 %v11966, %v11965
      %v12097 = vpack.c.b16 %v11968, %v11967
      %v12098 = vpack.c.b16 %v11970, %v11969
      %v12099 = vpack.c.b16 %v11971, %v11971
      %12228 = vst [vmem:[%s531] sm:$0xff] %v11972
      %12229 = vst [vmem:[%s531 + $0x8] sm:$0xff] %v11973
      %12230 = vst [vmem:[%s531 + $0x10] sm:$0xff] %v11974
      %vm12231 = vcmask 125952
      %12232 = vst.msk [vmem:[%s531 + $0x18] sm:$0xf] %vm12231, %v11975
      %12233 = vst [vmem:[%s531 + $0x1c] sm:$0xff] %v11976
      %12234 = vst [vmem:[%s531 + $0x24] sm:$0xff] %v11977
      %12235 = vst [vmem:[%s531 + $0x2c] sm:$0xff] %v11978
      %12236 = vst.msk [vmem:[%s531 + $0x34] sm:$0xf] %vm12231, %v11979
      %12237 = vst [vmem:[%s531 + $0x38] sm:$0xff] %v11980
      %12238 = vst [vmem:[%s531 + $0x40] sm:$0xff] %v11981
      %12239 = vst [vmem:[%s531 + $0x48] sm:$0xff] %v11982
      %12240 = vst.msk [vmem:[%s531 + $0x50] sm:$0xf] %vm12231, %v11983
      %12241 = vst [vmem:[%s531 + $0x54] sm:$0xff] %v11984
      %12242 = vst [vmem:[%s531 + $0x5c] sm:$0xff] %v11985
      %12243 = vst [vmem:[%s531 + $0x64] sm:$0xff] %v11986
      %12244 = vst.msk [vmem:[%s531 + $0x6c] sm:$0xf] %vm12231, %v11987
      %12245 = vst [vmem:[%s531 + $0x70] sm:$0xff] %v11988
      %12246 = vst [vmem:[%s531 + $0x78] sm:$0xff] %v11989
      %12247 = vst [vmem:[%s531 + $0x80] sm:$0xff] %v11990
      %12248 = vst.msk [vmem:[%s531 + $0x88] sm:$0xf] %vm12231, %v11991
      %12249 = vst [vmem:[%s531 + $0x8c] sm:$0xff] %v11992
      %12250 = vst [vmem:[%s531 + $0x94] sm:$0xff] %v11993
      %12251 = vst [vmem:[%s531 + $0x9c] sm:$0xff] %v11994
      %12252 = vst.msk [vmem:[%s531 + $0xa4] sm:$0xf] %vm12231, %v11995
      %12253 = vst [vmem:[%s531 + $0xa8] sm:$0xff] %v11996
      %12254 = vst [vmem:[%s531 + $0xb0] sm:$0xff] %v11997
      %12255 = vst [vmem:[%s531 + $0xb8] sm:$0xff] %v11998
      %12256 = vst.msk [vmem:[%s531 + $0xc0] sm:$0xf] %vm12231, %v11999
      %12257 = vst [vmem:[%s531 + $0xc4] sm:$0xff] %v12000
      %12258 = vst [vmem:[%s531 + $0xcc] sm:$0xff] %v12001
      %12259 = vst [vmem:[%s531 + $0xd4] sm:$0xff] %v12002
      %12260 = vst.msk [vmem:[%s531 + $0xdc] sm:$0xf] %vm12231, %v12003
      %12261 = vst [vmem:[%s531 + $0xe0] sm:$0xff] %v12004
      %12262 = vst [vmem:[%s531 + $0xe8] sm:$0xff] %v12005
      %12263 = vst [vmem:[%s531 + $0xf0] sm:$0xff] %v12006
      %12264 = vst.msk [vmem:[%s531 + $0xf8] sm:$0xf] %vm12231, %v12007
      %12265 = vst [vmem:[%s531 + $0xfc] sm:$0xff] %v12008
      %12266 = vst [vmem:[%s531 + $0x104] sm:$0xff] %v12009
      %12267 = vst [vmem:[%s531 + $0x10c] sm:$0xff] %v12010
      %12268 = vst.msk [vmem:[%s531 + $0x114] sm:$0xf] %vm12231, %v12011
      %12269 = vst [vmem:[%s531 + $0x118] sm:$0xff] %v12012
      %12270 = vst [vmem:[%s531 + $0x120] sm:$0xff] %v12013
      %12271 = vst [vmem:[%s531 + $0x128] sm:$0xff] %v12014
      %12272 = vst.msk [vmem:[%s531 + $0x130] sm:$0xf] %vm12231, %v12015
      %12273 = vst [vmem:[%s531 + $0x134] sm:$0xff] %v12016
      %12274 = vst [vmem:[%s531 + $0x13c] sm:$0xff] %v12017
      %12275 = vst [vmem:[%s531 + $0x144] sm:$0xff] %v12018
      %12276 = vst.msk [vmem:[%s531 + $0x14c] sm:$0xf] %vm12231, %v12019
      %12277 = vst [vmem:[%s531 + $0x150] sm:$0xff] %v12020
      %12278 = vst [vmem:[%s531 + $0x158] sm:$0xff] %v12021
      %12279 = vst [vmem:[%s531 + $0x160] sm:$0xff] %v12022
      %12280 = vst.msk [vmem:[%s531 + $0x168] sm:$0xf] %vm12231, %v12023
      %12281 = vst [vmem:[%s531 + $0x16c] sm:$0xff] %v12024
      %12282 = vst [vmem:[%s531 + $0x174] sm:$0xff] %v12025
      %12283 = vst [vmem:[%s531 + $0x17c] sm:$0xff] %v12026
      %12284 = vst.msk [vmem:[%s531 + $0x184] sm:$0xf] %vm12231, %v12027
      %12285 = vst [vmem:[%s531 + $0x188] sm:$0xff] %v12028
      %12286 = vst [vmem:[%s531 + $0x190] sm:$0xff] %v12029
      %12287 = vst [vmem:[%s531 + $0x198] sm:$0xff] %v12030
      %12288 = vst.msk [vmem:[%s531 + $0x1a0] sm:$0xf] %vm12231, %v12031
      %12289 = vst [vmem:[%s531 + $0x1a4] sm:$0xff] %v12032
      %12290 = vst [vmem:[%s531 + $0x1ac] sm:$0xff] %v12033
      %12291 = vst [vmem:[%s531 + $0x1b4] sm:$0xff] %v12034
      %12292 = vst.msk [vmem:[%s531 + $0x1bc] sm:$0xf] %vm12231, %v12035
      %12293 = vst [vmem:[%s531 + $0x1c0] sm:$0xff] %v12036
      %12294 = vst [vmem:[%s531 + $0x1c8] sm:$0xff] %v12037
      %12295 = vst [vmem:[%s531 + $0x1d0] sm:$0xff] %v12038
      %12296 = vst.msk [vmem:[%s531 + $0x1d8] sm:$0xf] %vm12231, %v12039
      %12297 = vst [vmem:[%s531 + $0x1dc] sm:$0xff] %v12040
      %12298 = vst [vmem:[%s531 + $0x1e4] sm:$0xff] %v12041
      %12299 = vst [vmem:[%s531 + $0x1ec] sm:$0xff] %v12042
      %12300 = vst.msk [vmem:[%s531 + $0x1f4] sm:$0xf] %vm12231, %v12043
      %12301 = vst [vmem:[%s531 + $0x1f8] sm:$0xff] %v12044
      %12302 = vst [vmem:[%s531 + $0x200] sm:$0xff] %v12045
      %12303 = vst [vmem:[%s531 + $0x208] sm:$0xff] %v12046
      %12304 = vst.msk [vmem:[%s531 + $0x210] sm:$0xf] %vm12231, %v12047
      %12305 = vst [vmem:[%s531 + $0x214] sm:$0xff] %v12048
      %12306 = vst [vmem:[%s531 + $0x21c] sm:$0xff] %v12049
      %12307 = vst [vmem:[%s531 + $0x224] sm:$0xff] %v12050
      %12308 = vst.msk [vmem:[%s531 + $0x22c] sm:$0xf] %vm12231, %v12051
      %12309 = vst [vmem:[%s531 + $0x230] sm:$0xff] %v12052
      %12310 = vst [vmem:[%s531 + $0x238] sm:$0xff] %v12053
      %12311 = vst [vmem:[%s531 + $0x240] sm:$0xff] %v12054
      %12312 = vst.msk [vmem:[%s531 + $0x248] sm:$0xf] %vm12231, %v12055
      %12313 = vst [vmem:[%s531 + $0x24c] sm:$0xff] %v12056
      %12314 = vst [vmem:[%s531 + $0x254] sm:$0xff] %v12057
      %12315 = vst [vmem:[%s531 + $0x25c] sm:$0xff] %v12058
      %12316 = vst.msk [vmem:[%s531 + $0x264] sm:$0xf] %vm12231, %v12059
      %12317 = vst [vmem:[%s531 + $0x268] sm:$0xff] %v12060
      %12318 = vst [vmem:[%s531 + $0x270] sm:$0xff] %v12061
      %12319 = vst [vmem:[%s531 + $0x278] sm:$0xff] %v12062
      %12320 = vst.msk [vmem:[%s531 + $0x280] sm:$0xf] %vm12231, %v12063
      %12321 = vst [vmem:[%s531 + $0x284] sm:$0xff] %v12064
      %12322 = vst [vmem:[%s531 + $0x28c] sm:$0xff] %v12065
      %12323 = vst [vmem:[%s531 + $0x294] sm:$0xff] %v12066
      %12324 = vst.msk [vmem:[%s531 + $0x29c] sm:$0xf] %vm12231, %v12067
      %12325 = vst [vmem:[%s531 + $0x2a0] sm:$0xff] %v12068
      %12326 = vst [vmem:[%s531 + $0x2a8] sm:$0xff] %v12069
      %12327 = vst [vmem:[%s531 + $0x2b0] sm:$0xff] %v12070
      %12328 = vst.msk [vmem:[%s531 + $0x2b8] sm:$0xf] %vm12231, %v12071
      %12329 = vst [vmem:[%s531 + $0x2bc] sm:$0xff] %v12072
      %12330 = vst [vmem:[%s531 + $0x2c4] sm:$0xff] %v12073
      %12331 = vst [vmem:[%s531 + $0x2cc] sm:$0xff] %v12074
      %12332 = vst.msk [vmem:[%s531 + $0x2d4] sm:$0xf] %vm12231, %v12075
      %12333 = vst [vmem:[%s531 + $0x2d8] sm:$0xff] %v12076
      %12334 = vst [vmem:[%s531 + $0x2e0] sm:$0xff] %v12077
      %12335 = vst [vmem:[%s531 + $0x2e8] sm:$0xff] %v12078
      %12336 = vst.msk [vmem:[%s531 + $0x2f0] sm:$0xf] %vm12231, %v12079
      %12337 = vst [vmem:[%s531 + $0x2f4] sm:$0xff] %v12080
      %12338 = vst [vmem:[%s531 + $0x2fc] sm:$0xff] %v12081
      %12339 = vst [vmem:[%s531 + $0x304] sm:$0xff] %v12082
      %12340 = vst.msk [vmem:[%s531 + $0x30c] sm:$0xf] %vm12231, %v12083
      %12341 = vst [vmem:[%s531 + $0x310] sm:$0xff] %v12084
      %12342 = vst [vmem:[%s531 + $0x318] sm:$0xff] %v12085
      %12343 = vst [vmem:[%s531 + $0x320] sm:$0xff] %v12086
      %12344 = vst.msk [vmem:[%s531 + $0x328] sm:$0xf] %vm12231, %v12087
      %12345 = vst [vmem:[%s531 + $0x32c] sm:$0xff] %v12088
      %12346 = vst [vmem:[%s531 + $0x334] sm:$0xff] %v12089
      %12347 = vst [vmem:[%s531 + $0x33c] sm:$0xff] %v12090
      %12348 = vst.msk [vmem:[%s531 + $0x344] sm:$0xf] %vm12231, %v12091
      %12349 = vst [vmem:[%s531 + $0x348] sm:$0xff] %v12092
      %12350 = vst [vmem:[%s531 + $0x350] sm:$0xff] %v12093
      %12351 = vst [vmem:[%s531 + $0x358] sm:$0xff] %v12094
      %12352 = vst.msk [vmem:[%s531 + $0x360] sm:$0xf] %vm12231, %v12095
      %12353 = vst [vmem:[%s531 + $0x364] sm:$0xff] %v12096
      %12354 = vst [vmem:[%s531 + $0x36c] sm:$0xff] %v12097
      %12355 = vst [vmem:[%s531 + $0x374] sm:$0xff] %v12098
      %12356 = vst.msk [vmem:[%s531 + $0x37c] sm:$0xf] %vm12231, %v12099
      %vm12357 = vcmask 31744
      %12358 = vst.msk [vmem:[%s537] sm:$0xff] %vm12357, %v5490
      %12359 = vst.msk [vmem:[%s537 + $0x8] sm:$0xff] %vm12357, %v5493
      %12360 = vst.msk [vmem:[%s537 + $0x10] sm:$0xff] %vm12357, %v5498
      %12361 = vst.msk [vmem:[%s537 + $0x18] sm:$0xff] %vm12357, %v5501
      %12362 = vst.msk [vmem:[%s537 + $0x20] sm:$0xff] %vm12357, %v5506
      %12363 = vst.msk [vmem:[%s537 + $0x28] sm:$0xff] %vm12357, %v5509
      %12364 = vst.msk [vmem:[%s537 + $0x30] sm:$0xff] %vm12357, %v5514
      %12365 = vst.msk [vmem:[%s537 + $0x38] sm:$0xff] %vm12357, %v5517
      %12366 = vst.msk [vmem:[%s537 + $0x40] sm:$0xff] %vm12357, %v5522
      %12367 = vst.msk [vmem:[%s537 + $0x48] sm:$0xff] %vm12357, %v5525
      %12368 = vst.msk [vmem:[%s537 + $0x50] sm:$0xff] %vm12357, %v5530
      %12369 = vst.msk [vmem:[%s537 + $0x58] sm:$0xff] %vm12357, %v5533
      %12370 = vst.msk [vmem:[%s537 + $0x60] sm:$0xff] %vm12357, %v5538
      %12371 = vst.msk [vmem:[%s537 + $0x68] sm:$0xff] %vm12357, %v5541
      %12372 = vst.msk [vmem:[%s537 + $0x70] sm:$0xff] %vm12357, %v5546
      %12373 = vst.msk [vmem:[%s537 + $0x78] sm:$0xff] %vm12357, %v5549
      %12374 = vst.msk [vmem:[%s537 + $0x80] sm:$0xff] %vm12357, %v5554
      %12375 = vst.msk [vmem:[%s537 + $0x88] sm:$0xff] %vm12357, %v5557
      %12376 = vst.msk [vmem:[%s537 + $0x90] sm:$0xff] %vm12357, %v5562
      %12377 = vst.msk [vmem:[%s537 + $0x98] sm:$0xff] %vm12357, %v5565
      %12378 = vst.msk [vmem:[%s537 + $0xa0] sm:$0xff] %vm12357, %v5570
      %12379 = vst.msk [vmem:[%s537 + $0xa8] sm:$0xff] %vm12357, %v5573
      %12380 = vst.msk [vmem:[%s537 + $0xb0] sm:$0xff] %vm12357, %v5578
      %12381 = vst.msk [vmem:[%s537 + $0xb8] sm:$0xff] %vm12357, %v5581
      %12382 = vst.msk [vmem:[%s537 + $0xc0] sm:$0xff] %vm12357, %v5586
      %12383 = vst.msk [vmem:[%s537 + $0xc8] sm:$0xff] %vm12357, %v5589
      %12384 = vst.msk [vmem:[%s537 + $0xd0] sm:$0xff] %vm12357, %v5594
      %12385 = vst.msk [vmem:[%s537 + $0xd8] sm:$0xff] %vm12357, %v5597
      %12386 = vst.msk [vmem:[%s537 + $0xe0] sm:$0xff] %vm12357, %v5602
      %12387 = vst.msk [vmem:[%s537 + $0xe8] sm:$0xff] %vm12357, %v5605
      %12388 = vst.msk [vmem:[%s537 + $0xf0] sm:$0xff] %vm12357, %v5610
      %12389 = vst.msk [vmem:[%s537 + $0xf8] sm:$0xff] %vm12357, %v5613
      %s12390 = smul.u32 32, %s27
      %p12391 = scmp.lt.s32.totalorder %s12390, 127
      %s12392 = scalar_select %p12391, %s12390, 127
      %s12393 = smul.addr %s12392, 7
      %s12394 = smul.addr %s12393, 4
      %s12395 = scalar_lea.vmem %s14, %s12394
      %s12396 = smul.u32 32, %s27
      %p12397 = scmp.lt.s32.totalorder %s12396, 127
      %s12398 = scalar_select %p12397, %s12396, 127
      %s12399 = smul.addr %s12398, 8
      %s12400 = scalar_lea.vmem %s15, %s12399
      // Predicated region
      $region77: #{vae_forward.1} parent=75 // pred_check
        %p12401 = pneg %p349
      $region78: #{vae_forward.1} parent=75 // pred_check_branch
        %12403 = sbr.rel (%p12401) target = $region80
      $region79: #{vae_forward.1} parent=75 // pred_region
        %s12404 = smul.u32 32, %s27
      $region80: #{vae_forward.1} parent=75 // pred_fallthru
        _
      // Predicated region
      $region81: #{vae_forward.1} parent=75 // pred_check
        %p12405 = pneg %p375
      $region82: #{vae_forward.1} parent=75 // pred_check_branch
        %12407 = sbr.rel (%p12405) target = $region84
      $region83: #{vae_forward.1} parent=75 // pred_region
        %s12408 = smul.u32 32, %s27
      $region84: #{vae_forward.1} parent=75 // pred_fallthru
        _
    $region76: #{vae_forward.1} parent=5 // pred_fallthru
      _
    %p12409 = scmp.le.s32.totalorder 2, %s22
    // Predicated region
    $region85: #{vae_forward.1} parent=5 // pred_check
      %p12410 = pneg %p12409
    $region86: #{vae_forward.1} parent=5 // pred_check_branch
      %12412 = sbr.rel (%p12410) target = $region88
    $region87: #{vae_forward.1} parent=5 // pred_region
      %s12413 = ssub.s32 %s22, 2
      // Predicated region
      $region89: #{vae_forward.1} parent=87 // pred_check
        %p12414 = pneg %p355
      $region90: #{vae_forward.1} parent=87 // pred_check_branch
        %12416 = sbr.rel (%p12414) target = $region92
      $region91: #{vae_forward.1} parent=87 // pred_region
        %s12417 = smul.u32 32, %s28
        %p12418 = scmp.lt.s32.totalorder %s12417, 127
        %s12419 = scalar_select %p12418, %s12417, 127
        %s12420 = smul.addr %s12419, 7
        %s12421 = smul.addr %s12420, 4
        %s12422 = scalar_lea.vmem %s14, %s12421
      $region92: #{vae_forward.1} parent=87 // pred_fallthru
        _
      // Predicated region
      $region93: #{vae_forward.1} parent=87 // pred_check
        %p12423 = pneg %p381
      $region94: #{vae_forward.1} parent=87 // pred_check_branch
        %12425 = sbr.rel (%p12423) target = $region96
      $region95: #{vae_forward.1} parent=87 // pred_region
        %s12426 = smul.u32 32, %s28
        %p12427 = scmp.lt.s32.totalorder %s12426, 127
        %s12428 = scalar_select %p12427, %s12426, 127
        %s12429 = smul.addr %s12428, 8
        %s12430 = scalar_lea.vmem %s15, %s12429
      $region96: #{vae_forward.1} parent=87 // pred_fallthru
        _
    $region88: #{vae_forward.1} parent=5 // pred_fallthru
      _
  $region6: #{vae_forward.1} parent=0 // loop_footer
    %s26 = sadd.s32 1, %s22
  $region7: #{vae_forward.1} parent=0 // loop_footer_branch
    %21 = sbr.rel target = $region3
  $region8: #{vae_forward.1} parent=0 // loop_exit
    _

</llo_original>
